<compile_context>
chip_gen: v6e
topology: v6e:2x2x1
jax: 0.10.0
libtpu: 0.0.40
codegen_flags: <defaults>
</compile_context>

<pallas_src>
import functools

import jax
import jax.numpy as jnp
from jax.experimental import pallas as pl
from jax.experimental.pallas import tpu as pltpu


def _conv_relu_layer(load_in, store_out, w_ref, b_ref, cin, cout, n):
    """Valid 3-D conv (k=2, stride 1) + bias + ReLU on lane-dense slabs.

    load_in(ci)        -> (n, n*n) f32 slab (depth on sublanes, h*n+w on lanes)
    store_out(co, slab)   stores the (n, n*n) output slab of channel co
    w_ref : SMEM flat (cout*cin*8,), row-major over (co, ci, kd, kh, kw)
    b_ref : SMEM (cout,)
    """
    hw = n * n
    # One accumulator slab per output channel, initialized with the bias.
    accs = [jnp.full((n, hw), b_ref[co], dtype=jnp.float32) for co in range(cout)]
    for ci in range(cin):
        x_ci = load_in(ci)                                       # (n, hw)
        for kd in range(2):
            # depth tap: output row d reads input row d+kd  (sublane roll)
            xd = x_ci if kd == 0 else pltpu.roll(x_ci, shift=n - kd, axis=0)
            for kh in range(2):
                for kw in range(2):
                    s = kh * n + kw
                    # h/w tap: lane p reads lane p + kh*n + kw  (lane roll)
                    xs = xd if s == 0 else pltpu.roll(xd, shift=hw - s, axis=1)
                    t = kd * 4 + kh * 2 + kw
                    for co in range(cout):
                        wv = w_ref[(co * cin + ci) * 8 + t]
                        accs[co] = accs[co] + wv * xs
    for co in range(cout):
        store_out(co, jnp.maximum(accs[co], 0.0))


def _fused_block_kernel(w1_ref, b1_ref, w2_ref, b2_ref, w3_ref, b3_ref,
                        x_ref, o_ref, a1_ref, a2_ref, *, nf, n):
    """One batch element: three fused conv3d(k=2)+ReLU layers, all on-chip."""
    def load_x(ci):            # single input channel
        return x_ref[0]

    def store_a1(co, v):
        a1_ref[co] = v

    def load_a1(ci):
        return a1_ref[ci]

    def store_a2(co, v):
        a2_ref[co] = v

    def load_a2(ci):
        return a2_ref[ci]

    def store_out(co, v):
        o_ref[0, co] = v

    _conv_relu_layer(load_x, store_a1, w1_ref, b1_ref, 1, nf, n)   # 1 -> nf
    _conv_relu_layer(load_a1, store_a2, w2_ref, b2_ref, nf, 5, n)  # nf -> 5
    _conv_relu_layer(load_a2, store_out, w3_ref, b3_ref, 5, 3, n)  # 5 -> 3


def conv3d_block_forward(x, params):
    """_Conv3dBlock.forward: view (B,1,N,N,N), then 3x (Conv3d k=2 + ReLU)."""
    B = x.shape[0]
    N = x.shape[-1]
    (w1, b1), (w2, b2), (w3, b3) = params
    nf = w1.shape[0]

    # = input.view(batch, 1, N, N, N), then flatten to lane-dense (B, N, N*N)
    h = x.reshape(B, 1, N, N, N).reshape(B, N, N * N).astype(jnp.float32)

    kernel = functools.partial(_fused_block_kernel, nf=nf, n=N)
    smem = pl.BlockSpec(memory_space=pltpu.MemorySpace.SMEM)
    y_pad = pl.pallas_call(
        kernel,
        out_shape=jax.ShapeDtypeStruct((B, 3, N, N * N), jnp.float32),
        grid=(B,),
        in_specs=[
            smem, smem,                                       # w1 flat, b1
            smem, smem,                                       # w2 flat, b2
            smem, smem,                                       # w3 flat, b3
            pl.BlockSpec((1, N, N * N), lambda bi: (bi, 0, 0)),
        ],
        out_specs=pl.BlockSpec((1, 3, N, N * N), lambda bi: (bi, 0, 0, 0)),
        scratch_shapes=[
            pltpu.VMEM((nf, N, N * N), jnp.float32),          # layer-1 acts
            pltpu.VMEM((5, N, N * N), jnp.float32),           # layer-2 acts
        ],
        compiler_params=pltpu.CompilerParams(
            dimension_semantics=("parallel",),
        ),
    )(w1.reshape(-1), b1, w2.reshape(-1), b2, w3.reshape(-1), b3, h)

    # Extract the valid (N-3)^3 region from the padded lane-dense output.
    n_out = N - 3
    return y_pad.reshape(B, 3, N, N, N)[:, :, :n_out, :n_out, :n_out]


def _reference_forward(x, params):
    """Plain-JAX reference (lax conv, NCDHW) for a correctness check."""
    B = x.shape[0]
    N = x.shape[-1]
    h = x.reshape(B, 1, N, N, N)
    dn = jax.lax.conv_dimension_numbers(h.shape, params[0][0].shape,
                                        ("NCDHW", "OIDHW", "NCDHW"))
    for w, b in params:
        h = jax.lax.conv_general_dilated(h, w, (1, 1, 1), "VALID",
                                         dimension_numbers=dn)
        h = jax.nn.relu(h + b[None, :, None, None, None])
    return h


def _init_params(key, n_filters):
    # Deterministic synthetic init (shapes from the module's __init__).
    ks = jax.random.split(key, 6)

    def mk(kw, kb, cout, cin, k=2):
        w = jax.random.normal(kw, (cout, cin, k, k, k), jnp.float32) * 0.1
        b = jax.random.normal(kb, (cout,), jnp.float32) * 0.1
        return w, b

    return (
        mk(ks[0], ks[1], n_filters, 1),   # FirstConv3d(1, n_filters, 2)
        mk(ks[2], ks[3], 5, n_filters),   # NextConv3d(n_filters, 5, 2)
        mk(ks[4], ks[5], 3, 5),           # NextConv3d(5, 3, 2)
    )


if __name__ == "__main__":
    key = jax.random.PRNGKey(0)
    k_param, k_x = jax.random.split(key)

    n_filters = 4
    B, N = 2, 16
    params = _init_params(k_param, n_filters)
    x = jax.random.normal(k_x, (B, N, N, N), jnp.float32)

    y = conv3d_block_forward(x, params)
    y = jax.block_until_ready(y)

    assert y.shape == (B, 3, N - 3, N - 3, N - 3), y.shape

    y_ref = _reference_forward(x, params)
    assert jnp.allclose(y, y_ref, atol=1e-4, rtol=1e-4), "mismatch vs reference"

    print("KERNEL_OK")
</pallas_src>

<mosaic_0001>
module attributes {stable_mosaic.version = 11 : i64} {
  func.func @_fused_block_kernel(%arg0: i32, %arg1: memref<32xf32, #tpu.memory_space<smem>>, %arg2: memref<4xf32, #tpu.memory_space<smem>>, %arg3: memref<160xf32, #tpu.memory_space<smem>>, %arg4: memref<5xf32, #tpu.memory_space<smem>>, %arg5: memref<120xf32, #tpu.memory_space<smem>>, %arg6: memref<3xf32, #tpu.memory_space<smem>>, %arg7: memref<1x16x256xf32, #tpu.memory_space<vmem>>, %arg8: memref<1x3x16x256xf32, #tpu.memory_space<vmem>>, %arg9: memref<4x16x256xf32, #tpu.memory_space<vmem>>, %arg10: memref<5x16x256xf32, #tpu.memory_space<vmem>>) attributes {dimension_semantics = [#tpu.dimension_semantics<parallel>], iteration_bounds = array<i64: 2>, scalar_prefetch = 0 : i64, scratch_operands = 2 : i64, tpu.core_type = #tpu.core_type<tc>, window_params = [{transform_indices = @transform_0, window_bounds = array<i64: 32>}, {transform_indices = @transform_1, window_bounds = array<i64: 4>}, {transform_indices = @transform_2, window_bounds = array<i64: 160>}, {transform_indices = @transform_3, window_bounds = array<i64: 5>}, {transform_indices = @transform_4, window_bounds = array<i64: 120>}, {transform_indices = @transform_5, window_bounds = array<i64: 3>}, {transform_indices = @transform_6, window_bounds = array<i64: 1, 16, 256>}, {transform_indices = @transform_7, window_bounds = array<i64: 1, 3, 16, 256>}]} {
    %c0 = arith.constant 0 : index
    %0 = memref.load %arg2[%c0] : memref<4xf32, #tpu.memory_space<smem>>
    %1 = vector.broadcast %0 : f32 to vector<16x256xf32>
    %c1 = arith.constant 1 : index
    %2 = memref.load %arg2[%c1] : memref<4xf32, #tpu.memory_space<smem>>
    %3 = vector.broadcast %2 : f32 to vector<16x256xf32>
    %c2 = arith.constant 2 : index
    %4 = memref.load %arg2[%c2] : memref<4xf32, #tpu.memory_space<smem>>
    %5 = vector.broadcast %4 : f32 to vector<16x256xf32>
    %c3 = arith.constant 3 : index
    %6 = memref.load %arg2[%c3] : memref<4xf32, #tpu.memory_space<smem>>
    %7 = vector.broadcast %6 : f32 to vector<16x256xf32>
    %c0_0 = arith.constant 0 : index
    %c0_1 = arith.constant 0 : index
    %c0_2 = arith.constant 0 : index
    %8 = vector.load %arg7[%c0_0, %c0_1, %c0_2] : memref<1x16x256xf32, #tpu.memory_space<vmem>>, vector<1x16x256xf32>
    %9 = vector.shape_cast %8 : vector<1x16x256xf32> to vector<16x256xf32>
    %c0_3 = arith.constant 0 : index
    %10 = memref.load %arg1[%c0_3] : memref<32xf32, #tpu.memory_space<smem>>
    %11 = vector.broadcast %10 : f32 to vector<16x256xf32>
    %12 = arith.mulf %11, %9 : vector<16x256xf32>
    %13 = arith.addf %1, %12 : vector<16x256xf32>
    %c8 = arith.constant 8 : index
    %14 = memref.load %arg1[%c8] : memref<32xf32, #tpu.memory_space<smem>>
    %15 = vector.broadcast %14 : f32 to vector<16x256xf32>
    %16 = arith.mulf %15, %9 : vector<16x256xf32>
    %17 = arith.addf %3, %16 : vector<16x256xf32>
    %c16 = arith.constant 16 : index
    %18 = memref.load %arg1[%c16] : memref<32xf32, #tpu.memory_space<smem>>
    %19 = vector.broadcast %18 : f32 to vector<16x256xf32>
    %20 = arith.mulf %19, %9 : vector<16x256xf32>
    %21 = arith.addf %5, %20 : vector<16x256xf32>
    %c24 = arith.constant 24 : index
    %22 = memref.load %arg1[%c24] : memref<32xf32, #tpu.memory_space<smem>>
    %23 = vector.broadcast %22 : f32 to vector<16x256xf32>
    %24 = arith.mulf %23, %9 : vector<16x256xf32>
    %25 = arith.addf %7, %24 : vector<16x256xf32>
    %c255_i32 = arith.constant 255 : i32
    %26 = tpu.dynamic_rotate %9 by %c255_i32 dim 1 : vector<16x256xf32>, i32 -> vector<16x256xf32>
    %c1_4 = arith.constant 1 : index
    %27 = memref.load %arg1[%c1_4] : memref<32xf32, #tpu.memory_space<smem>>
    %28 = vector.broadcast %27 : f32 to vector<16x256xf32>
    %29 = arith.mulf %28, %26 : vector<16x256xf32>
    %30 = arith.addf %13, %29 : vector<16x256xf32>
    %c9 = arith.constant 9 : index
    %31 = memref.load %arg1[%c9] : memref<32xf32, #tpu.memory_space<smem>>
    %32 = vector.broadcast %31 : f32 to vector<16x256xf32>
    %33 = arith.mulf %32, %26 : vector<16x256xf32>
    %34 = arith.addf %17, %33 : vector<16x256xf32>
    %c17 = arith.constant 17 : index
    %35 = memref.load %arg1[%c17] : memref<32xf32, #tpu.memory_space<smem>>
    %36 = vector.broadcast %35 : f32 to vector<16x256xf32>
    %37 = arith.mulf %36, %26 : vector<16x256xf32>
    %38 = arith.addf %21, %37 : vector<16x256xf32>
    %c25 = arith.constant 25 : index
    %39 = memref.load %arg1[%c25] : memref<32xf32, #tpu.memory_space<smem>>
    %40 = vector.broadcast %39 : f32 to vector<16x256xf32>
    %41 = arith.mulf %40, %26 : vector<16x256xf32>
    %42 = arith.addf %25, %41 : vector<16x256xf32>
    %c240_i32 = arith.constant 240 : i32
    %43 = tpu.dynamic_rotate %9 by %c240_i32 dim 1 : vector<16x256xf32>, i32 -> vector<16x256xf32>
    %c2_5 = arith.constant 2 : index
    %44 = memref.load %arg1[%c2_5] : memref<32xf32, #tpu.memory_space<smem>>
    %45 = vector.broadcast %44 : f32 to vector<16x256xf32>
    %46 = arith.mulf %45, %43 : vector<16x256xf32>
    %47 = arith.addf %30, %46 : vector<16x256xf32>
    %c10 = arith.constant 10 : index
    %48 = memref.load %arg1[%c10] : memref<32xf32, #tpu.memory_space<smem>>
    %49 = vector.broadcast %48 : f32 to vector<16x256xf32>
    %50 = arith.mulf %49, %43 : vector<16x256xf32>
    %51 = arith.addf %34, %50 : vector<16x256xf32>
    %c18 = arith.constant 18 : index
    %52 = memref.load %arg1[%c18] : memref<32xf32, #tpu.memory_space<smem>>
    %53 = vector.broadcast %52 : f32 to vector<16x256xf32>
    %54 = arith.mulf %53, %43 : vector<16x256xf32>
    %55 = arith.addf %38, %54 : vector<16x256xf32>
    %c26 = arith.constant 26 : index
    %56 = memref.load %arg1[%c26] : memref<32xf32, #tpu.memory_space<smem>>
    %57 = vector.broadcast %56 : f32 to vector<16x256xf32>
    %58 = arith.mulf %57, %43 : vector<16x256xf32>
    %59 = arith.addf %42, %58 : vector<16x256xf32>
    %c239_i32 = arith.constant 239 : i32
    %60 = tpu.dynamic_rotate %9 by %c239_i32 dim 1 : vector<16x256xf32>, i32 -> vector<16x256xf32>
    %c3_6 = arith.constant 3 : index
    %61 = memref.load %arg1[%c3_6] : memref<32xf32, #tpu.memory_space<smem>>
    %62 = vector.broadcast %61 : f32 to vector<16x256xf32>
    %63 = arith.mulf %62, %60 : vector<16x256xf32>
    %64 = arith.addf %47, %63 : vector<16x256xf32>
    %c11 = arith.constant 11 : index
    %65 = memref.load %arg1[%c11] : memref<32xf32, #tpu.memory_space<smem>>
    %66 = vector.broadcast %65 : f32 to vector<16x256xf32>
    %67 = arith.mulf %66, %60 : vector<16x256xf32>
    %68 = arith.addf %51, %67 : vector<16x256xf32>
    %c19 = arith.constant 19 : index
    %69 = memref.load %arg1[%c19] : memref<32xf32, #tpu.memory_space<smem>>
    %70 = vector.broadcast %69 : f32 to vector<16x256xf32>
    %71 = arith.mulf %70, %60 : vector<16x256xf32>
    %72 = arith.addf %55, %71 : vector<16x256xf32>
    %c27 = arith.constant 27 : index
    %73 = memref.load %arg1[%c27] : memref<32xf32, #tpu.memory_space<smem>>
    %74 = vector.broadcast %73 : f32 to vector<16x256xf32>
    %75 = arith.mulf %74, %60 : vector<16x256xf32>
    %76 = arith.addf %59, %75 : vector<16x256xf32>
    %c15_i32 = arith.constant 15 : i32
    %77 = tpu.dynamic_rotate %9 by %c15_i32 dim 0 : vector<16x256xf32>, i32 -> vector<16x256xf32>
    %c4 = arith.constant 4 : index
    %78 = memref.load %arg1[%c4] : memref<32xf32, #tpu.memory_space<smem>>
    %79 = vector.broadcast %78 : f32 to vector<16x256xf32>
    %80 = arith.mulf %79, %77 : vector<16x256xf32>
    %81 = arith.addf %64, %80 : vector<16x256xf32>
    %c12 = arith.constant 12 : index
    %82 = memref.load %arg1[%c12] : memref<32xf32, #tpu.memory_space<smem>>
    %83 = vector.broadcast %82 : f32 to vector<16x256xf32>
    %84 = arith.mulf %83, %77 : vector<16x256xf32>
    %85 = arith.addf %68, %84 : vector<16x256xf32>
    %c20 = arith.constant 20 : index
    %86 = memref.load %arg1[%c20] : memref<32xf32, #tpu.memory_space<smem>>
    %87 = vector.broadcast %86 : f32 to vector<16x256xf32>
    %88 = arith.mulf %87, %77 : vector<16x256xf32>
    %89 = arith.addf %72, %88 : vector<16x256xf32>
    %c28 = arith.constant 28 : index
    %90 = memref.load %arg1[%c28] : memref<32xf32, #tpu.memory_space<smem>>
    %91 = vector.broadcast %90 : f32 to vector<16x256xf32>
    %92 = arith.mulf %91, %77 : vector<16x256xf32>
    %93 = arith.addf %76, %92 : vector<16x256xf32>
    %c255_i32_7 = arith.constant 255 : i32
    %94 = tpu.dynamic_rotate %77 by %c255_i32_7 dim 1 : vector<16x256xf32>, i32 -> vector<16x256xf32>
    %c5 = arith.constant 5 : index
    %95 = memref.load %arg1[%c5] : memref<32xf32, #tpu.memory_space<smem>>
    %96 = vector.broadcast %95 : f32 to vector<16x256xf32>
    %97 = arith.mulf %96, %94 : vector<16x256xf32>
    %98 = arith.addf %81, %97 : vector<16x256xf32>
    %c13 = arith.constant 13 : index
    %99 = memref.load %arg1[%c13] : memref<32xf32, #tpu.memory_space<smem>>
    %100 = vector.broadcast %99 : f32 to vector<16x256xf32>
    %101 = arith.mulf %100, %94 : vector<16x256xf32>
    %102 = arith.addf %85, %101 : vector<16x256xf32>
    %c21 = arith.constant 21 : index
    %103 = memref.load %arg1[%c21] : memref<32xf32, #tpu.memory_space<smem>>
    %104 = vector.broadcast %103 : f32 to vector<16x256xf32>
    %105 = arith.mulf %104, %94 : vector<16x256xf32>
    %106 = arith.addf %89, %105 : vector<16x256xf32>
    %c29 = arith.constant 29 : index
    %107 = memref.load %arg1[%c29] : memref<32xf32, #tpu.memory_space<smem>>
    %108 = vector.broadcast %107 : f32 to vector<16x256xf32>
    %109 = arith.mulf %108, %94 : vector<16x256xf32>
    %110 = arith.addf %93, %109 : vector<16x256xf32>
    %c240_i32_8 = arith.constant 240 : i32
    %111 = tpu.dynamic_rotate %77 by %c240_i32_8 dim 1 : vector<16x256xf32>, i32 -> vector<16x256xf32>
    %c6 = arith.constant 6 : index
    %112 = memref.load %arg1[%c6] : memref<32xf32, #tpu.memory_space<smem>>
    %113 = vector.broadcast %112 : f32 to vector<16x256xf32>
    %114 = arith.mulf %113, %111 : vector<16x256xf32>
    %115 = arith.addf %98, %114 : vector<16x256xf32>
    %c14 = arith.constant 14 : index
    %116 = memref.load %arg1[%c14] : memref<32xf32, #tpu.memory_space<smem>>
    %117 = vector.broadcast %116 : f32 to vector<16x256xf32>
    %118 = arith.mulf %117, %111 : vector<16x256xf32>
    %119 = arith.addf %102, %118 : vector<16x256xf32>
    %c22 = arith.constant 22 : index
    %120 = memref.load %arg1[%c22] : memref<32xf32, #tpu.memory_space<smem>>
    %121 = vector.broadcast %120 : f32 to vector<16x256xf32>
    %122 = arith.mulf %121, %111 : vector<16x256xf32>
    %123 = arith.addf %106, %122 : vector<16x256xf32>
    %c30 = arith.constant 30 : index
    %124 = memref.load %arg1[%c30] : memref<32xf32, #tpu.memory_space<smem>>
    %125 = vector.broadcast %124 : f32 to vector<16x256xf32>
    %126 = arith.mulf %125, %111 : vector<16x256xf32>
    %127 = arith.addf %110, %126 : vector<16x256xf32>
    %c239_i32_9 = arith.constant 239 : i32
    %128 = tpu.dynamic_rotate %77 by %c239_i32_9 dim 1 : vector<16x256xf32>, i32 -> vector<16x256xf32>
    %c7 = arith.constant 7 : index
    %129 = memref.load %arg1[%c7] : memref<32xf32, #tpu.memory_space<smem>>
    %130 = vector.broadcast %129 : f32 to vector<16x256xf32>
    %131 = arith.mulf %130, %128 : vector<16x256xf32>
    %132 = arith.addf %115, %131 : vector<16x256xf32>
    %c15 = arith.constant 15 : index
    %133 = memref.load %arg1[%c15] : memref<32xf32, #tpu.memory_space<smem>>
    %134 = vector.broadcast %133 : f32 to vector<16x256xf32>
    %135 = arith.mulf %134, %128 : vector<16x256xf32>
    %136 = arith.addf %119, %135 : vector<16x256xf32>
    %c23 = arith.constant 23 : index
    %137 = memref.load %arg1[%c23] : memref<32xf32, #tpu.memory_space<smem>>
    %138 = vector.broadcast %137 : f32 to vector<16x256xf32>
    %139 = arith.mulf %138, %128 : vector<16x256xf32>
    %140 = arith.addf %123, %139 : vector<16x256xf32>
    %c31 = arith.constant 31 : index
    %141 = memref.load %arg1[%c31] : memref<32xf32, #tpu.memory_space<smem>>
    %142 = vector.broadcast %141 : f32 to vector<16x256xf32>
    %143 = arith.mulf %142, %128 : vector<16x256xf32>
    %144 = arith.addf %127, %143 : vector<16x256xf32>
    %cst = arith.constant 0.000000e+00 : f32
    %145 = vector.broadcast %cst : f32 to vector<16x256xf32>
    %146 = arith.maximumf %132, %145 : vector<16x256xf32>
    %c0_10 = arith.constant 0 : index
    %c0_11 = arith.constant 0 : index
    %c0_12 = arith.constant 0 : index
    %147 = vector.load %arg9[%c0_10, %c0_11, %c0_12] : memref<4x16x256xf32, #tpu.memory_space<vmem>>, vector<1x16x256xf32>
    %148 = vector.shape_cast %147 : vector<1x16x256xf32> to vector<16x256xf32>
    %149 = vector.shape_cast %146 : vector<16x256xf32> to vector<1x16x256xf32>
    tpu.vector_store %arg9[%c0_10, %c0_11, %c0_12], %149 {strides = array<i32>} : memref<4x16x256xf32, #tpu.memory_space<vmem>>, vector<1x16x256xf32>,
    %cst_13 = arith.constant 0.000000e+00 : f32
    %150 = vector.broadcast %cst_13 : f32 to vector<16x256xf32>
    %151 = arith.maximumf %136, %150 : vector<16x256xf32>
    %c1_14 = arith.constant 1 : index
    %c0_15 = arith.constant 0 : index
    %c0_16 = arith.constant 0 : index
    %152 = vector.load %arg9[%c1_14, %c0_15, %c0_16] : memref<4x16x256xf32, #tpu.memory_space<vmem>>, vector<1x16x256xf32>
    %153 = vector.shape_cast %152 : vector<1x16x256xf32> to vector<16x256xf32>
    %154 = vector.shape_cast %151 : vector<16x256xf32> to vector<1x16x256xf32>
    tpu.vector_store %arg9[%c1_14, %c0_15, %c0_16], %154 {strides = array<i32>} : memref<4x16x256xf32, #tpu.memory_space<vmem>>, vector<1x16x256xf32>,
    %cst_17 = arith.constant 0.000000e+00 : f32
    %155 = vector.broadcast %cst_17 : f32 to vector<16x256xf32>
    %156 = arith.maximumf %140, %155 : vector<16x256xf32>
    %c2_18 = arith.constant 2 : index
    %c0_19 = arith.constant 0 : index
    %c0_20 = arith.constant 0 : index
    %157 = vector.load %arg9[%c2_18, %c0_19, %c0_20] : memref<4x16x256xf32, #tpu.memory_space<vmem>>, vector<1x16x256xf32>
    %158 = vector.shape_cast %157 : vector<1x16x256xf32> to vector<16x256xf32>
    %159 = vector.shape_cast %156 : vector<16x256xf32> to vector<1x16x256xf32>
    tpu.vector_store %arg9[%c2_18, %c0_19, %c0_20], %159 {strides = array<i32>} : memref<4x16x256xf32, #tpu.memory_space<vmem>>, vector<1x16x256xf32>,
    %cst_21 = arith.constant 0.000000e+00 : f32
    %160 = vector.broadcast %cst_21 : f32 to vector<16x256xf32>
    %161 = arith.maximumf %144, %160 : vector<16x256xf32>
    %c3_22 = arith.constant 3 : index
    %c0_23 = arith.constant 0 : index
    %c0_24 = arith.constant 0 : index
    %162 = vector.load %arg9[%c3_22, %c0_23, %c0_24] : memref<4x16x256xf32, #tpu.memory_space<vmem>>, vector<1x16x256xf32>
    %163 = vector.shape_cast %162 : vector<1x16x256xf32> to vector<16x256xf32>
    %164 = vector.shape_cast %161 : vector<16x256xf32> to vector<1x16x256xf32>
    tpu.vector_store %arg9[%c3_22, %c0_23, %c0_24], %164 {strides = array<i32>} : memref<4x16x256xf32, #tpu.memory_space<vmem>>, vector<1x16x256xf32>,
    %c0_25 = arith.constant 0 : index
    %165 = memref.load %arg4[%c0_25] : memref<5xf32, #tpu.memory_space<smem>>
    %166 = vector.broadcast %165 : f32 to vector<16x256xf32>
    %c1_26 = arith.constant 1 : index
    %167 = memref.load %arg4[%c1_26] : memref<5xf32, #tpu.memory_space<smem>>
    %168 = vector.broadcast %167 : f32 to vector<16x256xf32>
    %c2_27 = arith.constant 2 : index
    %169 = memref.load %arg4[%c2_27] : memref<5xf32, #tpu.memory_space<smem>>
    %170 = vector.broadcast %169 : f32 to vector<16x256xf32>
    %c3_28 = arith.constant 3 : index
    %171 = memref.load %arg4[%c3_28] : memref<5xf32, #tpu.memory_space<smem>>
    %172 = vector.broadcast %171 : f32 to vector<16x256xf32>
    %c4_29 = arith.constant 4 : index
    %173 = memref.load %arg4[%c4_29] : memref<5xf32, #tpu.memory_space<smem>>
    %174 = vector.broadcast %173 : f32 to vector<16x256xf32>
    %c0_30 = arith.constant 0 : index
    %c0_31 = arith.constant 0 : index
    %c0_32 = arith.constant 0 : index
    %175 = vector.load %arg9[%c0_30, %c0_31, %c0_32] : memref<4x16x256xf32, #tpu.memory_space<vmem>>, vector<1x16x256xf32>
    %176 = vector.shape_cast %175 : vector<1x16x256xf32> to vector<16x256xf32>
    %c0_33 = arith.constant 0 : index
    %177 = memref.load %arg3[%c0_33] : memref<160xf32, #tpu.memory_space<smem>>
    %178 = vector.broadcast %177 : f32 to vector<16x256xf32>
    %179 = arith.mulf %178, %176 : vector<16x256xf32>
    %180 = arith.addf %166, %179 : vector<16x256xf32>
    %c32 = arith.constant 32 : index
    %181 = memref.load %arg3[%c32] : memref<160xf32, #tpu.memory_space<smem>>
    %182 = vector.broadcast %181 : f32 to vector<16x256xf32>
    %183 = arith.mulf %182, %176 : vector<16x256xf32>
    %184 = arith.addf %168, %183 : vector<16x256xf32>
    %c64 = arith.constant 64 : index
    %185 = memref.load %arg3[%c64] : memref<160xf32, #tpu.memory_space<smem>>
    %186 = vector.broadcast %185 : f32 to vector<16x256xf32>
    %187 = arith.mulf %186, %176 : vector<16x256xf32>
    %188 = arith.addf %170, %187 : vector<16x256xf32>
    %c96 = arith.constant 96 : index
    %189 = memref.load %arg3[%c96] : memref<160xf32, #tpu.memory_space<smem>>
    %190 = vector.broadcast %189 : f32 to vector<16x256xf32>
    %191 = arith.mulf %190, %176 : vector<16x256xf32>
    %192 = arith.addf %172, %191 : vector<16x256xf32>
    %c128 = arith.constant 128 : index
    %193 = memref.load %arg3[%c128] : memref<160xf32, #tpu.memory_space<smem>>
    %194 = vector.broadcast %193 : f32 to vector<16x256xf32>
    %195 = arith.mulf %194, %176 : vector<16x256xf32>
    %196 = arith.addf %174, %195 : vector<16x256xf32>
    %c255_i32_34 = arith.constant 255 : i32
    %197 = tpu.dynamic_rotate %176 by %c255_i32_34 dim 1 : vector<16x256xf32>, i32 -> vector<16x256xf32>
    %c1_35 = arith.constant 1 : index
    %198 = memref.load %arg3[%c1_35] : memref<160xf32, #tpu.memory_space<smem>>
    %199 = vector.broadcast %198 : f32 to vector<16x256xf32>
    %200 = arith.mulf %199, %197 : vector<16x256xf32>
    %201 = arith.addf %180, %200 : vector<16x256xf32>
    %c33 = arith.constant 33 : index
    %202 = memref.load %arg3[%c33] : memref<160xf32, #tpu.memory_space<smem>>
    %203 = vector.broadcast %202 : f32 to vector<16x256xf32>
    %204 = arith.mulf %203, %197 : vector<16x256xf32>
    %205 = arith.addf %184, %204 : vector<16x256xf32>
    %c65 = arith.constant 65 : index
    %206 = memref.load %arg3[%c65] : memref<160xf32, #tpu.memory_space<smem>>
    %207 = vector.broadcast %206 : f32 to vector<16x256xf32>
    %208 = arith.mulf %207, %197 : vector<16x256xf32>
    %209 = arith.addf %188, %208 : vector<16x256xf32>
    %c97 = arith.constant 97 : index
    %210 = memref.load %arg3[%c97] : memref<160xf32, #tpu.memory_space<smem>>
    %211 = vector.broadcast %210 : f32 to vector<16x256xf32>
    %212 = arith.mulf %211, %197 : vector<16x256xf32>
    %213 = arith.addf %192, %212 : vector<16x256xf32>
    %c129 = arith.constant 129 : index
    %214 = memref.load %arg3[%c129] : memref<160xf32, #tpu.memory_space<smem>>
    %215 = vector.broadcast %214 : f32 to vector<16x256xf32>
    %216 = arith.mulf %215, %197 : vector<16x256xf32>
    %217 = arith.addf %196, %216 : vector<16x256xf32>
    %c240_i32_36 = arith.constant 240 : i32
    %218 = tpu.dynamic_rotate %176 by %c240_i32_36 dim 1 : vector<16x256xf32>, i32 -> vector<16x256xf32>
    %c2_37 = arith.constant 2 : index
    %219 = memref.load %arg3[%c2_37] : memref<160xf32, #tpu.memory_space<smem>>
    %220 = vector.broadcast %219 : f32 to vector<16x256xf32>
    %221 = arith.mulf %220, %218 : vector<16x256xf32>
    %222 = arith.addf %201, %221 : vector<16x256xf32>
    %c34 = arith.constant 34 : index
    %223 = memref.load %arg3[%c34] : memref<160xf32, #tpu.memory_space<smem>>
    %224 = vector.broadcast %223 : f32 to vector<16x256xf32>
    %225 = arith.mulf %224, %218 : vector<16x256xf32>
    %226 = arith.addf %205, %225 : vector<16x256xf32>
    %c66 = arith.constant 66 : index
    %227 = memref.load %arg3[%c66] : memref<160xf32, #tpu.memory_space<smem>>
    %228 = vector.broadcast %227 : f32 to vector<16x256xf32>
    %229 = arith.mulf %228, %218 : vector<16x256xf32>
    %230 = arith.addf %209, %229 : vector<16x256xf32>
    %c98 = arith.constant 98 : index
    %231 = memref.load %arg3[%c98] : memref<160xf32, #tpu.memory_space<smem>>
    %232 = vector.broadcast %231 : f32 to vector<16x256xf32>
    %233 = arith.mulf %232, %218 : vector<16x256xf32>
    %234 = arith.addf %213, %233 : vector<16x256xf32>
    %c130 = arith.constant 130 : index
    %235 = memref.load %arg3[%c130] : memref<160xf32, #tpu.memory_space<smem>>
    %236 = vector.broadcast %235 : f32 to vector<16x256xf32>
    %237 = arith.mulf %236, %218 : vector<16x256xf32>
    %238 = arith.addf %217, %237 : vector<16x256xf32>
    %c239_i32_38 = arith.constant 239 : i32
    %239 = tpu.dynamic_rotate %176 by %c239_i32_38 dim 1 : vector<16x256xf32>, i32 -> vector<16x256xf32>
    %c3_39 = arith.constant 3 : index
    %240 = memref.load %arg3[%c3_39] : memref<160xf32, #tpu.memory_space<smem>>
    %241 = vector.broadcast %240 : f32 to vector<16x256xf32>
    %242 = arith.mulf %241, %239 : vector<16x256xf32>
    %243 = arith.addf %222, %242 : vector<16x256xf32>
    %c35 = arith.constant 35 : index
    %244 = memref.load %arg3[%c35] : memref<160xf32, #tpu.memory_space<smem>>
    %245 = vector.broadcast %244 : f32 to vector<16x256xf32>
    %246 = arith.mulf %245, %239 : vector<16x256xf32>
    %247 = arith.addf %226, %246 : vector<16x256xf32>
    %c67 = arith.constant 67 : index
    %248 = memref.load %arg3[%c67] : memref<160xf32, #tpu.memory_space<smem>>
    %249 = vector.broadcast %248 : f32 to vector<16x256xf32>
    %250 = arith.mulf %249, %239 : vector<16x256xf32>
    %251 = arith.addf %230, %250 : vector<16x256xf32>
    %c99 = arith.constant 99 : index
    %252 = memref.load %arg3[%c99] : memref<160xf32, #tpu.memory_space<smem>>
    %253 = vector.broadcast %252 : f32 to vector<16x256xf32>
    %254 = arith.mulf %253, %239 : vector<16x256xf32>
    %255 = arith.addf %234, %254 : vector<16x256xf32>
    %c131 = arith.constant 131 : index
    %256 = memref.load %arg3[%c131] : memref<160xf32, #tpu.memory_space<smem>>
    %257 = vector.broadcast %256 : f32 to vector<16x256xf32>
    %258 = arith.mulf %257, %239 : vector<16x256xf32>
    %259 = arith.addf %238, %258 : vector<16x256xf32>
    %c15_i32_40 = arith.constant 15 : i32
    %260 = tpu.dynamic_rotate %176 by %c15_i32_40 dim 0 : vector<16x256xf32>, i32 -> vector<16x256xf32>
    %c4_41 = arith.constant 4 : index
    %261 = memref.load %arg3[%c4_41] : memref<160xf32, #tpu.memory_space<smem>>
    %262 = vector.broadcast %261 : f32 to vector<16x256xf32>
    %263 = arith.mulf %262, %260 : vector<16x256xf32>
    %264 = arith.addf %243, %263 : vector<16x256xf32>
    %c36 = arith.constant 36 : index
    %265 = memref.load %arg3[%c36] : memref<160xf32, #tpu.memory_space<smem>>
    %266 = vector.broadcast %265 : f32 to vector<16x256xf32>
    %267 = arith.mulf %266, %260 : vector<16x256xf32>
    %268 = arith.addf %247, %267 : vector<16x256xf32>
    %c68 = arith.constant 68 : index
    %269 = memref.load %arg3[%c68] : memref<160xf32, #tpu.memory_space<smem>>
    %270 = vector.broadcast %269 : f32 to vector<16x256xf32>
    %271 = arith.mulf %270, %260 : vector<16x256xf32>
    %272 = arith.addf %251, %271 : vector<16x256xf32>
    %c100 = arith.constant 100 : index
    %273 = memref.load %arg3[%c100] : memref<160xf32, #tpu.memory_space<smem>>
    %274 = vector.broadcast %273 : f32 to vector<16x256xf32>
    %275 = arith.mulf %274, %260 : vector<16x256xf32>
    %276 = arith.addf %255, %275 : vector<16x256xf32>
    %c132 = arith.constant 132 : index
    %277 = memref.load %arg3[%c132] : memref<160xf32, #tpu.memory_space<smem>>
    %278 = vector.broadcast %277 : f32 to vector<16x256xf32>
    %279 = arith.mulf %278, %260 : vector<16x256xf32>
    %280 = arith.addf %259, %279 : vector<16x256xf32>
    %c255_i32_42 = arith.constant 255 : i32
    %281 = tpu.dynamic_rotate %260 by %c255_i32_42 dim 1 : vector<16x256xf32>, i32 -> vector<16x256xf32>
    %c5_43 = arith.constant 5 : index
    %282 = memref.load %arg3[%c5_43] : memref<160xf32, #tpu.memory_space<smem>>
    %283 = vector.broadcast %282 : f32 to vector<16x256xf32>
    %284 = arith.mulf %283, %281 : vector<16x256xf32>
    %285 = arith.addf %264, %284 : vector<16x256xf32>
    %c37 = arith.constant 37 : index
    %286 = memref.load %arg3[%c37] : memref<160xf32, #tpu.memory_space<smem>>
    %287 = vector.broadcast %286 : f32 to vector<16x256xf32>
    %288 = arith.mulf %287, %281 : vector<16x256xf32>
    %289 = arith.addf %268, %288 : vector<16x256xf32>
    %c69 = arith.constant 69 : index
    %290 = memref.load %arg3[%c69] : memref<160xf32, #tpu.memory_space<smem>>
    %291 = vector.broadcast %290 : f32 to vector<16x256xf32>
    %292 = arith.mulf %291, %281 : vector<16x256xf32>
    %293 = arith.addf %272, %292 : vector<16x256xf32>
    %c101 = arith.constant 101 : index
    %294 = memref.load %arg3[%c101] : memref<160xf32, #tpu.memory_space<smem>>
    %295 = vector.broadcast %294 : f32 to vector<16x256xf32>
    %296 = arith.mulf %295, %281 : vector<16x256xf32>
    %297 = arith.addf %276, %296 : vector<16x256xf32>
    %c133 = arith.constant 133 : index
    %298 = memref.load %arg3[%c133] : memref<160xf32, #tpu.memory_space<smem>>
    %299 = vector.broadcast %298 : f32 to vector<16x256xf32>
    %300 = arith.mulf %299, %281 : vector<16x256xf32>
    %301 = arith.addf %280, %300 : vector<16x256xf32>
    %c240_i32_44 = arith.constant 240 : i32
    %302 = tpu.dynamic_rotate %260 by %c240_i32_44 dim 1 : vector<16x256xf32>, i32 -> vector<16x256xf32>
    %c6_45 = arith.constant 6 : index
    %303 = memref.load %arg3[%c6_45] : memref<160xf32, #tpu.memory_space<smem>>
    %304 = vector.broadcast %303 : f32 to vector<16x256xf32>
    %305 = arith.mulf %304, %302 : vector<16x256xf32>
    %306 = arith.addf %285, %305 : vector<16x256xf32>
    %c38 = arith.constant 38 : index
    %307 = memref.load %arg3[%c38] : memref<160xf32, #tpu.memory_space<smem>>
    %308 = vector.broadcast %307 : f32 to vector<16x256xf32>
    %309 = arith.mulf %308, %302 : vector<16x256xf32>
    %310 = arith.addf %289, %309 : vector<16x256xf32>
    %c70 = arith.constant 70 : index
    %311 = memref.load %arg3[%c70] : memref<160xf32, #tpu.memory_space<smem>>
    %312 = vector.broadcast %311 : f32 to vector<16x256xf32>
    %313 = arith.mulf %312, %302 : vector<16x256xf32>
    %314 = arith.addf %293, %313 : vector<16x256xf32>
    %c102 = arith.constant 102 : index
    %315 = memref.load %arg3[%c102] : memref<160xf32, #tpu.memory_space<smem>>
    %316 = vector.broadcast %315 : f32 to vector<16x256xf32>
    %317 = arith.mulf %316, %302 : vector<16x256xf32>
    %318 = arith.addf %297, %317 : vector<16x256xf32>
    %c134 = arith.constant 134 : index
    %319 = memref.load %arg3[%c134] : memref<160xf32, #tpu.memory_space<smem>>
    %320 = vector.broadcast %319 : f32 to vector<16x256xf32>
    %321 = arith.mulf %320, %302 : vector<16x256xf32>
    %322 = arith.addf %301, %321 : vector<16x256xf32>
    %c239_i32_46 = arith.constant 239 : i32
    %323 = tpu.dynamic_rotate %260 by %c239_i32_46 dim 1 : vector<16x256xf32>, i32 -> vector<16x256xf32>
    %c7_47 = arith.constant 7 : index
    %324 = memref.load %arg3[%c7_47] : memref<160xf32, #tpu.memory_space<smem>>
    %325 = vector.broadcast %324 : f32 to vector<16x256xf32>
    %326 = arith.mulf %325, %323 : vector<16x256xf32>
    %327 = arith.addf %306, %326 : vector<16x256xf32>
    %c39 = arith.constant 39 : index
    %328 = memref.load %arg3[%c39] : memref<160xf32, #tpu.memory_space<smem>>
    %329 = vector.broadcast %328 : f32 to vector<16x256xf32>
    %330 = arith.mulf %329, %323 : vector<16x256xf32>
    %331 = arith.addf %310, %330 : vector<16x256xf32>
    %c71 = arith.constant 71 : index
    %332 = memref.load %arg3[%c71] : memref<160xf32, #tpu.memory_space<smem>>
    %333 = vector.broadcast %332 : f32 to vector<16x256xf32>
    %334 = arith.mulf %333, %323 : vector<16x256xf32>
    %335 = arith.addf %314, %334 : vector<16x256xf32>
    %c103 = arith.constant 103 : index
    %336 = memref.load %arg3[%c103] : memref<160xf32, #tpu.memory_space<smem>>
    %337 = vector.broadcast %336 : f32 to vector<16x256xf32>
    %338 = arith.mulf %337, %323 : vector<16x256xf32>
    %339 = arith.addf %318, %338 : vector<16x256xf32>
    %c135 = arith.constant 135 : index
    %340 = memref.load %arg3[%c135] : memref<160xf32, #tpu.memory_space<smem>>
    %341 = vector.broadcast %340 : f32 to vector<16x256xf32>
    %342 = arith.mulf %341, %323 : vector<16x256xf32>
    %343 = arith.addf %322, %342 : vector<16x256xf32>
    %c1_48 = arith.constant 1 : index
    %c0_49 = arith.constant 0 : index
    %c0_50 = arith.constant 0 : index
    %344 = vector.load %arg9[%c1_48, %c0_49, %c0_50] : memref<4x16x256xf32, #tpu.memory_space<vmem>>, vector<1x16x256xf32>
    %345 = vector.shape_cast %344 : vector<1x16x256xf32> to vector<16x256xf32>
    %c8_51 = arith.constant 8 : index
    %346 = memref.load %arg3[%c8_51] : memref<160xf32, #tpu.memory_space<smem>>
    %347 = vector.broadcast %346 : f32 to vector<16x256xf32>
    %348 = arith.mulf %347, %345 : vector<16x256xf32>
    %349 = arith.addf %327, %348 : vector<16x256xf32>
    %c40 = arith.constant 40 : index
    %350 = memref.load %arg3[%c40] : memref<160xf32, #tpu.memory_space<smem>>
    %351 = vector.broadcast %350 : f32 to vector<16x256xf32>
    %352 = arith.mulf %351, %345 : vector<16x256xf32>
    %353 = arith.addf %331, %352 : vector<16x256xf32>
    %c72 = arith.constant 72 : index
    %354 = memref.load %arg3[%c72] : memref<160xf32, #tpu.memory_space<smem>>
    %355 = vector.broadcast %354 : f32 to vector<16x256xf32>
    %356 = arith.mulf %355, %345 : vector<16x256xf32>
    %357 = arith.addf %335, %356 : vector<16x256xf32>
    %c104 = arith.constant 104 : index
    %358 = memref.load %arg3[%c104] : memref<160xf32, #tpu.memory_space<smem>>
    %359 = vector.broadcast %358 : f32 to vector<16x256xf32>
    %360 = arith.mulf %359, %345 : vector<16x256xf32>
    %361 = arith.addf %339, %360 : vector<16x256xf32>
    %c136 = arith.constant 136 : index
    %362 = memref.load %arg3[%c136] : memref<160xf32, #tpu.memory_space<smem>>
    %363 = vector.broadcast %362 : f32 to vector<16x256xf32>
    %364 = arith.mulf %363, %345 : vector<16x256xf32>
    %365 = arith.addf %343, %364 : vector<16x256xf32>
    %c255_i32_52 = arith.constant 255 : i32
    %366 = tpu.dynamic_rotate %345 by %c255_i32_52 dim 1 : vector<16x256xf32>, i32 -> vector<16x256xf32>
    %c9_53 = arith.constant 9 : index
    %367 = memref.load %arg3[%c9_53] : memref<160xf32, #tpu.memory_space<smem>>
    %368 = vector.broadcast %367 : f32 to vector<16x256xf32>
    %369 = arith.mulf %368, %366 : vector<16x256xf32>
    %370 = arith.addf %349, %369 : vector<16x256xf32>
    %c41 = arith.constant 41 : index
    %371 = memref.load %arg3[%c41] : memref<160xf32, #tpu.memory_space<smem>>
    %372 = vector.broadcast %371 : f32 to vector<16x256xf32>
    %373 = arith.mulf %372, %366 : vector<16x256xf32>
    %374 = arith.addf %353, %373 : vector<16x256xf32>
    %c73 = arith.constant 73 : index
    %375 = memref.load %arg3[%c73] : memref<160xf32, #tpu.memory_space<smem>>
    %376 = vector.broadcast %375 : f32 to vector<16x256xf32>
    %377 = arith.mulf %376, %366 : vector<16x256xf32>
    %378 = arith.addf %357, %377 : vector<16x256xf32>
    %c105 = arith.constant 105 : index
    %379 = memref.load %arg3[%c105] : memref<160xf32, #tpu.memory_space<smem>>
    %380 = vector.broadcast %379 : f32 to vector<16x256xf32>
    %381 = arith.mulf %380, %366 : vector<16x256xf32>
    %382 = arith.addf %361, %381 : vector<16x256xf32>
    %c137 = arith.constant 137 : index
    %383 = memref.load %arg3[%c137] : memref<160xf32, #tpu.memory_space<smem>>
    %384 = vector.broadcast %383 : f32 to vector<16x256xf32>
    %385 = arith.mulf %384, %366 : vector<16x256xf32>
    %386 = arith.addf %365, %385 : vector<16x256xf32>
    %c240_i32_54 = arith.constant 240 : i32
    %387 = tpu.dynamic_rotate %345 by %c240_i32_54 dim 1 : vector<16x256xf32>, i32 -> vector<16x256xf32>
    %c10_55 = arith.constant 10 : index
    %388 = memref.load %arg3[%c10_55] : memref<160xf32, #tpu.memory_space<smem>>
    %389 = vector.broadcast %388 : f32 to vector<16x256xf32>
    %390 = arith.mulf %389, %387 : vector<16x256xf32>
    %391 = arith.addf %370, %390 : vector<16x256xf32>
    %c42 = arith.constant 42 : index
    %392 = memref.load %arg3[%c42] : memref<160xf32, #tpu.memory_space<smem>>
    %393 = vector.broadcast %392 : f32 to vector<16x256xf32>
    %394 = arith.mulf %393, %387 : vector<16x256xf32>
    %395 = arith.addf %374, %394 : vector<16x256xf32>
    %c74 = arith.constant 74 : index
    %396 = memref.load %arg3[%c74] : memref<160xf32, #tpu.memory_space<smem>>
    %397 = vector.broadcast %396 : f32 to vector<16x256xf32>
    %398 = arith.mulf %397, %387 : vector<16x256xf32>
    %399 = arith.addf %378, %398 : vector<16x256xf32>
    %c106 = arith.constant 106 : index
    %400 = memref.load %arg3[%c106] : memref<160xf32, #tpu.memory_space<smem>>
    %401 = vector.broadcast %400 : f32 to vector<16x256xf32>
    %402 = arith.mulf %401, %387 : vector<16x256xf32>
    %403 = arith.addf %382, %402 : vector<16x256xf32>
    %c138 = arith.constant 138 : index
    %404 = memref.load %arg3[%c138] : memref<160xf32, #tpu.memory_space<smem>>
    %405 = vector.broadcast %404 : f32 to vector<16x256xf32>
    %406 = arith.mulf %405, %387 : vector<16x256xf32>
    %407 = arith.addf %386, %406 : vector<16x256xf32>
    %c239_i32_56 = arith.constant 239 : i32
    %408 = tpu.dynamic_rotate %345 by %c239_i32_56 dim 1 : vector<16x256xf32>, i32 -> vector<16x256xf32>
    %c11_57 = arith.constant 11 : index
    %409 = memref.load %arg3[%c11_57] : memref<160xf32, #tpu.memory_space<smem>>
    %410 = vector.broadcast %409 : f32 to vector<16x256xf32>
    %411 = arith.mulf %410, %408 : vector<16x256xf32>
    %412 = arith.addf %391, %411 : vector<16x256xf32>
    %c43 = arith.constant 43 : index
    %413 = memref.load %arg3[%c43] : memref<160xf32, #tpu.memory_space<smem>>
    %414 = vector.broadcast %413 : f32 to vector<16x256xf32>
    %415 = arith.mulf %414, %408 : vector<16x256xf32>
    %416 = arith.addf %395, %415 : vector<16x256xf32>
    %c75 = arith.constant 75 : index
    %417 = memref.load %arg3[%c75] : memref<160xf32, #tpu.memory_space<smem>>
    %418 = vector.broadcast %417 : f32 to vector<16x256xf32>
    %419 = arith.mulf %418, %408 : vector<16x256xf32>
    %420 = arith.addf %399, %419 : vector<16x256xf32>
    %c107 = arith.constant 107 : index
    %421 = memref.load %arg3[%c107] : memref<160xf32, #tpu.memory_space<smem>>
    %422 = vector.broadcast %421 : f32 to vector<16x256xf32>
    %423 = arith.mulf %422, %408 : vector<16x256xf32>
    %424 = arith.addf %403, %423 : vector<16x256xf32>
    %c139 = arith.constant 139 : index
    %425 = memref.load %arg3[%c139] : memref<160xf32, #tpu.memory_space<smem>>
    %426 = vector.broadcast %425 : f32 to vector<16x256xf32>
    %427 = arith.mulf %426, %408 : vector<16x256xf32>
    %428 = arith.addf %407, %427 : vector<16x256xf32>
    %c15_i32_58 = arith.constant 15 : i32
    %429 = tpu.dynamic_rotate %345 by %c15_i32_58 dim 0 : vector<16x256xf32>, i32 -> vector<16x256xf32>
    %c12_59 = arith.constant 12 : index
    %430 = memref.load %arg3[%c12_59] : memref<160xf32, #tpu.memory_space<smem>>
    %431 = vector.broadcast %430 : f32 to vector<16x256xf32>
    %432 = arith.mulf %431, %429 : vector<16x256xf32>
    %433 = arith.addf %412, %432 : vector<16x256xf32>
    %c44 = arith.constant 44 : index
    %434 = memref.load %arg3[%c44] : memref<160xf32, #tpu.memory_space<smem>>
    %435 = vector.broadcast %434 : f32 to vector<16x256xf32>
    %436 = arith.mulf %435, %429 : vector<16x256xf32>
    %437 = arith.addf %416, %436 : vector<16x256xf32>
    %c76 = arith.constant 76 : index
    %438 = memref.load %arg3[%c76] : memref<160xf32, #tpu.memory_space<smem>>
    %439 = vector.broadcast %438 : f32 to vector<16x256xf32>
    %440 = arith.mulf %439, %429 : vector<16x256xf32>
    %441 = arith.addf %420, %440 : vector<16x256xf32>
    %c108 = arith.constant 108 : index
    %442 = memref.load %arg3[%c108] : memref<160xf32, #tpu.memory_space<smem>>
    %443 = vector.broadcast %442 : f32 to vector<16x256xf32>
    %444 = arith.mulf %443, %429 : vector<16x256xf32>
    %445 = arith.addf %424, %444 : vector<16x256xf32>
    %c140 = arith.constant 140 : index
    %446 = memref.load %arg3[%c140] : memref<160xf32, #tpu.memory_space<smem>>
    %447 = vector.broadcast %446 : f32 to vector<16x256xf32>
    %448 = arith.mulf %447, %429 : vector<16x256xf32>
    %449 = arith.addf %428, %448 : vector<16x256xf32>
    %c255_i32_60 = arith.constant 255 : i32
    %450 = tpu.dynamic_rotate %429 by %c255_i32_60 dim 1 : vector<16x256xf32>, i32 -> vector<16x256xf32>
    %c13_61 = arith.constant 13 : index
    %451 = memref.load %arg3[%c13_61] : memref<160xf32, #tpu.memory_space<smem>>
    %452 = vector.broadcast %451 : f32 to vector<16x256xf32>
    %453 = arith.mulf %452, %450 : vector<16x256xf32>
    %454 = arith.addf %433, %453 : vector<16x256xf32>
    %c45 = arith.constant 45 : index
    %455 = memref.load %arg3[%c45] : memref<160xf32, #tpu.memory_space<smem>>
    %456 = vector.broadcast %455 : f32 to vector<16x256xf32>
    %457 = arith.mulf %456, %450 : vector<16x256xf32>
    %458 = arith.addf %437, %457 : vector<16x256xf32>
    %c77 = arith.constant 77 : index
    %459 = memref.load %arg3[%c77] : memref<160xf32, #tpu.memory_space<smem>>
    %460 = vector.broadcast %459 : f32 to vector<16x256xf32>
    %461 = arith.mulf %460, %450 : vector<16x256xf32>
    %462 = arith.addf %441, %461 : vector<16x256xf32>
    %c109 = arith.constant 109 : index
    %463 = memref.load %arg3[%c109] : memref<160xf32, #tpu.memory_space<smem>>
    %464 = vector.broadcast %463 : f32 to vector<16x256xf32>
    %465 = arith.mulf %464, %450 : vector<16x256xf32>
    %466 = arith.addf %445, %465 : vector<16x256xf32>
    %c141 = arith.constant 141 : index
    %467 = memref.load %arg3[%c141] : memref<160xf32, #tpu.memory_space<smem>>
    %468 = vector.broadcast %467 : f32 to vector<16x256xf32>
    %469 = arith.mulf %468, %450 : vector<16x256xf32>
    %470 = arith.addf %449, %469 : vector<16x256xf32>
    %c240_i32_62 = arith.constant 240 : i32
    %471 = tpu.dynamic_rotate %429 by %c240_i32_62 dim 1 : vector<16x256xf32>, i32 -> vector<16x256xf32>
    %c14_63 = arith.constant 14 : index
    %472 = memref.load %arg3[%c14_63] : memref<160xf32, #tpu.memory_space<smem>>
    %473 = vector.broadcast %472 : f32 to vector<16x256xf32>
    %474 = arith.mulf %473, %471 : vector<16x256xf32>
    %475 = arith.addf %454, %474 : vector<16x256xf32>
    %c46 = arith.constant 46 : index
    %476 = memref.load %arg3[%c46] : memref<160xf32, #tpu.memory_space<smem>>
    %477 = vector.broadcast %476 : f32 to vector<16x256xf32>
    %478 = arith.mulf %477, %471 : vector<16x256xf32>
    %479 = arith.addf %458, %478 : vector<16x256xf32>
    %c78 = arith.constant 78 : index
    %480 = memref.load %arg3[%c78] : memref<160xf32, #tpu.memory_space<smem>>
    %481 = vector.broadcast %480 : f32 to vector<16x256xf32>
    %482 = arith.mulf %481, %471 : vector<16x256xf32>
    %483 = arith.addf %462, %482 : vector<16x256xf32>
    %c110 = arith.constant 110 : index
    %484 = memref.load %arg3[%c110] : memref<160xf32, #tpu.memory_space<smem>>
    %485 = vector.broadcast %484 : f32 to vector<16x256xf32>
    %486 = arith.mulf %485, %471 : vector<16x256xf32>
    %487 = arith.addf %466, %486 : vector<16x256xf32>
    %c142 = arith.constant 142 : index
    %488 = memref.load %arg3[%c142] : memref<160xf32, #tpu.memory_space<smem>>
    %489 = vector.broadcast %488 : f32 to vector<16x256xf32>
    %490 = arith.mulf %489, %471 : vector<16x256xf32>
    %491 = arith.addf %470, %490 : vector<16x256xf32>
    %c239_i32_64 = arith.constant 239 : i32
    %492 = tpu.dynamic_rotate %429 by %c239_i32_64 dim 1 : vector<16x256xf32>, i32 -> vector<16x256xf32>
    %c15_65 = arith.constant 15 : index
    %493 = memref.load %arg3[%c15_65] : memref<160xf32, #tpu.memory_space<smem>>
    %494 = vector.broadcast %493 : f32 to vector<16x256xf32>
    %495 = arith.mulf %494, %492 : vector<16x256xf32>
    %496 = arith.addf %475, %495 : vector<16x256xf32>
    %c47 = arith.constant 47 : index
    %497 = memref.load %arg3[%c47] : memref<160xf32, #tpu.memory_space<smem>>
    %498 = vector.broadcast %497 : f32 to vector<16x256xf32>
    %499 = arith.mulf %498, %492 : vector<16x256xf32>
    %500 = arith.addf %479, %499 : vector<16x256xf32>
    %c79 = arith.constant 79 : index
    %501 = memref.load %arg3[%c79] : memref<160xf32, #tpu.memory_space<smem>>
    %502 = vector.broadcast %501 : f32 to vector<16x256xf32>
    %503 = arith.mulf %502, %492 : vector<16x256xf32>
    %504 = arith.addf %483, %503 : vector<16x256xf32>
    %c111 = arith.constant 111 : index
    %505 = memref.load %arg3[%c111] : memref<160xf32, #tpu.memory_space<smem>>
    %506 = vector.broadcast %505 : f32 to vector<16x256xf32>
    %507 = arith.mulf %506, %492 : vector<16x256xf32>
    %508 = arith.addf %487, %507 : vector<16x256xf32>
    %c143 = arith.constant 143 : index
    %509 = memref.load %arg3[%c143] : memref<160xf32, #tpu.memory_space<smem>>
    %510 = vector.broadcast %509 : f32 to vector<16x256xf32>
    %511 = arith.mulf %510, %492 : vector<16x256xf32>
    %512 = arith.addf %491, %511 : vector<16x256xf32>
    %c2_66 = arith.constant 2 : index
    %c0_67 = arith.constant 0 : index
    %c0_68 = arith.constant 0 : index
    %513 = vector.load %arg9[%c2_66, %c0_67, %c0_68] : memref<4x16x256xf32, #tpu.memory_space<vmem>>, vector<1x16x256xf32>
    %514 = vector.shape_cast %513 : vector<1x16x256xf32> to vector<16x256xf32>
    %c16_69 = arith.constant 16 : index
    %515 = memref.load %arg3[%c16_69] : memref<160xf32, #tpu.memory_space<smem>>
    %516 = vector.broadcast %515 : f32 to vector<16x256xf32>
    %517 = arith.mulf %516, %514 : vector<16x256xf32>
    %518 = arith.addf %496, %517 : vector<16x256xf32>
    %c48 = arith.constant 48 : index
    %519 = memref.load %arg3[%c48] : memref<160xf32, #tpu.memory_space<smem>>
    %520 = vector.broadcast %519 : f32 to vector<16x256xf32>
    %521 = arith.mulf %520, %514 : vector<16x256xf32>
    %522 = arith.addf %500, %521 : vector<16x256xf32>
    %c80 = arith.constant 80 : index
    %523 = memref.load %arg3[%c80] : memref<160xf32, #tpu.memory_space<smem>>
    %524 = vector.broadcast %523 : f32 to vector<16x256xf32>
    %525 = arith.mulf %524, %514 : vector<16x256xf32>
    %526 = arith.addf %504, %525 : vector<16x256xf32>
    %c112 = arith.constant 112 : index
    %527 = memref.load %arg3[%c112] : memref<160xf32, #tpu.memory_space<smem>>
    %528 = vector.broadcast %527 : f32 to vector<16x256xf32>
    %529 = arith.mulf %528, %514 : vector<16x256xf32>
    %530 = arith.addf %508, %529 : vector<16x256xf32>
    %c144 = arith.constant 144 : index
    %531 = memref.load %arg3[%c144] : memref<160xf32, #tpu.memory_space<smem>>
    %532 = vector.broadcast %531 : f32 to vector<16x256xf32>
    %533 = arith.mulf %532, %514 : vector<16x256xf32>
    %534 = arith.addf %512, %533 : vector<16x256xf32>
    %c255_i32_70 = arith.constant 255 : i32
    %535 = tpu.dynamic_rotate %514 by %c255_i32_70 dim 1 : vector<16x256xf32>, i32 -> vector<16x256xf32>
    %c17_71 = arith.constant 17 : index
    %536 = memref.load %arg3[%c17_71] : memref<160xf32, #tpu.memory_space<smem>>
    %537 = vector.broadcast %536 : f32 to vector<16x256xf32>
    %538 = arith.mulf %537, %535 : vector<16x256xf32>
    %539 = arith.addf %518, %538 : vector<16x256xf32>
    %c49 = arith.constant 49 : index
    %540 = memref.load %arg3[%c49] : memref<160xf32, #tpu.memory_space<smem>>
    %541 = vector.broadcast %540 : f32 to vector<16x256xf32>
    %542 = arith.mulf %541, %535 : vector<16x256xf32>
    %543 = arith.addf %522, %542 : vector<16x256xf32>
    %c81 = arith.constant 81 : index
    %544 = memref.load %arg3[%c81] : memref<160xf32, #tpu.memory_space<smem>>
    %545 = vector.broadcast %544 : f32 to vector<16x256xf32>
    %546 = arith.mulf %545, %535 : vector<16x256xf32>
    %547 = arith.addf %526, %546 : vector<16x256xf32>
    %c113 = arith.constant 113 : index
    %548 = memref.load %arg3[%c113] : memref<160xf32, #tpu.memory_space<smem>>
    %549 = vector.broadcast %548 : f32 to vector<16x256xf32>
    %550 = arith.mulf %549, %535 : vector<16x256xf32>
    %551 = arith.addf %530, %550 : vector<16x256xf32>
    %c145 = arith.constant 145 : index
    %552 = memref.load %arg3[%c145] : memref<160xf32, #tpu.memory_space<smem>>
    %553 = vector.broadcast %552 : f32 to vector<16x256xf32>
    %554 = arith.mulf %553, %535 : vector<16x256xf32>
    %555 = arith.addf %534, %554 : vector<16x256xf32>
    %c240_i32_72 = arith.constant 240 : i32
    %556 = tpu.dynamic_rotate %514 by %c240_i32_72 dim 1 : vector<16x256xf32>, i32 -> vector<16x256xf32>
    %c18_73 = arith.constant 18 : index
    %557 = memref.load %arg3[%c18_73] : memref<160xf32, #tpu.memory_space<smem>>
    %558 = vector.broadcast %557 : f32 to vector<16x256xf32>
    %559 = arith.mulf %558, %556 : vector<16x256xf32>
    %560 = arith.addf %539, %559 : vector<16x256xf32>
    %c50 = arith.constant 50 : index
    %561 = memref.load %arg3[%c50] : memref<160xf32, #tpu.memory_space<smem>>
    %562 = vector.broadcast %561 : f32 to vector<16x256xf32>
    %563 = arith.mulf %562, %556 : vector<16x256xf32>
    %564 = arith.addf %543, %563 : vector<16x256xf32>
    %c82 = arith.constant 82 : index
    %565 = memref.load %arg3[%c82] : memref<160xf32, #tpu.memory_space<smem>>
    %566 = vector.broadcast %565 : f32 to vector<16x256xf32>
    %567 = arith.mulf %566, %556 : vector<16x256xf32>
    %568 = arith.addf %547, %567 : vector<16x256xf32>
    %c114 = arith.constant 114 : index
    %569 = memref.load %arg3[%c114] : memref<160xf32, #tpu.memory_space<smem>>
    %570 = vector.broadcast %569 : f32 to vector<16x256xf32>
    %571 = arith.mulf %570, %556 : vector<16x256xf32>
    %572 = arith.addf %551, %571 : vector<16x256xf32>
    %c146 = arith.constant 146 : index
    %573 = memref.load %arg3[%c146] : memref<160xf32, #tpu.memory_space<smem>>
    %574 = vector.broadcast %573 : f32 to vector<16x256xf32>
    %575 = arith.mulf %574, %556 : vector<16x256xf32>
    %576 = arith.addf %555, %575 : vector<16x256xf32>
    %c239_i32_74 = arith.constant 239 : i32
    %577 = tpu.dynamic_rotate %514 by %c239_i32_74 dim 1 : vector<16x256xf32>, i32 -> vector<16x256xf32>
    %c19_75 = arith.constant 19 : index
    %578 = memref.load %arg3[%c19_75] : memref<160xf32, #tpu.memory_space<smem>>
    %579 = vector.broadcast %578 : f32 to vector<16x256xf32>
    %580 = arith.mulf %579, %577 : vector<16x256xf32>
    %581 = arith.addf %560, %580 : vector<16x256xf32>
    %c51 = arith.constant 51 : index
    %582 = memref.load %arg3[%c51] : memref<160xf32, #tpu.memory_space<smem>>
    %583 = vector.broadcast %582 : f32 to vector<16x256xf32>
    %584 = arith.mulf %583, %577 : vector<16x256xf32>
    %585 = arith.addf %564, %584 : vector<16x256xf32>
    %c83 = arith.constant 83 : index
    %586 = memref.load %arg3[%c83] : memref<160xf32, #tpu.memory_space<smem>>
    %587 = vector.broadcast %586 : f32 to vector<16x256xf32>
    %588 = arith.mulf %587, %577 : vector<16x256xf32>
    %589 = arith.addf %568, %588 : vector<16x256xf32>
    %c115 = arith.constant 115 : index
    %590 = memref.load %arg3[%c115] : memref<160xf32, #tpu.memory_space<smem>>
    %591 = vector.broadcast %590 : f32 to vector<16x256xf32>
    %592 = arith.mulf %591, %577 : vector<16x256xf32>
    %593 = arith.addf %572, %592 : vector<16x256xf32>
    %c147 = arith.constant 147 : index
    %594 = memref.load %arg3[%c147] : memref<160xf32, #tpu.memory_space<smem>>
    %595 = vector.broadcast %594 : f32 to vector<16x256xf32>
    %596 = arith.mulf %595, %577 : vector<16x256xf32>
    %597 = arith.addf %576, %596 : vector<16x256xf32>
    %c15_i32_76 = arith.constant 15 : i32
    %598 = tpu.dynamic_rotate %514 by %c15_i32_76 dim 0 : vector<16x256xf32>, i32 -> vector<16x256xf32>
    %c20_77 = arith.constant 20 : index
    %599 = memref.load %arg3[%c20_77] : memref<160xf32, #tpu.memory_space<smem>>
    %600 = vector.broadcast %599 : f32 to vector<16x256xf32>
    %601 = arith.mulf %600, %598 : vector<16x256xf32>
    %602 = arith.addf %581, %601 : vector<16x256xf32>
    %c52 = arith.constant 52 : index
    %603 = memref.load %arg3[%c52] : memref<160xf32, #tpu.memory_space<smem>>
    %604 = vector.broadcast %603 : f32 to vector<16x256xf32>
    %605 = arith.mulf %604, %598 : vector<16x256xf32>
    %606 = arith.addf %585, %605 : vector<16x256xf32>
    %c84 = arith.constant 84 : index
    %607 = memref.load %arg3[%c84] : memref<160xf32, #tpu.memory_space<smem>>
    %608 = vector.broadcast %607 : f32 to vector<16x256xf32>
    %609 = arith.mulf %608, %598 : vector<16x256xf32>
    %610 = arith.addf %589, %609 : vector<16x256xf32>
    %c116 = arith.constant 116 : index
    %611 = memref.load %arg3[%c116] : memref<160xf32, #tpu.memory_space<smem>>
    %612 = vector.broadcast %611 : f32 to vector<16x256xf32>
    %613 = arith.mulf %612, %598 : vector<16x256xf32>
    %614 = arith.addf %593, %613 : vector<16x256xf32>
    %c148 = arith.constant 148 : index
    %615 = memref.load %arg3[%c148] : memref<160xf32, #tpu.memory_space<smem>>
    %616 = vector.broadcast %615 : f32 to vector<16x256xf32>
    %617 = arith.mulf %616, %598 : vector<16x256xf32>
    %618 = arith.addf %597, %617 : vector<16x256xf32>
    %c255_i32_78 = arith.constant 255 : i32
    %619 = tpu.dynamic_rotate %598 by %c255_i32_78 dim 1 : vector<16x256xf32>, i32 -> vector<16x256xf32>
    %c21_79 = arith.constant 21 : index
    %620 = memref.load %arg3[%c21_79] : memref<160xf32, #tpu.memory_space<smem>>
    %621 = vector.broadcast %620 : f32 to vector<16x256xf32>
    %622 = arith.mulf %621, %619 : vector<16x256xf32>
    %623 = arith.addf %602, %622 : vector<16x256xf32>
    %c53 = arith.constant 53 : index
    %624 = memref.load %arg3[%c53] : memref<160xf32, #tpu.memory_space<smem>>
    %625 = vector.broadcast %624 : f32 to vector<16x256xf32>
    %626 = arith.mulf %625, %619 : vector<16x256xf32>
    %627 = arith.addf %606, %626 : vector<16x256xf32>
    %c85 = arith.constant 85 : index
    %628 = memref.load %arg3[%c85] : memref<160xf32, #tpu.memory_space<smem>>
    %629 = vector.broadcast %628 : f32 to vector<16x256xf32>
    %630 = arith.mulf %629, %619 : vector<16x256xf32>
    %631 = arith.addf %610, %630 : vector<16x256xf32>
    %c117 = arith.constant 117 : index
    %632 = memref.load %arg3[%c117] : memref<160xf32, #tpu.memory_space<smem>>
    %633 = vector.broadcast %632 : f32 to vector<16x256xf32>
    %634 = arith.mulf %633, %619 : vector<16x256xf32>
    %635 = arith.addf %614, %634 : vector<16x256xf32>
    %c149 = arith.constant 149 : index
    %636 = memref.load %arg3[%c149] : memref<160xf32, #tpu.memory_space<smem>>
    %637 = vector.broadcast %636 : f32 to vector<16x256xf32>
    %638 = arith.mulf %637, %619 : vector<16x256xf32>
    %639 = arith.addf %618, %638 : vector<16x256xf32>
    %c240_i32_80 = arith.constant 240 : i32
    %640 = tpu.dynamic_rotate %598 by %c240_i32_80 dim 1 : vector<16x256xf32>, i32 -> vector<16x256xf32>
    %c22_81 = arith.constant 22 : index
    %641 = memref.load %arg3[%c22_81] : memref<160xf32, #tpu.memory_space<smem>>
    %642 = vector.broadcast %641 : f32 to vector<16x256xf32>
    %643 = arith.mulf %642, %640 : vector<16x256xf32>
    %644 = arith.addf %623, %643 : vector<16x256xf32>
    %c54 = arith.constant 54 : index
    %645 = memref.load %arg3[%c54] : memref<160xf32, #tpu.memory_space<smem>>
    %646 = vector.broadcast %645 : f32 to vector<16x256xf32>
    %647 = arith.mulf %646, %640 : vector<16x256xf32>
    %648 = arith.addf %627, %647 : vector<16x256xf32>
    %c86 = arith.constant 86 : index
    %649 = memref.load %arg3[%c86] : memref<160xf32, #tpu.memory_space<smem>>
    %650 = vector.broadcast %649 : f32 to vector<16x256xf32>
    %651 = arith.mulf %650, %640 : vector<16x256xf32>
    %652 = arith.addf %631, %651 : vector<16x256xf32>
    %c118 = arith.constant 118 : index
    %653 = memref.load %arg3[%c118] : memref<160xf32, #tpu.memory_space<smem>>
    %654 = vector.broadcast %653 : f32 to vector<16x256xf32>
    %655 = arith.mulf %654, %640 : vector<16x256xf32>
    %656 = arith.addf %635, %655 : vector<16x256xf32>
    %c150 = arith.constant 150 : index
    %657 = memref.load %arg3[%c150] : memref<160xf32, #tpu.memory_space<smem>>
    %658 = vector.broadcast %657 : f32 to vector<16x256xf32>
    %659 = arith.mulf %658, %640 : vector<16x256xf32>
    %660 = arith.addf %639, %659 : vector<16x256xf32>
    %c239_i32_82 = arith.constant 239 : i32
    %661 = tpu.dynamic_rotate %598 by %c239_i32_82 dim 1 : vector<16x256xf32>, i32 -> vector<16x256xf32>
    %c23_83 = arith.constant 23 : index
    %662 = memref.load %arg3[%c23_83] : memref<160xf32, #tpu.memory_space<smem>>
    %663 = vector.broadcast %662 : f32 to vector<16x256xf32>
    %664 = arith.mulf %663, %661 : vector<16x256xf32>
    %665 = arith.addf %644, %664 : vector<16x256xf32>
    %c55 = arith.constant 55 : index
    %666 = memref.load %arg3[%c55] : memref<160xf32, #tpu.memory_space<smem>>
    %667 = vector.broadcast %666 : f32 to vector<16x256xf32>
    %668 = arith.mulf %667, %661 : vector<16x256xf32>
    %669 = arith.addf %648, %668 : vector<16x256xf32>
    %c87 = arith.constant 87 : index
    %670 = memref.load %arg3[%c87] : memref<160xf32, #tpu.memory_space<smem>>
    %671 = vector.broadcast %670 : f32 to vector<16x256xf32>
    %672 = arith.mulf %671, %661 : vector<16x256xf32>
    %673 = arith.addf %652, %672 : vector<16x256xf32>
    %c119 = arith.constant 119 : index
    %674 = memref.load %arg3[%c119] : memref<160xf32, #tpu.memory_space<smem>>
    %675 = vector.broadcast %674 : f32 to vector<16x256xf32>
    %676 = arith.mulf %675, %661 : vector<16x256xf32>
    %677 = arith.addf %656, %676 : vector<16x256xf32>
    %c151 = arith.constant 151 : index
    %678 = memref.load %arg3[%c151] : memref<160xf32, #tpu.memory_space<smem>>
    %679 = vector.broadcast %678 : f32 to vector<16x256xf32>
    %680 = arith.mulf %679, %661 : vector<16x256xf32>
    %681 = arith.addf %660, %680 : vector<16x256xf32>
    %c3_84 = arith.constant 3 : index
    %c0_85 = arith.constant 0 : index
    %c0_86 = arith.constant 0 : index
    %682 = vector.load %arg9[%c3_84, %c0_85, %c0_86] : memref<4x16x256xf32, #tpu.memory_space<vmem>>, vector<1x16x256xf32>
    %683 = vector.shape_cast %682 : vector<1x16x256xf32> to vector<16x256xf32>
    %c24_87 = arith.constant 24 : index
    %684 = memref.load %arg3[%c24_87] : memref<160xf32, #tpu.memory_space<smem>>
    %685 = vector.broadcast %684 : f32 to vector<16x256xf32>
    %686 = arith.mulf %685, %683 : vector<16x256xf32>
    %687 = arith.addf %665, %686 : vector<16x256xf32>
    %c56 = arith.constant 56 : index
    %688 = memref.load %arg3[%c56] : memref<160xf32, #tpu.memory_space<smem>>
    %689 = vector.broadcast %688 : f32 to vector<16x256xf32>
    %690 = arith.mulf %689, %683 : vector<16x256xf32>
    %691 = arith.addf %669, %690 : vector<16x256xf32>
    %c88 = arith.constant 88 : index
    %692 = memref.load %arg3[%c88] : memref<160xf32, #tpu.memory_space<smem>>
    %693 = vector.broadcast %692 : f32 to vector<16x256xf32>
    %694 = arith.mulf %693, %683 : vector<16x256xf32>
    %695 = arith.addf %673, %694 : vector<16x256xf32>
    %c120 = arith.constant 120 : index
    %696 = memref.load %arg3[%c120] : memref<160xf32, #tpu.memory_space<smem>>
    %697 = vector.broadcast %696 : f32 to vector<16x256xf32>
    %698 = arith.mulf %697, %683 : vector<16x256xf32>
    %699 = arith.addf %677, %698 : vector<16x256xf32>
    %c152 = arith.constant 152 : index
    %700 = memref.load %arg3[%c152] : memref<160xf32, #tpu.memory_space<smem>>
    %701 = vector.broadcast %700 : f32 to vector<16x256xf32>
    %702 = arith.mulf %701, %683 : vector<16x256xf32>
    %703 = arith.addf %681, %702 : vector<16x256xf32>
    %c255_i32_88 = arith.constant 255 : i32
    %704 = tpu.dynamic_rotate %683 by %c255_i32_88 dim 1 : vector<16x256xf32>, i32 -> vector<16x256xf32>
    %c25_89 = arith.constant 25 : index
    %705 = memref.load %arg3[%c25_89] : memref<160xf32, #tpu.memory_space<smem>>
    %706 = vector.broadcast %705 : f32 to vector<16x256xf32>
    %707 = arith.mulf %706, %704 : vector<16x256xf32>
    %708 = arith.addf %687, %707 : vector<16x256xf32>
    %c57 = arith.constant 57 : index
    %709 = memref.load %arg3[%c57] : memref<160xf32, #tpu.memory_space<smem>>
    %710 = vector.broadcast %709 : f32 to vector<16x256xf32>
    %711 = arith.mulf %710, %704 : vector<16x256xf32>
    %712 = arith.addf %691, %711 : vector<16x256xf32>
    %c89 = arith.constant 89 : index
    %713 = memref.load %arg3[%c89] : memref<160xf32, #tpu.memory_space<smem>>
    %714 = vector.broadcast %713 : f32 to vector<16x256xf32>
    %715 = arith.mulf %714, %704 : vector<16x256xf32>
    %716 = arith.addf %695, %715 : vector<16x256xf32>
    %c121 = arith.constant 121 : index
    %717 = memref.load %arg3[%c121] : memref<160xf32, #tpu.memory_space<smem>>
    %718 = vector.broadcast %717 : f32 to vector<16x256xf32>
    %719 = arith.mulf %718, %704 : vector<16x256xf32>
    %720 = arith.addf %699, %719 : vector<16x256xf32>
    %c153 = arith.constant 153 : index
    %721 = memref.load %arg3[%c153] : memref<160xf32, #tpu.memory_space<smem>>
    %722 = vector.broadcast %721 : f32 to vector<16x256xf32>
    %723 = arith.mulf %722, %704 : vector<16x256xf32>
    %724 = arith.addf %703, %723 : vector<16x256xf32>
    %c240_i32_90 = arith.constant 240 : i32
    %725 = tpu.dynamic_rotate %683 by %c240_i32_90 dim 1 : vector<16x256xf32>, i32 -> vector<16x256xf32>
    %c26_91 = arith.constant 26 : index
    %726 = memref.load %arg3[%c26_91] : memref<160xf32, #tpu.memory_space<smem>>
    %727 = vector.broadcast %726 : f32 to vector<16x256xf32>
    %728 = arith.mulf %727, %725 : vector<16x256xf32>
    %729 = arith.addf %708, %728 : vector<16x256xf32>
    %c58 = arith.constant 58 : index
    %730 = memref.load %arg3[%c58] : memref<160xf32, #tpu.memory_space<smem>>
    %731 = vector.broadcast %730 : f32 to vector<16x256xf32>
    %732 = arith.mulf %731, %725 : vector<16x256xf32>
    %733 = arith.addf %712, %732 : vector<16x256xf32>
    %c90 = arith.constant 90 : index
    %734 = memref.load %arg3[%c90] : memref<160xf32, #tpu.memory_space<smem>>
    %735 = vector.broadcast %734 : f32 to vector<16x256xf32>
    %736 = arith.mulf %735, %725 : vector<16x256xf32>
    %737 = arith.addf %716, %736 : vector<16x256xf32>
    %c122 = arith.constant 122 : index
    %738 = memref.load %arg3[%c122] : memref<160xf32, #tpu.memory_space<smem>>
    %739 = vector.broadcast %738 : f32 to vector<16x256xf32>
    %740 = arith.mulf %739, %725 : vector<16x256xf32>
    %741 = arith.addf %720, %740 : vector<16x256xf32>
    %c154 = arith.constant 154 : index
    %742 = memref.load %arg3[%c154] : memref<160xf32, #tpu.memory_space<smem>>
    %743 = vector.broadcast %742 : f32 to vector<16x256xf32>
    %744 = arith.mulf %743, %725 : vector<16x256xf32>
    %745 = arith.addf %724, %744 : vector<16x256xf32>
    %c239_i32_92 = arith.constant 239 : i32
    %746 = tpu.dynamic_rotate %683 by %c239_i32_92 dim 1 : vector<16x256xf32>, i32 -> vector<16x256xf32>
    %c27_93 = arith.constant 27 : index
    %747 = memref.load %arg3[%c27_93] : memref<160xf32, #tpu.memory_space<smem>>
    %748 = vector.broadcast %747 : f32 to vector<16x256xf32>
    %749 = arith.mulf %748, %746 : vector<16x256xf32>
    %750 = arith.addf %729, %749 : vector<16x256xf32>
    %c59 = arith.constant 59 : index
    %751 = memref.load %arg3[%c59] : memref<160xf32, #tpu.memory_space<smem>>
    %752 = vector.broadcast %751 : f32 to vector<16x256xf32>
    %753 = arith.mulf %752, %746 : vector<16x256xf32>
    %754 = arith.addf %733, %753 : vector<16x256xf32>
    %c91 = arith.constant 91 : index
    %755 = memref.load %arg3[%c91] : memref<160xf32, #tpu.memory_space<smem>>
    %756 = vector.broadcast %755 : f32 to vector<16x256xf32>
    %757 = arith.mulf %756, %746 : vector<16x256xf32>
    %758 = arith.addf %737, %757 : vector<16x256xf32>
    %c123 = arith.constant 123 : index
    %759 = memref.load %arg3[%c123] : memref<160xf32, #tpu.memory_space<smem>>
    %760 = vector.broadcast %759 : f32 to vector<16x256xf32>
    %761 = arith.mulf %760, %746 : vector<16x256xf32>
    %762 = arith.addf %741, %761 : vector<16x256xf32>
    %c155 = arith.constant 155 : index
    %763 = memref.load %arg3[%c155] : memref<160xf32, #tpu.memory_space<smem>>
    %764 = vector.broadcast %763 : f32 to vector<16x256xf32>
    %765 = arith.mulf %764, %746 : vector<16x256xf32>
    %766 = arith.addf %745, %765 : vector<16x256xf32>
    %c15_i32_94 = arith.constant 15 : i32
    %767 = tpu.dynamic_rotate %683 by %c15_i32_94 dim 0 : vector<16x256xf32>, i32 -> vector<16x256xf32>
    %c28_95 = arith.constant 28 : index
    %768 = memref.load %arg3[%c28_95] : memref<160xf32, #tpu.memory_space<smem>>
    %769 = vector.broadcast %768 : f32 to vector<16x256xf32>
    %770 = arith.mulf %769, %767 : vector<16x256xf32>
    %771 = arith.addf %750, %770 : vector<16x256xf32>
    %c60 = arith.constant 60 : index
    %772 = memref.load %arg3[%c60] : memref<160xf32, #tpu.memory_space<smem>>
    %773 = vector.broadcast %772 : f32 to vector<16x256xf32>
    %774 = arith.mulf %773, %767 : vector<16x256xf32>
    %775 = arith.addf %754, %774 : vector<16x256xf32>
    %c92 = arith.constant 92 : index
    %776 = memref.load %arg3[%c92] : memref<160xf32, #tpu.memory_space<smem>>
    %777 = vector.broadcast %776 : f32 to vector<16x256xf32>
    %778 = arith.mulf %777, %767 : vector<16x256xf32>
    %779 = arith.addf %758, %778 : vector<16x256xf32>
    %c124 = arith.constant 124 : index
    %780 = memref.load %arg3[%c124] : memref<160xf32, #tpu.memory_space<smem>>
    %781 = vector.broadcast %780 : f32 to vector<16x256xf32>
    %782 = arith.mulf %781, %767 : vector<16x256xf32>
    %783 = arith.addf %762, %782 : vector<16x256xf32>
    %c156 = arith.constant 156 : index
    %784 = memref.load %arg3[%c156] : memref<160xf32, #tpu.memory_space<smem>>
    %785 = vector.broadcast %784 : f32 to vector<16x256xf32>
    %786 = arith.mulf %785, %767 : vector<16x256xf32>
    %787 = arith.addf %766, %786 : vector<16x256xf32>
    %c255_i32_96 = arith.constant 255 : i32
    %788 = tpu.dynamic_rotate %767 by %c255_i32_96 dim 1 : vector<16x256xf32>, i32 -> vector<16x256xf32>
    %c29_97 = arith.constant 29 : index
    %789 = memref.load %arg3[%c29_97] : memref<160xf32, #tpu.memory_space<smem>>
    %790 = vector.broadcast %789 : f32 to vector<16x256xf32>
    %791 = arith.mulf %790, %788 : vector<16x256xf32>
    %792 = arith.addf %771, %791 : vector<16x256xf32>
    %c61 = arith.constant 61 : index
    %793 = memref.load %arg3[%c61] : memref<160xf32, #tpu.memory_space<smem>>
    %794 = vector.broadcast %793 : f32 to vector<16x256xf32>
    %795 = arith.mulf %794, %788 : vector<16x256xf32>
    %796 = arith.addf %775, %795 : vector<16x256xf32>
    %c93 = arith.constant 93 : index
    %797 = memref.load %arg3[%c93] : memref<160xf32, #tpu.memory_space<smem>>
    %798 = vector.broadcast %797 : f32 to vector<16x256xf32>
    %799 = arith.mulf %798, %788 : vector<16x256xf32>
    %800 = arith.addf %779, %799 : vector<16x256xf32>
    %c125 = arith.constant 125 : index
    %801 = memref.load %arg3[%c125] : memref<160xf32, #tpu.memory_space<smem>>
    %802 = vector.broadcast %801 : f32 to vector<16x256xf32>
    %803 = arith.mulf %802, %788 : vector<16x256xf32>
    %804 = arith.addf %783, %803 : vector<16x256xf32>
    %c157 = arith.constant 157 : index
    %805 = memref.load %arg3[%c157] : memref<160xf32, #tpu.memory_space<smem>>
    %806 = vector.broadcast %805 : f32 to vector<16x256xf32>
    %807 = arith.mulf %806, %788 : vector<16x256xf32>
    %808 = arith.addf %787, %807 : vector<16x256xf32>
    %c240_i32_98 = arith.constant 240 : i32
    %809 = tpu.dynamic_rotate %767 by %c240_i32_98 dim 1 : vector<16x256xf32>, i32 -> vector<16x256xf32>
    %c30_99 = arith.constant 30 : index
    %810 = memref.load %arg3[%c30_99] : memref<160xf32, #tpu.memory_space<smem>>
    %811 = vector.broadcast %810 : f32 to vector<16x256xf32>
    %812 = arith.mulf %811, %809 : vector<16x256xf32>
    %813 = arith.addf %792, %812 : vector<16x256xf32>
    %c62 = arith.constant 62 : index
    %814 = memref.load %arg3[%c62] : memref<160xf32, #tpu.memory_space<smem>>
    %815 = vector.broadcast %814 : f32 to vector<16x256xf32>
    %816 = arith.mulf %815, %809 : vector<16x256xf32>
    %817 = arith.addf %796, %816 : vector<16x256xf32>
    %c94 = arith.constant 94 : index
    %818 = memref.load %arg3[%c94] : memref<160xf32, #tpu.memory_space<smem>>
    %819 = vector.broadcast %818 : f32 to vector<16x256xf32>
    %820 = arith.mulf %819, %809 : vector<16x256xf32>
    %821 = arith.addf %800, %820 : vector<16x256xf32>
    %c126 = arith.constant 126 : index
    %822 = memref.load %arg3[%c126] : memref<160xf32, #tpu.memory_space<smem>>
    %823 = vector.broadcast %822 : f32 to vector<16x256xf32>
    %824 = arith.mulf %823, %809 : vector<16x256xf32>
    %825 = arith.addf %804, %824 : vector<16x256xf32>
    %c158 = arith.constant 158 : index
    %826 = memref.load %arg3[%c158] : memref<160xf32, #tpu.memory_space<smem>>
    %827 = vector.broadcast %826 : f32 to vector<16x256xf32>
    %828 = arith.mulf %827, %809 : vector<16x256xf32>
    %829 = arith.addf %808, %828 : vector<16x256xf32>
    %c239_i32_100 = arith.constant 239 : i32
    %830 = tpu.dynamic_rotate %767 by %c239_i32_100 dim 1 : vector<16x256xf32>, i32 -> vector<16x256xf32>
    %c31_101 = arith.constant 31 : index
    %831 = memref.load %arg3[%c31_101] : memref<160xf32, #tpu.memory_space<smem>>
    %832 = vector.broadcast %831 : f32 to vector<16x256xf32>
    %833 = arith.mulf %832, %830 : vector<16x256xf32>
    %834 = arith.addf %813, %833 : vector<16x256xf32>
    %c63 = arith.constant 63 : index
    %835 = memref.load %arg3[%c63] : memref<160xf32, #tpu.memory_space<smem>>
    %836 = vector.broadcast %835 : f32 to vector<16x256xf32>
    %837 = arith.mulf %836, %830 : vector<16x256xf32>
    %838 = arith.addf %817, %837 : vector<16x256xf32>
    %c95 = arith.constant 95 : index
    %839 = memref.load %arg3[%c95] : memref<160xf32, #tpu.memory_space<smem>>
    %840 = vector.broadcast %839 : f32 to vector<16x256xf32>
    %841 = arith.mulf %840, %830 : vector<16x256xf32>
    %842 = arith.addf %821, %841 : vector<16x256xf32>
    %c127 = arith.constant 127 : index
    %843 = memref.load %arg3[%c127] : memref<160xf32, #tpu.memory_space<smem>>
    %844 = vector.broadcast %843 : f32 to vector<16x256xf32>
    %845 = arith.mulf %844, %830 : vector<16x256xf32>
    %846 = arith.addf %825, %845 : vector<16x256xf32>
    %c159 = arith.constant 159 : index
    %847 = memref.load %arg3[%c159] : memref<160xf32, #tpu.memory_space<smem>>
    %848 = vector.broadcast %847 : f32 to vector<16x256xf32>
    %849 = arith.mulf %848, %830 : vector<16x256xf32>
    %850 = arith.addf %829, %849 : vector<16x256xf32>
    %cst_102 = arith.constant 0.000000e+00 : f32
    %851 = vector.broadcast %cst_102 : f32 to vector<16x256xf32>
    %852 = arith.maximumf %834, %851 : vector<16x256xf32>
    %c0_103 = arith.constant 0 : index
    %c0_104 = arith.constant 0 : index
    %c0_105 = arith.constant 0 : index
    %853 = vector.load %arg10[%c0_103, %c0_104, %c0_105] : memref<5x16x256xf32, #tpu.memory_space<vmem>>, vector<1x16x256xf32>
    %854 = vector.shape_cast %853 : vector<1x16x256xf32> to vector<16x256xf32>
    %855 = vector.shape_cast %852 : vector<16x256xf32> to vector<1x16x256xf32>
    tpu.vector_store %arg10[%c0_103, %c0_104, %c0_105], %855 {strides = array<i32>} : memref<5x16x256xf32, #tpu.memory_space<vmem>>, vector<1x16x256xf32>,
    %cst_106 = arith.constant 0.000000e+00 : f32
    %856 = vector.broadcast %cst_106 : f32 to vector<16x256xf32>
    %857 = arith.maximumf %838, %856 : vector<16x256xf32>
    %c1_107 = arith.constant 1 : index
    %c0_108 = arith.constant 0 : index
    %c0_109 = arith.constant 0 : index
    %858 = vector.load %arg10[%c1_107, %c0_108, %c0_109] : memref<5x16x256xf32, #tpu.memory_space<vmem>>, vector<1x16x256xf32>
    %859 = vector.shape_cast %858 : vector<1x16x256xf32> to vector<16x256xf32>
    %860 = vector.shape_cast %857 : vector<16x256xf32> to vector<1x16x256xf32>
    tpu.vector_store %arg10[%c1_107, %c0_108, %c0_109], %860 {strides = array<i32>} : memref<5x16x256xf32, #tpu.memory_space<vmem>>, vector<1x16x256xf32>,
    %cst_110 = arith.constant 0.000000e+00 : f32
    %861 = vector.broadcast %cst_110 : f32 to vector<16x256xf32>
    %862 = arith.maximumf %842, %861 : vector<16x256xf32>
    %c2_111 = arith.constant 2 : index
    %c0_112 = arith.constant 0 : index
    %c0_113 = arith.constant 0 : index
    %863 = vector.load %arg10[%c2_111, %c0_112, %c0_113] : memref<5x16x256xf32, #tpu.memory_space<vmem>>, vector<1x16x256xf32>
    %864 = vector.shape_cast %863 : vector<1x16x256xf32> to vector<16x256xf32>
    %865 = vector.shape_cast %862 : vector<16x256xf32> to vector<1x16x256xf32>
    tpu.vector_store %arg10[%c2_111, %c0_112, %c0_113], %865 {strides = array<i32>} : memref<5x16x256xf32, #tpu.memory_space<vmem>>, vector<1x16x256xf32>,
    %cst_114 = arith.constant 0.000000e+00 : f32
    %866 = vector.broadcast %cst_114 : f32 to vector<16x256xf32>
    %867 = arith.maximumf %846, %866 : vector<16x256xf32>
    %c3_115 = arith.constant 3 : index
    %c0_116 = arith.constant 0 : index
    %c0_117 = arith.constant 0 : index
    %868 = vector.load %arg10[%c3_115, %c0_116, %c0_117] : memref<5x16x256xf32, #tpu.memory_space<vmem>>, vector<1x16x256xf32>
    %869 = vector.shape_cast %868 : vector<1x16x256xf32> to vector<16x256xf32>
    %870 = vector.shape_cast %867 : vector<16x256xf32> to vector<1x16x256xf32>
    tpu.vector_store %arg10[%c3_115, %c0_116, %c0_117], %870 {strides = array<i32>} : memref<5x16x256xf32, #tpu.memory_space<vmem>>, vector<1x16x256xf32>,
    %cst_118 = arith.constant 0.000000e+00 : f32
    %871 = vector.broadcast %cst_118 : f32 to vector<16x256xf32>
    %872 = arith.maximumf %850, %871 : vector<16x256xf32>
    %c4_119 = arith.constant 4 : index
    %c0_120 = arith.constant 0 : index
    %c0_121 = arith.constant 0 : index
    %873 = vector.load %arg10[%c4_119, %c0_120, %c0_121] : memref<5x16x256xf32, #tpu.memory_space<vmem>>, vector<1x16x256xf32>
    %874 = vector.shape_cast %873 : vector<1x16x256xf32> to vector<16x256xf32>
    %875 = vector.shape_cast %872 : vector<16x256xf32> to vector<1x16x256xf32>
    tpu.vector_store %arg10[%c4_119, %c0_120, %c0_121], %875 {strides = array<i32>} : memref<5x16x256xf32, #tpu.memory_space<vmem>>, vector<1x16x256xf32>,
    %c0_122 = arith.constant 0 : index
    %876 = memref.load %arg6[%c0_122] : memref<3xf32, #tpu.memory_space<smem>>
    %877 = vector.broadcast %876 : f32 to vector<16x256xf32>
    %c1_123 = arith.constant 1 : index
    %878 = memref.load %arg6[%c1_123] : memref<3xf32, #tpu.memory_space<smem>>
    %879 = vector.broadcast %878 : f32 to vector<16x256xf32>
    %c2_124 = arith.constant 2 : index
    %880 = memref.load %arg6[%c2_124] : memref<3xf32, #tpu.memory_space<smem>>
    %881 = vector.broadcast %880 : f32 to vector<16x256xf32>
    %c0_125 = arith.constant 0 : index
    %c0_126 = arith.constant 0 : index
    %c0_127 = arith.constant 0 : index
    %882 = vector.load %arg10[%c0_125, %c0_126, %c0_127] : memref<5x16x256xf32, #tpu.memory_space<vmem>>, vector<1x16x256xf32>
    %883 = vector.shape_cast %882 : vector<1x16x256xf32> to vector<16x256xf32>
    %c0_128 = arith.constant 0 : index
    %884 = memref.load %arg5[%c0_128] : memref<120xf32, #tpu.memory_space<smem>>
    %885 = vector.broadcast %884 : f32 to vector<16x256xf32>
    %886 = arith.mulf %885, %883 : vector<16x256xf32>
    %887 = arith.addf %877, %886 : vector<16x256xf32>
    %c40_129 = arith.constant 40 : index
    %888 = memref.load %arg5[%c40_129] : memref<120xf32, #tpu.memory_space<smem>>
    %889 = vector.broadcast %888 : f32 to vector<16x256xf32>
    %890 = arith.mulf %889, %883 : vector<16x256xf32>
    %891 = arith.addf %879, %890 : vector<16x256xf32>
    %c80_130 = arith.constant 80 : index
    %892 = memref.load %arg5[%c80_130] : memref<120xf32, #tpu.memory_space<smem>>
    %893 = vector.broadcast %892 : f32 to vector<16x256xf32>
    %894 = arith.mulf %893, %883 : vector<16x256xf32>
    %895 = arith.addf %881, %894 : vector<16x256xf32>
    %c255_i32_131 = arith.constant 255 : i32
    %896 = tpu.dynamic_rotate %883 by %c255_i32_131 dim 1 : vector<16x256xf32>, i32 -> vector<16x256xf32>
    %c1_132 = arith.constant 1 : index
    %897 = memref.load %arg5[%c1_132] : memref<120xf32, #tpu.memory_space<smem>>
    %898 = vector.broadcast %897 : f32 to vector<16x256xf32>
    %899 = arith.mulf %898, %896 : vector<16x256xf32>
    %900 = arith.addf %887, %899 : vector<16x256xf32>
    %c41_133 = arith.constant 41 : index
    %901 = memref.load %arg5[%c41_133] : memref<120xf32, #tpu.memory_space<smem>>
    %902 = vector.broadcast %901 : f32 to vector<16x256xf32>
    %903 = arith.mulf %902, %896 : vector<16x256xf32>
    %904 = arith.addf %891, %903 : vector<16x256xf32>
    %c81_134 = arith.constant 81 : index
    %905 = memref.load %arg5[%c81_134] : memref<120xf32, #tpu.memory_space<smem>>
    %906 = vector.broadcast %905 : f32 to vector<16x256xf32>
    %907 = arith.mulf %906, %896 : vector<16x256xf32>
    %908 = arith.addf %895, %907 : vector<16x256xf32>
    %c240_i32_135 = arith.constant 240 : i32
    %909 = tpu.dynamic_rotate %883 by %c240_i32_135 dim 1 : vector<16x256xf32>, i32 -> vector<16x256xf32>
    %c2_136 = arith.constant 2 : index
    %910 = memref.load %arg5[%c2_136] : memref<120xf32, #tpu.memory_space<smem>>
    %911 = vector.broadcast %910 : f32 to vector<16x256xf32>
    %912 = arith.mulf %911, %909 : vector<16x256xf32>
    %913 = arith.addf %900, %912 : vector<16x256xf32>
    %c42_137 = arith.constant 42 : index
    %914 = memref.load %arg5[%c42_137] : memref<120xf32, #tpu.memory_space<smem>>
    %915 = vector.broadcast %914 : f32 to vector<16x256xf32>
    %916 = arith.mulf %915, %909 : vector<16x256xf32>
    %917 = arith.addf %904, %916 : vector<16x256xf32>
    %c82_138 = arith.constant 82 : index
    %918 = memref.load %arg5[%c82_138] : memref<120xf32, #tpu.memory_space<smem>>
    %919 = vector.broadcast %918 : f32 to vector<16x256xf32>
    %920 = arith.mulf %919, %909 : vector<16x256xf32>
    %921 = arith.addf %908, %920 : vector<16x256xf32>
    %c239_i32_139 = arith.constant 239 : i32
    %922 = tpu.dynamic_rotate %883 by %c239_i32_139 dim 1 : vector<16x256xf32>, i32 -> vector<16x256xf32>
    %c3_140 = arith.constant 3 : index
    %923 = memref.load %arg5[%c3_140] : memref<120xf32, #tpu.memory_space<smem>>
    %924 = vector.broadcast %923 : f32 to vector<16x256xf32>
    %925 = arith.mulf %924, %922 : vector<16x256xf32>
    %926 = arith.addf %913, %925 : vector<16x256xf32>
    %c43_141 = arith.constant 43 : index
    %927 = memref.load %arg5[%c43_141] : memref<120xf32, #tpu.memory_space<smem>>
    %928 = vector.broadcast %927 : f32 to vector<16x256xf32>
    %929 = arith.mulf %928, %922 : vector<16x256xf32>
    %930 = arith.addf %917, %929 : vector<16x256xf32>
    %c83_142 = arith.constant 83 : index
    %931 = memref.load %arg5[%c83_142] : memref<120xf32, #tpu.memory_space<smem>>
    %932 = vector.broadcast %931 : f32 to vector<16x256xf32>
    %933 = arith.mulf %932, %922 : vector<16x256xf32>
    %934 = arith.addf %921, %933 : vector<16x256xf32>
    %c15_i32_143 = arith.constant 15 : i32
    %935 = tpu.dynamic_rotate %883 by %c15_i32_143 dim 0 : vector<16x256xf32>, i32 -> vector<16x256xf32>
    %c4_144 = arith.constant 4 : index
    %936 = memref.load %arg5[%c4_144] : memref<120xf32, #tpu.memory_space<smem>>
    %937 = vector.broadcast %936 : f32 to vector<16x256xf32>
    %938 = arith.mulf %937, %935 : vector<16x256xf32>
    %939 = arith.addf %926, %938 : vector<16x256xf32>
    %c44_145 = arith.constant 44 : index
    %940 = memref.load %arg5[%c44_145] : memref<120xf32, #tpu.memory_space<smem>>
    %941 = vector.broadcast %940 : f32 to vector<16x256xf32>
    %942 = arith.mulf %941, %935 : vector<16x256xf32>
    %943 = arith.addf %930, %942 : vector<16x256xf32>
    %c84_146 = arith.constant 84 : index
    %944 = memref.load %arg5[%c84_146] : memref<120xf32, #tpu.memory_space<smem>>
    %945 = vector.broadcast %944 : f32 to vector<16x256xf32>
    %946 = arith.mulf %945, %935 : vector<16x256xf32>
    %947 = arith.addf %934, %946 : vector<16x256xf32>
    %c255_i32_147 = arith.constant 255 : i32
    %948 = tpu.dynamic_rotate %935 by %c255_i32_147 dim 1 : vector<16x256xf32>, i32 -> vector<16x256xf32>
    %c5_148 = arith.constant 5 : index
    %949 = memref.load %arg5[%c5_148] : memref<120xf32, #tpu.memory_space<smem>>
    %950 = vector.broadcast %949 : f32 to vector<16x256xf32>
    %951 = arith.mulf %950, %948 : vector<16x256xf32>
    %952 = arith.addf %939, %951 : vector<16x256xf32>
    %c45_149 = arith.constant 45 : index
    %953 = memref.load %arg5[%c45_149] : memref<120xf32, #tpu.memory_space<smem>>
    %954 = vector.broadcast %953 : f32 to vector<16x256xf32>
    %955 = arith.mulf %954, %948 : vector<16x256xf32>
    %956 = arith.addf %943, %955 : vector<16x256xf32>
    %c85_150 = arith.constant 85 : index
    %957 = memref.load %arg5[%c85_150] : memref<120xf32, #tpu.memory_space<smem>>
    %958 = vector.broadcast %957 : f32 to vector<16x256xf32>
    %959 = arith.mulf %958, %948 : vector<16x256xf32>
    %960 = arith.addf %947, %959 : vector<16x256xf32>
    %c240_i32_151 = arith.constant 240 : i32
    %961 = tpu.dynamic_rotate %935 by %c240_i32_151 dim 1 : vector<16x256xf32>, i32 -> vector<16x256xf32>
    %c6_152 = arith.constant 6 : index
    %962 = memref.load %arg5[%c6_152] : memref<120xf32, #tpu.memory_space<smem>>
    %963 = vector.broadcast %962 : f32 to vector<16x256xf32>
    %964 = arith.mulf %963, %961 : vector<16x256xf32>
    %965 = arith.addf %952, %964 : vector<16x256xf32>
    %c46_153 = arith.constant 46 : index
    %966 = memref.load %arg5[%c46_153] : memref<120xf32, #tpu.memory_space<smem>>
    %967 = vector.broadcast %966 : f32 to vector<16x256xf32>
    %968 = arith.mulf %967, %961 : vector<16x256xf32>
    %969 = arith.addf %956, %968 : vector<16x256xf32>
    %c86_154 = arith.constant 86 : index
    %970 = memref.load %arg5[%c86_154] : memref<120xf32, #tpu.memory_space<smem>>
    %971 = vector.broadcast %970 : f32 to vector<16x256xf32>
    %972 = arith.mulf %971, %961 : vector<16x256xf32>
    %973 = arith.addf %960, %972 : vector<16x256xf32>
    %c239_i32_155 = arith.constant 239 : i32
    %974 = tpu.dynamic_rotate %935 by %c239_i32_155 dim 1 : vector<16x256xf32>, i32 -> vector<16x256xf32>
    %c7_156 = arith.constant 7 : index
    %975 = memref.load %arg5[%c7_156] : memref<120xf32, #tpu.memory_space<smem>>
    %976 = vector.broadcast %975 : f32 to vector<16x256xf32>
    %977 = arith.mulf %976, %974 : vector<16x256xf32>
    %978 = arith.addf %965, %977 : vector<16x256xf32>
    %c47_157 = arith.constant 47 : index
    %979 = memref.load %arg5[%c47_157] : memref<120xf32, #tpu.memory_space<smem>>
    %980 = vector.broadcast %979 : f32 to vector<16x256xf32>
    %981 = arith.mulf %980, %974 : vector<16x256xf32>
    %982 = arith.addf %969, %981 : vector<16x256xf32>
    %c87_158 = arith.constant 87 : index
    %983 = memref.load %arg5[%c87_158] : memref<120xf32, #tpu.memory_space<smem>>
    %984 = vector.broadcast %983 : f32 to vector<16x256xf32>
    %985 = arith.mulf %984, %974 : vector<16x256xf32>
    %986 = arith.addf %973, %985 : vector<16x256xf32>
    %c1_159 = arith.constant 1 : index
    %c0_160 = arith.constant 0 : index
    %c0_161 = arith.constant 0 : index
    %987 = vector.load %arg10[%c1_159, %c0_160, %c0_161] : memref<5x16x256xf32, #tpu.memory_space<vmem>>, vector<1x16x256xf32>
    %988 = vector.shape_cast %987 : vector<1x16x256xf32> to vector<16x256xf32>
    %c8_162 = arith.constant 8 : index
    %989 = memref.load %arg5[%c8_162] : memref<120xf32, #tpu.memory_space<smem>>
    %990 = vector.broadcast %989 : f32 to vector<16x256xf32>
    %991 = arith.mulf %990, %988 : vector<16x256xf32>
    %992 = arith.addf %978, %991 : vector<16x256xf32>
    %c48_163 = arith.constant 48 : index
    %993 = memref.load %arg5[%c48_163] : memref<120xf32, #tpu.memory_space<smem>>
    %994 = vector.broadcast %993 : f32 to vector<16x256xf32>
    %995 = arith.mulf %994, %988 : vector<16x256xf32>
    %996 = arith.addf %982, %995 : vector<16x256xf32>
    %c88_164 = arith.constant 88 : index
    %997 = memref.load %arg5[%c88_164] : memref<120xf32, #tpu.memory_space<smem>>
    %998 = vector.broadcast %997 : f32 to vector<16x256xf32>
    %999 = arith.mulf %998, %988 : vector<16x256xf32>
    %1000 = arith.addf %986, %999 : vector<16x256xf32>
    %c255_i32_165 = arith.constant 255 : i32
    %1001 = tpu.dynamic_rotate %988 by %c255_i32_165 dim 1 : vector<16x256xf32>, i32 -> vector<16x256xf32>
    %c9_166 = arith.constant 9 : index
    %1002 = memref.load %arg5[%c9_166] : memref<120xf32, #tpu.memory_space<smem>>
    %1003 = vector.broadcast %1002 : f32 to vector<16x256xf32>
    %1004 = arith.mulf %1003, %1001 : vector<16x256xf32>
    %1005 = arith.addf %992, %1004 : vector<16x256xf32>
    %c49_167 = arith.constant 49 : index
    %1006 = memref.load %arg5[%c49_167] : memref<120xf32, #tpu.memory_space<smem>>
    %1007 = vector.broadcast %1006 : f32 to vector<16x256xf32>
    %1008 = arith.mulf %1007, %1001 : vector<16x256xf32>
    %1009 = arith.addf %996, %1008 : vector<16x256xf32>
    %c89_168 = arith.constant 89 : index
    %1010 = memref.load %arg5[%c89_168] : memref<120xf32, #tpu.memory_space<smem>>
    %1011 = vector.broadcast %1010 : f32 to vector<16x256xf32>
    %1012 = arith.mulf %1011, %1001 : vector<16x256xf32>
    %1013 = arith.addf %1000, %1012 : vector<16x256xf32>
    %c240_i32_169 = arith.constant 240 : i32
    %1014 = tpu.dynamic_rotate %988 by %c240_i32_169 dim 1 : vector<16x256xf32>, i32 -> vector<16x256xf32>
    %c10_170 = arith.constant 10 : index
    %1015 = memref.load %arg5[%c10_170] : memref<120xf32, #tpu.memory_space<smem>>
    %1016 = vector.broadcast %1015 : f32 to vector<16x256xf32>
    %1017 = arith.mulf %1016, %1014 : vector<16x256xf32>
    %1018 = arith.addf %1005, %1017 : vector<16x256xf32>
    %c50_171 = arith.constant 50 : index
    %1019 = memref.load %arg5[%c50_171] : memref<120xf32, #tpu.memory_space<smem>>
    %1020 = vector.broadcast %1019 : f32 to vector<16x256xf32>
    %1021 = arith.mulf %1020, %1014 : vector<16x256xf32>
    %1022 = arith.addf %1009, %1021 : vector<16x256xf32>
    %c90_172 = arith.constant 90 : index
    %1023 = memref.load %arg5[%c90_172] : memref<120xf32, #tpu.memory_space<smem>>
    %1024 = vector.broadcast %1023 : f32 to vector<16x256xf32>
    %1025 = arith.mulf %1024, %1014 : vector<16x256xf32>
    %1026 = arith.addf %1013, %1025 : vector<16x256xf32>
    %c239_i32_173 = arith.constant 239 : i32
    %1027 = tpu.dynamic_rotate %988 by %c239_i32_173 dim 1 : vector<16x256xf32>, i32 -> vector<16x256xf32>
    %c11_174 = arith.constant 11 : index
    %1028 = memref.load %arg5[%c11_174] : memref<120xf32, #tpu.memory_space<smem>>
    %1029 = vector.broadcast %1028 : f32 to vector<16x256xf32>
    %1030 = arith.mulf %1029, %1027 : vector<16x256xf32>
    %1031 = arith.addf %1018, %1030 : vector<16x256xf32>
    %c51_175 = arith.constant 51 : index
    %1032 = memref.load %arg5[%c51_175] : memref<120xf32, #tpu.memory_space<smem>>
    %1033 = vector.broadcast %1032 : f32 to vector<16x256xf32>
    %1034 = arith.mulf %1033, %1027 : vector<16x256xf32>
    %1035 = arith.addf %1022, %1034 : vector<16x256xf32>
    %c91_176 = arith.constant 91 : index
    %1036 = memref.load %arg5[%c91_176] : memref<120xf32, #tpu.memory_space<smem>>
    %1037 = vector.broadcast %1036 : f32 to vector<16x256xf32>
    %1038 = arith.mulf %1037, %1027 : vector<16x256xf32>
    %1039 = arith.addf %1026, %1038 : vector<16x256xf32>
    %c15_i32_177 = arith.constant 15 : i32
    %1040 = tpu.dynamic_rotate %988 by %c15_i32_177 dim 0 : vector<16x256xf32>, i32 -> vector<16x256xf32>
    %c12_178 = arith.constant 12 : index
    %1041 = memref.load %arg5[%c12_178] : memref<120xf32, #tpu.memory_space<smem>>
    %1042 = vector.broadcast %1041 : f32 to vector<16x256xf32>
    %1043 = arith.mulf %1042, %1040 : vector<16x256xf32>
    %1044 = arith.addf %1031, %1043 : vector<16x256xf32>
    %c52_179 = arith.constant 52 : index
    %1045 = memref.load %arg5[%c52_179] : memref<120xf32, #tpu.memory_space<smem>>
    %1046 = vector.broadcast %1045 : f32 to vector<16x256xf32>
    %1047 = arith.mulf %1046, %1040 : vector<16x256xf32>
    %1048 = arith.addf %1035, %1047 : vector<16x256xf32>
    %c92_180 = arith.constant 92 : index
    %1049 = memref.load %arg5[%c92_180] : memref<120xf32, #tpu.memory_space<smem>>
    %1050 = vector.broadcast %1049 : f32 to vector<16x256xf32>
    %1051 = arith.mulf %1050, %1040 : vector<16x256xf32>
    %1052 = arith.addf %1039, %1051 : vector<16x256xf32>
    %c255_i32_181 = arith.constant 255 : i32
    %1053 = tpu.dynamic_rotate %1040 by %c255_i32_181 dim 1 : vector<16x256xf32>, i32 -> vector<16x256xf32>
    %c13_182 = arith.constant 13 : index
    %1054 = memref.load %arg5[%c13_182] : memref<120xf32, #tpu.memory_space<smem>>
    %1055 = vector.broadcast %1054 : f32 to vector<16x256xf32>
    %1056 = arith.mulf %1055, %1053 : vector<16x256xf32>
    %1057 = arith.addf %1044, %1056 : vector<16x256xf32>
    %c53_183 = arith.constant 53 : index
    %1058 = memref.load %arg5[%c53_183] : memref<120xf32, #tpu.memory_space<smem>>
    %1059 = vector.broadcast %1058 : f32 to vector<16x256xf32>
    %1060 = arith.mulf %1059, %1053 : vector<16x256xf32>
    %1061 = arith.addf %1048, %1060 : vector<16x256xf32>
    %c93_184 = arith.constant 93 : index
    %1062 = memref.load %arg5[%c93_184] : memref<120xf32, #tpu.memory_space<smem>>
    %1063 = vector.broadcast %1062 : f32 to vector<16x256xf32>
    %1064 = arith.mulf %1063, %1053 : vector<16x256xf32>
    %1065 = arith.addf %1052, %1064 : vector<16x256xf32>
    %c240_i32_185 = arith.constant 240 : i32
    %1066 = tpu.dynamic_rotate %1040 by %c240_i32_185 dim 1 : vector<16x256xf32>, i32 -> vector<16x256xf32>
    %c14_186 = arith.constant 14 : index
    %1067 = memref.load %arg5[%c14_186] : memref<120xf32, #tpu.memory_space<smem>>
    %1068 = vector.broadcast %1067 : f32 to vector<16x256xf32>
    %1069 = arith.mulf %1068, %1066 : vector<16x256xf32>
    %1070 = arith.addf %1057, %1069 : vector<16x256xf32>
    %c54_187 = arith.constant 54 : index
    %1071 = memref.load %arg5[%c54_187] : memref<120xf32, #tpu.memory_space<smem>>
    %1072 = vector.broadcast %1071 : f32 to vector<16x256xf32>
    %1073 = arith.mulf %1072, %1066 : vector<16x256xf32>
    %1074 = arith.addf %1061, %1073 : vector<16x256xf32>
    %c94_188 = arith.constant 94 : index
    %1075 = memref.load %arg5[%c94_188] : memref<120xf32, #tpu.memory_space<smem>>
    %1076 = vector.broadcast %1075 : f32 to vector<16x256xf32>
    %1077 = arith.mulf %1076, %1066 : vector<16x256xf32>
    %1078 = arith.addf %1065, %1077 : vector<16x256xf32>
    %c239_i32_189 = arith.constant 239 : i32
    %1079 = tpu.dynamic_rotate %1040 by %c239_i32_189 dim 1 : vector<16x256xf32>, i32 -> vector<16x256xf32>
    %c15_190 = arith.constant 15 : index
    %1080 = memref.load %arg5[%c15_190] : memref<120xf32, #tpu.memory_space<smem>>
    %1081 = vector.broadcast %1080 : f32 to vector<16x256xf32>
    %1082 = arith.mulf %1081, %1079 : vector<16x256xf32>
    %1083 = arith.addf %1070, %1082 : vector<16x256xf32>
    %c55_191 = arith.constant 55 : index
    %1084 = memref.load %arg5[%c55_191] : memref<120xf32, #tpu.memory_space<smem>>
    %1085 = vector.broadcast %1084 : f32 to vector<16x256xf32>
    %1086 = arith.mulf %1085, %1079 : vector<16x256xf32>
    %1087 = arith.addf %1074, %1086 : vector<16x256xf32>
    %c95_192 = arith.constant 95 : index
    %1088 = memref.load %arg5[%c95_192] : memref<120xf32, #tpu.memory_space<smem>>
    %1089 = vector.broadcast %1088 : f32 to vector<16x256xf32>
    %1090 = arith.mulf %1089, %1079 : vector<16x256xf32>
    %1091 = arith.addf %1078, %1090 : vector<16x256xf32>
    %c2_193 = arith.constant 2 : index
    %c0_194 = arith.constant 0 : index
    %c0_195 = arith.constant 0 : index
    %1092 = vector.load %arg10[%c2_193, %c0_194, %c0_195] : memref<5x16x256xf32, #tpu.memory_space<vmem>>, vector<1x16x256xf32>
    %1093 = vector.shape_cast %1092 : vector<1x16x256xf32> to vector<16x256xf32>
    %c16_196 = arith.constant 16 : index
    %1094 = memref.load %arg5[%c16_196] : memref<120xf32, #tpu.memory_space<smem>>
    %1095 = vector.broadcast %1094 : f32 to vector<16x256xf32>
    %1096 = arith.mulf %1095, %1093 : vector<16x256xf32>
    %1097 = arith.addf %1083, %1096 : vector<16x256xf32>
    %c56_197 = arith.constant 56 : index
    %1098 = memref.load %arg5[%c56_197] : memref<120xf32, #tpu.memory_space<smem>>
    %1099 = vector.broadcast %1098 : f32 to vector<16x256xf32>
    %1100 = arith.mulf %1099, %1093 : vector<16x256xf32>
    %1101 = arith.addf %1087, %1100 : vector<16x256xf32>
    %c96_198 = arith.constant 96 : index
    %1102 = memref.load %arg5[%c96_198] : memref<120xf32, #tpu.memory_space<smem>>
    %1103 = vector.broadcast %1102 : f32 to vector<16x256xf32>
    %1104 = arith.mulf %1103, %1093 : vector<16x256xf32>
    %1105 = arith.addf %1091, %1104 : vector<16x256xf32>
    %c255_i32_199 = arith.constant 255 : i32
    %1106 = tpu.dynamic_rotate %1093 by %c255_i32_199 dim 1 : vector<16x256xf32>, i32 -> vector<16x256xf32>
    %c17_200 = arith.constant 17 : index
    %1107 = memref.load %arg5[%c17_200] : memref<120xf32, #tpu.memory_space<smem>>
    %1108 = vector.broadcast %1107 : f32 to vector<16x256xf32>
    %1109 = arith.mulf %1108, %1106 : vector<16x256xf32>
    %1110 = arith.addf %1097, %1109 : vector<16x256xf32>
    %c57_201 = arith.constant 57 : index
    %1111 = memref.load %arg5[%c57_201] : memref<120xf32, #tpu.memory_space<smem>>
    %1112 = vector.broadcast %1111 : f32 to vector<16x256xf32>
    %1113 = arith.mulf %1112, %1106 : vector<16x256xf32>
    %1114 = arith.addf %1101, %1113 : vector<16x256xf32>
    %c97_202 = arith.constant 97 : index
    %1115 = memref.load %arg5[%c97_202] : memref<120xf32, #tpu.memory_space<smem>>
    %1116 = vector.broadcast %1115 : f32 to vector<16x256xf32>
    %1117 = arith.mulf %1116, %1106 : vector<16x256xf32>
    %1118 = arith.addf %1105, %1117 : vector<16x256xf32>
    %c240_i32_203 = arith.constant 240 : i32
    %1119 = tpu.dynamic_rotate %1093 by %c240_i32_203 dim 1 : vector<16x256xf32>, i32 -> vector<16x256xf32>
    %c18_204 = arith.constant 18 : index
    %1120 = memref.load %arg5[%c18_204] : memref<120xf32, #tpu.memory_space<smem>>
    %1121 = vector.broadcast %1120 : f32 to vector<16x256xf32>
    %1122 = arith.mulf %1121, %1119 : vector<16x256xf32>
    %1123 = arith.addf %1110, %1122 : vector<16x256xf32>
    %c58_205 = arith.constant 58 : index
    %1124 = memref.load %arg5[%c58_205] : memref<120xf32, #tpu.memory_space<smem>>
    %1125 = vector.broadcast %1124 : f32 to vector<16x256xf32>
    %1126 = arith.mulf %1125, %1119 : vector<16x256xf32>
    %1127 = arith.addf %1114, %1126 : vector<16x256xf32>
    %c98_206 = arith.constant 98 : index
    %1128 = memref.load %arg5[%c98_206] : memref<120xf32, #tpu.memory_space<smem>>
    %1129 = vector.broadcast %1128 : f32 to vector<16x256xf32>
    %1130 = arith.mulf %1129, %1119 : vector<16x256xf32>
    %1131 = arith.addf %1118, %1130 : vector<16x256xf32>
    %c239_i32_207 = arith.constant 239 : i32
    %1132 = tpu.dynamic_rotate %1093 by %c239_i32_207 dim 1 : vector<16x256xf32>, i32 -> vector<16x256xf32>
    %c19_208 = arith.constant 19 : index
    %1133 = memref.load %arg5[%c19_208] : memref<120xf32, #tpu.memory_space<smem>>
    %1134 = vector.broadcast %1133 : f32 to vector<16x256xf32>
    %1135 = arith.mulf %1134, %1132 : vector<16x256xf32>
    %1136 = arith.addf %1123, %1135 : vector<16x256xf32>
    %c59_209 = arith.constant 59 : index
    %1137 = memref.load %arg5[%c59_209] : memref<120xf32, #tpu.memory_space<smem>>
    %1138 = vector.broadcast %1137 : f32 to vector<16x256xf32>
    %1139 = arith.mulf %1138, %1132 : vector<16x256xf32>
    %1140 = arith.addf %1127, %1139 : vector<16x256xf32>
    %c99_210 = arith.constant 99 : index
    %1141 = memref.load %arg5[%c99_210] : memref<120xf32, #tpu.memory_space<smem>>
    %1142 = vector.broadcast %1141 : f32 to vector<16x256xf32>
    %1143 = arith.mulf %1142, %1132 : vector<16x256xf32>
    %1144 = arith.addf %1131, %1143 : vector<16x256xf32>
    %c15_i32_211 = arith.constant 15 : i32
    %1145 = tpu.dynamic_rotate %1093 by %c15_i32_211 dim 0 : vector<16x256xf32>, i32 -> vector<16x256xf32>
    %c20_212 = arith.constant 20 : index
    %1146 = memref.load %arg5[%c20_212] : memref<120xf32, #tpu.memory_space<smem>>
    %1147 = vector.broadcast %1146 : f32 to vector<16x256xf32>
    %1148 = arith.mulf %1147, %1145 : vector<16x256xf32>
    %1149 = arith.addf %1136, %1148 : vector<16x256xf32>
    %c60_213 = arith.constant 60 : index
    %1150 = memref.load %arg5[%c60_213] : memref<120xf32, #tpu.memory_space<smem>>
    %1151 = vector.broadcast %1150 : f32 to vector<16x256xf32>
    %1152 = arith.mulf %1151, %1145 : vector<16x256xf32>
    %1153 = arith.addf %1140, %1152 : vector<16x256xf32>
    %c100_214 = arith.constant 100 : index
    %1154 = memref.load %arg5[%c100_214] : memref<120xf32, #tpu.memory_space<smem>>
    %1155 = vector.broadcast %1154 : f32 to vector<16x256xf32>
    %1156 = arith.mulf %1155, %1145 : vector<16x256xf32>
    %1157 = arith.addf %1144, %1156 : vector<16x256xf32>
    %c255_i32_215 = arith.constant 255 : i32
    %1158 = tpu.dynamic_rotate %1145 by %c255_i32_215 dim 1 : vector<16x256xf32>, i32 -> vector<16x256xf32>
    %c21_216 = arith.constant 21 : index
    %1159 = memref.load %arg5[%c21_216] : memref<120xf32, #tpu.memory_space<smem>>
    %1160 = vector.broadcast %1159 : f32 to vector<16x256xf32>
    %1161 = arith.mulf %1160, %1158 : vector<16x256xf32>
    %1162 = arith.addf %1149, %1161 : vector<16x256xf32>
    %c61_217 = arith.constant 61 : index
    %1163 = memref.load %arg5[%c61_217] : memref<120xf32, #tpu.memory_space<smem>>
    %1164 = vector.broadcast %1163 : f32 to vector<16x256xf32>
    %1165 = arith.mulf %1164, %1158 : vector<16x256xf32>
    %1166 = arith.addf %1153, %1165 : vector<16x256xf32>
    %c101_218 = arith.constant 101 : index
    %1167 = memref.load %arg5[%c101_218] : memref<120xf32, #tpu.memory_space<smem>>
    %1168 = vector.broadcast %1167 : f32 to vector<16x256xf32>
    %1169 = arith.mulf %1168, %1158 : vector<16x256xf32>
    %1170 = arith.addf %1157, %1169 : vector<16x256xf32>
    %c240_i32_219 = arith.constant 240 : i32
    %1171 = tpu.dynamic_rotate %1145 by %c240_i32_219 dim 1 : vector<16x256xf32>, i32 -> vector<16x256xf32>
    %c22_220 = arith.constant 22 : index
    %1172 = memref.load %arg5[%c22_220] : memref<120xf32, #tpu.memory_space<smem>>
    %1173 = vector.broadcast %1172 : f32 to vector<16x256xf32>
    %1174 = arith.mulf %1173, %1171 : vector<16x256xf32>
    %1175 = arith.addf %1162, %1174 : vector<16x256xf32>
    %c62_221 = arith.constant 62 : index
    %1176 = memref.load %arg5[%c62_221] : memref<120xf32, #tpu.memory_space<smem>>
    %1177 = vector.broadcast %1176 : f32 to vector<16x256xf32>
    %1178 = arith.mulf %1177, %1171 : vector<16x256xf32>
    %1179 = arith.addf %1166, %1178 : vector<16x256xf32>
    %c102_222 = arith.constant 102 : index
    %1180 = memref.load %arg5[%c102_222] : memref<120xf32, #tpu.memory_space<smem>>
    %1181 = vector.broadcast %1180 : f32 to vector<16x256xf32>
    %1182 = arith.mulf %1181, %1171 : vector<16x256xf32>
    %1183 = arith.addf %1170, %1182 : vector<16x256xf32>
    %c239_i32_223 = arith.constant 239 : i32
    %1184 = tpu.dynamic_rotate %1145 by %c239_i32_223 dim 1 : vector<16x256xf32>, i32 -> vector<16x256xf32>
    %c23_224 = arith.constant 23 : index
    %1185 = memref.load %arg5[%c23_224] : memref<120xf32, #tpu.memory_space<smem>>
    %1186 = vector.broadcast %1185 : f32 to vector<16x256xf32>
    %1187 = arith.mulf %1186, %1184 : vector<16x256xf32>
    %1188 = arith.addf %1175, %1187 : vector<16x256xf32>
    %c63_225 = arith.constant 63 : index
    %1189 = memref.load %arg5[%c63_225] : memref<120xf32, #tpu.memory_space<smem>>
    %1190 = vector.broadcast %1189 : f32 to vector<16x256xf32>
    %1191 = arith.mulf %1190, %1184 : vector<16x256xf32>
    %1192 = arith.addf %1179, %1191 : vector<16x256xf32>
    %c103_226 = arith.constant 103 : index
    %1193 = memref.load %arg5[%c103_226] : memref<120xf32, #tpu.memory_space<smem>>
    %1194 = vector.broadcast %1193 : f32 to vector<16x256xf32>
    %1195 = arith.mulf %1194, %1184 : vector<16x256xf32>
    %1196 = arith.addf %1183, %1195 : vector<16x256xf32>
    %c3_227 = arith.constant 3 : index
    %c0_228 = arith.constant 0 : index
    %c0_229 = arith.constant 0 : index
    %1197 = vector.load %arg10[%c3_227, %c0_228, %c0_229] : memref<5x16x256xf32, #tpu.memory_space<vmem>>, vector<1x16x256xf32>
    %1198 = vector.shape_cast %1197 : vector<1x16x256xf32> to vector<16x256xf32>
    %c24_230 = arith.constant 24 : index
    %1199 = memref.load %arg5[%c24_230] : memref<120xf32, #tpu.memory_space<smem>>
    %1200 = vector.broadcast %1199 : f32 to vector<16x256xf32>
    %1201 = arith.mulf %1200, %1198 : vector<16x256xf32>
    %1202 = arith.addf %1188, %1201 : vector<16x256xf32>
    %c64_231 = arith.constant 64 : index
    %1203 = memref.load %arg5[%c64_231] : memref<120xf32, #tpu.memory_space<smem>>
    %1204 = vector.broadcast %1203 : f32 to vector<16x256xf32>
    %1205 = arith.mulf %1204, %1198 : vector<16x256xf32>
    %1206 = arith.addf %1192, %1205 : vector<16x256xf32>
    %c104_232 = arith.constant 104 : index
    %1207 = memref.load %arg5[%c104_232] : memref<120xf32, #tpu.memory_space<smem>>
    %1208 = vector.broadcast %1207 : f32 to vector<16x256xf32>
    %1209 = arith.mulf %1208, %1198 : vector<16x256xf32>
    %1210 = arith.addf %1196, %1209 : vector<16x256xf32>
    %c255_i32_233 = arith.constant 255 : i32
    %1211 = tpu.dynamic_rotate %1198 by %c255_i32_233 dim 1 : vector<16x256xf32>, i32 -> vector<16x256xf32>
    %c25_234 = arith.constant 25 : index
    %1212 = memref.load %arg5[%c25_234] : memref<120xf32, #tpu.memory_space<smem>>
    %1213 = vector.broadcast %1212 : f32 to vector<16x256xf32>
    %1214 = arith.mulf %1213, %1211 : vector<16x256xf32>
    %1215 = arith.addf %1202, %1214 : vector<16x256xf32>
    %c65_235 = arith.constant 65 : index
    %1216 = memref.load %arg5[%c65_235] : memref<120xf32, #tpu.memory_space<smem>>
    %1217 = vector.broadcast %1216 : f32 to vector<16x256xf32>
    %1218 = arith.mulf %1217, %1211 : vector<16x256xf32>
    %1219 = arith.addf %1206, %1218 : vector<16x256xf32>
    %c105_236 = arith.constant 105 : index
    %1220 = memref.load %arg5[%c105_236] : memref<120xf32, #tpu.memory_space<smem>>
    %1221 = vector.broadcast %1220 : f32 to vector<16x256xf32>
    %1222 = arith.mulf %1221, %1211 : vector<16x256xf32>
    %1223 = arith.addf %1210, %1222 : vector<16x256xf32>
    %c240_i32_237 = arith.constant 240 : i32
    %1224 = tpu.dynamic_rotate %1198 by %c240_i32_237 dim 1 : vector<16x256xf32>, i32 -> vector<16x256xf32>
    %c26_238 = arith.constant 26 : index
    %1225 = memref.load %arg5[%c26_238] : memref<120xf32, #tpu.memory_space<smem>>
    %1226 = vector.broadcast %1225 : f32 to vector<16x256xf32>
    %1227 = arith.mulf %1226, %1224 : vector<16x256xf32>
    %1228 = arith.addf %1215, %1227 : vector<16x256xf32>
    %c66_239 = arith.constant 66 : index
    %1229 = memref.load %arg5[%c66_239] : memref<120xf32, #tpu.memory_space<smem>>
    %1230 = vector.broadcast %1229 : f32 to vector<16x256xf32>
    %1231 = arith.mulf %1230, %1224 : vector<16x256xf32>
    %1232 = arith.addf %1219, %1231 : vector<16x256xf32>
    %c106_240 = arith.constant 106 : index
    %1233 = memref.load %arg5[%c106_240] : memref<120xf32, #tpu.memory_space<smem>>
    %1234 = vector.broadcast %1233 : f32 to vector<16x256xf32>
    %1235 = arith.mulf %1234, %1224 : vector<16x256xf32>
    %1236 = arith.addf %1223, %1235 : vector<16x256xf32>
    %c239_i32_241 = arith.constant 239 : i32
    %1237 = tpu.dynamic_rotate %1198 by %c239_i32_241 dim 1 : vector<16x256xf32>, i32 -> vector<16x256xf32>
    %c27_242 = arith.constant 27 : index
    %1238 = memref.load %arg5[%c27_242] : memref<120xf32, #tpu.memory_space<smem>>
    %1239 = vector.broadcast %1238 : f32 to vector<16x256xf32>
    %1240 = arith.mulf %1239, %1237 : vector<16x256xf32>
    %1241 = arith.addf %1228, %1240 : vector<16x256xf32>
    %c67_243 = arith.constant 67 : index
    %1242 = memref.load %arg5[%c67_243] : memref<120xf32, #tpu.memory_space<smem>>
    %1243 = vector.broadcast %1242 : f32 to vector<16x256xf32>
    %1244 = arith.mulf %1243, %1237 : vector<16x256xf32>
    %1245 = arith.addf %1232, %1244 : vector<16x256xf32>
    %c107_244 = arith.constant 107 : index
    %1246 = memref.load %arg5[%c107_244] : memref<120xf32, #tpu.memory_space<smem>>
    %1247 = vector.broadcast %1246 : f32 to vector<16x256xf32>
    %1248 = arith.mulf %1247, %1237 : vector<16x256xf32>
    %1249 = arith.addf %1236, %1248 : vector<16x256xf32>
    %c15_i32_245 = arith.constant 15 : i32
    %1250 = tpu.dynamic_rotate %1198 by %c15_i32_245 dim 0 : vector<16x256xf32>, i32 -> vector<16x256xf32>
    %c28_246 = arith.constant 28 : index
    %1251 = memref.load %arg5[%c28_246] : memref<120xf32, #tpu.memory_space<smem>>
    %1252 = vector.broadcast %1251 : f32 to vector<16x256xf32>
    %1253 = arith.mulf %1252, %1250 : vector<16x256xf32>
    %1254 = arith.addf %1241, %1253 : vector<16x256xf32>
    %c68_247 = arith.constant 68 : index
    %1255 = memref.load %arg5[%c68_247] : memref<120xf32, #tpu.memory_space<smem>>
    %1256 = vector.broadcast %1255 : f32 to vector<16x256xf32>
    %1257 = arith.mulf %1256, %1250 : vector<16x256xf32>
    %1258 = arith.addf %1245, %1257 : vector<16x256xf32>
    %c108_248 = arith.constant 108 : index
    %1259 = memref.load %arg5[%c108_248] : memref<120xf32, #tpu.memory_space<smem>>
    %1260 = vector.broadcast %1259 : f32 to vector<16x256xf32>
    %1261 = arith.mulf %1260, %1250 : vector<16x256xf32>
    %1262 = arith.addf %1249, %1261 : vector<16x256xf32>
    %c255_i32_249 = arith.constant 255 : i32
    %1263 = tpu.dynamic_rotate %1250 by %c255_i32_249 dim 1 : vector<16x256xf32>, i32 -> vector<16x256xf32>
    %c29_250 = arith.constant 29 : index
    %1264 = memref.load %arg5[%c29_250] : memref<120xf32, #tpu.memory_space<smem>>
    %1265 = vector.broadcast %1264 : f32 to vector<16x256xf32>
    %1266 = arith.mulf %1265, %1263 : vector<16x256xf32>
    %1267 = arith.addf %1254, %1266 : vector<16x256xf32>
    %c69_251 = arith.constant 69 : index
    %1268 = memref.load %arg5[%c69_251] : memref<120xf32, #tpu.memory_space<smem>>
    %1269 = vector.broadcast %1268 : f32 to vector<16x256xf32>
    %1270 = arith.mulf %1269, %1263 : vector<16x256xf32>
    %1271 = arith.addf %1258, %1270 : vector<16x256xf32>
    %c109_252 = arith.constant 109 : index
    %1272 = memref.load %arg5[%c109_252] : memref<120xf32, #tpu.memory_space<smem>>
    %1273 = vector.broadcast %1272 : f32 to vector<16x256xf32>
    %1274 = arith.mulf %1273, %1263 : vector<16x256xf32>
    %1275 = arith.addf %1262, %1274 : vector<16x256xf32>
    %c240_i32_253 = arith.constant 240 : i32
    %1276 = tpu.dynamic_rotate %1250 by %c240_i32_253 dim 1 : vector<16x256xf32>, i32 -> vector<16x256xf32>
    %c30_254 = arith.constant 30 : index
    %1277 = memref.load %arg5[%c30_254] : memref<120xf32, #tpu.memory_space<smem>>
    %1278 = vector.broadcast %1277 : f32 to vector<16x256xf32>
    %1279 = arith.mulf %1278, %1276 : vector<16x256xf32>
    %1280 = arith.addf %1267, %1279 : vector<16x256xf32>
    %c70_255 = arith.constant 70 : index
    %1281 = memref.load %arg5[%c70_255] : memref<120xf32, #tpu.memory_space<smem>>
    %1282 = vector.broadcast %1281 : f32 to vector<16x256xf32>
    %1283 = arith.mulf %1282, %1276 : vector<16x256xf32>
    %1284 = arith.addf %1271, %1283 : vector<16x256xf32>
    %c110_256 = arith.constant 110 : index
    %1285 = memref.load %arg5[%c110_256] : memref<120xf32, #tpu.memory_space<smem>>
    %1286 = vector.broadcast %1285 : f32 to vector<16x256xf32>
    %1287 = arith.mulf %1286, %1276 : vector<16x256xf32>
    %1288 = arith.addf %1275, %1287 : vector<16x256xf32>
    %c239_i32_257 = arith.constant 239 : i32
    %1289 = tpu.dynamic_rotate %1250 by %c239_i32_257 dim 1 : vector<16x256xf32>, i32 -> vector<16x256xf32>
    %c31_258 = arith.constant 31 : index
    %1290 = memref.load %arg5[%c31_258] : memref<120xf32, #tpu.memory_space<smem>>
    %1291 = vector.broadcast %1290 : f32 to vector<16x256xf32>
    %1292 = arith.mulf %1291, %1289 : vector<16x256xf32>
    %1293 = arith.addf %1280, %1292 : vector<16x256xf32>
    %c71_259 = arith.constant 71 : index
    %1294 = memref.load %arg5[%c71_259] : memref<120xf32, #tpu.memory_space<smem>>
    %1295 = vector.broadcast %1294 : f32 to vector<16x256xf32>
    %1296 = arith.mulf %1295, %1289 : vector<16x256xf32>
    %1297 = arith.addf %1284, %1296 : vector<16x256xf32>
    %c111_260 = arith.constant 111 : index
    %1298 = memref.load %arg5[%c111_260] : memref<120xf32, #tpu.memory_space<smem>>
    %1299 = vector.broadcast %1298 : f32 to vector<16x256xf32>
    %1300 = arith.mulf %1299, %1289 : vector<16x256xf32>
    %1301 = arith.addf %1288, %1300 : vector<16x256xf32>
    %c4_261 = arith.constant 4 : index
    %c0_262 = arith.constant 0 : index
    %c0_263 = arith.constant 0 : index
    %1302 = vector.load %arg10[%c4_261, %c0_262, %c0_263] : memref<5x16x256xf32, #tpu.memory_space<vmem>>, vector<1x16x256xf32>
    %1303 = vector.shape_cast %1302 : vector<1x16x256xf32> to vector<16x256xf32>
    %c32_264 = arith.constant 32 : index
    %1304 = memref.load %arg5[%c32_264] : memref<120xf32, #tpu.memory_space<smem>>
    %1305 = vector.broadcast %1304 : f32 to vector<16x256xf32>
    %1306 = arith.mulf %1305, %1303 : vector<16x256xf32>
    %1307 = arith.addf %1293, %1306 : vector<16x256xf32>
    %c72_265 = arith.constant 72 : index
    %1308 = memref.load %arg5[%c72_265] : memref<120xf32, #tpu.memory_space<smem>>
    %1309 = vector.broadcast %1308 : f32 to vector<16x256xf32>
    %1310 = arith.mulf %1309, %1303 : vector<16x256xf32>
    %1311 = arith.addf %1297, %1310 : vector<16x256xf32>
    %c112_266 = arith.constant 112 : index
    %1312 = memref.load %arg5[%c112_266] : memref<120xf32, #tpu.memory_space<smem>>
    %1313 = vector.broadcast %1312 : f32 to vector<16x256xf32>
    %1314 = arith.mulf %1313, %1303 : vector<16x256xf32>
    %1315 = arith.addf %1301, %1314 : vector<16x256xf32>
    %c255_i32_267 = arith.constant 255 : i32
    %1316 = tpu.dynamic_rotate %1303 by %c255_i32_267 dim 1 : vector<16x256xf32>, i32 -> vector<16x256xf32>
    %c33_268 = arith.constant 33 : index
    %1317 = memref.load %arg5[%c33_268] : memref<120xf32, #tpu.memory_space<smem>>
    %1318 = vector.broadcast %1317 : f32 to vector<16x256xf32>
    %1319 = arith.mulf %1318, %1316 : vector<16x256xf32>
    %1320 = arith.addf %1307, %1319 : vector<16x256xf32>
    %c73_269 = arith.constant 73 : index
    %1321 = memref.load %arg5[%c73_269] : memref<120xf32, #tpu.memory_space<smem>>
    %1322 = vector.broadcast %1321 : f32 to vector<16x256xf32>
    %1323 = arith.mulf %1322, %1316 : vector<16x256xf32>
    %1324 = arith.addf %1311, %1323 : vector<16x256xf32>
    %c113_270 = arith.constant 113 : index
    %1325 = memref.load %arg5[%c113_270] : memref<120xf32, #tpu.memory_space<smem>>
    %1326 = vector.broadcast %1325 : f32 to vector<16x256xf32>
    %1327 = arith.mulf %1326, %1316 : vector<16x256xf32>
    %1328 = arith.addf %1315, %1327 : vector<16x256xf32>
    %c240_i32_271 = arith.constant 240 : i32
    %1329 = tpu.dynamic_rotate %1303 by %c240_i32_271 dim 1 : vector<16x256xf32>, i32 -> vector<16x256xf32>
    %c34_272 = arith.constant 34 : index
    %1330 = memref.load %arg5[%c34_272] : memref<120xf32, #tpu.memory_space<smem>>
    %1331 = vector.broadcast %1330 : f32 to vector<16x256xf32>
    %1332 = arith.mulf %1331, %1329 : vector<16x256xf32>
    %1333 = arith.addf %1320, %1332 : vector<16x256xf32>
    %c74_273 = arith.constant 74 : index
    %1334 = memref.load %arg5[%c74_273] : memref<120xf32, #tpu.memory_space<smem>>
    %1335 = vector.broadcast %1334 : f32 to vector<16x256xf32>
    %1336 = arith.mulf %1335, %1329 : vector<16x256xf32>
    %1337 = arith.addf %1324, %1336 : vector<16x256xf32>
    %c114_274 = arith.constant 114 : index
    %1338 = memref.load %arg5[%c114_274] : memref<120xf32, #tpu.memory_space<smem>>
    %1339 = vector.broadcast %1338 : f32 to vector<16x256xf32>
    %1340 = arith.mulf %1339, %1329 : vector<16x256xf32>
    %1341 = arith.addf %1328, %1340 : vector<16x256xf32>
    %c239_i32_275 = arith.constant 239 : i32
    %1342 = tpu.dynamic_rotate %1303 by %c239_i32_275 dim 1 : vector<16x256xf32>, i32 -> vector<16x256xf32>
    %c35_276 = arith.constant 35 : index
    %1343 = memref.load %arg5[%c35_276] : memref<120xf32, #tpu.memory_space<smem>>
    %1344 = vector.broadcast %1343 : f32 to vector<16x256xf32>
    %1345 = arith.mulf %1344, %1342 : vector<16x256xf32>
    %1346 = arith.addf %1333, %1345 : vector<16x256xf32>
    %c75_277 = arith.constant 75 : index
    %1347 = memref.load %arg5[%c75_277] : memref<120xf32, #tpu.memory_space<smem>>
    %1348 = vector.broadcast %1347 : f32 to vector<16x256xf32>
    %1349 = arith.mulf %1348, %1342 : vector<16x256xf32>
    %1350 = arith.addf %1337, %1349 : vector<16x256xf32>
    %c115_278 = arith.constant 115 : index
    %1351 = memref.load %arg5[%c115_278] : memref<120xf32, #tpu.memory_space<smem>>
    %1352 = vector.broadcast %1351 : f32 to vector<16x256xf32>
    %1353 = arith.mulf %1352, %1342 : vector<16x256xf32>
    %1354 = arith.addf %1341, %1353 : vector<16x256xf32>
    %c15_i32_279 = arith.constant 15 : i32
    %1355 = tpu.dynamic_rotate %1303 by %c15_i32_279 dim 0 : vector<16x256xf32>, i32 -> vector<16x256xf32>
    %c36_280 = arith.constant 36 : index
    %1356 = memref.load %arg5[%c36_280] : memref<120xf32, #tpu.memory_space<smem>>
    %1357 = vector.broadcast %1356 : f32 to vector<16x256xf32>
    %1358 = arith.mulf %1357, %1355 : vector<16x256xf32>
    %1359 = arith.addf %1346, %1358 : vector<16x256xf32>
    %c76_281 = arith.constant 76 : index
    %1360 = memref.load %arg5[%c76_281] : memref<120xf32, #tpu.memory_space<smem>>
    %1361 = vector.broadcast %1360 : f32 to vector<16x256xf32>
    %1362 = arith.mulf %1361, %1355 : vector<16x256xf32>
    %1363 = arith.addf %1350, %1362 : vector<16x256xf32>
    %c116_282 = arith.constant 116 : index
    %1364 = memref.load %arg5[%c116_282] : memref<120xf32, #tpu.memory_space<smem>>
    %1365 = vector.broadcast %1364 : f32 to vector<16x256xf32>
    %1366 = arith.mulf %1365, %1355 : vector<16x256xf32>
    %1367 = arith.addf %1354, %1366 : vector<16x256xf32>
    %c255_i32_283 = arith.constant 255 : i32
    %1368 = tpu.dynamic_rotate %1355 by %c255_i32_283 dim 1 : vector<16x256xf32>, i32 -> vector<16x256xf32>
    %c37_284 = arith.constant 37 : index
    %1369 = memref.load %arg5[%c37_284] : memref<120xf32, #tpu.memory_space<smem>>
    %1370 = vector.broadcast %1369 : f32 to vector<16x256xf32>
    %1371 = arith.mulf %1370, %1368 : vector<16x256xf32>
    %1372 = arith.addf %1359, %1371 : vector<16x256xf32>
    %c77_285 = arith.constant 77 : index
    %1373 = memref.load %arg5[%c77_285] : memref<120xf32, #tpu.memory_space<smem>>
    %1374 = vector.broadcast %1373 : f32 to vector<16x256xf32>
    %1375 = arith.mulf %1374, %1368 : vector<16x256xf32>
    %1376 = arith.addf %1363, %1375 : vector<16x256xf32>
    %c117_286 = arith.constant 117 : index
    %1377 = memref.load %arg5[%c117_286] : memref<120xf32, #tpu.memory_space<smem>>
    %1378 = vector.broadcast %1377 : f32 to vector<16x256xf32>
    %1379 = arith.mulf %1378, %1368 : vector<16x256xf32>
    %1380 = arith.addf %1367, %1379 : vector<16x256xf32>
    %c240_i32_287 = arith.constant 240 : i32
    %1381 = tpu.dynamic_rotate %1355 by %c240_i32_287 dim 1 : vector<16x256xf32>, i32 -> vector<16x256xf32>
    %c38_288 = arith.constant 38 : index
    %1382 = memref.load %arg5[%c38_288] : memref<120xf32, #tpu.memory_space<smem>>
    %1383 = vector.broadcast %1382 : f32 to vector<16x256xf32>
    %1384 = arith.mulf %1383, %1381 : vector<16x256xf32>
    %1385 = arith.addf %1372, %1384 : vector<16x256xf32>
    %c78_289 = arith.constant 78 : index
    %1386 = memref.load %arg5[%c78_289] : memref<120xf32, #tpu.memory_space<smem>>
    %1387 = vector.broadcast %1386 : f32 to vector<16x256xf32>
    %1388 = arith.mulf %1387, %1381 : vector<16x256xf32>
    %1389 = arith.addf %1376, %1388 : vector<16x256xf32>
    %c118_290 = arith.constant 118 : index
    %1390 = memref.load %arg5[%c118_290] : memref<120xf32, #tpu.memory_space<smem>>
    %1391 = vector.broadcast %1390 : f32 to vector<16x256xf32>
    %1392 = arith.mulf %1391, %1381 : vector<16x256xf32>
    %1393 = arith.addf %1380, %1392 : vector<16x256xf32>
    %c239_i32_291 = arith.constant 239 : i32
    %1394 = tpu.dynamic_rotate %1355 by %c239_i32_291 dim 1 : vector<16x256xf32>, i32 -> vector<16x256xf32>
    %c39_292 = arith.constant 39 : index
    %1395 = memref.load %arg5[%c39_292] : memref<120xf32, #tpu.memory_space<smem>>
    %1396 = vector.broadcast %1395 : f32 to vector<16x256xf32>
    %1397 = arith.mulf %1396, %1394 : vector<16x256xf32>
    %1398 = arith.addf %1385, %1397 : vector<16x256xf32>
    %c79_293 = arith.constant 79 : index
    %1399 = memref.load %arg5[%c79_293] : memref<120xf32, #tpu.memory_space<smem>>
    %1400 = vector.broadcast %1399 : f32 to vector<16x256xf32>
    %1401 = arith.mulf %1400, %1394 : vector<16x256xf32>
    %1402 = arith.addf %1389, %1401 : vector<16x256xf32>
    %c119_294 = arith.constant 119 : index
    %1403 = memref.load %arg5[%c119_294] : memref<120xf32, #tpu.memory_space<smem>>
    %1404 = vector.broadcast %1403 : f32 to vector<16x256xf32>
    %1405 = arith.mulf %1404, %1394 : vector<16x256xf32>
    %1406 = arith.addf %1393, %1405 : vector<16x256xf32>
    %cst_295 = arith.constant 0.000000e+00 : f32
    %1407 = vector.broadcast %cst_295 : f32 to vector<16x256xf32>
    %1408 = arith.maximumf %1398, %1407 : vector<16x256xf32>
    %c0_296 = arith.constant 0 : index
    %c0_297 = arith.constant 0 : index
    %c0_298 = arith.constant 0 : index
    %c0_299 = arith.constant 0 : index
    %1409 = vector.load %arg8[%c0_296, %c0_297, %c0_298, %c0_299] : memref<1x3x16x256xf32, #tpu.memory_space<vmem>>, vector<1x1x16x256xf32>
    %1410 = vector.shape_cast %1409 : vector<1x1x16x256xf32> to vector<16x256xf32>
    %1411 = vector.shape_cast %1408 : vector<16x256xf32> to vector<1x1x16x256xf32>
    tpu.vector_store %arg8[%c0_296, %c0_297, %c0_298, %c0_299], %1411 {strides = array<i32>} : memref<1x3x16x256xf32, #tpu.memory_space<vmem>>, vector<1x1x16x256xf32>,
    %cst_300 = arith.constant 0.000000e+00 : f32
    %1412 = vector.broadcast %cst_300 : f32 to vector<16x256xf32>
    %1413 = arith.maximumf %1402, %1412 : vector<16x256xf32>
    %c0_301 = arith.constant 0 : index
    %c1_302 = arith.constant 1 : index
    %c0_303 = arith.constant 0 : index
    %c0_304 = arith.constant 0 : index
    %1414 = vector.load %arg8[%c0_301, %c1_302, %c0_303, %c0_304] : memref<1x3x16x256xf32, #tpu.memory_space<vmem>>, vector<1x1x16x256xf32>
    %1415 = vector.shape_cast %1414 : vector<1x1x16x256xf32> to vector<16x256xf32>
    %1416 = vector.shape_cast %1413 : vector<16x256xf32> to vector<1x1x16x256xf32>
    tpu.vector_store %arg8[%c0_301, %c1_302, %c0_303, %c0_304], %1416 {strides = array<i32>} : memref<1x3x16x256xf32, #tpu.memory_space<vmem>>, vector<1x1x16x256xf32>,
    %cst_305 = arith.constant 0.000000e+00 : f32
    %1417 = vector.broadcast %cst_305 : f32 to vector<16x256xf32>
    %1418 = arith.maximumf %1406, %1417 : vector<16x256xf32>
    %c0_306 = arith.constant 0 : index
    %c2_307 = arith.constant 2 : index
    %c0_308 = arith.constant 0 : index
    %c0_309 = arith.constant 0 : index
    %1419 = vector.load %arg8[%c0_306, %c2_307, %c0_308, %c0_309] : memref<1x3x16x256xf32, #tpu.memory_space<vmem>>, vector<1x1x16x256xf32>
    %1420 = vector.shape_cast %1419 : vector<1x1x16x256xf32> to vector<16x256xf32>
    %1421 = vector.shape_cast %1418 : vector<16x256xf32> to vector<1x1x16x256xf32>
    tpu.vector_store %arg8[%c0_306, %c2_307, %c0_308, %c0_309], %1421 {strides = array<i32>} : memref<1x3x16x256xf32, #tpu.memory_space<vmem>>, vector<1x1x16x256xf32>,
    return
  }
  func.func @transform_0(%arg0: i32) -> i32 {
    %c0_i32 = arith.constant 0 : i32
    %c0_i32_0 = arith.constant 0 : i32
    return %c0_i32 : i32
  }
  func.func @transform_1(%arg0: i32) -> i32 {
    %c0_i32 = arith.constant 0 : i32
    %c0_i32_0 = arith.constant 0 : i32
    return %c0_i32 : i32
  }
  func.func @transform_2(%arg0: i32) -> i32 {
    %c0_i32 = arith.constant 0 : i32
    %c0_i32_0 = arith.constant 0 : i32
    return %c0_i32 : i32
  }
  func.func @transform_3(%arg0: i32) -> i32 {
    %c0_i32 = arith.constant 0 : i32
    %c0_i32_0 = arith.constant 0 : i32
    return %c0_i32 : i32
  }
  func.func @transform_4(%arg0: i32) -> i32 {
    %c0_i32 = arith.constant 0 : i32
    %c0_i32_0 = arith.constant 0 : i32
    return %c0_i32 : i32
  }
  func.func @transform_5(%arg0: i32) -> i32 {
    %c0_i32 = arith.constant 0 : i32
    %c0_i32_0 = arith.constant 0 : i32
    return %c0_i32 : i32
  }
  func.func @transform_6(%arg0: i32) -> (i32, i32, i32) {
    %c0_i32 = arith.constant 0 : i32
    %c0_i32_0 = arith.constant 0 : i32
    %c0_i32_1 = arith.constant 0 : i32
    return %arg0, %c0_i32, %c0_i32_0 : i32, i32, i32
  }
  func.func @transform_7(%arg0: i32) -> (i32, i32, i32, i32) {
    %c0_i32 = arith.constant 0 : i32
    %c0_i32_0 = arith.constant 0 : i32
    %c0_i32_1 = arith.constant 0 : i32
    %c0_i32_2 = arith.constant 0 : i32
    return %arg0, %c0_i32, %c0_i32_0, %c0_i32_1 : i32, i32, i32, i32
  }
}

</mosaic_0001>

<llo_original>
// kernel: tpu_custom_call.1
$region0: #{tpu_custom_call.1}
  #allocation0 [shape = 'u32[]', space=smem, size = 0x4, offset = 0x4, fixed_abs, tag = 'smem constant byte address 0x4 - core index']
  #allocation1 [shape = 'u32[144,128]{1,0:T(1,128)}', space=vmem, size = 0x12000, scoped, tag = 'internal scratch']
  #allocation2 [shape = 'f32[4,16,256]{2,1,0:T(8,128)}', space=vmem, size = 0x10000, scoped, tag = 'scratch operand']
  #allocation3 [shape = 'f32[5,16,256]{2,1,0:T(8,128)}', space=vmem, size = 0x14000, scoped, tag = 'scratch operand']
  %s0 = inlined_call_operand.hbm [shape: f32[32], index: 0, kind: input, shape index: {}]
  %s1 = inlined_call_operand.vmem [shape: f32[4], index: 1, kind: input, shape index: {}]
  %s2 = inlined_call_operand.vmem [shape: f32[160], index: 2, kind: input, shape index: {}]
  %s3 = inlined_call_operand.vmem [shape: f32[5], index: 3, kind: input, shape index: {}]
  %s4 = inlined_call_operand.vmem [shape: f32[120], index: 4, kind: input, shape index: {}]
  %s5 = inlined_call_operand.vmem [shape: f32[3], index: 5, kind: input, shape index: {}]
  %s6 = inlined_call_operand.hbm [shape: f32[2,16,256], index: 6, kind: input, shape index: {}]
  %s7 = inlined_call_operand.hbm [shape: f32[2,3,16,256], index: 7, kind: output, shape index: {}]
  %s8 = sld [smem:[#allocation0]]
  $region89: #{tpu_custom_call.1} parent=0
    _
  %s10 = ssub.s32 1, %s8
  %s11 = scalar_select 0, %s10, %s8
  $region1: #{tpu_custom_call.1} parent=0
    #allocation4 [shape = 'u8[512]{0}', space=smem, size = 0x200, scoped, tag = 'input window, operand 0, single buffered']
    #allocation5 [shape = 's32[2]{0}', space=sflag, size = 0x8, scoped, tag = 'scoped memory for tpu_custom_call.1']
    #allocation6 [shape = 's32[2]{0}', space=sflag, size = 0x8, scoped, tag = 'scoped memory for tpu_custom_call.1']
    #allocation7 [shape = 's32[2]{0}', space=sflag, size = 0x8, scoped, tag = 'scoped memory for tpu_custom_call.1']
    #allocation8 [shape = 's32[2]{0}', space=sflag, size = 0x8, scoped, tag = 'scoped memory for tpu_custom_call.1']
    #allocation9 [shape = 'u8[512]{0}', space=smem, size = 0x200, scoped, tag = 'input window, operand 1, single buffered']
    #allocation10 [shape = 'u8[1024]{0}', space=smem, size = 0x400, scoped, tag = 'input window, operand 2, single buffered']
    #allocation11 [shape = 's32[1]{0}', space=sflag, size = 0x4, scoped, tag = 'scoped memory for tpu_custom_call.1']
    #allocation12 [shape = 'u8[512]{0}', space=smem, size = 0x200, scoped, tag = 'input window, operand 3, single buffered']
    #allocation13 [shape = 'u8[512]{0}', space=smem, size = 0x200, scoped, tag = 'input window, operand 4, single buffered']
    #allocation14 [shape = 's32[1]{0}', space=sflag, size = 0x4, scoped, tag = 'scoped memory for tpu_custom_call.1']
    #allocation15 [shape = 'u8[512]{0}', space=smem, size = 0x200, scoped, tag = 'input window, operand 5, single buffered']
    #allocation16 [shape = 'u8[32768]{0}', space=vmem, size = 0x8000, scoped, tag = 'input window, operand 6']
    #allocation17 [shape = 'u8[98304]{0}', space=vmem, size = 0x18000, scoped, tag = 'output window, operand 0']
    %12 = vsyncpa [#allocation7], 0
    %13 = vsyncpa [#allocation8], 0
    %14 = vsyncpa [#allocation11], 0
    %15 = vsyncpa [#allocation14], 0
    %16 = vsyncpa [#allocation5], 0
    %s17 = scalar_lea.sflag [#allocation5], 1
    %18 = vsyncpa %s17, 0
    %19 = vsyncpa [#allocation6], 0
    %s20 = scalar_lea.sflag [#allocation6], 1
    %21 = vsyncpa %s20, 0
    loop: start=0, step=1, limit=4
    $region2: #{tpu_custom_call.1} parent=1 // loop_pre_header
      _
    $region3: #{tpu_custom_call.1} parent=1 // loop_header
      %s23 = sphi 0, %s27
      %p24 = scmp.ge.s32.totalorder %s23, 4
      %s31 = sphi 0, %s31
      %s33 = sphi 0, %s31
      %s34 = sphi 0, %s33
      %s48 = sphi 0, %s34
      %s52 = sphi 0, %s52
      %s54 = sphi 0, %s52
      %s55 = sphi 0, %s54
      %s69 = sphi 0, %s55
      %s73 = sphi 0, %s73
      %s75 = sphi 0, %s73
      %s76 = sphi 0, %s75
      %s90 = sphi 0, %s76
      %s94 = sphi 0, %s94
      %s96 = sphi 0, %s94
      %s97 = sphi 0, %s96
      %s111 = sphi 0, %s97
      %s115 = sphi 0, %s115
      %s117 = sphi 0, %s115
      %s118 = sphi 0, %s117
      %s132 = sphi 0, %s118
      %s136 = sphi 0, %s136
      %s138 = sphi 0, %s136
      %s139 = sphi 0, %s138
      %s153 = sphi 0, %s139
      %s159 = sphi 0, %s161
      %s162 = sphi 0, %s159
      %s163 = sphi 0, %s162
      %s179 = sphi 0, %s163
      %s185 = sphi 0, %s187
      %s188 = sphi 0, %s185
      %s189 = sphi 0, %s188
      %s205 = sphi 0, %s189
    $region4: #{tpu_custom_call.1} parent=1 // loop_header_branch
      %26 = sbr.rel (%p24) target = $region8
    $region5: #{tpu_custom_call.1} parent=1 // loop_body
      %s28 = ssub.s32 %s23, 1
      %s29 = ssub.s32 %s23, 2
      %s30 = sadd.s32 %s23, 1
      %s32 = sadd.s32 %s31, 1
      %p35 = scmp.eq.s32.totalorder %s23, 1
      %p36 = scmp.ne.s32.totalorder %s31, %s33
      %p37 = scmp.eq.s32.totalorder %s23, 0
      %p38 = por %p36, %p37
      %p39 = scmp.ne.s32.totalorder %s31, %s33
      %p40 = scmp.eq.s32.totalorder %s28, 1
      %p41 = por %p39, %p40
      %p42 = scmp.ne.s32.totalorder %s33, %s34
      %p43 = scmp.eq.s32.totalorder %s28, 0
      %p44 = por %p42, %p43
      %p45 = scmp.ne.s32.totalorder %s33, %s34
      %p46 = scmp.eq.s32.totalorder %s29, 1
      %p47 = por %p45, %p46
      %p49 = scmp.ne.s32.totalorder %s34, %s48
      %p50 = scmp.eq.s32.totalorder %s29, 0
      %p51 = por %p49, %p50
      %s53 = sadd.s32 %s52, 1
      %p56 = scmp.eq.s32.totalorder %s23, 1
      %p57 = scmp.ne.s32.totalorder %s52, %s54
      %p58 = scmp.eq.s32.totalorder %s23, 0
      %p59 = por %p57, %p58
      %p60 = scmp.ne.s32.totalorder %s52, %s54
      %p61 = scmp.eq.s32.totalorder %s28, 1
      %p62 = por %p60, %p61
      %p63 = scmp.ne.s32.totalorder %s54, %s55
      %p64 = scmp.eq.s32.totalorder %s28, 0
      %p65 = por %p63, %p64
      %p66 = scmp.ne.s32.totalorder %s54, %s55
      %p67 = scmp.eq.s32.totalorder %s29, 1
      %p68 = por %p66, %p67
      %p70 = scmp.ne.s32.totalorder %s55, %s69
      %p71 = scmp.eq.s32.totalorder %s29, 0
      %p72 = por %p70, %p71
      %s74 = sadd.s32 %s73, 1
      %p77 = scmp.eq.s32.totalorder %s23, 1
      %p78 = scmp.ne.s32.totalorder %s73, %s75
      %p79 = scmp.eq.s32.totalorder %s23, 0
      %p80 = por %p78, %p79
      %p81 = scmp.ne.s32.totalorder %s73, %s75
      %p82 = scmp.eq.s32.totalorder %s28, 1
      %p83 = por %p81, %p82
      %p84 = scmp.ne.s32.totalorder %s75, %s76
      %p85 = scmp.eq.s32.totalorder %s28, 0
      %p86 = por %p84, %p85
      %p87 = scmp.ne.s32.totalorder %s75, %s76
      %p88 = scmp.eq.s32.totalorder %s29, 1
      %p89 = por %p87, %p88
      %p91 = scmp.ne.s32.totalorder %s76, %s90
      %p92 = scmp.eq.s32.totalorder %s29, 0
      %p93 = por %p91, %p92
      %s95 = sadd.s32 %s94, 1
      %p98 = scmp.eq.s32.totalorder %s23, 1
      %p99 = scmp.ne.s32.totalorder %s94, %s96
      %p100 = scmp.eq.s32.totalorder %s23, 0
      %p101 = por %p99, %p100
      %p102 = scmp.ne.s32.totalorder %s94, %s96
      %p103 = scmp.eq.s32.totalorder %s28, 1
      %p104 = por %p102, %p103
      %p105 = scmp.ne.s32.totalorder %s96, %s97
      %p106 = scmp.eq.s32.totalorder %s28, 0
      %p107 = por %p105, %p106
      %p108 = scmp.ne.s32.totalorder %s96, %s97
      %p109 = scmp.eq.s32.totalorder %s29, 1
      %p110 = por %p108, %p109
      %p112 = scmp.ne.s32.totalorder %s97, %s111
      %p113 = scmp.eq.s32.totalorder %s29, 0
      %p114 = por %p112, %p113
      %s116 = sadd.s32 %s115, 1
      %p119 = scmp.eq.s32.totalorder %s23, 1
      %p120 = scmp.ne.s32.totalorder %s115, %s117
      %p121 = scmp.eq.s32.totalorder %s23, 0
      %p122 = por %p120, %p121
      %p123 = scmp.ne.s32.totalorder %s115, %s117
      %p124 = scmp.eq.s32.totalorder %s28, 1
      %p125 = por %p123, %p124
      %p126 = scmp.ne.s32.totalorder %s117, %s118
      %p127 = scmp.eq.s32.totalorder %s28, 0
      %p128 = por %p126, %p127
      %p129 = scmp.ne.s32.totalorder %s117, %s118
      %p130 = scmp.eq.s32.totalorder %s29, 1
      %p131 = por %p129, %p130
      %p133 = scmp.ne.s32.totalorder %s118, %s132
      %p134 = scmp.eq.s32.totalorder %s29, 0
      %p135 = por %p133, %p134
      %s137 = sadd.s32 %s136, 1
      %p140 = scmp.eq.s32.totalorder %s23, 1
      %p141 = scmp.ne.s32.totalorder %s136, %s138
      %p142 = scmp.eq.s32.totalorder %s23, 0
      %p143 = por %p141, %p142
      %p144 = scmp.ne.s32.totalorder %s136, %s138
      %p145 = scmp.eq.s32.totalorder %s28, 1
      %p146 = por %p144, %p145
      %p147 = scmp.ne.s32.totalorder %s138, %s139
      %p148 = scmp.eq.s32.totalorder %s28, 0
      %p149 = por %p147, %p148
      %p150 = scmp.ne.s32.totalorder %s138, %s139
      %p151 = scmp.eq.s32.totalorder %s29, 1
      %p152 = por %p150, %p151
      %p154 = scmp.ne.s32.totalorder %s139, %s153
      %p155 = scmp.eq.s32.totalorder %s29, 0
      %p156 = por %p154, %p155
      %s157 = ssub.s32 %s23, %s30
      %p158 = scmp.eq.s32.totalorder %s157, 0
      %s160 = sadd.s32 %s159, 1
      %s161 = scalar_select %p158, %s159, %s160
      %p164 = pneg %p158
      %p165 = scmp.eq.s32.totalorder %s23, 1
      %p166 = por %p164, %p165
      %p167 = scmp.ne.s32.totalorder %s159, %s162
      %p168 = scmp.eq.s32.totalorder %s23, 0
      %p169 = por %p167, %p168
      %p170 = scmp.ne.s32.totalorder %s159, %s162
      %p171 = scmp.eq.s32.totalorder %s28, 1
      %p172 = por %p170, %p171
      %p173 = scmp.ne.s32.totalorder %s162, %s163
      %p174 = scmp.eq.s32.totalorder %s28, 0
      %p175 = por %p173, %p174
      %p176 = scmp.ne.s32.totalorder %s162, %s163
      %p177 = scmp.eq.s32.totalorder %s29, 1
      %p178 = por %p176, %p177
      %p180 = scmp.ne.s32.totalorder %s163, %s179
      %p181 = scmp.eq.s32.totalorder %s29, 0
      %p182 = por %p180, %p181
      %s183 = ssub.s32 %s23, %s30
      %p184 = scmp.eq.s32.totalorder %s183, 0
      %s186 = sadd.s32 %s185, 1
      %s187 = scalar_select %p184, %s185, %s186
      %p190 = pneg %p184
      %p191 = scmp.eq.s32.totalorder %s23, 1
      %p192 = por %p190, %p191
      %p193 = scmp.ne.s32.totalorder %s185, %s188
      %p194 = scmp.eq.s32.totalorder %s23, 0
      %p195 = por %p193, %p194
      %p196 = scmp.ne.s32.totalorder %s185, %s188
      %p197 = scmp.eq.s32.totalorder %s28, 1
      %p198 = por %p196, %p197
      %p199 = scmp.ne.s32.totalorder %s188, %s189
      %p200 = scmp.eq.s32.totalorder %s28, 0
      %p201 = por %p199, %p200
      %p202 = scmp.ne.s32.totalorder %s188, %s189
      %p203 = scmp.eq.s32.totalorder %s29, 1
      %p204 = por %p202, %p203
      %p206 = scmp.ne.s32.totalorder %s189, %s205
      %p207 = scmp.eq.s32.totalorder %s29, 0
      %p208 = por %p206, %p207
      %p209 = scmp.le.s32.totalorder 1, %s23
      %p210 = scmp.lt.s32.totalorder %s23, 3
      %p211 = pnand %p209, %p210
      %p212 = pneg %p211
      // Predicated region
      $region9: #{tpu_custom_call.1} parent=5 // pred_check
        _
      $region10: #{tpu_custom_call.1} parent=5 // pred_check_branch
        %214 = sbr.rel (%p211) target = $region12
      $region11: #{tpu_custom_call.1} parent=5 // pred_region
        %s215 = ssub.s32 %s23, 1
        // Predicated region
        $region13: #{tpu_custom_call.1} parent=11 // pred_check
          %p216 = pneg %p44
        $region14: #{tpu_custom_call.1} parent=11 // pred_check_branch
          %218 = sbr.rel (%p216) target = $region16
        $region15: #{tpu_custom_call.1} parent=11 // pred_region
          %s220 = ssub.s32 16, 16
          %221 = vsyncadd [#allocation7], %s220
          %224 = dma.hbm_to_smem %s0, 16, [#allocation4], [#allocation7]
        $region16: #{tpu_custom_call.1} parent=11 // pred_fallthru
          _
        // Predicated region
        $region17: #{tpu_custom_call.1} parent=11 // pred_check
          %p225 = pneg %p65
        $region18: #{tpu_custom_call.1} parent=11 // pred_check_branch
          %227 = sbr.rel (%p225) target = $region20
        $region19: #{tpu_custom_call.1} parent=11 // pred_region
          %s229 = ssub.s32 16, 16
          %230 = vsyncadd [#allocation8], %s229
          %s232 = sshll.u32 %s1, 4
          %s233 = int_to_ptr.vmem [resolvable:$true] %s232
          %235 = dma.vmem_to_smem %s233, 16, [#allocation9], [#allocation8]
        $region20: #{tpu_custom_call.1} parent=11 // pred_fallthru
          _
        // Predicated region
        $region21: #{tpu_custom_call.1} parent=11 // pred_check
          %p236 = pneg %p86
        $region22: #{tpu_custom_call.1} parent=11 // pred_check_branch
          %238 = sbr.rel (%p236) target = $region24
        $region23: #{tpu_custom_call.1} parent=11 // pred_region
          %s240 = ssub.s32 32, 32
          %241 = vsyncadd [#allocation11], %s240
          %s243 = sshll.u32 %s2, 4
          %s244 = int_to_ptr.vmem [resolvable:$true] %s243
          %246 = dma.vmem_to_smem %s244, 32, [#allocation10], [#allocation11]
        $region24: #{tpu_custom_call.1} parent=11 // pred_fallthru
          _
        // Predicated region
        $region25: #{tpu_custom_call.1} parent=11 // pred_check
          %p247 = pneg %p107
        $region26: #{tpu_custom_call.1} parent=11 // pred_check_branch
          %249 = sbr.rel (%p247) target = $region28
        $region27: #{tpu_custom_call.1} parent=11 // pred_region
          %s251 = ssub.s32 16, 16
          %252 = vsyncadd [#allocation11], %s251
          %s254 = sshll.u32 %s3, 4
          %s255 = int_to_ptr.vmem [resolvable:$true] %s254
          %257 = dma.vmem_to_smem %s255, 16, [#allocation12], [#allocation11]
        $region28: #{tpu_custom_call.1} parent=11 // pred_fallthru
          _
        // Predicated region
        $region29: #{tpu_custom_call.1} parent=11 // pred_check
          %p258 = pneg %p128
        $region30: #{tpu_custom_call.1} parent=11 // pred_check_branch
          %260 = sbr.rel (%p258) target = $region32
        $region31: #{tpu_custom_call.1} parent=11 // pred_region
          %s262 = ssub.s32 16, 16
          %263 = vsyncadd [#allocation14], %s262
          %s265 = sshll.u32 %s4, 4
          %s266 = int_to_ptr.vmem [resolvable:$true] %s265
          %268 = dma.vmem_to_smem %s266, 16, [#allocation13], [#allocation14]
        $region32: #{tpu_custom_call.1} parent=11 // pred_fallthru
          _
        // Predicated region
        $region33: #{tpu_custom_call.1} parent=11 // pred_check
          %p269 = pneg %p149
        $region34: #{tpu_custom_call.1} parent=11 // pred_check_branch
          %271 = sbr.rel (%p269) target = $region36
        $region35: #{tpu_custom_call.1} parent=11 // pred_region
          %s273 = ssub.s32 16, 16
          %274 = vsyncadd [#allocation14], %s273
          %s276 = sshll.u32 %s5, 4
          %s277 = int_to_ptr.vmem [resolvable:$true] %s276
          %279 = dma.vmem_to_smem %s277, 16, [#allocation15], [#allocation14]
        $region36: #{tpu_custom_call.1} parent=11 // pred_fallthru
          _
      $region12: #{tpu_custom_call.1} parent=5 // pred_fallthru
        _
      %p280 = scmp.lt.s32.totalorder %s23, 2
      // Predicated region
      $region37: #{tpu_custom_call.1} parent=5 // pred_check
        %p281 = pneg %p280
      $region38: #{tpu_custom_call.1} parent=5 // pred_check_branch
        %283 = sbr.rel (%p281) target = $region40
      $region39: #{tpu_custom_call.1} parent=5 // pred_region
        // Predicated region
        $region41: #{tpu_custom_call.1} parent=39 // pred_check
          %p284 = pneg %p169
        $region42: #{tpu_custom_call.1} parent=39 // pred_check_branch
          %286 = sbr.rel (%p284) target = $region44
        $region43: #{tpu_custom_call.1} parent=39 // pred_region
          %s287 = sand.u32 %s159, 1
          %s288 = scalar_lea.sflag [#allocation5], %s287
          %s289 = sand.u32 %s159, 1
          %s290 = smul.addr %s289, 32
          %s291 = scalar_lea.vmem [#allocation16], %s290
          %s293 = ssub.s32 512, 512
          %294 = vsyncadd %s288, %s293
          %s295 = smul.addr %s23, 4
          %s296 = smul.addr %s295, 128
          %s297 = scalar_lea.hbm %s6, %s296
          %s298 = sshll.u32 %s291, 4
          %s299 = int_to_ptr.vmem [resolvable:$true] %s298
          %304 = dma.hbm_to_vmem [thread:$0]  %s297, 512, %s299, %s288, 256, 256, 16
        $region44: #{tpu_custom_call.1} parent=39 // pred_fallthru
          _
      $region40: #{tpu_custom_call.1} parent=5 // pred_fallthru
        _
      %p305 = scmp.le.s32.totalorder 1, %s23
      %p306 = scmp.lt.s32.totalorder %s23, 3
      %p307 = pnand %p305, %p306
      %p308 = pneg %p307
      // Predicated region
      $region45: #{tpu_custom_call.1} parent=5 // pred_check
        _
      $region46: #{tpu_custom_call.1} parent=5 // pred_check_branch
        %310 = sbr.rel (%p307) target = $region48
      $region47: #{tpu_custom_call.1} parent=5 // pred_region
        %s311 = ssub.s32 %s23, 1
        // Predicated region
        $region49: #{tpu_custom_call.1} parent=47 // pred_check
          %p312 = pneg %p44
        $region50: #{tpu_custom_call.1} parent=47 // pred_check_branch
          %314 = sbr.rel (%p312) target = $region52
        $region51: #{tpu_custom_call.1} parent=47 // pred_region
          %315 = dma.done [#allocation7], 16
        $region52: #{tpu_custom_call.1} parent=47 // pred_fallthru
          _
        // Predicated region
        $region53: #{tpu_custom_call.1} parent=47 // pred_check
          %p316 = pneg %p65
        $region54: #{tpu_custom_call.1} parent=47 // pred_check_branch
          %318 = sbr.rel (%p316) target = $region56
        $region55: #{tpu_custom_call.1} parent=47 // pred_region
          %319 = dma.done [#allocation8], 16
        $region56: #{tpu_custom_call.1} parent=47 // pred_fallthru
          _
        // Predicated region
        $region57: #{tpu_custom_call.1} parent=47 // pred_check
          %p320 = pneg %p86
        $region58: #{tpu_custom_call.1} parent=47 // pred_check_branch
          %322 = sbr.rel (%p320) target = $region60
        $region59: #{tpu_custom_call.1} parent=47 // pred_region
          %323 = dma.done [#allocation11], 32
        $region60: #{tpu_custom_call.1} parent=47 // pred_fallthru
          _
        // Predicated region
        $region61: #{tpu_custom_call.1} parent=47 // pred_check
          %p324 = pneg %p107
        $region62: #{tpu_custom_call.1} parent=47 // pred_check_branch
          %326 = sbr.rel (%p324) target = $region64
        $region63: #{tpu_custom_call.1} parent=47 // pred_region
          %327 = dma.done [#allocation11], 16
        $region64: #{tpu_custom_call.1} parent=47 // pred_fallthru
          _
        // Predicated region
        $region65: #{tpu_custom_call.1} parent=47 // pred_check
          %p328 = pneg %p128
        $region66: #{tpu_custom_call.1} parent=47 // pred_check_branch
          %330 = sbr.rel (%p328) target = $region68
        $region67: #{tpu_custom_call.1} parent=47 // pred_region
          %331 = dma.done [#allocation14], 16
        $region68: #{tpu_custom_call.1} parent=47 // pred_fallthru
          _
        // Predicated region
        $region69: #{tpu_custom_call.1} parent=47 // pred_check
          %p332 = pneg %p149
        $region70: #{tpu_custom_call.1} parent=47 // pred_check_branch
          %334 = sbr.rel (%p332) target = $region72
        $region71: #{tpu_custom_call.1} parent=47 // pred_region
          %335 = dma.done [#allocation14], 16
        $region72: #{tpu_custom_call.1} parent=47 // pred_fallthru
          _
        %s336 = sand.u32 %s162, 1
        %s337 = scalar_lea.sflag [#allocation5], %s336
        %s338 = sand.u32 %s162, 1
        %s339 = smul.addr %s338, 32
        %s340 = scalar_lea.vmem [#allocation16], %s339
        // Predicated region
        $region73: #{tpu_custom_call.1} parent=47 // pred_check
          %p341 = pneg %p175
        $region74: #{tpu_custom_call.1} parent=47 // pred_check_branch
          %343 = sbr.rel (%p341) target = $region76
        $region75: #{tpu_custom_call.1} parent=47 // pred_region
          %344 = dma.done %s337, 512
        $region76: #{tpu_custom_call.1} parent=47 // pred_fallthru
          _
        %345 = sfence
        %p346 = pneg %p44
        %p347 = pneg %p41
        %p348 = pneg %p65
        %p349 = pneg %p62
        %p350 = pneg %p86
        %p351 = pneg %p83
        %p352 = pneg %p107
        %p353 = pneg %p104
        %p354 = pneg %p128
        %p355 = pneg %p125
        %p356 = pneg %p149
        %p357 = pneg %p146
        %s358 = sand.u32 %s162, 1
        %s359 = scalar_lea.sflag [#allocation5], %s358
        %s360 = sand.u32 %s162, 1
        %s361 = smul.addr %s360, 32
        %s362 = scalar_lea.vmem [#allocation16], %s361
        %p363 = pneg %p175
        %p364 = pneg %p172
        %p365 = pneg %p201
        %p366 = pneg %p198
        %s367 = sand.u32 %s188, 1
        %s368 = scalar_lea.sflag [#allocation6], %s367
        %s369 = sand.u32 %s188, 1
        %s370 = smul.addr %s369, 96
        %s371 = scalar_lea.vmem [#allocation17], %s370
        %s372 = sld [smem:[#allocation9]]
        %v373 = vstv %s372
        %s374 = sld [smem:[#allocation9 + $0x1]]
        %v375 = vstv %s374
        %s376 = sld [smem:[#allocation9 + $0x2]]
        %v377 = vstv %s376
        %s378 = sld [smem:[#allocation9 + $0x3]]
        %v379 = vstv %s378
        %v380 = vld [vmem:[%s340] sm:$0xff]
        %v381 = vld [vmem:[%s340 + $0x8] sm:$0xff]
        %v382 = vld [vmem:[%s340 + $0x10] sm:$0xff]
        %v383 = vld [vmem:[%s340 + $0x18] sm:$0xff]
        %s384 = sld [smem:[#allocation4]]
        %v385 = vstv %s384
        %v386 = vmul.f32 %v385, %v380
        %v387 = vmul.f32 %v385, %v381
        %v388 = vmul.f32 %v385, %v382
        %v389 = vmul.f32 %v385, %v383
        %v390 = vadd.f32 %v373, %v386
        %v391 = vadd.f32 %v373, %v387
        %v392 = vadd.f32 %v373, %v388
        %v393 = vadd.f32 %v373, %v389
        %s394 = sld [smem:[#allocation4 + $0x8]]
        %v395 = vstv %s394
        %v396 = vmul.f32 %v395, %v380
        %v397 = vmul.f32 %v395, %v381
        %v398 = vmul.f32 %v395, %v382
        %v399 = vmul.f32 %v395, %v383
        %v400 = vadd.f32 %v375, %v396
        %v401 = vadd.f32 %v375, %v397
        %v402 = vadd.f32 %v375, %v398
        %v403 = vadd.f32 %v375, %v399
        %s404 = sld [smem:[#allocation4 + $0x10]]
        %v405 = vstv %s404
        %v406 = vmul.f32 %v405, %v380
        %v407 = vmul.f32 %v405, %v381
        %v408 = vmul.f32 %v405, %v382
        %v409 = vmul.f32 %v405, %v383
        %v410 = vadd.f32 %v377, %v406
        %v411 = vadd.f32 %v377, %v407
        %v412 = vadd.f32 %v377, %v408
        %v413 = vadd.f32 %v377, %v409
        %s414 = sld [smem:[#allocation4 + $0x18]]
        %v415 = vstv %s414
        %v416 = vmul.f32 %v415, %v380
        %v417 = vmul.f32 %v415, %v381
        %v418 = vmul.f32 %v415, %v382
        %v419 = vmul.f32 %v415, %v383
        %v420 = vadd.f32 %v379, %v416
        %v421 = vadd.f32 %v379, %v417
        %v422 = vadd.f32 %v379, %v418
        %v423 = vadd.f32 %v379, %v419
        %424 = vrot.lane.b32.xlu0 %v380, 127
        %v425 = vpop.permute.xlu0 %424
        %426 = vrot.lane.b32.xlu0 %v382, 127
        %v427 = vpop.permute.xlu0 %426
        %428 = vrot.lane.b32.xlu0 %v381, 127
        %v429 = vpop.permute.xlu0 %428
        %430 = vrot.lane.b32.xlu0 %v383, 127
        %v431 = vpop.permute.xlu0 %430
        %v432 = vlaneseq
        %v433 = vand.u32 %v432, 127
        %vm434 = vcmp.lt.s32.totalorder %v433, 127
        %v435 = vsel %vm434, %v425, %v429
        %v436 = vsel %vm434, %v427, %v431
        %v437 = vsel %vm434, %v429, %v425
        %v438 = vsel %vm434, %v431, %v427
        %s439 = sld [smem:[#allocation4 + $0x1]]
        %v440 = vstv %s439
        %v441 = vmul.f32 %v440, %v435
        %v442 = vmul.f32 %v440, %v437
        %v443 = vmul.f32 %v440, %v436
        %v444 = vmul.f32 %v440, %v438
        %v445 = vadd.f32 %v390, %v441
        %v446 = vadd.f32 %v391, %v442
        %v447 = vadd.f32 %v392, %v443
        %v448 = vadd.f32 %v393, %v444
        %s449 = sld [smem:[#allocation4 + $0x9]]
        %v450 = vstv %s449
        %v451 = vmul.f32 %v450, %v435
        %v452 = vmul.f32 %v450, %v437
        %v453 = vmul.f32 %v450, %v436
        %v454 = vmul.f32 %v450, %v438
        %v455 = vadd.f32 %v400, %v451
        %v456 = vadd.f32 %v401, %v452
        %v457 = vadd.f32 %v402, %v453
        %v458 = vadd.f32 %v403, %v454
        %s459 = sld [smem:[#allocation4 + $0x11]]
        %v460 = vstv %s459
        %v461 = vmul.f32 %v460, %v435
        %v462 = vmul.f32 %v460, %v437
        %v463 = vmul.f32 %v460, %v436
        %v464 = vmul.f32 %v460, %v438
        %v465 = vadd.f32 %v410, %v461
        %v466 = vadd.f32 %v411, %v462
        %v467 = vadd.f32 %v412, %v463
        %v468 = vadd.f32 %v413, %v464
        %s469 = sld [smem:[#allocation4 + $0x19]]
        %v470 = vstv %s469
        %v471 = vmul.f32 %v470, %v435
        %v472 = vmul.f32 %v470, %v437
        %v473 = vmul.f32 %v470, %v436
        %v474 = vmul.f32 %v470, %v438
        %v475 = vadd.f32 %v420, %v471
        %v476 = vadd.f32 %v421, %v472
        %v477 = vadd.f32 %v422, %v473
        %v478 = vadd.f32 %v423, %v474
        %479 = vrot.lane.b32.xlu0 %v380, 112
        %v480 = vpop.permute.xlu0 %479
        %481 = vrot.lane.b32.xlu0 %v382, 112
        %v482 = vpop.permute.xlu0 %481
        %483 = vrot.lane.b32.xlu0 %v381, 112
        %v484 = vpop.permute.xlu0 %483
        %485 = vrot.lane.b32.xlu0 %v383, 112
        %v486 = vpop.permute.xlu0 %485
        %vm487 = vcmp.lt.s32.totalorder %v433, 112
        %v488 = vsel %vm487, %v480, %v484
        %v489 = vsel %vm487, %v482, %v486
        %v490 = vsel %vm487, %v484, %v480
        %v491 = vsel %vm487, %v486, %v482
        %s492 = sld [smem:[#allocation4 + $0x2]]
        %v493 = vstv %s492
        %v494 = vmul.f32 %v493, %v488
        %v495 = vmul.f32 %v493, %v490
        %v496 = vmul.f32 %v493, %v489
        %v497 = vmul.f32 %v493, %v491
        %v498 = vadd.f32 %v445, %v494
        %v499 = vadd.f32 %v446, %v495
        %v500 = vadd.f32 %v447, %v496
        %v501 = vadd.f32 %v448, %v497
        %s502 = sld [smem:[#allocation4 + $0xa]]
        %v503 = vstv %s502
        %v504 = vmul.f32 %v503, %v488
        %v505 = vmul.f32 %v503, %v490
        %v506 = vmul.f32 %v503, %v489
        %v507 = vmul.f32 %v503, %v491
        %v508 = vadd.f32 %v455, %v504
        %v509 = vadd.f32 %v456, %v505
        %v510 = vadd.f32 %v457, %v506
        %v511 = vadd.f32 %v458, %v507
        %s512 = sld [smem:[#allocation4 + $0x12]]
        %v513 = vstv %s512
        %v514 = vmul.f32 %v513, %v488
        %v515 = vmul.f32 %v513, %v490
        %v516 = vmul.f32 %v513, %v489
        %v517 = vmul.f32 %v513, %v491
        %v518 = vadd.f32 %v465, %v514
        %v519 = vadd.f32 %v466, %v515
        %v520 = vadd.f32 %v467, %v516
        %v521 = vadd.f32 %v468, %v517
        %s522 = sld [smem:[#allocation4 + $0x1a]]
        %v523 = vstv %s522
        %v524 = vmul.f32 %v523, %v488
        %v525 = vmul.f32 %v523, %v490
        %v526 = vmul.f32 %v523, %v489
        %v527 = vmul.f32 %v523, %v491
        %v528 = vadd.f32 %v475, %v524
        %v529 = vadd.f32 %v476, %v525
        %v530 = vadd.f32 %v477, %v526
        %v531 = vadd.f32 %v478, %v527
        %532 = vrot.lane.b32.xlu0 %v380, 111
        %v533 = vpop.permute.xlu0 %532
        %534 = vrot.lane.b32.xlu0 %v382, 111
        %v535 = vpop.permute.xlu0 %534
        %536 = vrot.lane.b32.xlu0 %v381, 111
        %v537 = vpop.permute.xlu0 %536
        %538 = vrot.lane.b32.xlu0 %v383, 111
        %v539 = vpop.permute.xlu0 %538
        %vm540 = vcmp.lt.s32.totalorder %v433, 111
        %v541 = vsel %vm540, %v533, %v537
        %v542 = vsel %vm540, %v535, %v539
        %v543 = vsel %vm540, %v537, %v533
        %v544 = vsel %vm540, %v539, %v535
        %s545 = sld [smem:[#allocation4 + $0x3]]
        %v546 = vstv %s545
        %v547 = vmul.f32 %v546, %v541
        %v548 = vmul.f32 %v546, %v543
        %v549 = vmul.f32 %v546, %v542
        %v550 = vmul.f32 %v546, %v544
        %v551 = vadd.f32 %v498, %v547
        %v552 = vadd.f32 %v499, %v548
        %v553 = vadd.f32 %v500, %v549
        %v554 = vadd.f32 %v501, %v550
        %s555 = sld [smem:[#allocation4 + $0xb]]
        %v556 = vstv %s555
        %v557 = vmul.f32 %v556, %v541
        %v558 = vmul.f32 %v556, %v543
        %v559 = vmul.f32 %v556, %v542
        %v560 = vmul.f32 %v556, %v544
        %v561 = vadd.f32 %v508, %v557
        %v562 = vadd.f32 %v509, %v558
        %v563 = vadd.f32 %v510, %v559
        %v564 = vadd.f32 %v511, %v560
        %s565 = sld [smem:[#allocation4 + $0x13]]
        %v566 = vstv %s565
        %v567 = vmul.f32 %v566, %v541
        %v568 = vmul.f32 %v566, %v543
        %v569 = vmul.f32 %v566, %v542
        %v570 = vmul.f32 %v566, %v544
        %v571 = vadd.f32 %v518, %v567
        %v572 = vadd.f32 %v519, %v568
        %v573 = vadd.f32 %v520, %v569
        %v574 = vadd.f32 %v521, %v570
        %s575 = sld [smem:[#allocation4 + $0x1b]]
        %v576 = vstv %s575
        %v577 = vmul.f32 %v576, %v541
        %v578 = vmul.f32 %v576, %v543
        %v579 = vmul.f32 %v576, %v542
        %v580 = vmul.f32 %v576, %v544
        %v581 = vadd.f32 %v528, %v577
        %v582 = vadd.f32 %v529, %v578
        %v583 = vadd.f32 %v530, %v579
        %v584 = vadd.f32 %v531, %v580
        %v585 = vrot.slane %v380, 1
        %v586 = vrot.slane %v381, 1
        %v587 = vrot.slane %v382, 1
        %v588 = vrot.slane %v383, 1
        %v589 = vlaneseq
        %v590 = vshrl.u32 %v589, 7
        %vm591 = vcmp.lt.s32.totalorder %v590, 7
        %v592 = vsel %vm591, %v585, %v587
        %v593 = vsel %vm591, %v586, %v588
        %v594 = vsel %vm591, %v587, %v585
        %v595 = vsel %vm591, %v588, %v586
        %s596 = sld [smem:[#allocation4 + $0x4]]
        %v597 = vstv %s596
        %v598 = vmul.f32 %v597, %v592
        %v599 = vmul.f32 %v597, %v593
        %v600 = vmul.f32 %v597, %v594
        %v601 = vmul.f32 %v597, %v595
        %v602 = vadd.f32 %v551, %v598
        %v603 = vadd.f32 %v552, %v599
        %v604 = vadd.f32 %v553, %v600
        %v605 = vadd.f32 %v554, %v601
        %s606 = sld [smem:[#allocation4 + $0xc]]
        %v607 = vstv %s606
        %v608 = vmul.f32 %v607, %v592
        %v609 = vmul.f32 %v607, %v593
        %v610 = vmul.f32 %v607, %v594
        %v611 = vmul.f32 %v607, %v595
        %v612 = vadd.f32 %v561, %v608
        %v613 = vadd.f32 %v562, %v609
        %v614 = vadd.f32 %v563, %v610
        %v615 = vadd.f32 %v564, %v611
        %s616 = sld [smem:[#allocation4 + $0x14]]
        %v617 = vstv %s616
        %v618 = vmul.f32 %v617, %v592
        %v619 = vmul.f32 %v617, %v593
        %v620 = vmul.f32 %v617, %v594
        %v621 = vmul.f32 %v617, %v595
        %v622 = vadd.f32 %v571, %v618
        %v623 = vadd.f32 %v572, %v619
        %v624 = vadd.f32 %v573, %v620
        %v625 = vadd.f32 %v574, %v621
        %s626 = sld [smem:[#allocation4 + $0x1c]]
        %v627 = vstv %s626
        %v628 = vmul.f32 %v627, %v592
        %v629 = vmul.f32 %v627, %v593
        %v630 = vmul.f32 %v627, %v594
        %v631 = vmul.f32 %v627, %v595
        %v632 = vadd.f32 %v581, %v628
        %v633 = vadd.f32 %v582, %v629
        %v634 = vadd.f32 %v583, %v630
        %v635 = vadd.f32 %v584, %v631
        %636 = vrot.lane.b32.xlu0 %v592, 127
        %v637 = vpop.permute.xlu0 %636
        %638 = vrot.lane.b32.xlu0 %v594, 127
        %v639 = vpop.permute.xlu0 %638
        %640 = vrot.lane.b32.xlu0 %v593, 127
        %v641 = vpop.permute.xlu0 %640
        %642 = vrot.lane.b32.xlu0 %v595, 127
        %v643 = vpop.permute.xlu0 %642
        %v644 = vsel %vm434, %v637, %v641
        %v645 = vsel %vm434, %v639, %v643
        %v646 = vsel %vm434, %v641, %v637
        %v647 = vsel %vm434, %v643, %v639
        %s648 = sld [smem:[#allocation4 + $0x5]]
        %v649 = vstv %s648
        %v650 = vmul.f32 %v649, %v644
        %v651 = vmul.f32 %v649, %v646
        %v652 = vmul.f32 %v649, %v645
        %v653 = vmul.f32 %v649, %v647
        %v654 = vadd.f32 %v602, %v650
        %v655 = vadd.f32 %v603, %v651
        %v656 = vadd.f32 %v604, %v652
        %v657 = vadd.f32 %v605, %v653
        %s658 = sld [smem:[#allocation4 + $0xd]]
        %v659 = vstv %s658
        %v660 = vmul.f32 %v659, %v644
        %v661 = vmul.f32 %v659, %v646
        %v662 = vmul.f32 %v659, %v645
        %v663 = vmul.f32 %v659, %v647
        %v664 = vadd.f32 %v612, %v660
        %v665 = vadd.f32 %v613, %v661
        %v666 = vadd.f32 %v614, %v662
        %v667 = vadd.f32 %v615, %v663
        %s668 = sld [smem:[#allocation4 + $0x15]]
        %v669 = vstv %s668
        %v670 = vmul.f32 %v669, %v644
        %v671 = vmul.f32 %v669, %v646
        %v672 = vmul.f32 %v669, %v645
        %v673 = vmul.f32 %v669, %v647
        %v674 = vadd.f32 %v622, %v670
        %v675 = vadd.f32 %v623, %v671
        %v676 = vadd.f32 %v624, %v672
        %v677 = vadd.f32 %v625, %v673
        %s678 = sld [smem:[#allocation4 + $0x1d]]
        %v679 = vstv %s678
        %v680 = vmul.f32 %v679, %v644
        %v681 = vmul.f32 %v679, %v646
        %v682 = vmul.f32 %v679, %v645
        %v683 = vmul.f32 %v679, %v647
        %v684 = vadd.f32 %v632, %v680
        %v685 = vadd.f32 %v633, %v681
        %v686 = vadd.f32 %v634, %v682
        %v687 = vadd.f32 %v635, %v683
        %688 = vrot.lane.b32.xlu0 %v592, 112
        %v689 = vpop.permute.xlu0 %688
        %690 = vrot.lane.b32.xlu0 %v594, 112
        %v691 = vpop.permute.xlu0 %690
        %692 = vrot.lane.b32.xlu0 %v593, 112
        %v693 = vpop.permute.xlu0 %692
        %694 = vrot.lane.b32.xlu0 %v595, 112
        %v695 = vpop.permute.xlu0 %694
        %v696 = vsel %vm487, %v689, %v693
        %v697 = vsel %vm487, %v691, %v695
        %v698 = vsel %vm487, %v693, %v689
        %v699 = vsel %vm487, %v695, %v691
        %s700 = sld [smem:[#allocation4 + $0x6]]
        %v701 = vstv %s700
        %v702 = vmul.f32 %v701, %v696
        %v703 = vmul.f32 %v701, %v698
        %v704 = vmul.f32 %v701, %v697
        %v705 = vmul.f32 %v701, %v699
        %v706 = vadd.f32 %v654, %v702
        %v707 = vadd.f32 %v655, %v703
        %v708 = vadd.f32 %v656, %v704
        %v709 = vadd.f32 %v657, %v705
        %s710 = sld [smem:[#allocation4 + $0xe]]
        %v711 = vstv %s710
        %v712 = vmul.f32 %v711, %v696
        %v713 = vmul.f32 %v711, %v698
        %v714 = vmul.f32 %v711, %v697
        %v715 = vmul.f32 %v711, %v699
        %v716 = vadd.f32 %v664, %v712
        %v717 = vadd.f32 %v665, %v713
        %v718 = vadd.f32 %v666, %v714
        %v719 = vadd.f32 %v667, %v715
        %s720 = sld [smem:[#allocation4 + $0x16]]
        %v721 = vstv %s720
        %v722 = vmul.f32 %v721, %v696
        %v723 = vmul.f32 %v721, %v698
        %v724 = vmul.f32 %v721, %v697
        %v725 = vmul.f32 %v721, %v699
        %v726 = vadd.f32 %v674, %v722
        %v727 = vadd.f32 %v675, %v723
        %v728 = vadd.f32 %v676, %v724
        %v729 = vadd.f32 %v677, %v725
        %s730 = sld [smem:[#allocation4 + $0x1e]]
        %v731 = vstv %s730
        %v732 = vmul.f32 %v731, %v696
        %v733 = vmul.f32 %v731, %v698
        %v734 = vmul.f32 %v731, %v697
        %v735 = vmul.f32 %v731, %v699
        %v736 = vadd.f32 %v684, %v732
        %v737 = vadd.f32 %v685, %v733
        %v738 = vadd.f32 %v686, %v734
        %v739 = vadd.f32 %v687, %v735
        %740 = vrot.lane.b32.xlu0 %v592, 111
        %v741 = vpop.permute.xlu0 %740
        %742 = vrot.lane.b32.xlu0 %v594, 111
        %v743 = vpop.permute.xlu0 %742
        %744 = vrot.lane.b32.xlu0 %v593, 111
        %v745 = vpop.permute.xlu0 %744
        %746 = vrot.lane.b32.xlu0 %v595, 111
        %v747 = vpop.permute.xlu0 %746
        %v748 = vsel %vm540, %v741, %v745
        %v749 = vsel %vm540, %v743, %v747
        %v750 = vsel %vm540, %v745, %v741
        %v751 = vsel %vm540, %v747, %v743
        %s752 = sld [smem:[#allocation4 + $0x7]]
        %v753 = vstv %s752
        %v754 = vmul.f32 %v753, %v748
        %v755 = vmul.f32 %v753, %v750
        %v756 = vmul.f32 %v753, %v749
        %v757 = vmul.f32 %v753, %v751
        %v758 = vadd.f32 %v706, %v754
        %v759 = vadd.f32 %v707, %v755
        %v760 = vadd.f32 %v708, %v756
        %v761 = vadd.f32 %v709, %v757
        %s762 = sld [smem:[#allocation4 + $0xf]]
        %v763 = vstv %s762
        %v764 = vmul.f32 %v763, %v748
        %v765 = vmul.f32 %v763, %v750
        %v766 = vmul.f32 %v763, %v749
        %v767 = vmul.f32 %v763, %v751
        %v768 = vadd.f32 %v716, %v764
        %v769 = vadd.f32 %v717, %v765
        %v770 = vadd.f32 %v718, %v766
        %v771 = vadd.f32 %v719, %v767
        %s772 = sld [smem:[#allocation4 + $0x17]]
        %v773 = vstv %s772
        %v774 = vmul.f32 %v773, %v748
        %v775 = vmul.f32 %v773, %v750
        %v776 = vmul.f32 %v773, %v749
        %v777 = vmul.f32 %v773, %v751
        %v778 = vadd.f32 %v726, %v774
        %v779 = vadd.f32 %v727, %v775
        %v780 = vadd.f32 %v728, %v776
        %v781 = vadd.f32 %v729, %v777
        %s782 = sld [smem:[#allocation4 + $0x1f]]
        %v783 = vstv %s782
        %v784 = vmul.f32 %v783, %v748
        %v785 = vmul.f32 %v783, %v750
        %v786 = vmul.f32 %v783, %v749
        %v787 = vmul.f32 %v783, %v751
        %v788 = vadd.f32 %v736, %v784
        %v789 = vadd.f32 %v737, %v785
        %v790 = vadd.f32 %v738, %v786
        %v791 = vadd.f32 %v739, %v787
        %v792 = vmax.f32 %v758, 0.0
        %v793 = vmax.f32 %v759, 0.0
        %v794 = vmax.f32 %v760, 0.0
        %v795 = vmax.f32 %v761, 0.0
        %796 = vst [vmem:[#allocation2] sm:$0xff] %v792
        %797 = vst [vmem:[#allocation2 + $0x8] sm:$0xff] %v793
        %798 = vst [vmem:[#allocation2 + $0x10] sm:$0xff] %v794
        %799 = vst [vmem:[#allocation2 + $0x18] sm:$0xff] %v795
        %v800 = vmax.f32 %v768, 0.0
        %v801 = vmax.f32 %v769, 0.0
        %v802 = vmax.f32 %v770, 0.0
        %v803 = vmax.f32 %v771, 0.0
        %s804 = scalar_lea.vmem [#allocation2], 32
        %805 = vst [vmem:[%s804] sm:$0xff] %v800
        %806 = vst [vmem:[%s804 + $0x8] sm:$0xff] %v801
        %807 = vst [vmem:[%s804 + $0x10] sm:$0xff] %v802
        %808 = vst [vmem:[%s804 + $0x18] sm:$0xff] %v803
        %v809 = vmax.f32 %v778, 0.0
        %v810 = vmax.f32 %v779, 0.0
        %v811 = vmax.f32 %v780, 0.0
        %v812 = vmax.f32 %v781, 0.0
        %s813 = scalar_lea.vmem [#allocation2], 64
        %814 = vst [vmem:[%s813] sm:$0xff] %v809
        %815 = vst [vmem:[%s813 + $0x8] sm:$0xff] %v810
        %816 = vst [vmem:[%s813 + $0x10] sm:$0xff] %v811
        %817 = vst [vmem:[%s813 + $0x18] sm:$0xff] %v812
        %v818 = vmax.f32 %v788, 0.0
        %v819 = vmax.f32 %v789, 0.0
        %v820 = vmax.f32 %v790, 0.0
        %v821 = vmax.f32 %v791, 0.0
        %s822 = scalar_lea.vmem [#allocation2], 96
        %823 = vst [vmem:[%s822] sm:$0xff] %v818
        %824 = vst [vmem:[%s822 + $0x8] sm:$0xff] %v819
        %825 = vst [vmem:[%s822 + $0x10] sm:$0xff] %v820
        %826 = vst [vmem:[%s822 + $0x18] sm:$0xff] %v821
        %s827 = sld [smem:[#allocation12]]
        %v828 = vstv %s827
        %s829 = sld [smem:[#allocation12 + $0x1]]
        %v830 = vstv %s829
        %s831 = sld [smem:[#allocation12 + $0x2]]
        %v832 = vstv %s831
        %s833 = sld [smem:[#allocation12 + $0x3]]
        %v834 = vstv %s833
        %s835 = sld [smem:[#allocation12 + $0x4]]
        %v836 = vstv %s835
        %v837 = vld [vmem:[#allocation2] sm:$0xff]
        %v838 = vld [vmem:[#allocation2 + $0x8] sm:$0xff]
        %v839 = vld [vmem:[#allocation2 + $0x10] sm:$0xff]
        %v840 = vld [vmem:[#allocation2 + $0x18] sm:$0xff]
        %s841 = sld [smem:[#allocation10]]
        %v842 = vstv %s841
        %v843 = vmul.f32 %v842, %v837
        %v844 = vmul.f32 %v842, %v838
        %v845 = vmul.f32 %v842, %v839
        %v846 = vmul.f32 %v842, %v840
        %v847 = vadd.f32 %v828, %v843
        %v848 = vadd.f32 %v828, %v844
        %v849 = vadd.f32 %v828, %v845
        %v850 = vadd.f32 %v828, %v846
        %s851 = sld [smem:[#allocation10 + $0x20]]
        %v852 = vstv %s851
        %v853 = vmul.f32 %v852, %v837
        %v854 = vmul.f32 %v852, %v838
        %v855 = vmul.f32 %v852, %v839
        %v856 = vmul.f32 %v852, %v840
        %v857 = vadd.f32 %v830, %v853
        %v858 = vadd.f32 %v830, %v854
        %v859 = vadd.f32 %v830, %v855
        %v860 = vadd.f32 %v830, %v856
        %s861 = sld [smem:[#allocation10 + $0x40]]
        %v862 = vstv %s861
        %v863 = vmul.f32 %v862, %v837
        %v864 = vmul.f32 %v862, %v838
        %v865 = vmul.f32 %v862, %v839
        %v866 = vmul.f32 %v862, %v840
        %v867 = vadd.f32 %v832, %v863
        %v868 = vadd.f32 %v832, %v864
        %v869 = vadd.f32 %v832, %v865
        %v870 = vadd.f32 %v832, %v866
        %s871 = sld [smem:[#allocation10 + $0x60]]
        %v872 = vstv %s871
        %v873 = vmul.f32 %v872, %v837
        %v874 = vmul.f32 %v872, %v838
        %v875 = vmul.f32 %v872, %v839
        %v876 = vmul.f32 %v872, %v840
        %v877 = vadd.f32 %v834, %v873
        %v878 = vadd.f32 %v834, %v874
        %v879 = vadd.f32 %v834, %v875
        %v880 = vadd.f32 %v834, %v876
        %s881 = sld [smem:[#allocation10 + $0x80]]
        %v882 = vstv %s881
        %v883 = vmul.f32 %v882, %v837
        %v884 = vmul.f32 %v882, %v838
        %v885 = vmul.f32 %v882, %v839
        %v886 = vmul.f32 %v882, %v840
        %v887 = vadd.f32 %v836, %v883
        %v888 = vadd.f32 %v836, %v884
        %v889 = vadd.f32 %v836, %v885
        %v890 = vadd.f32 %v836, %v886
        %891 = vrot.lane.b32.xlu0 %v837, 127
        %v892 = vpop.permute.xlu0 %891
        %893 = vrot.lane.b32.xlu0 %v839, 127
        %v894 = vpop.permute.xlu0 %893
        %895 = vrot.lane.b32.xlu0 %v838, 127
        %v896 = vpop.permute.xlu0 %895
        %897 = vrot.lane.b32.xlu0 %v840, 127
        %v898 = vpop.permute.xlu0 %897
        %v899 = vsel %vm434, %v892, %v896
        %v900 = vsel %vm434, %v894, %v898
        %v901 = vsel %vm434, %v896, %v892
        %v902 = vsel %vm434, %v898, %v894
        %s903 = sld [smem:[#allocation10 + $0x1]]
        %v904 = vstv %s903
        %v905 = vmul.f32 %v904, %v899
        %v906 = vmul.f32 %v904, %v901
        %v907 = vmul.f32 %v904, %v900
        %v908 = vmul.f32 %v904, %v902
        %v909 = vadd.f32 %v847, %v905
        %v910 = vadd.f32 %v848, %v906
        %v911 = vadd.f32 %v849, %v907
        %v912 = vadd.f32 %v850, %v908
        %s913 = sld [smem:[#allocation10 + $0x21]]
        %v914 = vstv %s913
        %v915 = vmul.f32 %v914, %v899
        %v916 = vmul.f32 %v914, %v901
        %v917 = vmul.f32 %v914, %v900
        %v918 = vmul.f32 %v914, %v902
        %v919 = vadd.f32 %v857, %v915
        %v920 = vadd.f32 %v858, %v916
        %v921 = vadd.f32 %v859, %v917
        %v922 = vadd.f32 %v860, %v918
        %s923 = sld [smem:[#allocation10 + $0x41]]
        %v924 = vstv %s923
        %v925 = vmul.f32 %v924, %v899
        %v926 = vmul.f32 %v924, %v901
        %v927 = vmul.f32 %v924, %v900
        %v928 = vmul.f32 %v924, %v902
        %v929 = vadd.f32 %v867, %v925
        %v930 = vadd.f32 %v868, %v926
        %v931 = vadd.f32 %v869, %v927
        %v932 = vadd.f32 %v870, %v928
        %s933 = sld [smem:[#allocation10 + $0x61]]
        %v934 = vstv %s933
        %v935 = vmul.f32 %v934, %v899
        %v936 = vmul.f32 %v934, %v901
        %v937 = vmul.f32 %v934, %v900
        %v938 = vmul.f32 %v934, %v902
        %v939 = vadd.f32 %v877, %v935
        %v940 = vadd.f32 %v878, %v936
        %v941 = vadd.f32 %v879, %v937
        %v942 = vadd.f32 %v880, %v938
        %s943 = sld [smem:[#allocation10 + $0x81]]
        %v944 = vstv %s943
        %v945 = vmul.f32 %v944, %v899
        %v946 = vmul.f32 %v944, %v901
        %v947 = vmul.f32 %v944, %v900
        %v948 = vmul.f32 %v944, %v902
        %v949 = vadd.f32 %v887, %v945
        %v950 = vadd.f32 %v888, %v946
        %v951 = vadd.f32 %v889, %v947
        %v952 = vadd.f32 %v890, %v948
        %953 = vrot.lane.b32.xlu0 %v837, 112
        %v954 = vpop.permute.xlu0 %953
        %955 = vrot.lane.b32.xlu0 %v839, 112
        %v956 = vpop.permute.xlu0 %955
        %957 = vrot.lane.b32.xlu0 %v838, 112
        %v958 = vpop.permute.xlu0 %957
        %959 = vrot.lane.b32.xlu0 %v840, 112
        %v960 = vpop.permute.xlu0 %959
        %v961 = vsel %vm487, %v954, %v958
        %v962 = vsel %vm487, %v956, %v960
        %v963 = vsel %vm487, %v958, %v954
        %v964 = vsel %vm487, %v960, %v956
        %s965 = sld [smem:[#allocation10 + $0x2]]
        %v966 = vstv %s965
        %v967 = vmul.f32 %v966, %v961
        %v968 = vmul.f32 %v966, %v963
        %v969 = vmul.f32 %v966, %v962
        %v970 = vmul.f32 %v966, %v964
        %v971 = vadd.f32 %v909, %v967
        %v972 = vadd.f32 %v910, %v968
        %v973 = vadd.f32 %v911, %v969
        %v974 = vadd.f32 %v912, %v970
        %s975 = sld [smem:[#allocation10 + $0x22]]
        %v976 = vstv %s975
        %v977 = vmul.f32 %v976, %v961
        %v978 = vmul.f32 %v976, %v963
        %v979 = vmul.f32 %v976, %v962
        %v980 = vmul.f32 %v976, %v964
        %v981 = vadd.f32 %v919, %v977
        %v982 = vadd.f32 %v920, %v978
        %v983 = vadd.f32 %v921, %v979
        %v984 = vadd.f32 %v922, %v980
        %s985 = sld [smem:[#allocation10 + $0x42]]
        %v986 = vstv %s985
        %v987 = vmul.f32 %v986, %v961
        %v988 = vmul.f32 %v986, %v963
        %v989 = vmul.f32 %v986, %v962
        %v990 = vmul.f32 %v986, %v964
        %v991 = vadd.f32 %v929, %v987
        %v992 = vadd.f32 %v930, %v988
        %v993 = vadd.f32 %v931, %v989
        %v994 = vadd.f32 %v932, %v990
        %s995 = sld [smem:[#allocation10 + $0x62]]
        %v996 = vstv %s995
        %v997 = vmul.f32 %v996, %v961
        %v998 = vmul.f32 %v996, %v963
        %v999 = vmul.f32 %v996, %v962
        %v1000 = vmul.f32 %v996, %v964
        %v1001 = vadd.f32 %v939, %v997
        %v1002 = vadd.f32 %v940, %v998
        %v1003 = vadd.f32 %v941, %v999
        %v1004 = vadd.f32 %v942, %v1000
        %s1005 = sld [smem:[#allocation10 + $0x82]]
        %v1006 = vstv %s1005
        %v1007 = vmul.f32 %v1006, %v961
        %v1008 = vmul.f32 %v1006, %v963
        %v1009 = vmul.f32 %v1006, %v962
        %v1010 = vmul.f32 %v1006, %v964
        %v1011 = vadd.f32 %v949, %v1007
        %v1012 = vadd.f32 %v950, %v1008
        %v1013 = vadd.f32 %v951, %v1009
        %v1014 = vadd.f32 %v952, %v1010
        %1015 = vrot.lane.b32.xlu0 %v837, 111
        %v1016 = vpop.permute.xlu0 %1015
        %1017 = vrot.lane.b32.xlu0 %v839, 111
        %v1018 = vpop.permute.xlu0 %1017
        %1019 = vrot.lane.b32.xlu0 %v838, 111
        %v1020 = vpop.permute.xlu0 %1019
        %1021 = vrot.lane.b32.xlu0 %v840, 111
        %v1022 = vpop.permute.xlu0 %1021
        %v1023 = vsel %vm540, %v1016, %v1020
        %v1024 = vsel %vm540, %v1018, %v1022
        %v1025 = vsel %vm540, %v1020, %v1016
        %v1026 = vsel %vm540, %v1022, %v1018
        %s1027 = sld [smem:[#allocation10 + $0x3]]
        %v1028 = vstv %s1027
        %v1029 = vmul.f32 %v1028, %v1023
        %v1030 = vmul.f32 %v1028, %v1025
        %v1031 = vmul.f32 %v1028, %v1024
        %v1032 = vmul.f32 %v1028, %v1026
        %v1033 = vadd.f32 %v971, %v1029
        %v1034 = vadd.f32 %v972, %v1030
        %v1035 = vadd.f32 %v973, %v1031
        %v1036 = vadd.f32 %v974, %v1032
        %s1037 = sld [smem:[#allocation10 + $0x23]]
        %v1038 = vstv %s1037
        %v1039 = vmul.f32 %v1038, %v1023
        %v1040 = vmul.f32 %v1038, %v1025
        %v1041 = vmul.f32 %v1038, %v1024
        %v1042 = vmul.f32 %v1038, %v1026
        %v1043 = vadd.f32 %v981, %v1039
        %v1044 = vadd.f32 %v982, %v1040
        %v1045 = vadd.f32 %v983, %v1041
        %v1046 = vadd.f32 %v984, %v1042
        %s1047 = sld [smem:[#allocation10 + $0x43]]
        %v1048 = vstv %s1047
        %v1049 = vmul.f32 %v1048, %v1023
        %v1050 = vmul.f32 %v1048, %v1025
        %v1051 = vmul.f32 %v1048, %v1024
        %v1052 = vmul.f32 %v1048, %v1026
        %v1053 = vadd.f32 %v991, %v1049
        %v1054 = vadd.f32 %v992, %v1050
        %v1055 = vadd.f32 %v993, %v1051
        %v1056 = vadd.f32 %v994, %v1052
        %s1057 = sld [smem:[#allocation10 + $0x63]]
        %v1058 = vstv %s1057
        %v1059 = vmul.f32 %v1058, %v1023
        %v1060 = vmul.f32 %v1058, %v1025
        %v1061 = vmul.f32 %v1058, %v1024
        %v1062 = vmul.f32 %v1058, %v1026
        %v1063 = vadd.f32 %v1001, %v1059
        %v1064 = vadd.f32 %v1002, %v1060
        %v1065 = vadd.f32 %v1003, %v1061
        %v1066 = vadd.f32 %v1004, %v1062
        %s1067 = sld [smem:[#allocation10 + $0x83]]
        %v1068 = vstv %s1067
        %v1069 = vmul.f32 %v1068, %v1023
        %v1070 = vmul.f32 %v1068, %v1025
        %v1071 = vmul.f32 %v1068, %v1024
        %v1072 = vmul.f32 %v1068, %v1026
        %v1073 = vadd.f32 %v1011, %v1069
        %v1074 = vadd.f32 %v1012, %v1070
        %v1075 = vadd.f32 %v1013, %v1071
        %v1076 = vadd.f32 %v1014, %v1072
        %v1077 = vrot.slane %v837, 1
        %v1078 = vrot.slane %v838, 1
        %v1079 = vrot.slane %v839, 1
        %v1080 = vrot.slane %v840, 1
        %v1081 = vsel %vm591, %v1077, %v1079
        %v1082 = vsel %vm591, %v1078, %v1080
        %v1083 = vsel %vm591, %v1079, %v1077
        %v1084 = vsel %vm591, %v1080, %v1078
        %s1085 = sld [smem:[#allocation10 + $0x4]]
        %v1086 = vstv %s1085
        %v1087 = vmul.f32 %v1086, %v1081
        %v1088 = vmul.f32 %v1086, %v1082
        %v1089 = vmul.f32 %v1086, %v1083
        %v1090 = vmul.f32 %v1086, %v1084
        %v1091 = vadd.f32 %v1033, %v1087
        %v1092 = vadd.f32 %v1034, %v1088
        %v1093 = vadd.f32 %v1035, %v1089
        %v1094 = vadd.f32 %v1036, %v1090
        %s1095 = sld [smem:[#allocation10 + $0x24]]
        %v1096 = vstv %s1095
        %v1097 = vmul.f32 %v1096, %v1081
        %v1098 = vmul.f32 %v1096, %v1082
        %v1099 = vmul.f32 %v1096, %v1083
        %v1100 = vmul.f32 %v1096, %v1084
        %v1101 = vadd.f32 %v1043, %v1097
        %v1102 = vadd.f32 %v1044, %v1098
        %v1103 = vadd.f32 %v1045, %v1099
        %v1104 = vadd.f32 %v1046, %v1100
        %s1105 = sld [smem:[#allocation10 + $0x44]]
        %v1106 = vstv %s1105
        %v1107 = vmul.f32 %v1106, %v1081
        %v1108 = vmul.f32 %v1106, %v1082
        %v1109 = vmul.f32 %v1106, %v1083
        %v1110 = vmul.f32 %v1106, %v1084
        %v1111 = vadd.f32 %v1053, %v1107
        %v1112 = vadd.f32 %v1054, %v1108
        %v1113 = vadd.f32 %v1055, %v1109
        %v1114 = vadd.f32 %v1056, %v1110
        %s1115 = sld [smem:[#allocation10 + $0x64]]
        %v1116 = vstv %s1115
        %v1117 = vmul.f32 %v1116, %v1081
        %v1118 = vmul.f32 %v1116, %v1082
        %v1119 = vmul.f32 %v1116, %v1083
        %v1120 = vmul.f32 %v1116, %v1084
        %v1121 = vadd.f32 %v1063, %v1117
        %v1122 = vadd.f32 %v1064, %v1118
        %v1123 = vadd.f32 %v1065, %v1119
        %v1124 = vadd.f32 %v1066, %v1120
        %s1125 = sld [smem:[#allocation10 + $0x84]]
        %v1126 = vstv %s1125
        %v1127 = vmul.f32 %v1126, %v1081
        %v1128 = vmul.f32 %v1126, %v1082
        %v1129 = vmul.f32 %v1126, %v1083
        %v1130 = vmul.f32 %v1126, %v1084
        %v1131 = vadd.f32 %v1073, %v1127
        %v1132 = vadd.f32 %v1074, %v1128
        %v1133 = vadd.f32 %v1075, %v1129
        %v1134 = vadd.f32 %v1076, %v1130
        %1135 = vrot.lane.b32.xlu0 %v1081, 127
        %v1136 = vpop.permute.xlu0 %1135
        %1137 = vrot.lane.b32.xlu0 %v1083, 127
        %v1138 = vpop.permute.xlu0 %1137
        %1139 = vrot.lane.b32.xlu0 %v1082, 127
        %v1140 = vpop.permute.xlu0 %1139
        %1141 = vrot.lane.b32.xlu0 %v1084, 127
        %v1142 = vpop.permute.xlu0 %1141
        %v1143 = vsel %vm434, %v1136, %v1140
        %v1144 = vsel %vm434, %v1138, %v1142
        %v1145 = vsel %vm434, %v1140, %v1136
        %v1146 = vsel %vm434, %v1142, %v1138
        %s1147 = sld [smem:[#allocation10 + $0x5]]
        %v1148 = vstv %s1147
        %v1149 = vmul.f32 %v1148, %v1143
        %v1150 = vmul.f32 %v1148, %v1145
        %v1151 = vmul.f32 %v1148, %v1144
        %v1152 = vmul.f32 %v1148, %v1146
        %v1153 = vadd.f32 %v1091, %v1149
        %v1154 = vadd.f32 %v1092, %v1150
        %v1155 = vadd.f32 %v1093, %v1151
        %v1156 = vadd.f32 %v1094, %v1152
        %s1157 = sld [smem:[#allocation10 + $0x25]]
        %v1158 = vstv %s1157
        %v1159 = vmul.f32 %v1158, %v1143
        %v1160 = vmul.f32 %v1158, %v1145
        %v1161 = vmul.f32 %v1158, %v1144
        %v1162 = vmul.f32 %v1158, %v1146
        %v1163 = vadd.f32 %v1101, %v1159
        %v1164 = vadd.f32 %v1102, %v1160
        %v1165 = vadd.f32 %v1103, %v1161
        %v1166 = vadd.f32 %v1104, %v1162
        %s1167 = sld [smem:[#allocation10 + $0x45]]
        %v1168 = vstv %s1167
        %v1169 = vmul.f32 %v1168, %v1143
        %v1170 = vmul.f32 %v1168, %v1145
        %v1171 = vmul.f32 %v1168, %v1144
        %v1172 = vmul.f32 %v1168, %v1146
        %v1173 = vadd.f32 %v1111, %v1169
        %v1174 = vadd.f32 %v1112, %v1170
        %v1175 = vadd.f32 %v1113, %v1171
        %v1176 = vadd.f32 %v1114, %v1172
        %s1177 = sld [smem:[#allocation10 + $0x65]]
        %v1178 = vstv %s1177
        %v1179 = vmul.f32 %v1178, %v1143
        %v1180 = vmul.f32 %v1178, %v1145
        %v1181 = vmul.f32 %v1178, %v1144
        %v1182 = vmul.f32 %v1178, %v1146
        %v1183 = vadd.f32 %v1121, %v1179
        %v1184 = vadd.f32 %v1122, %v1180
        %v1185 = vadd.f32 %v1123, %v1181
        %v1186 = vadd.f32 %v1124, %v1182
        %s1187 = sld [smem:[#allocation10 + $0x85]]
        %v1188 = vstv %s1187
        %v1189 = vmul.f32 %v1188, %v1143
        %v1190 = vmul.f32 %v1188, %v1145
        %v1191 = vmul.f32 %v1188, %v1144
        %v1192 = vmul.f32 %v1188, %v1146
        %v1193 = vadd.f32 %v1131, %v1189
        %v1194 = vadd.f32 %v1132, %v1190
        %v1195 = vadd.f32 %v1133, %v1191
        %v1196 = vadd.f32 %v1134, %v1192
        %1197 = vrot.lane.b32.xlu0 %v1081, 112
        %v1198 = vpop.permute.xlu0 %1197
        %1199 = vrot.lane.b32.xlu0 %v1083, 112
        %v1200 = vpop.permute.xlu0 %1199
        %1201 = vrot.lane.b32.xlu0 %v1082, 112
        %v1202 = vpop.permute.xlu0 %1201
        %1203 = vrot.lane.b32.xlu0 %v1084, 112
        %v1204 = vpop.permute.xlu0 %1203
        %v1205 = vsel %vm487, %v1198, %v1202
        %v1206 = vsel %vm487, %v1200, %v1204
        %v1207 = vsel %vm487, %v1202, %v1198
        %v1208 = vsel %vm487, %v1204, %v1200
        %s1209 = sld [smem:[#allocation10 + $0x6]]
        %v1210 = vstv %s1209
        %v1211 = vmul.f32 %v1210, %v1205
        %v1212 = vmul.f32 %v1210, %v1207
        %v1213 = vmul.f32 %v1210, %v1206
        %v1214 = vmul.f32 %v1210, %v1208
        %v1215 = vadd.f32 %v1153, %v1211
        %v1216 = vadd.f32 %v1154, %v1212
        %v1217 = vadd.f32 %v1155, %v1213
        %v1218 = vadd.f32 %v1156, %v1214
        %s1219 = sld [smem:[#allocation10 + $0x26]]
        %v1220 = vstv %s1219
        %v1221 = vmul.f32 %v1220, %v1205
        %v1222 = vmul.f32 %v1220, %v1207
        %v1223 = vmul.f32 %v1220, %v1206
        %v1224 = vmul.f32 %v1220, %v1208
        %v1225 = vadd.f32 %v1163, %v1221
        %v1226 = vadd.f32 %v1164, %v1222
        %v1227 = vadd.f32 %v1165, %v1223
        %v1228 = vadd.f32 %v1166, %v1224
        %s1229 = sld [smem:[#allocation10 + $0x46]]
        %v1230 = vstv %s1229
        %v1231 = vmul.f32 %v1230, %v1205
        %v1232 = vmul.f32 %v1230, %v1207
        %v1233 = vmul.f32 %v1230, %v1206
        %v1234 = vmul.f32 %v1230, %v1208
        %v1235 = vadd.f32 %v1173, %v1231
        %v1236 = vadd.f32 %v1174, %v1232
        %v1237 = vadd.f32 %v1175, %v1233
        %v1238 = vadd.f32 %v1176, %v1234
        %s1239 = sld [smem:[#allocation10 + $0x66]]
        %v1240 = vstv %s1239
        %v1241 = vmul.f32 %v1240, %v1205
        %v1242 = vmul.f32 %v1240, %v1207
        %v1243 = vmul.f32 %v1240, %v1206
        %v1244 = vmul.f32 %v1240, %v1208
        %v1245 = vadd.f32 %v1183, %v1241
        %v1246 = vadd.f32 %v1184, %v1242
        %v1247 = vadd.f32 %v1185, %v1243
        %v1248 = vadd.f32 %v1186, %v1244
        %s1249 = sld [smem:[#allocation10 + $0x86]]
        %v1250 = vstv %s1249
        %v1251 = vmul.f32 %v1250, %v1205
        %v1252 = vmul.f32 %v1250, %v1207
        %v1253 = vmul.f32 %v1250, %v1206
        %v1254 = vmul.f32 %v1250, %v1208
        %v1255 = vadd.f32 %v1193, %v1251
        %v1256 = vadd.f32 %v1194, %v1252
        %v1257 = vadd.f32 %v1195, %v1253
        %v1258 = vadd.f32 %v1196, %v1254
        %1259 = vrot.lane.b32.xlu0 %v1081, 111
        %v1260 = vpop.permute.xlu0 %1259
        %1261 = vrot.lane.b32.xlu0 %v1083, 111
        %v1262 = vpop.permute.xlu0 %1261
        %1263 = vrot.lane.b32.xlu0 %v1082, 111
        %v1264 = vpop.permute.xlu0 %1263
        %1265 = vrot.lane.b32.xlu0 %v1084, 111
        %v1266 = vpop.permute.xlu0 %1265
        %v1267 = vsel %vm540, %v1260, %v1264
        %v1268 = vsel %vm540, %v1262, %v1266
        %v1269 = vsel %vm540, %v1264, %v1260
        %v1270 = vsel %vm540, %v1266, %v1262
        %s1271 = sld [smem:[#allocation10 + $0x7]]
        %v1272 = vstv %s1271
        %v1273 = vmul.f32 %v1272, %v1267
        %v1274 = vmul.f32 %v1272, %v1269
        %v1275 = vmul.f32 %v1272, %v1268
        %v1276 = vmul.f32 %v1272, %v1270
        %v1277 = vadd.f32 %v1215, %v1273
        %v1278 = vadd.f32 %v1216, %v1274
        %v1279 = vadd.f32 %v1217, %v1275
        %v1280 = vadd.f32 %v1218, %v1276
        %s1281 = sld [smem:[#allocation10 + $0x27]]
        %v1282 = vstv %s1281
        %v1283 = vmul.f32 %v1282, %v1267
        %v1284 = vmul.f32 %v1282, %v1269
        %v1285 = vmul.f32 %v1282, %v1268
        %v1286 = vmul.f32 %v1282, %v1270
        %v1287 = vadd.f32 %v1225, %v1283
        %v1288 = vadd.f32 %v1226, %v1284
        %v1289 = vadd.f32 %v1227, %v1285
        %v1290 = vadd.f32 %v1228, %v1286
        %s1291 = sld [smem:[#allocation10 + $0x47]]
        %v1292 = vstv %s1291
        %v1293 = vmul.f32 %v1292, %v1267
        %v1294 = vmul.f32 %v1292, %v1269
        %v1295 = vmul.f32 %v1292, %v1268
        %v1296 = vmul.f32 %v1292, %v1270
        %v1297 = vadd.f32 %v1235, %v1293
        %v1298 = vadd.f32 %v1236, %v1294
        %v1299 = vadd.f32 %v1237, %v1295
        %v1300 = vadd.f32 %v1238, %v1296
        %s1301 = sld [smem:[#allocation10 + $0x67]]
        %v1302 = vstv %s1301
        %v1303 = vmul.f32 %v1302, %v1267
        %v1304 = vmul.f32 %v1302, %v1269
        %v1305 = vmul.f32 %v1302, %v1268
        %v1306 = vmul.f32 %v1302, %v1270
        %v1307 = vadd.f32 %v1245, %v1303
        %v1308 = vadd.f32 %v1246, %v1304
        %v1309 = vadd.f32 %v1247, %v1305
        %v1310 = vadd.f32 %v1248, %v1306
        %s1311 = sld [smem:[#allocation10 + $0x87]]
        %v1312 = vstv %s1311
        %v1313 = vmul.f32 %v1312, %v1267
        %v1314 = vmul.f32 %v1312, %v1269
        %v1315 = vmul.f32 %v1312, %v1268
        %v1316 = vmul.f32 %v1312, %v1270
        %v1317 = vadd.f32 %v1255, %v1313
        %v1318 = vadd.f32 %v1256, %v1314
        %v1319 = vadd.f32 %v1257, %v1315
        %v1320 = vadd.f32 %v1258, %v1316
        %v1321 = vld [vmem:[%s804] sm:$0xff]
        %v1322 = vld [vmem:[%s804 + $0x8] sm:$0xff]
        %v1323 = vld [vmem:[%s804 + $0x10] sm:$0xff]
        %v1324 = vld [vmem:[%s804 + $0x18] sm:$0xff]
        %s1325 = sld [smem:[#allocation10 + $0x8]]
        %v1326 = vstv %s1325
        %v1327 = vmul.f32 %v1326, %v1321
        %v1328 = vmul.f32 %v1326, %v1322
        %v1329 = vmul.f32 %v1326, %v1323
        %v1330 = vmul.f32 %v1326, %v1324
        %v1331 = vadd.f32 %v1277, %v1327
        %v1332 = vadd.f32 %v1278, %v1328
        %v1333 = vadd.f32 %v1279, %v1329
        %v1334 = vadd.f32 %v1280, %v1330
        %s1335 = sld [smem:[#allocation10 + $0x28]]
        %v1336 = vstv %s1335
        %v1337 = vmul.f32 %v1336, %v1321
        %v1338 = vmul.f32 %v1336, %v1322
        %v1339 = vmul.f32 %v1336, %v1323
        %v1340 = vmul.f32 %v1336, %v1324
        %v1341 = vadd.f32 %v1287, %v1337
        %v1342 = vadd.f32 %v1288, %v1338
        %v1343 = vadd.f32 %v1289, %v1339
        %v1344 = vadd.f32 %v1290, %v1340
        %s1345 = sld [smem:[#allocation10 + $0x48]]
        %v1346 = vstv %s1345
        %v1347 = vmul.f32 %v1346, %v1321
        %v1348 = vmul.f32 %v1346, %v1322
        %v1349 = vmul.f32 %v1346, %v1323
        %v1350 = vmul.f32 %v1346, %v1324
        %v1351 = vadd.f32 %v1297, %v1347
        %v1352 = vadd.f32 %v1298, %v1348
        %v1353 = vadd.f32 %v1299, %v1349
        %v1354 = vadd.f32 %v1300, %v1350
        %s1355 = sld [smem:[#allocation10 + $0x68]]
        %v1356 = vstv %s1355
        %v1357 = vmul.f32 %v1356, %v1321
        %v1358 = vmul.f32 %v1356, %v1322
        %v1359 = vmul.f32 %v1356, %v1323
        %v1360 = vmul.f32 %v1356, %v1324
        %v1361 = vadd.f32 %v1307, %v1357
        %v1362 = vadd.f32 %v1308, %v1358
        %v1363 = vadd.f32 %v1309, %v1359
        %v1364 = vadd.f32 %v1310, %v1360
        %s1365 = sld [smem:[#allocation10 + $0x88]]
        %v1366 = vstv %s1365
        %v1367 = vmul.f32 %v1366, %v1321
        %v1368 = vmul.f32 %v1366, %v1322
        %v1369 = vmul.f32 %v1366, %v1323
        %v1370 = vmul.f32 %v1366, %v1324
        %v1371 = vadd.f32 %v1317, %v1367
        %v1372 = vadd.f32 %v1318, %v1368
        %v1373 = vadd.f32 %v1319, %v1369
        %v1374 = vadd.f32 %v1320, %v1370
        %1375 = vrot.lane.b32.xlu0 %v1321, 127
        %v1376 = vpop.permute.xlu0 %1375
        %1377 = vrot.lane.b32.xlu0 %v1323, 127
        %v1378 = vpop.permute.xlu0 %1377
        %1379 = vrot.lane.b32.xlu0 %v1322, 127
        %v1380 = vpop.permute.xlu0 %1379
        %1381 = vrot.lane.b32.xlu0 %v1324, 127
        %v1382 = vpop.permute.xlu0 %1381
        %v1383 = vsel %vm434, %v1376, %v1380
        %v1384 = vsel %vm434, %v1378, %v1382
        %v1385 = vsel %vm434, %v1380, %v1376
        %v1386 = vsel %vm434, %v1382, %v1378
        %s1387 = sld [smem:[#allocation10 + $0x9]]
        %v1388 = vstv %s1387
        %v1389 = vmul.f32 %v1388, %v1383
        %v1390 = vmul.f32 %v1388, %v1385
        %v1391 = vmul.f32 %v1388, %v1384
        %v1392 = vmul.f32 %v1388, %v1386
        %v1393 = vadd.f32 %v1331, %v1389
        %v1394 = vadd.f32 %v1332, %v1390
        %v1395 = vadd.f32 %v1333, %v1391
        %v1396 = vadd.f32 %v1334, %v1392
        %s1397 = sld [smem:[#allocation10 + $0x29]]
        %v1398 = vstv %s1397
        %v1399 = vmul.f32 %v1398, %v1383
        %v1400 = vmul.f32 %v1398, %v1385
        %v1401 = vmul.f32 %v1398, %v1384
        %v1402 = vmul.f32 %v1398, %v1386
        %v1403 = vadd.f32 %v1341, %v1399
        %v1404 = vadd.f32 %v1342, %v1400
        %v1405 = vadd.f32 %v1343, %v1401
        %v1406 = vadd.f32 %v1344, %v1402
        %s1407 = sld [smem:[#allocation10 + $0x49]]
        %v1408 = vstv %s1407
        %v1409 = vmul.f32 %v1408, %v1383
        %v1410 = vmul.f32 %v1408, %v1385
        %v1411 = vmul.f32 %v1408, %v1384
        %v1412 = vmul.f32 %v1408, %v1386
        %v1413 = vadd.f32 %v1351, %v1409
        %v1414 = vadd.f32 %v1352, %v1410
        %v1415 = vadd.f32 %v1353, %v1411
        %v1416 = vadd.f32 %v1354, %v1412
        %s1417 = sld [smem:[#allocation10 + $0x69]]
        %v1418 = vstv %s1417
        %v1419 = vmul.f32 %v1418, %v1383
        %v1420 = vmul.f32 %v1418, %v1385
        %v1421 = vmul.f32 %v1418, %v1384
        %v1422 = vmul.f32 %v1418, %v1386
        %v1423 = vadd.f32 %v1361, %v1419
        %v1424 = vadd.f32 %v1362, %v1420
        %v1425 = vadd.f32 %v1363, %v1421
        %v1426 = vadd.f32 %v1364, %v1422
        %s1427 = sld [smem:[#allocation10 + $0x89]]
        %v1428 = vstv %s1427
        %v1429 = vmul.f32 %v1428, %v1383
        %v1430 = vmul.f32 %v1428, %v1385
        %v1431 = vmul.f32 %v1428, %v1384
        %v1432 = vmul.f32 %v1428, %v1386
        %v1433 = vadd.f32 %v1371, %v1429
        %v1434 = vadd.f32 %v1372, %v1430
        %v1435 = vadd.f32 %v1373, %v1431
        %v1436 = vadd.f32 %v1374, %v1432
        %1437 = vrot.lane.b32.xlu0 %v1321, 112
        %v1438 = vpop.permute.xlu0 %1437
        %1439 = vrot.lane.b32.xlu0 %v1323, 112
        %v1440 = vpop.permute.xlu0 %1439
        %1441 = vrot.lane.b32.xlu0 %v1322, 112
        %v1442 = vpop.permute.xlu0 %1441
        %1443 = vrot.lane.b32.xlu0 %v1324, 112
        %v1444 = vpop.permute.xlu0 %1443
        %v1445 = vsel %vm487, %v1438, %v1442
        %v1446 = vsel %vm487, %v1440, %v1444
        %v1447 = vsel %vm487, %v1442, %v1438
        %v1448 = vsel %vm487, %v1444, %v1440
        %s1449 = sld [smem:[#allocation10 + $0xa]]
        %v1450 = vstv %s1449
        %v1451 = vmul.f32 %v1450, %v1445
        %v1452 = vmul.f32 %v1450, %v1447
        %v1453 = vmul.f32 %v1450, %v1446
        %v1454 = vmul.f32 %v1450, %v1448
        %v1455 = vadd.f32 %v1393, %v1451
        %v1456 = vadd.f32 %v1394, %v1452
        %v1457 = vadd.f32 %v1395, %v1453
        %v1458 = vadd.f32 %v1396, %v1454
        %s1459 = sld [smem:[#allocation10 + $0x2a]]
        %v1460 = vstv %s1459
        %v1461 = vmul.f32 %v1460, %v1445
        %v1462 = vmul.f32 %v1460, %v1447
        %v1463 = vmul.f32 %v1460, %v1446
        %v1464 = vmul.f32 %v1460, %v1448
        %v1465 = vadd.f32 %v1403, %v1461
        %v1466 = vadd.f32 %v1404, %v1462
        %v1467 = vadd.f32 %v1405, %v1463
        %v1468 = vadd.f32 %v1406, %v1464
        %s1469 = sld [smem:[#allocation10 + $0x4a]]
        %v1470 = vstv %s1469
        %v1471 = vmul.f32 %v1470, %v1445
        %v1472 = vmul.f32 %v1470, %v1447
        %v1473 = vmul.f32 %v1470, %v1446
        %v1474 = vmul.f32 %v1470, %v1448
        %v1475 = vadd.f32 %v1413, %v1471
        %v1476 = vadd.f32 %v1414, %v1472
        %v1477 = vadd.f32 %v1415, %v1473
        %v1478 = vadd.f32 %v1416, %v1474
        %s1479 = sld [smem:[#allocation10 + $0x6a]]
        %v1480 = vstv %s1479
        %v1481 = vmul.f32 %v1480, %v1445
        %v1482 = vmul.f32 %v1480, %v1447
        %v1483 = vmul.f32 %v1480, %v1446
        %v1484 = vmul.f32 %v1480, %v1448
        %v1485 = vadd.f32 %v1423, %v1481
        %v1486 = vadd.f32 %v1424, %v1482
        %v1487 = vadd.f32 %v1425, %v1483
        %v1488 = vadd.f32 %v1426, %v1484
        %s1489 = sld [smem:[#allocation10 + $0x8a]]
        %v1490 = vstv %s1489
        %v1491 = vmul.f32 %v1490, %v1445
        %v1492 = vmul.f32 %v1490, %v1447
        %v1493 = vmul.f32 %v1490, %v1446
        %v1494 = vmul.f32 %v1490, %v1448
        %v1495 = vadd.f32 %v1433, %v1491
        %v1496 = vadd.f32 %v1434, %v1492
        %v1497 = vadd.f32 %v1435, %v1493
        %v1498 = vadd.f32 %v1436, %v1494
        %1499 = vrot.lane.b32.xlu0 %v1321, 111
        %v1500 = vpop.permute.xlu0 %1499
        %1501 = vrot.lane.b32.xlu0 %v1323, 111
        %v1502 = vpop.permute.xlu0 %1501
        %1503 = vrot.lane.b32.xlu0 %v1322, 111
        %v1504 = vpop.permute.xlu0 %1503
        %1505 = vrot.lane.b32.xlu0 %v1324, 111
        %v1506 = vpop.permute.xlu0 %1505
        %v1507 = vsel %vm540, %v1500, %v1504
        %v1508 = vsel %vm540, %v1502, %v1506
        %v1509 = vsel %vm540, %v1504, %v1500
        %v1510 = vsel %vm540, %v1506, %v1502
        %s1511 = sld [smem:[#allocation10 + $0xb]]
        %v1512 = vstv %s1511
        %v1513 = vmul.f32 %v1512, %v1507
        %v1514 = vmul.f32 %v1512, %v1509
        %v1515 = vmul.f32 %v1512, %v1508
        %v1516 = vmul.f32 %v1512, %v1510
        %v1517 = vadd.f32 %v1455, %v1513
        %v1518 = vadd.f32 %v1456, %v1514
        %v1519 = vadd.f32 %v1457, %v1515
        %v1520 = vadd.f32 %v1458, %v1516
        %s1521 = sld [smem:[#allocation10 + $0x2b]]
        %v1522 = vstv %s1521
        %v1523 = vmul.f32 %v1522, %v1507
        %v1524 = vmul.f32 %v1522, %v1509
        %v1525 = vmul.f32 %v1522, %v1508
        %v1526 = vmul.f32 %v1522, %v1510
        %v1527 = vadd.f32 %v1465, %v1523
        %v1528 = vadd.f32 %v1466, %v1524
        %v1529 = vadd.f32 %v1467, %v1525
        %v1530 = vadd.f32 %v1468, %v1526
        %s1531 = sld [smem:[#allocation10 + $0x4b]]
        %v1532 = vstv %s1531
        %v1533 = vmul.f32 %v1532, %v1507
        %v1534 = vmul.f32 %v1532, %v1509
        %v1535 = vmul.f32 %v1532, %v1508
        %v1536 = vmul.f32 %v1532, %v1510
        %v1537 = vadd.f32 %v1475, %v1533
        %v1538 = vadd.f32 %v1476, %v1534
        %v1539 = vadd.f32 %v1477, %v1535
        %v1540 = vadd.f32 %v1478, %v1536
        %s1541 = sld [smem:[#allocation10 + $0x6b]]
        %v1542 = vstv %s1541
        %v1543 = vmul.f32 %v1542, %v1507
        %v1544 = vmul.f32 %v1542, %v1509
        %v1545 = vmul.f32 %v1542, %v1508
        %v1546 = vmul.f32 %v1542, %v1510
        %v1547 = vadd.f32 %v1485, %v1543
        %v1548 = vadd.f32 %v1486, %v1544
        %v1549 = vadd.f32 %v1487, %v1545
        %v1550 = vadd.f32 %v1488, %v1546
        %s1551 = sld [smem:[#allocation10 + $0x8b]]
        %v1552 = vstv %s1551
        %v1553 = vmul.f32 %v1552, %v1507
        %v1554 = vmul.f32 %v1552, %v1509
        %v1555 = vmul.f32 %v1552, %v1508
        %v1556 = vmul.f32 %v1552, %v1510
        %v1557 = vadd.f32 %v1495, %v1553
        %v1558 = vadd.f32 %v1496, %v1554
        %v1559 = vadd.f32 %v1497, %v1555
        %v1560 = vadd.f32 %v1498, %v1556
        %v1561 = vrot.slane %v1321, 1
        %v1562 = vrot.slane %v1322, 1
        %v1563 = vrot.slane %v1323, 1
        %v1564 = vrot.slane %v1324, 1
        %v1565 = vsel %vm591, %v1561, %v1563
        %v1566 = vsel %vm591, %v1562, %v1564
        %v1567 = vsel %vm591, %v1563, %v1561
        %v1568 = vsel %vm591, %v1564, %v1562
        %s1569 = sld [smem:[#allocation10 + $0xc]]
        %v1570 = vstv %s1569
        %v1571 = vmul.f32 %v1570, %v1565
        %v1572 = vmul.f32 %v1570, %v1566
        %v1573 = vmul.f32 %v1570, %v1567
        %v1574 = vmul.f32 %v1570, %v1568
        %v1575 = vadd.f32 %v1517, %v1571
        %v1576 = vadd.f32 %v1518, %v1572
        %v1577 = vadd.f32 %v1519, %v1573
        %v1578 = vadd.f32 %v1520, %v1574
        %s1579 = sld [smem:[#allocation10 + $0x2c]]
        %v1580 = vstv %s1579
        %v1581 = vmul.f32 %v1580, %v1565
        %v1582 = vmul.f32 %v1580, %v1566
        %v1583 = vmul.f32 %v1580, %v1567
        %v1584 = vmul.f32 %v1580, %v1568
        %v1585 = vadd.f32 %v1527, %v1581
        %v1586 = vadd.f32 %v1528, %v1582
        %v1587 = vadd.f32 %v1529, %v1583
        %v1588 = vadd.f32 %v1530, %v1584
        %s1589 = sld [smem:[#allocation10 + $0x4c]]
        %v1590 = vstv %s1589
        %v1591 = vmul.f32 %v1590, %v1565
        %v1592 = vmul.f32 %v1590, %v1566
        %v1593 = vmul.f32 %v1590, %v1567
        %v1594 = vmul.f32 %v1590, %v1568
        %v1595 = vadd.f32 %v1537, %v1591
        %v1596 = vadd.f32 %v1538, %v1592
        %v1597 = vadd.f32 %v1539, %v1593
        %v1598 = vadd.f32 %v1540, %v1594
        %s1599 = sld [smem:[#allocation10 + $0x6c]]
        %v1600 = vstv %s1599
        %v1601 = vmul.f32 %v1600, %v1565
        %v1602 = vmul.f32 %v1600, %v1566
        %v1603 = vmul.f32 %v1600, %v1567
        %v1604 = vmul.f32 %v1600, %v1568
        %v1605 = vadd.f32 %v1547, %v1601
        %v1606 = vadd.f32 %v1548, %v1602
        %v1607 = vadd.f32 %v1549, %v1603
        %v1608 = vadd.f32 %v1550, %v1604
        %s1609 = sld [smem:[#allocation10 + $0x8c]]
        %v1610 = vstv %s1609
        %v1611 = vmul.f32 %v1610, %v1565
        %v1612 = vmul.f32 %v1610, %v1566
        %v1613 = vmul.f32 %v1610, %v1567
        %v1614 = vmul.f32 %v1610, %v1568
        %v1615 = vadd.f32 %v1557, %v1611
        %v1616 = vadd.f32 %v1558, %v1612
        %v1617 = vadd.f32 %v1559, %v1613
        %v1618 = vadd.f32 %v1560, %v1614
        %1619 = vrot.lane.b32.xlu0 %v1565, 127
        %v1620 = vpop.permute.xlu0 %1619
        %1621 = vrot.lane.b32.xlu0 %v1567, 127
        %v1622 = vpop.permute.xlu0 %1621
        %1623 = vrot.lane.b32.xlu0 %v1566, 127
        %v1624 = vpop.permute.xlu0 %1623
        %1625 = vrot.lane.b32.xlu0 %v1568, 127
        %v1626 = vpop.permute.xlu0 %1625
        %v1627 = vsel %vm434, %v1620, %v1624
        %v1628 = vsel %vm434, %v1622, %v1626
        %v1629 = vsel %vm434, %v1624, %v1620
        %v1630 = vsel %vm434, %v1626, %v1622
        %s1631 = sld [smem:[#allocation10 + $0xd]]
        %v1632 = vstv %s1631
        %v1633 = vmul.f32 %v1632, %v1627
        %v1634 = vmul.f32 %v1632, %v1629
        %v1635 = vmul.f32 %v1632, %v1628
        %v1636 = vmul.f32 %v1632, %v1630
        %v1637 = vadd.f32 %v1575, %v1633
        %v1638 = vadd.f32 %v1576, %v1634
        %v1639 = vadd.f32 %v1577, %v1635
        %v1640 = vadd.f32 %v1578, %v1636
        %s1641 = sld [smem:[#allocation10 + $0x2d]]
        %v1642 = vstv %s1641
        %v1643 = vmul.f32 %v1642, %v1627
        %v1644 = vmul.f32 %v1642, %v1629
        %v1645 = vmul.f32 %v1642, %v1628
        %v1646 = vmul.f32 %v1642, %v1630
        %v1647 = vadd.f32 %v1585, %v1643
        %v1648 = vadd.f32 %v1586, %v1644
        %v1649 = vadd.f32 %v1587, %v1645
        %v1650 = vadd.f32 %v1588, %v1646
        %s1651 = sld [smem:[#allocation10 + $0x4d]]
        %v1652 = vstv %s1651
        %v1653 = vmul.f32 %v1652, %v1627
        %v1654 = vmul.f32 %v1652, %v1629
        %v1655 = vmul.f32 %v1652, %v1628
        %v1656 = vmul.f32 %v1652, %v1630
        %v1657 = vadd.f32 %v1595, %v1653
        %v1658 = vadd.f32 %v1596, %v1654
        %v1659 = vadd.f32 %v1597, %v1655
        %v1660 = vadd.f32 %v1598, %v1656
        %s1661 = sld [smem:[#allocation10 + $0x6d]]
        %v1662 = vstv %s1661
        %v1663 = vmul.f32 %v1662, %v1627
        %v1664 = vmul.f32 %v1662, %v1629
        %v1665 = vmul.f32 %v1662, %v1628
        %v1666 = vmul.f32 %v1662, %v1630
        %v1667 = vadd.f32 %v1605, %v1663
        %v1668 = vadd.f32 %v1606, %v1664
        %v1669 = vadd.f32 %v1607, %v1665
        %v1670 = vadd.f32 %v1608, %v1666
        %s1671 = sld [smem:[#allocation10 + $0x8d]]
        %v1672 = vstv %s1671
        %v1673 = vmul.f32 %v1672, %v1627
        %v1674 = vmul.f32 %v1672, %v1629
        %v1675 = vmul.f32 %v1672, %v1628
        %v1676 = vmul.f32 %v1672, %v1630
        %v1677 = vadd.f32 %v1615, %v1673
        %v1678 = vadd.f32 %v1616, %v1674
        %v1679 = vadd.f32 %v1617, %v1675
        %v1680 = vadd.f32 %v1618, %v1676
        %1681 = vrot.lane.b32.xlu0 %v1565, 112
        %v1682 = vpop.permute.xlu0 %1681
        %1683 = vrot.lane.b32.xlu0 %v1567, 112
        %v1684 = vpop.permute.xlu0 %1683
        %1685 = vrot.lane.b32.xlu0 %v1566, 112
        %v1686 = vpop.permute.xlu0 %1685
        %1687 = vrot.lane.b32.xlu0 %v1568, 112
        %v1688 = vpop.permute.xlu0 %1687
        %v1689 = vsel %vm487, %v1682, %v1686
        %v1690 = vsel %vm487, %v1684, %v1688
        %v1691 = vsel %vm487, %v1686, %v1682
        %v1692 = vsel %vm487, %v1688, %v1684
        %s1693 = sld [smem:[#allocation10 + $0xe]]
        %v1694 = vstv %s1693
        %v1695 = vmul.f32 %v1694, %v1689
        %v1696 = vmul.f32 %v1694, %v1691
        %v1697 = vmul.f32 %v1694, %v1690
        %v1698 = vmul.f32 %v1694, %v1692
        %v1699 = vadd.f32 %v1637, %v1695
        %v1700 = vadd.f32 %v1638, %v1696
        %v1701 = vadd.f32 %v1639, %v1697
        %v1702 = vadd.f32 %v1640, %v1698
        %s1703 = sld [smem:[#allocation10 + $0x2e]]
        %v1704 = vstv %s1703
        %v1705 = vmul.f32 %v1704, %v1689
        %v1706 = vmul.f32 %v1704, %v1691
        %v1707 = vmul.f32 %v1704, %v1690
        %v1708 = vmul.f32 %v1704, %v1692
        %v1709 = vadd.f32 %v1647, %v1705
        %v1710 = vadd.f32 %v1648, %v1706
        %v1711 = vadd.f32 %v1649, %v1707
        %v1712 = vadd.f32 %v1650, %v1708
        %s1713 = sld [smem:[#allocation10 + $0x4e]]
        %v1714 = vstv %s1713
        %v1715 = vmul.f32 %v1714, %v1689
        %v1716 = vmul.f32 %v1714, %v1691
        %v1717 = vmul.f32 %v1714, %v1690
        %v1718 = vmul.f32 %v1714, %v1692
        %v1719 = vadd.f32 %v1657, %v1715
        %v1720 = vadd.f32 %v1658, %v1716
        %v1721 = vadd.f32 %v1659, %v1717
        %v1722 = vadd.f32 %v1660, %v1718
        %s1723 = sld [smem:[#allocation10 + $0x6e]]
        %v1724 = vstv %s1723
        %v1725 = vmul.f32 %v1724, %v1689
        %v1726 = vmul.f32 %v1724, %v1691
        %v1727 = vmul.f32 %v1724, %v1690
        %v1728 = vmul.f32 %v1724, %v1692
        %v1729 = vadd.f32 %v1667, %v1725
        %v1730 = vadd.f32 %v1668, %v1726
        %v1731 = vadd.f32 %v1669, %v1727
        %v1732 = vadd.f32 %v1670, %v1728
        %s1733 = sld [smem:[#allocation10 + $0x8e]]
        %v1734 = vstv %s1733
        %v1735 = vmul.f32 %v1734, %v1689
        %v1736 = vmul.f32 %v1734, %v1691
        %v1737 = vmul.f32 %v1734, %v1690
        %v1738 = vmul.f32 %v1734, %v1692
        %v1739 = vadd.f32 %v1677, %v1735
        %v1740 = vadd.f32 %v1678, %v1736
        %v1741 = vadd.f32 %v1679, %v1737
        %v1742 = vadd.f32 %v1680, %v1738
        %1743 = vrot.lane.b32.xlu0 %v1565, 111
        %v1744 = vpop.permute.xlu0 %1743
        %1745 = vrot.lane.b32.xlu0 %v1567, 111
        %v1746 = vpop.permute.xlu0 %1745
        %1747 = vrot.lane.b32.xlu0 %v1566, 111
        %v1748 = vpop.permute.xlu0 %1747
        %1749 = vrot.lane.b32.xlu0 %v1568, 111
        %v1750 = vpop.permute.xlu0 %1749
        %v1751 = vsel %vm540, %v1744, %v1748
        %v1752 = vsel %vm540, %v1746, %v1750
        %v1753 = vsel %vm540, %v1748, %v1744
        %v1754 = vsel %vm540, %v1750, %v1746
        %s1755 = sld [smem:[#allocation10 + $0xf]]
        %v1756 = vstv %s1755
        %v1757 = vmul.f32 %v1756, %v1751
        %v1758 = vmul.f32 %v1756, %v1753
        %v1759 = vmul.f32 %v1756, %v1752
        %v1760 = vmul.f32 %v1756, %v1754
        %v1761 = vadd.f32 %v1699, %v1757
        %v1762 = vadd.f32 %v1700, %v1758
        %v1763 = vadd.f32 %v1701, %v1759
        %v1764 = vadd.f32 %v1702, %v1760
        %s1765 = sld [smem:[#allocation10 + $0x2f]]
        %v1766 = vstv %s1765
        %v1767 = vmul.f32 %v1766, %v1751
        %v1768 = vmul.f32 %v1766, %v1753
        %v1769 = vmul.f32 %v1766, %v1752
        %v1770 = vmul.f32 %v1766, %v1754
        %v1771 = vadd.f32 %v1709, %v1767
        %v1772 = vadd.f32 %v1710, %v1768
        %v1773 = vadd.f32 %v1711, %v1769
        %v1774 = vadd.f32 %v1712, %v1770
        %s1775 = sld [smem:[#allocation10 + $0x4f]]
        %v1776 = vstv %s1775
        %v1777 = vmul.f32 %v1776, %v1751
        %v1778 = vmul.f32 %v1776, %v1753
        %v1779 = vmul.f32 %v1776, %v1752
        %v1780 = vmul.f32 %v1776, %v1754
        %v1781 = vadd.f32 %v1719, %v1777
        %v1782 = vadd.f32 %v1720, %v1778
        %v1783 = vadd.f32 %v1721, %v1779
        %v1784 = vadd.f32 %v1722, %v1780
        %s1785 = sld [smem:[#allocation10 + $0x6f]]
        %v1786 = vstv %s1785
        %v1787 = vmul.f32 %v1786, %v1751
        %v1788 = vmul.f32 %v1786, %v1753
        %v1789 = vmul.f32 %v1786, %v1752
        %v1790 = vmul.f32 %v1786, %v1754
        %v1791 = vadd.f32 %v1729, %v1787
        %v1792 = vadd.f32 %v1730, %v1788
        %v1793 = vadd.f32 %v1731, %v1789
        %v1794 = vadd.f32 %v1732, %v1790
        %s1795 = sld [smem:[#allocation10 + $0x8f]]
        %v1796 = vstv %s1795
        %v1797 = vmul.f32 %v1796, %v1751
        %v1798 = vmul.f32 %v1796, %v1753
        %v1799 = vmul.f32 %v1796, %v1752
        %v1800 = vmul.f32 %v1796, %v1754
        %v1801 = vadd.f32 %v1739, %v1797
        %v1802 = vadd.f32 %v1740, %v1798
        %v1803 = vadd.f32 %v1741, %v1799
        %v1804 = vadd.f32 %v1742, %v1800
        %v1805 = vld [vmem:[%s813] sm:$0xff]
        %v1806 = vld [vmem:[%s813 + $0x8] sm:$0xff]
        %v1807 = vld [vmem:[%s813 + $0x10] sm:$0xff]
        %v1808 = vld [vmem:[%s813 + $0x18] sm:$0xff]
        %s1809 = sld [smem:[#allocation10 + $0x10]]
        %v1810 = vstv %s1809
        %v1811 = vmul.f32 %v1810, %v1805
        %v1812 = vmul.f32 %v1810, %v1806
        %v1813 = vmul.f32 %v1810, %v1807
        %v1814 = vmul.f32 %v1810, %v1808
        %v1815 = vadd.f32 %v1761, %v1811
        %v1816 = vadd.f32 %v1762, %v1812
        %v1817 = vadd.f32 %v1763, %v1813
        %v1818 = vadd.f32 %v1764, %v1814
        %s1819 = sld [smem:[#allocation10 + $0x30]]
        %v1820 = vstv %s1819
        %v1821 = vmul.f32 %v1820, %v1805
        %v1822 = vmul.f32 %v1820, %v1806
        %v1823 = vmul.f32 %v1820, %v1807
        %v1824 = vmul.f32 %v1820, %v1808
        %v1825 = vadd.f32 %v1771, %v1821
        %v1826 = vadd.f32 %v1772, %v1822
        %v1827 = vadd.f32 %v1773, %v1823
        %v1828 = vadd.f32 %v1774, %v1824
        %s1829 = sld [smem:[#allocation10 + $0x50]]
        %v1830 = vstv %s1829
        %v1831 = vmul.f32 %v1830, %v1805
        %v1832 = vmul.f32 %v1830, %v1806
        %v1833 = vmul.f32 %v1830, %v1807
        %v1834 = vmul.f32 %v1830, %v1808
        %v1835 = vadd.f32 %v1781, %v1831
        %v1836 = vadd.f32 %v1782, %v1832
        %v1837 = vadd.f32 %v1783, %v1833
        %v1838 = vadd.f32 %v1784, %v1834
        %s1839 = sld [smem:[#allocation10 + $0x70]]
        %v1840 = vstv %s1839
        %v1841 = vmul.f32 %v1840, %v1805
        %v1842 = vmul.f32 %v1840, %v1806
        %v1843 = vmul.f32 %v1840, %v1807
        %v1844 = vmul.f32 %v1840, %v1808
        %v1845 = vadd.f32 %v1791, %v1841
        %v1846 = vadd.f32 %v1792, %v1842
        %v1847 = vadd.f32 %v1793, %v1843
        %v1848 = vadd.f32 %v1794, %v1844
        %s1849 = sld [smem:[#allocation10 + $0x90]]
        %v1850 = vstv %s1849
        %v1851 = vmul.f32 %v1850, %v1805
        %v1852 = vmul.f32 %v1850, %v1806
        %v1853 = vmul.f32 %v1850, %v1807
        %v1854 = vmul.f32 %v1850, %v1808
        %v1855 = vadd.f32 %v1801, %v1851
        %v1856 = vadd.f32 %v1802, %v1852
        %v1857 = vadd.f32 %v1803, %v1853
        %v1858 = vadd.f32 %v1804, %v1854
        %1859 = vrot.lane.b32.xlu0 %v1805, 127
        %v1860 = vpop.permute.xlu0 %1859
        %1861 = vrot.lane.b32.xlu0 %v1807, 127
        %v1862 = vpop.permute.xlu0 %1861
        %1863 = vrot.lane.b32.xlu0 %v1806, 127
        %v1864 = vpop.permute.xlu0 %1863
        %1865 = vrot.lane.b32.xlu0 %v1808, 127
        %v1866 = vpop.permute.xlu0 %1865
        %v1867 = vsel %vm434, %v1860, %v1864
        %v1868 = vsel %vm434, %v1862, %v1866
        %v1869 = vsel %vm434, %v1864, %v1860
        %v1870 = vsel %vm434, %v1866, %v1862
        %s1871 = sld [smem:[#allocation10 + $0x11]]
        %v1872 = vstv %s1871
        %v1873 = vmul.f32 %v1872, %v1867
        %v1874 = vmul.f32 %v1872, %v1869
        %v1875 = vmul.f32 %v1872, %v1868
        %v1876 = vmul.f32 %v1872, %v1870
        %v1877 = vadd.f32 %v1815, %v1873
        %v1878 = vadd.f32 %v1816, %v1874
        %v1879 = vadd.f32 %v1817, %v1875
        %v1880 = vadd.f32 %v1818, %v1876
        %s1881 = sld [smem:[#allocation10 + $0x31]]
        %v1882 = vstv %s1881
        %v1883 = vmul.f32 %v1882, %v1867
        %v1884 = vmul.f32 %v1882, %v1869
        %v1885 = vmul.f32 %v1882, %v1868
        %v1886 = vmul.f32 %v1882, %v1870
        %v1887 = vadd.f32 %v1825, %v1883
        %v1888 = vadd.f32 %v1826, %v1884
        %v1889 = vadd.f32 %v1827, %v1885
        %v1890 = vadd.f32 %v1828, %v1886
        %s1891 = sld [smem:[#allocation10 + $0x51]]
        %v1892 = vstv %s1891
        %v1893 = vmul.f32 %v1892, %v1867
        %v1894 = vmul.f32 %v1892, %v1869
        %v1895 = vmul.f32 %v1892, %v1868
        %v1896 = vmul.f32 %v1892, %v1870
        %v1897 = vadd.f32 %v1835, %v1893
        %v1898 = vadd.f32 %v1836, %v1894
        %v1899 = vadd.f32 %v1837, %v1895
        %v1900 = vadd.f32 %v1838, %v1896
        %s1901 = sld [smem:[#allocation10 + $0x71]]
        %v1902 = vstv %s1901
        %v1903 = vmul.f32 %v1902, %v1867
        %v1904 = vmul.f32 %v1902, %v1869
        %v1905 = vmul.f32 %v1902, %v1868
        %v1906 = vmul.f32 %v1902, %v1870
        %v1907 = vadd.f32 %v1845, %v1903
        %v1908 = vadd.f32 %v1846, %v1904
        %v1909 = vadd.f32 %v1847, %v1905
        %v1910 = vadd.f32 %v1848, %v1906
        %s1911 = sld [smem:[#allocation10 + $0x91]]
        %v1912 = vstv %s1911
        %v1913 = vmul.f32 %v1912, %v1867
        %v1914 = vmul.f32 %v1912, %v1869
        %v1915 = vmul.f32 %v1912, %v1868
        %v1916 = vmul.f32 %v1912, %v1870
        %v1917 = vadd.f32 %v1855, %v1913
        %v1918 = vadd.f32 %v1856, %v1914
        %v1919 = vadd.f32 %v1857, %v1915
        %v1920 = vadd.f32 %v1858, %v1916
        %1921 = vrot.lane.b32.xlu0 %v1805, 112
        %v1922 = vpop.permute.xlu0 %1921
        %1923 = vrot.lane.b32.xlu0 %v1807, 112
        %v1924 = vpop.permute.xlu0 %1923
        %1925 = vrot.lane.b32.xlu0 %v1806, 112
        %v1926 = vpop.permute.xlu0 %1925
        %1927 = vrot.lane.b32.xlu0 %v1808, 112
        %v1928 = vpop.permute.xlu0 %1927
        %v1929 = vsel %vm487, %v1922, %v1926
        %v1930 = vsel %vm487, %v1924, %v1928
        %v1931 = vsel %vm487, %v1926, %v1922
        %v1932 = vsel %vm487, %v1928, %v1924
        %s1933 = sld [smem:[#allocation10 + $0x12]]
        %v1934 = vstv %s1933
        %v1935 = vmul.f32 %v1934, %v1929
        %v1936 = vmul.f32 %v1934, %v1931
        %v1937 = vmul.f32 %v1934, %v1930
        %v1938 = vmul.f32 %v1934, %v1932
        %v1939 = vadd.f32 %v1877, %v1935
        %v1940 = vadd.f32 %v1878, %v1936
        %v1941 = vadd.f32 %v1879, %v1937
        %v1942 = vadd.f32 %v1880, %v1938
        %s1943 = sld [smem:[#allocation10 + $0x32]]
        %v1944 = vstv %s1943
        %v1945 = vmul.f32 %v1944, %v1929
        %v1946 = vmul.f32 %v1944, %v1931
        %v1947 = vmul.f32 %v1944, %v1930
        %v1948 = vmul.f32 %v1944, %v1932
        %v1949 = vadd.f32 %v1887, %v1945
        %v1950 = vadd.f32 %v1888, %v1946
        %v1951 = vadd.f32 %v1889, %v1947
        %v1952 = vadd.f32 %v1890, %v1948
        %s1953 = sld [smem:[#allocation10 + $0x52]]
        %v1954 = vstv %s1953
        %v1955 = vmul.f32 %v1954, %v1929
        %v1956 = vmul.f32 %v1954, %v1931
        %v1957 = vmul.f32 %v1954, %v1930
        %v1958 = vmul.f32 %v1954, %v1932
        %v1959 = vadd.f32 %v1897, %v1955
        %v1960 = vadd.f32 %v1898, %v1956
        %v1961 = vadd.f32 %v1899, %v1957
        %v1962 = vadd.f32 %v1900, %v1958
        %s1963 = sld [smem:[#allocation10 + $0x72]]
        %v1964 = vstv %s1963
        %v1965 = vmul.f32 %v1964, %v1929
        %v1966 = vmul.f32 %v1964, %v1931
        %v1967 = vmul.f32 %v1964, %v1930
        %v1968 = vmul.f32 %v1964, %v1932
        %v1969 = vadd.f32 %v1907, %v1965
        %v1970 = vadd.f32 %v1908, %v1966
        %v1971 = vadd.f32 %v1909, %v1967
        %v1972 = vadd.f32 %v1910, %v1968
        %s1973 = sld [smem:[#allocation10 + $0x92]]
        %v1974 = vstv %s1973
        %v1975 = vmul.f32 %v1974, %v1929
        %v1976 = vmul.f32 %v1974, %v1931
        %v1977 = vmul.f32 %v1974, %v1930
        %v1978 = vmul.f32 %v1974, %v1932
        %v1979 = vadd.f32 %v1917, %v1975
        %v1980 = vadd.f32 %v1918, %v1976
        %v1981 = vadd.f32 %v1919, %v1977
        %v1982 = vadd.f32 %v1920, %v1978
        %1983 = vrot.lane.b32.xlu0 %v1805, 111
        %v1984 = vpop.permute.xlu0 %1983
        %1985 = vrot.lane.b32.xlu0 %v1807, 111
        %v1986 = vpop.permute.xlu0 %1985
        %1987 = vrot.lane.b32.xlu0 %v1806, 111
        %v1988 = vpop.permute.xlu0 %1987
        %1989 = vrot.lane.b32.xlu0 %v1808, 111
        %v1990 = vpop.permute.xlu0 %1989
        %v1991 = vsel %vm540, %v1984, %v1988
        %v1992 = vsel %vm540, %v1986, %v1990
        %v1993 = vsel %vm540, %v1988, %v1984
        %v1994 = vsel %vm540, %v1990, %v1986
        %s1995 = sld [smem:[#allocation10 + $0x13]]
        %v1996 = vstv %s1995
        %v1997 = vmul.f32 %v1996, %v1991
        %v1998 = vmul.f32 %v1996, %v1993
        %v1999 = vmul.f32 %v1996, %v1992
        %v2000 = vmul.f32 %v1996, %v1994
        %v2001 = vadd.f32 %v1939, %v1997
        %v2002 = vadd.f32 %v1940, %v1998
        %v2003 = vadd.f32 %v1941, %v1999
        %v2004 = vadd.f32 %v1942, %v2000
        %s2005 = sld [smem:[#allocation10 + $0x33]]
        %v2006 = vstv %s2005
        %v2007 = vmul.f32 %v2006, %v1991
        %v2008 = vmul.f32 %v2006, %v1993
        %v2009 = vmul.f32 %v2006, %v1992
        %v2010 = vmul.f32 %v2006, %v1994
        %v2011 = vadd.f32 %v1949, %v2007
        %v2012 = vadd.f32 %v1950, %v2008
        %v2013 = vadd.f32 %v1951, %v2009
        %v2014 = vadd.f32 %v1952, %v2010
        %s2015 = sld [smem:[#allocation10 + $0x53]]
        %v2016 = vstv %s2015
        %v2017 = vmul.f32 %v2016, %v1991
        %v2018 = vmul.f32 %v2016, %v1993
        %v2019 = vmul.f32 %v2016, %v1992
        %v2020 = vmul.f32 %v2016, %v1994
        %v2021 = vadd.f32 %v1959, %v2017
        %v2022 = vadd.f32 %v1960, %v2018
        %v2023 = vadd.f32 %v1961, %v2019
        %v2024 = vadd.f32 %v1962, %v2020
        %s2025 = sld [smem:[#allocation10 + $0x73]]
        %v2026 = vstv %s2025
        %v2027 = vmul.f32 %v2026, %v1991
        %v2028 = vmul.f32 %v2026, %v1993
        %v2029 = vmul.f32 %v2026, %v1992
        %v2030 = vmul.f32 %v2026, %v1994
        %v2031 = vadd.f32 %v1969, %v2027
        %v2032 = vadd.f32 %v1970, %v2028
        %v2033 = vadd.f32 %v1971, %v2029
        %v2034 = vadd.f32 %v1972, %v2030
        %s2035 = sld [smem:[#allocation10 + $0x93]]
        %v2036 = vstv %s2035
        %v2037 = vmul.f32 %v2036, %v1991
        %v2038 = vmul.f32 %v2036, %v1993
        %v2039 = vmul.f32 %v2036, %v1992
        %v2040 = vmul.f32 %v2036, %v1994
        %v2041 = vadd.f32 %v1979, %v2037
        %v2042 = vadd.f32 %v1980, %v2038
        %v2043 = vadd.f32 %v1981, %v2039
        %v2044 = vadd.f32 %v1982, %v2040
        %v2045 = vrot.slane %v1805, 1
        %v2046 = vrot.slane %v1806, 1
        %v2047 = vrot.slane %v1807, 1
        %v2048 = vrot.slane %v1808, 1
        %v2049 = vsel %vm591, %v2045, %v2047
        %v2050 = vsel %vm591, %v2046, %v2048
        %v2051 = vsel %vm591, %v2047, %v2045
        %v2052 = vsel %vm591, %v2048, %v2046
        %s2053 = sld [smem:[#allocation10 + $0x14]]
        %v2054 = vstv %s2053
        %v2055 = vmul.f32 %v2054, %v2049
        %v2056 = vmul.f32 %v2054, %v2050
        %v2057 = vmul.f32 %v2054, %v2051
        %v2058 = vmul.f32 %v2054, %v2052
        %v2059 = vadd.f32 %v2001, %v2055
        %v2060 = vadd.f32 %v2002, %v2056
        %v2061 = vadd.f32 %v2003, %v2057
        %v2062 = vadd.f32 %v2004, %v2058
        %s2063 = sld [smem:[#allocation10 + $0x34]]
        %v2064 = vstv %s2063
        %v2065 = vmul.f32 %v2064, %v2049
        %v2066 = vmul.f32 %v2064, %v2050
        %v2067 = vmul.f32 %v2064, %v2051
        %v2068 = vmul.f32 %v2064, %v2052
        %v2069 = vadd.f32 %v2011, %v2065
        %v2070 = vadd.f32 %v2012, %v2066
        %v2071 = vadd.f32 %v2013, %v2067
        %v2072 = vadd.f32 %v2014, %v2068
        %s2073 = sld [smem:[#allocation10 + $0x54]]
        %v2074 = vstv %s2073
        %v2075 = vmul.f32 %v2074, %v2049
        %v2076 = vmul.f32 %v2074, %v2050
        %v2077 = vmul.f32 %v2074, %v2051
        %v2078 = vmul.f32 %v2074, %v2052
        %v2079 = vadd.f32 %v2021, %v2075
        %v2080 = vadd.f32 %v2022, %v2076
        %v2081 = vadd.f32 %v2023, %v2077
        %v2082 = vadd.f32 %v2024, %v2078
        %s2083 = sld [smem:[#allocation10 + $0x74]]
        %v2084 = vstv %s2083
        %v2085 = vmul.f32 %v2084, %v2049
        %v2086 = vmul.f32 %v2084, %v2050
        %v2087 = vmul.f32 %v2084, %v2051
        %v2088 = vmul.f32 %v2084, %v2052
        %v2089 = vadd.f32 %v2031, %v2085
        %v2090 = vadd.f32 %v2032, %v2086
        %v2091 = vadd.f32 %v2033, %v2087
        %v2092 = vadd.f32 %v2034, %v2088
        %s2093 = sld [smem:[#allocation10 + $0x94]]
        %v2094 = vstv %s2093
        %v2095 = vmul.f32 %v2094, %v2049
        %v2096 = vmul.f32 %v2094, %v2050
        %v2097 = vmul.f32 %v2094, %v2051
        %v2098 = vmul.f32 %v2094, %v2052
        %v2099 = vadd.f32 %v2041, %v2095
        %v2100 = vadd.f32 %v2042, %v2096
        %v2101 = vadd.f32 %v2043, %v2097
        %v2102 = vadd.f32 %v2044, %v2098
        %2103 = vrot.lane.b32.xlu0 %v2049, 127
        %v2104 = vpop.permute.xlu0 %2103
        %2105 = vrot.lane.b32.xlu0 %v2051, 127
        %v2106 = vpop.permute.xlu0 %2105
        %2107 = vrot.lane.b32.xlu0 %v2050, 127
        %v2108 = vpop.permute.xlu0 %2107
        %2109 = vrot.lane.b32.xlu0 %v2052, 127
        %v2110 = vpop.permute.xlu0 %2109
        %v2111 = vsel %vm434, %v2104, %v2108
        %v2112 = vsel %vm434, %v2106, %v2110
        %v2113 = vsel %vm434, %v2108, %v2104
        %v2114 = vsel %vm434, %v2110, %v2106
        %s2115 = sld [smem:[#allocation10 + $0x15]]
        %v2116 = vstv %s2115
        %v2117 = vmul.f32 %v2116, %v2111
        %v2118 = vmul.f32 %v2116, %v2113
        %v2119 = vmul.f32 %v2116, %v2112
        %v2120 = vmul.f32 %v2116, %v2114
        %v2121 = vadd.f32 %v2059, %v2117
        %v2122 = vadd.f32 %v2060, %v2118
        %v2123 = vadd.f32 %v2061, %v2119
        %v2124 = vadd.f32 %v2062, %v2120
        %s2125 = sld [smem:[#allocation10 + $0x35]]
        %v2126 = vstv %s2125
        %v2127 = vmul.f32 %v2126, %v2111
        %v2128 = vmul.f32 %v2126, %v2113
        %v2129 = vmul.f32 %v2126, %v2112
        %v2130 = vmul.f32 %v2126, %v2114
        %v2131 = vadd.f32 %v2069, %v2127
        %v2132 = vadd.f32 %v2070, %v2128
        %v2133 = vadd.f32 %v2071, %v2129
        %v2134 = vadd.f32 %v2072, %v2130
        %s2135 = sld [smem:[#allocation10 + $0x55]]
        %v2136 = vstv %s2135
        %v2137 = vmul.f32 %v2136, %v2111
        %v2138 = vmul.f32 %v2136, %v2113
        %v2139 = vmul.f32 %v2136, %v2112
        %v2140 = vmul.f32 %v2136, %v2114
        %v2141 = vadd.f32 %v2079, %v2137
        %v2142 = vadd.f32 %v2080, %v2138
        %v2143 = vadd.f32 %v2081, %v2139
        %v2144 = vadd.f32 %v2082, %v2140
        %s2145 = sld [smem:[#allocation10 + $0x75]]
        %v2146 = vstv %s2145
        %v2147 = vmul.f32 %v2146, %v2111
        %v2148 = vmul.f32 %v2146, %v2113
        %v2149 = vmul.f32 %v2146, %v2112
        %v2150 = vmul.f32 %v2146, %v2114
        %v2151 = vadd.f32 %v2089, %v2147
        %v2152 = vadd.f32 %v2090, %v2148
        %v2153 = vadd.f32 %v2091, %v2149
        %v2154 = vadd.f32 %v2092, %v2150
        %s2155 = sld [smem:[#allocation10 + $0x95]]
        %v2156 = vstv %s2155
        %v2157 = vmul.f32 %v2156, %v2111
        %v2158 = vmul.f32 %v2156, %v2113
        %v2159 = vmul.f32 %v2156, %v2112
        %v2160 = vmul.f32 %v2156, %v2114
        %v2161 = vadd.f32 %v2099, %v2157
        %v2162 = vadd.f32 %v2100, %v2158
        %v2163 = vadd.f32 %v2101, %v2159
        %v2164 = vadd.f32 %v2102, %v2160
        %2165 = vrot.lane.b32.xlu0 %v2049, 112
        %v2166 = vpop.permute.xlu0 %2165
        %2167 = vrot.lane.b32.xlu0 %v2051, 112
        %v2168 = vpop.permute.xlu0 %2167
        %2169 = vrot.lane.b32.xlu0 %v2050, 112
        %v2170 = vpop.permute.xlu0 %2169
        %2171 = vrot.lane.b32.xlu0 %v2052, 112
        %v2172 = vpop.permute.xlu0 %2171
        %v2173 = vsel %vm487, %v2166, %v2170
        %v2174 = vsel %vm487, %v2168, %v2172
        %v2175 = vsel %vm487, %v2170, %v2166
        %v2176 = vsel %vm487, %v2172, %v2168
        %s2177 = sld [smem:[#allocation10 + $0x16]]
        %v2178 = vstv %s2177
        %v2179 = vmul.f32 %v2178, %v2173
        %v2180 = vmul.f32 %v2178, %v2175
        %v2181 = vmul.f32 %v2178, %v2174
        %v2182 = vmul.f32 %v2178, %v2176
        %v2183 = vadd.f32 %v2121, %v2179
        %v2184 = vadd.f32 %v2122, %v2180
        %v2185 = vadd.f32 %v2123, %v2181
        %v2186 = vadd.f32 %v2124, %v2182
        %s2187 = sld [smem:[#allocation10 + $0x36]]
        %v2188 = vstv %s2187
        %v2189 = vmul.f32 %v2188, %v2173
        %v2190 = vmul.f32 %v2188, %v2175
        %v2191 = vmul.f32 %v2188, %v2174
        %v2192 = vmul.f32 %v2188, %v2176
        %v2193 = vadd.f32 %v2131, %v2189
        %v2194 = vadd.f32 %v2132, %v2190
        %v2195 = vadd.f32 %v2133, %v2191
        %v2196 = vadd.f32 %v2134, %v2192
        %s2197 = sld [smem:[#allocation10 + $0x56]]
        %v2198 = vstv %s2197
        %v2199 = vmul.f32 %v2198, %v2173
        %v2200 = vmul.f32 %v2198, %v2175
        %v2201 = vmul.f32 %v2198, %v2174
        %v2202 = vmul.f32 %v2198, %v2176
        %v2203 = vadd.f32 %v2141, %v2199
        %v2204 = vadd.f32 %v2142, %v2200
        %v2205 = vadd.f32 %v2143, %v2201
        %v2206 = vadd.f32 %v2144, %v2202
        %s2207 = sld [smem:[#allocation10 + $0x76]]
        %v2208 = vstv %s2207
        %v2209 = vmul.f32 %v2208, %v2173
        %v2210 = vmul.f32 %v2208, %v2175
        %v2211 = vmul.f32 %v2208, %v2174
        %v2212 = vmul.f32 %v2208, %v2176
        %v2213 = vadd.f32 %v2151, %v2209
        %v2214 = vadd.f32 %v2152, %v2210
        %v2215 = vadd.f32 %v2153, %v2211
        %v2216 = vadd.f32 %v2154, %v2212
        %s2217 = sld [smem:[#allocation10 + $0x96]]
        %v2218 = vstv %s2217
        %v2219 = vmul.f32 %v2218, %v2173
        %v2220 = vmul.f32 %v2218, %v2175
        %v2221 = vmul.f32 %v2218, %v2174
        %v2222 = vmul.f32 %v2218, %v2176
        %v2223 = vadd.f32 %v2161, %v2219
        %v2224 = vadd.f32 %v2162, %v2220
        %v2225 = vadd.f32 %v2163, %v2221
        %v2226 = vadd.f32 %v2164, %v2222
        %2227 = vrot.lane.b32.xlu0 %v2049, 111
        %v2228 = vpop.permute.xlu0 %2227
        %2229 = vrot.lane.b32.xlu0 %v2051, 111
        %v2230 = vpop.permute.xlu0 %2229
        %2231 = vrot.lane.b32.xlu0 %v2050, 111
        %v2232 = vpop.permute.xlu0 %2231
        %2233 = vrot.lane.b32.xlu0 %v2052, 111
        %v2234 = vpop.permute.xlu0 %2233
        %v2235 = vsel %vm540, %v2228, %v2232
        %v2236 = vsel %vm540, %v2230, %v2234
        %v2237 = vsel %vm540, %v2232, %v2228
        %v2238 = vsel %vm540, %v2234, %v2230
        %s2239 = sld [smem:[#allocation10 + $0x17]]
        %v2240 = vstv %s2239
        %v2241 = vmul.f32 %v2240, %v2235
        %v2242 = vmul.f32 %v2240, %v2237
        %v2243 = vmul.f32 %v2240, %v2236
        %v2244 = vmul.f32 %v2240, %v2238
        %v2245 = vadd.f32 %v2183, %v2241
        %v2246 = vadd.f32 %v2184, %v2242
        %v2247 = vadd.f32 %v2185, %v2243
        %v2248 = vadd.f32 %v2186, %v2244
        %s2249 = sld [smem:[#allocation10 + $0x37]]
        %v2250 = vstv %s2249
        %v2251 = vmul.f32 %v2250, %v2235
        %v2252 = vmul.f32 %v2250, %v2237
        %v2253 = vmul.f32 %v2250, %v2236
        %v2254 = vmul.f32 %v2250, %v2238
        %v2255 = vadd.f32 %v2193, %v2251
        %v2256 = vadd.f32 %v2194, %v2252
        %v2257 = vadd.f32 %v2195, %v2253
        %v2258 = vadd.f32 %v2196, %v2254
        %s2259 = sld [smem:[#allocation10 + $0x57]]
        %v2260 = vstv %s2259
        %v2261 = vmul.f32 %v2260, %v2235
        %v2262 = vmul.f32 %v2260, %v2237
        %v2263 = vmul.f32 %v2260, %v2236
        %v2264 = vmul.f32 %v2260, %v2238
        %v2265 = vadd.f32 %v2203, %v2261
        %v2266 = vadd.f32 %v2204, %v2262
        %v2267 = vadd.f32 %v2205, %v2263
        %v2268 = vadd.f32 %v2206, %v2264
        %s2269 = sld [smem:[#allocation10 + $0x77]]
        %v2270 = vstv %s2269
        %v2271 = vmul.f32 %v2270, %v2235
        %v2272 = vmul.f32 %v2270, %v2237
        %v2273 = vmul.f32 %v2270, %v2236
        %v2274 = vmul.f32 %v2270, %v2238
        %v2275 = vadd.f32 %v2213, %v2271
        %v2276 = vadd.f32 %v2214, %v2272
        %v2277 = vadd.f32 %v2215, %v2273
        %v2278 = vadd.f32 %v2216, %v2274
        %s2279 = sld [smem:[#allocation10 + $0x97]]
        %v2280 = vstv %s2279
        %v2281 = vmul.f32 %v2280, %v2235
        %v2282 = vmul.f32 %v2280, %v2237
        %v2283 = vmul.f32 %v2280, %v2236
        %v2284 = vmul.f32 %v2280, %v2238
        %v2285 = vadd.f32 %v2223, %v2281
        %v2286 = vadd.f32 %v2224, %v2282
        %v2287 = vadd.f32 %v2225, %v2283
        %v2288 = vadd.f32 %v2226, %v2284
        %v2289 = vld [vmem:[%s822] sm:$0xff]
        %v2290 = vld [vmem:[%s822 + $0x8] sm:$0xff]
        %v2291 = vld [vmem:[%s822 + $0x10] sm:$0xff]
        %v2292 = vld [vmem:[%s822 + $0x18] sm:$0xff]
        %s2293 = sld [smem:[#allocation10 + $0x18]]
        %v2294 = vstv %s2293
        %v2295 = vmul.f32 %v2294, %v2289
        %v2296 = vmul.f32 %v2294, %v2290
        %v2297 = vmul.f32 %v2294, %v2291
        %v2298 = vmul.f32 %v2294, %v2292
        %v2299 = vadd.f32 %v2245, %v2295
        %v2300 = vadd.f32 %v2246, %v2296
        %v2301 = vadd.f32 %v2247, %v2297
        %v2302 = vadd.f32 %v2248, %v2298
        %s2303 = sld [smem:[#allocation10 + $0x38]]
        %v2304 = vstv %s2303
        %v2305 = vmul.f32 %v2304, %v2289
        %v2306 = vmul.f32 %v2304, %v2290
        %v2307 = vmul.f32 %v2304, %v2291
        %v2308 = vmul.f32 %v2304, %v2292
        %v2309 = vadd.f32 %v2255, %v2305
        %v2310 = vadd.f32 %v2256, %v2306
        %v2311 = vadd.f32 %v2257, %v2307
        %v2312 = vadd.f32 %v2258, %v2308
        %s2313 = sld [smem:[#allocation10 + $0x58]]
        %v2314 = vstv %s2313
        %v2315 = vmul.f32 %v2314, %v2289
        %v2316 = vmul.f32 %v2314, %v2290
        %v2317 = vmul.f32 %v2314, %v2291
        %v2318 = vmul.f32 %v2314, %v2292
        %v2319 = vadd.f32 %v2265, %v2315
        %v2320 = vadd.f32 %v2266, %v2316
        %v2321 = vadd.f32 %v2267, %v2317
        %v2322 = vadd.f32 %v2268, %v2318
        %s2323 = sld [smem:[#allocation10 + $0x78]]
        %v2324 = vstv %s2323
        %v2325 = vmul.f32 %v2324, %v2289
        %v2326 = vmul.f32 %v2324, %v2290
        %v2327 = vmul.f32 %v2324, %v2291
        %v2328 = vmul.f32 %v2324, %v2292
        %v2329 = vadd.f32 %v2275, %v2325
        %v2330 = vadd.f32 %v2276, %v2326
        %v2331 = vadd.f32 %v2277, %v2327
        %v2332 = vadd.f32 %v2278, %v2328
        %s2333 = sld [smem:[#allocation10 + $0x98]]
        %v2334 = vstv %s2333
        %v2335 = vmul.f32 %v2334, %v2289
        %v2336 = vmul.f32 %v2334, %v2290
        %v2337 = vmul.f32 %v2334, %v2291
        %v2338 = vmul.f32 %v2334, %v2292
        %v2339 = vadd.f32 %v2285, %v2335
        %v2340 = vadd.f32 %v2286, %v2336
        %v2341 = vadd.f32 %v2287, %v2337
        %v2342 = vadd.f32 %v2288, %v2338
        %2343 = vrot.lane.b32.xlu0 %v2289, 127
        %v2344 = vpop.permute.xlu0 %2343
        %2345 = vrot.lane.b32.xlu0 %v2291, 127
        %v2346 = vpop.permute.xlu0 %2345
        %2347 = vrot.lane.b32.xlu0 %v2290, 127
        %v2348 = vpop.permute.xlu0 %2347
        %2349 = vrot.lane.b32.xlu0 %v2292, 127
        %v2350 = vpop.permute.xlu0 %2349
        %v2351 = vsel %vm434, %v2344, %v2348
        %v2352 = vsel %vm434, %v2346, %v2350
        %v2353 = vsel %vm434, %v2348, %v2344
        %v2354 = vsel %vm434, %v2350, %v2346
        %s2355 = sld [smem:[#allocation10 + $0x19]]
        %v2356 = vstv %s2355
        %v2357 = vmul.f32 %v2356, %v2351
        %v2358 = vmul.f32 %v2356, %v2353
        %v2359 = vmul.f32 %v2356, %v2352
        %v2360 = vmul.f32 %v2356, %v2354
        %v2361 = vadd.f32 %v2299, %v2357
        %v2362 = vadd.f32 %v2300, %v2358
        %v2363 = vadd.f32 %v2301, %v2359
        %v2364 = vadd.f32 %v2302, %v2360
        %s2365 = sld [smem:[#allocation10 + $0x39]]
        %v2366 = vstv %s2365
        %v2367 = vmul.f32 %v2366, %v2351
        %v2368 = vmul.f32 %v2366, %v2353
        %v2369 = vmul.f32 %v2366, %v2352
        %v2370 = vmul.f32 %v2366, %v2354
        %v2371 = vadd.f32 %v2309, %v2367
        %v2372 = vadd.f32 %v2310, %v2368
        %v2373 = vadd.f32 %v2311, %v2369
        %v2374 = vadd.f32 %v2312, %v2370
        %s2375 = sld [smem:[#allocation10 + $0x59]]
        %v2376 = vstv %s2375
        %v2377 = vmul.f32 %v2376, %v2351
        %v2378 = vmul.f32 %v2376, %v2353
        %v2379 = vmul.f32 %v2376, %v2352
        %v2380 = vmul.f32 %v2376, %v2354
        %v2381 = vadd.f32 %v2319, %v2377
        %v2382 = vadd.f32 %v2320, %v2378
        %v2383 = vadd.f32 %v2321, %v2379
        %v2384 = vadd.f32 %v2322, %v2380
        %s2385 = sld [smem:[#allocation10 + $0x79]]
        %v2386 = vstv %s2385
        %v2387 = vmul.f32 %v2386, %v2351
        %v2388 = vmul.f32 %v2386, %v2353
        %v2389 = vmul.f32 %v2386, %v2352
        %v2390 = vmul.f32 %v2386, %v2354
        %v2391 = vadd.f32 %v2329, %v2387
        %v2392 = vadd.f32 %v2330, %v2388
        %v2393 = vadd.f32 %v2331, %v2389
        %v2394 = vadd.f32 %v2332, %v2390
        %s2395 = sld [smem:[#allocation10 + $0x99]]
        %v2396 = vstv %s2395
        %v2397 = vmul.f32 %v2396, %v2351
        %v2398 = vmul.f32 %v2396, %v2353
        %v2399 = vmul.f32 %v2396, %v2352
        %v2400 = vmul.f32 %v2396, %v2354
        %v2401 = vadd.f32 %v2339, %v2397
        %v2402 = vadd.f32 %v2340, %v2398
        %v2403 = vadd.f32 %v2341, %v2399
        %v2404 = vadd.f32 %v2342, %v2400
        %2405 = vrot.lane.b32.xlu0 %v2289, 112
        %v2406 = vpop.permute.xlu0 %2405
        %2407 = vrot.lane.b32.xlu0 %v2291, 112
        %v2408 = vpop.permute.xlu0 %2407
        %2409 = vrot.lane.b32.xlu0 %v2290, 112
        %v2410 = vpop.permute.xlu0 %2409
        %2411 = vrot.lane.b32.xlu0 %v2292, 112
        %v2412 = vpop.permute.xlu0 %2411
        %v2413 = vsel %vm487, %v2406, %v2410
        %v2414 = vsel %vm487, %v2408, %v2412
        %v2415 = vsel %vm487, %v2410, %v2406
        %v2416 = vsel %vm487, %v2412, %v2408
        %s2417 = sld [smem:[#allocation10 + $0x1a]]
        %v2418 = vstv %s2417
        %v2419 = vmul.f32 %v2418, %v2413
        %v2420 = vmul.f32 %v2418, %v2415
        %v2421 = vmul.f32 %v2418, %v2414
        %v2422 = vmul.f32 %v2418, %v2416
        %v2423 = vadd.f32 %v2361, %v2419
        %v2424 = vadd.f32 %v2362, %v2420
        %v2425 = vadd.f32 %v2363, %v2421
        %v2426 = vadd.f32 %v2364, %v2422
        %s2427 = sld [smem:[#allocation10 + $0x3a]]
        %v2428 = vstv %s2427
        %v2429 = vmul.f32 %v2428, %v2413
        %v2430 = vmul.f32 %v2428, %v2415
        %v2431 = vmul.f32 %v2428, %v2414
        %v2432 = vmul.f32 %v2428, %v2416
        %v2433 = vadd.f32 %v2371, %v2429
        %v2434 = vadd.f32 %v2372, %v2430
        %v2435 = vadd.f32 %v2373, %v2431
        %v2436 = vadd.f32 %v2374, %v2432
        %s2437 = sld [smem:[#allocation10 + $0x5a]]
        %v2438 = vstv %s2437
        %v2439 = vmul.f32 %v2438, %v2413
        %v2440 = vmul.f32 %v2438, %v2415
        %v2441 = vmul.f32 %v2438, %v2414
        %v2442 = vmul.f32 %v2438, %v2416
        %v2443 = vadd.f32 %v2381, %v2439
        %v2444 = vadd.f32 %v2382, %v2440
        %v2445 = vadd.f32 %v2383, %v2441
        %v2446 = vadd.f32 %v2384, %v2442
        %s2447 = sld [smem:[#allocation10 + $0x7a]]
        %v2448 = vstv %s2447
        %v2449 = vmul.f32 %v2448, %v2413
        %v2450 = vmul.f32 %v2448, %v2415
        %v2451 = vmul.f32 %v2448, %v2414
        %v2452 = vmul.f32 %v2448, %v2416
        %v2453 = vadd.f32 %v2391, %v2449
        %v2454 = vadd.f32 %v2392, %v2450
        %v2455 = vadd.f32 %v2393, %v2451
        %v2456 = vadd.f32 %v2394, %v2452
        %s2457 = sld [smem:[#allocation10 + $0x9a]]
        %v2458 = vstv %s2457
        %v2459 = vmul.f32 %v2458, %v2413
        %v2460 = vmul.f32 %v2458, %v2415
        %v2461 = vmul.f32 %v2458, %v2414
        %v2462 = vmul.f32 %v2458, %v2416
        %v2463 = vadd.f32 %v2401, %v2459
        %v2464 = vadd.f32 %v2402, %v2460
        %v2465 = vadd.f32 %v2403, %v2461
        %v2466 = vadd.f32 %v2404, %v2462
        %2467 = vrot.lane.b32.xlu0 %v2289, 111
        %v2468 = vpop.permute.xlu0 %2467
        %2469 = vrot.lane.b32.xlu0 %v2291, 111
        %v2470 = vpop.permute.xlu0 %2469
        %2471 = vrot.lane.b32.xlu0 %v2290, 111
        %v2472 = vpop.permute.xlu0 %2471
        %2473 = vrot.lane.b32.xlu0 %v2292, 111
        %v2474 = vpop.permute.xlu0 %2473
        %v2475 = vsel %vm540, %v2468, %v2472
        %v2476 = vsel %vm540, %v2470, %v2474
        %v2477 = vsel %vm540, %v2472, %v2468
        %v2478 = vsel %vm540, %v2474, %v2470
        %s2479 = sld [smem:[#allocation10 + $0x1b]]
        %v2480 = vstv %s2479
        %v2481 = vmul.f32 %v2480, %v2475
        %v2482 = vmul.f32 %v2480, %v2477
        %v2483 = vmul.f32 %v2480, %v2476
        %v2484 = vmul.f32 %v2480, %v2478
        %v2485 = vadd.f32 %v2423, %v2481
        %v2486 = vadd.f32 %v2424, %v2482
        %v2487 = vadd.f32 %v2425, %v2483
        %v2488 = vadd.f32 %v2426, %v2484
        %s2489 = sld [smem:[#allocation10 + $0x3b]]
        %v2490 = vstv %s2489
        %v2491 = vmul.f32 %v2490, %v2475
        %v2492 = vmul.f32 %v2490, %v2477
        %v2493 = vmul.f32 %v2490, %v2476
        %v2494 = vmul.f32 %v2490, %v2478
        %v2495 = vadd.f32 %v2433, %v2491
        %v2496 = vadd.f32 %v2434, %v2492
        %v2497 = vadd.f32 %v2435, %v2493
        %v2498 = vadd.f32 %v2436, %v2494
        %s2499 = sld [smem:[#allocation10 + $0x5b]]
        %v2500 = vstv %s2499
        %v2501 = vmul.f32 %v2500, %v2475
        %v2502 = vmul.f32 %v2500, %v2477
        %v2503 = vmul.f32 %v2500, %v2476
        %v2504 = vmul.f32 %v2500, %v2478
        %v2505 = vadd.f32 %v2443, %v2501
        %v2506 = vadd.f32 %v2444, %v2502
        %v2507 = vadd.f32 %v2445, %v2503
        %v2508 = vadd.f32 %v2446, %v2504
        %s2509 = sld [smem:[#allocation10 + $0x7b]]
        %v2510 = vstv %s2509
        %v2511 = vmul.f32 %v2510, %v2475
        %v2512 = vmul.f32 %v2510, %v2477
        %v2513 = vmul.f32 %v2510, %v2476
        %v2514 = vmul.f32 %v2510, %v2478
        %v2515 = vadd.f32 %v2453, %v2511
        %v2516 = vadd.f32 %v2454, %v2512
        %v2517 = vadd.f32 %v2455, %v2513
        %v2518 = vadd.f32 %v2456, %v2514
        %s2519 = sld [smem:[#allocation10 + $0x9b]]
        %v2520 = vstv %s2519
        %v2521 = vmul.f32 %v2520, %v2475
        %v2522 = vmul.f32 %v2520, %v2477
        %v2523 = vmul.f32 %v2520, %v2476
        %v2524 = vmul.f32 %v2520, %v2478
        %v2525 = vadd.f32 %v2463, %v2521
        %v2526 = vadd.f32 %v2464, %v2522
        %v2527 = vadd.f32 %v2465, %v2523
        %v2528 = vadd.f32 %v2466, %v2524
        %v2529 = vrot.slane %v2289, 1
        %v2530 = vrot.slane %v2290, 1
        %v2531 = vrot.slane %v2291, 1
        %v2532 = vrot.slane %v2292, 1
        %v2533 = vsel %vm591, %v2529, %v2531
        %v2534 = vsel %vm591, %v2530, %v2532
        %v2535 = vsel %vm591, %v2531, %v2529
        %v2536 = vsel %vm591, %v2532, %v2530
        %s2537 = sld [smem:[#allocation10 + $0x1c]]
        %v2538 = vstv %s2537
        %v2539 = vmul.f32 %v2538, %v2533
        %v2540 = vmul.f32 %v2538, %v2534
        %v2541 = vmul.f32 %v2538, %v2535
        %v2542 = vmul.f32 %v2538, %v2536
        %v2543 = vadd.f32 %v2485, %v2539
        %v2544 = vadd.f32 %v2486, %v2540
        %v2545 = vadd.f32 %v2487, %v2541
        %v2546 = vadd.f32 %v2488, %v2542
        %s2547 = sld [smem:[#allocation10 + $0x3c]]
        %v2548 = vstv %s2547
        %v2549 = vmul.f32 %v2548, %v2533
        %v2550 = vmul.f32 %v2548, %v2534
        %v2551 = vmul.f32 %v2548, %v2535
        %v2552 = vmul.f32 %v2548, %v2536
        %v2553 = vadd.f32 %v2495, %v2549
        %v2554 = vadd.f32 %v2496, %v2550
        %v2555 = vadd.f32 %v2497, %v2551
        %v2556 = vadd.f32 %v2498, %v2552
        %s2557 = sld [smem:[#allocation10 + $0x5c]]
        %v2558 = vstv %s2557
        %v2559 = vmul.f32 %v2558, %v2533
        %v2560 = vmul.f32 %v2558, %v2534
        %v2561 = vmul.f32 %v2558, %v2535
        %v2562 = vmul.f32 %v2558, %v2536
        %v2563 = vadd.f32 %v2505, %v2559
        %v2564 = vadd.f32 %v2506, %v2560
        %v2565 = vadd.f32 %v2507, %v2561
        %v2566 = vadd.f32 %v2508, %v2562
        %s2567 = sld [smem:[#allocation10 + $0x7c]]
        %v2568 = vstv %s2567
        %v2569 = vmul.f32 %v2568, %v2533
        %v2570 = vmul.f32 %v2568, %v2534
        %v2571 = vmul.f32 %v2568, %v2535
        %v2572 = vmul.f32 %v2568, %v2536
        %v2573 = vadd.f32 %v2515, %v2569
        %v2574 = vadd.f32 %v2516, %v2570
        %v2575 = vadd.f32 %v2517, %v2571
        %v2576 = vadd.f32 %v2518, %v2572
        %s2577 = sld [smem:[#allocation10 + $0x9c]]
        %v2578 = vstv %s2577
        %v2579 = vmul.f32 %v2578, %v2533
        %v2580 = vmul.f32 %v2578, %v2534
        %v2581 = vmul.f32 %v2578, %v2535
        %v2582 = vmul.f32 %v2578, %v2536
        %v2583 = vadd.f32 %v2525, %v2579
        %v2584 = vadd.f32 %v2526, %v2580
        %v2585 = vadd.f32 %v2527, %v2581
        %v2586 = vadd.f32 %v2528, %v2582
        %2587 = vrot.lane.b32.xlu0 %v2533, 127
        %v2588 = vpop.permute.xlu0 %2587
        %2589 = vrot.lane.b32.xlu0 %v2535, 127
        %v2590 = vpop.permute.xlu0 %2589
        %2591 = vrot.lane.b32.xlu0 %v2534, 127
        %v2592 = vpop.permute.xlu0 %2591
        %2593 = vrot.lane.b32.xlu0 %v2536, 127
        %v2594 = vpop.permute.xlu0 %2593
        %v2595 = vsel %vm434, %v2588, %v2592
        %v2596 = vsel %vm434, %v2590, %v2594
        %v2597 = vsel %vm434, %v2592, %v2588
        %v2598 = vsel %vm434, %v2594, %v2590
        %s2599 = sld [smem:[#allocation10 + $0x1d]]
        %v2600 = vstv %s2599
        %v2601 = vmul.f32 %v2600, %v2595
        %v2602 = vmul.f32 %v2600, %v2597
        %v2603 = vmul.f32 %v2600, %v2596
        %v2604 = vmul.f32 %v2600, %v2598
        %v2605 = vadd.f32 %v2543, %v2601
        %v2606 = vadd.f32 %v2544, %v2602
        %v2607 = vadd.f32 %v2545, %v2603
        %v2608 = vadd.f32 %v2546, %v2604
        %s2609 = sld [smem:[#allocation10 + $0x3d]]
        %v2610 = vstv %s2609
        %v2611 = vmul.f32 %v2610, %v2595
        %v2612 = vmul.f32 %v2610, %v2597
        %v2613 = vmul.f32 %v2610, %v2596
        %v2614 = vmul.f32 %v2610, %v2598
        %v2615 = vadd.f32 %v2553, %v2611
        %v2616 = vadd.f32 %v2554, %v2612
        %v2617 = vadd.f32 %v2555, %v2613
        %v2618 = vadd.f32 %v2556, %v2614
        %s2619 = sld [smem:[#allocation10 + $0x5d]]
        %v2620 = vstv %s2619
        %v2621 = vmul.f32 %v2620, %v2595
        %v2622 = vmul.f32 %v2620, %v2597
        %v2623 = vmul.f32 %v2620, %v2596
        %v2624 = vmul.f32 %v2620, %v2598
        %v2625 = vadd.f32 %v2563, %v2621
        %v2626 = vadd.f32 %v2564, %v2622
        %v2627 = vadd.f32 %v2565, %v2623
        %v2628 = vadd.f32 %v2566, %v2624
        %s2629 = sld [smem:[#allocation10 + $0x7d]]
        %v2630 = vstv %s2629
        %v2631 = vmul.f32 %v2630, %v2595
        %v2632 = vmul.f32 %v2630, %v2597
        %v2633 = vmul.f32 %v2630, %v2596
        %v2634 = vmul.f32 %v2630, %v2598
        %v2635 = vadd.f32 %v2573, %v2631
        %v2636 = vadd.f32 %v2574, %v2632
        %v2637 = vadd.f32 %v2575, %v2633
        %v2638 = vadd.f32 %v2576, %v2634
        %s2639 = sld [smem:[#allocation10 + $0x9d]]
        %v2640 = vstv %s2639
        %v2641 = vmul.f32 %v2640, %v2595
        %v2642 = vmul.f32 %v2640, %v2597
        %v2643 = vmul.f32 %v2640, %v2596
        %v2644 = vmul.f32 %v2640, %v2598
        %v2645 = vadd.f32 %v2583, %v2641
        %v2646 = vadd.f32 %v2584, %v2642
        %v2647 = vadd.f32 %v2585, %v2643
        %v2648 = vadd.f32 %v2586, %v2644
        %2649 = vrot.lane.b32.xlu0 %v2533, 112
        %v2650 = vpop.permute.xlu0 %2649
        %2651 = vrot.lane.b32.xlu0 %v2535, 112
        %v2652 = vpop.permute.xlu0 %2651
        %2653 = vrot.lane.b32.xlu0 %v2534, 112
        %v2654 = vpop.permute.xlu0 %2653
        %2655 = vrot.lane.b32.xlu0 %v2536, 112
        %v2656 = vpop.permute.xlu0 %2655
        %v2657 = vsel %vm487, %v2650, %v2654
        %v2658 = vsel %vm487, %v2652, %v2656
        %v2659 = vsel %vm487, %v2654, %v2650
        %v2660 = vsel %vm487, %v2656, %v2652
        %s2661 = sld [smem:[#allocation10 + $0x1e]]
        %v2662 = vstv %s2661
        %v2663 = vmul.f32 %v2662, %v2657
        %v2664 = vmul.f32 %v2662, %v2659
        %v2665 = vmul.f32 %v2662, %v2658
        %v2666 = vmul.f32 %v2662, %v2660
        %v2667 = vadd.f32 %v2605, %v2663
        %v2668 = vadd.f32 %v2606, %v2664
        %v2669 = vadd.f32 %v2607, %v2665
        %v2670 = vadd.f32 %v2608, %v2666
        %s2671 = sld [smem:[#allocation10 + $0x3e]]
        %v2672 = vstv %s2671
        %v2673 = vmul.f32 %v2672, %v2657
        %v2674 = vmul.f32 %v2672, %v2659
        %v2675 = vmul.f32 %v2672, %v2658
        %v2676 = vmul.f32 %v2672, %v2660
        %v2677 = vadd.f32 %v2615, %v2673
        %v2678 = vadd.f32 %v2616, %v2674
        %v2679 = vadd.f32 %v2617, %v2675
        %v2680 = vadd.f32 %v2618, %v2676
        %s2681 = sld [smem:[#allocation10 + $0x5e]]
        %v2682 = vstv %s2681
        %v2683 = vmul.f32 %v2682, %v2657
        %v2684 = vmul.f32 %v2682, %v2659
        %v2685 = vmul.f32 %v2682, %v2658
        %v2686 = vmul.f32 %v2682, %v2660
        %v2687 = vadd.f32 %v2625, %v2683
        %v2688 = vadd.f32 %v2626, %v2684
        %v2689 = vadd.f32 %v2627, %v2685
        %v2690 = vadd.f32 %v2628, %v2686
        %s2691 = sld [smem:[#allocation10 + $0x7e]]
        %v2692 = vstv %s2691
        %v2693 = vmul.f32 %v2692, %v2657
        %v2694 = vmul.f32 %v2692, %v2659
        %v2695 = vmul.f32 %v2692, %v2658
        %v2696 = vmul.f32 %v2692, %v2660
        %v2697 = vadd.f32 %v2635, %v2693
        %v2698 = vadd.f32 %v2636, %v2694
        %v2699 = vadd.f32 %v2637, %v2695
        %v2700 = vadd.f32 %v2638, %v2696
        %s2701 = sld [smem:[#allocation10 + $0x9e]]
        %v2702 = vstv %s2701
        %v2703 = vmul.f32 %v2702, %v2657
        %v2704 = vmul.f32 %v2702, %v2659
        %v2705 = vmul.f32 %v2702, %v2658
        %v2706 = vmul.f32 %v2702, %v2660
        %v2707 = vadd.f32 %v2645, %v2703
        %v2708 = vadd.f32 %v2646, %v2704
        %v2709 = vadd.f32 %v2647, %v2705
        %v2710 = vadd.f32 %v2648, %v2706
        %2711 = vrot.lane.b32.xlu0 %v2533, 111
        %v2712 = vpop.permute.xlu0 %2711
        %2713 = vrot.lane.b32.xlu0 %v2535, 111
        %v2714 = vpop.permute.xlu0 %2713
        %2715 = vrot.lane.b32.xlu0 %v2534, 111
        %v2716 = vpop.permute.xlu0 %2715
        %2717 = vrot.lane.b32.xlu0 %v2536, 111
        %v2718 = vpop.permute.xlu0 %2717
        %v2719 = vsel %vm540, %v2712, %v2716
        %v2720 = vsel %vm540, %v2714, %v2718
        %v2721 = vsel %vm540, %v2716, %v2712
        %v2722 = vsel %vm540, %v2718, %v2714
        %s2723 = sld [smem:[#allocation10 + $0x1f]]
        %v2724 = vstv %s2723
        %v2725 = vmul.f32 %v2724, %v2719
        %v2726 = vmul.f32 %v2724, %v2721
        %v2727 = vmul.f32 %v2724, %v2720
        %v2728 = vmul.f32 %v2724, %v2722
        %v2729 = vadd.f32 %v2667, %v2725
        %v2730 = vadd.f32 %v2668, %v2726
        %v2731 = vadd.f32 %v2669, %v2727
        %v2732 = vadd.f32 %v2670, %v2728
        %s2733 = sld [smem:[#allocation10 + $0x3f]]
        %v2734 = vstv %s2733
        %v2735 = vmul.f32 %v2734, %v2719
        %v2736 = vmul.f32 %v2734, %v2721
        %v2737 = vmul.f32 %v2734, %v2720
        %v2738 = vmul.f32 %v2734, %v2722
        %v2739 = vadd.f32 %v2677, %v2735
        %v2740 = vadd.f32 %v2678, %v2736
        %v2741 = vadd.f32 %v2679, %v2737
        %v2742 = vadd.f32 %v2680, %v2738
        %s2743 = sld [smem:[#allocation10 + $0x5f]]
        %v2744 = vstv %s2743
        %v2745 = vmul.f32 %v2744, %v2719
        %v2746 = vmul.f32 %v2744, %v2721
        %v2747 = vmul.f32 %v2744, %v2720
        %v2748 = vmul.f32 %v2744, %v2722
        %v2749 = vadd.f32 %v2687, %v2745
        %v2750 = vadd.f32 %v2688, %v2746
        %v2751 = vadd.f32 %v2689, %v2747
        %v2752 = vadd.f32 %v2690, %v2748
        %s2753 = sld [smem:[#allocation10 + $0x7f]]
        %v2754 = vstv %s2753
        %v2755 = vmul.f32 %v2754, %v2719
        %v2756 = vmul.f32 %v2754, %v2721
        %v2757 = vmul.f32 %v2754, %v2720
        %v2758 = vmul.f32 %v2754, %v2722
        %v2759 = vadd.f32 %v2697, %v2755
        %v2760 = vadd.f32 %v2698, %v2756
        %v2761 = vadd.f32 %v2699, %v2757
        %v2762 = vadd.f32 %v2700, %v2758
        %s2763 = sld [smem:[#allocation10 + $0x9f]]
        %v2764 = vstv %s2763
        %v2765 = vmul.f32 %v2764, %v2719
        %v2766 = vmul.f32 %v2764, %v2721
        %v2767 = vmul.f32 %v2764, %v2720
        %v2768 = vmul.f32 %v2764, %v2722
        %v2769 = vadd.f32 %v2707, %v2765
        %v2770 = vadd.f32 %v2708, %v2766
        %v2771 = vadd.f32 %v2709, %v2767
        %v2772 = vadd.f32 %v2710, %v2768
        %v2773 = vmax.f32 %v2729, 0.0
        %v2774 = vmax.f32 %v2730, 0.0
        %v2775 = vmax.f32 %v2731, 0.0
        %v2776 = vmax.f32 %v2732, 0.0
        %2777 = vst [vmem:[#allocation3] sm:$0xff] %v2773
        %2778 = vst [vmem:[#allocation3 + $0x8] sm:$0xff] %v2774
        %2779 = vst [vmem:[#allocation3 + $0x10] sm:$0xff] %v2775
        %2780 = vst [vmem:[#allocation3 + $0x18] sm:$0xff] %v2776
        %v2781 = vmax.f32 %v2739, 0.0
        %v2782 = vmax.f32 %v2740, 0.0
        %v2783 = vmax.f32 %v2741, 0.0
        %v2784 = vmax.f32 %v2742, 0.0
        %s2785 = scalar_lea.vmem [#allocation3], 32
        %2786 = vst [vmem:[%s2785] sm:$0xff] %v2781
        %2787 = vst [vmem:[%s2785 + $0x8] sm:$0xff] %v2782
        %2788 = vst [vmem:[%s2785 + $0x10] sm:$0xff] %v2783
        %2789 = vst [vmem:[%s2785 + $0x18] sm:$0xff] %v2784
        %v2790 = vmax.f32 %v2749, 0.0
        %v2791 = vmax.f32 %v2750, 0.0
        %v2792 = vmax.f32 %v2751, 0.0
        %v2793 = vmax.f32 %v2752, 0.0
        %s2794 = scalar_lea.vmem [#allocation3], 64
        %2795 = vst [vmem:[%s2794] sm:$0xff] %v2790
        %2796 = vst [vmem:[%s2794 + $0x8] sm:$0xff] %v2791
        %2797 = vst [vmem:[%s2794 + $0x10] sm:$0xff] %v2792
        %2798 = vst [vmem:[%s2794 + $0x18] sm:$0xff] %v2793
        %v2799 = vmax.f32 %v2759, 0.0
        %v2800 = vmax.f32 %v2760, 0.0
        %v2801 = vmax.f32 %v2761, 0.0
        %v2802 = vmax.f32 %v2762, 0.0
        %s2803 = scalar_lea.vmem [#allocation3], 96
        %2804 = vst [vmem:[%s2803] sm:$0xff] %v2799
        %2805 = vst [vmem:[%s2803 + $0x8] sm:$0xff] %v2800
        %2806 = vst [vmem:[%s2803 + $0x10] sm:$0xff] %v2801
        %2807 = vst [vmem:[%s2803 + $0x18] sm:$0xff] %v2802
        %v2808 = vmax.f32 %v2769, 0.0
        %v2809 = vmax.f32 %v2770, 0.0
        %v2810 = vmax.f32 %v2771, 0.0
        %v2811 = vmax.f32 %v2772, 0.0
        %s2812 = scalar_lea.vmem [#allocation3], 128
        %2813 = vst [vmem:[%s2812] sm:$0xff] %v2808
        %2814 = vst [vmem:[%s2812 + $0x8] sm:$0xff] %v2809
        %2815 = vst [vmem:[%s2812 + $0x10] sm:$0xff] %v2810
        %2816 = vst [vmem:[%s2812 + $0x18] sm:$0xff] %v2811
        %s2817 = sld [smem:[#allocation15]]
        %v2818 = vstv %s2817
        %s2819 = sld [smem:[#allocation15 + $0x1]]
        %v2820 = vstv %s2819
        %s2821 = sld [smem:[#allocation15 + $0x2]]
        %v2822 = vstv %s2821
        %v2823 = vld [vmem:[#allocation3] sm:$0xff]
        %v2824 = vld [vmem:[#allocation3 + $0x8] sm:$0xff]
        %v2825 = vld [vmem:[#allocation3 + $0x10] sm:$0xff]
        %v2826 = vld [vmem:[#allocation3 + $0x18] sm:$0xff]
        %s2827 = sld [smem:[#allocation13]]
        %v2828 = vstv %s2827
        %v2829 = vmul.f32 %v2828, %v2823
        %v2830 = vmul.f32 %v2828, %v2824
        %v2831 = vmul.f32 %v2828, %v2825
        %v2832 = vmul.f32 %v2828, %v2826
        %v2833 = vadd.f32 %v2818, %v2829
        %v2834 = vadd.f32 %v2818, %v2830
        %v2835 = vadd.f32 %v2818, %v2831
        %v2836 = vadd.f32 %v2818, %v2832
        %s2837 = sld [smem:[#allocation13 + $0x28]]
        %v2838 = vstv %s2837
        %v2839 = vmul.f32 %v2838, %v2823
        %v2840 = vmul.f32 %v2838, %v2824
        %v2841 = vmul.f32 %v2838, %v2825
        %v2842 = vmul.f32 %v2838, %v2826
        %v2843 = vadd.f32 %v2820, %v2839
        %v2844 = vadd.f32 %v2820, %v2840
        %v2845 = vadd.f32 %v2820, %v2841
        %v2846 = vadd.f32 %v2820, %v2842
        %s2847 = sld [smem:[#allocation13 + $0x50]]
        %v2848 = vstv %s2847
        %v2849 = vmul.f32 %v2848, %v2823
        %v2850 = vmul.f32 %v2848, %v2824
        %v2851 = vmul.f32 %v2848, %v2825
        %v2852 = vmul.f32 %v2848, %v2826
        %v2853 = vadd.f32 %v2822, %v2849
        %v2854 = vadd.f32 %v2822, %v2850
        %v2855 = vadd.f32 %v2822, %v2851
        %v2856 = vadd.f32 %v2822, %v2852
        %2857 = vrot.lane.b32.xlu0 %v2823, 127
        %v2858 = vpop.permute.xlu0 %2857
        %2859 = vrot.lane.b32.xlu0 %v2825, 127
        %v2860 = vpop.permute.xlu0 %2859
        %2861 = vrot.lane.b32.xlu0 %v2824, 127
        %v2862 = vpop.permute.xlu0 %2861
        %2863 = vrot.lane.b32.xlu0 %v2826, 127
        %v2864 = vpop.permute.xlu0 %2863
        %v2865 = vsel %vm434, %v2858, %v2862
        %v2866 = vsel %vm434, %v2860, %v2864
        %v2867 = vsel %vm434, %v2862, %v2858
        %v2868 = vsel %vm434, %v2864, %v2860
        %s2869 = sld [smem:[#allocation13 + $0x1]]
        %v2870 = vstv %s2869
        %v2871 = vmul.f32 %v2870, %v2865
        %v2872 = vmul.f32 %v2870, %v2867
        %v2873 = vmul.f32 %v2870, %v2866
        %v2874 = vmul.f32 %v2870, %v2868
        %v2875 = vadd.f32 %v2833, %v2871
        %v2876 = vadd.f32 %v2834, %v2872
        %v2877 = vadd.f32 %v2835, %v2873
        %v2878 = vadd.f32 %v2836, %v2874
        %s2879 = sld [smem:[#allocation13 + $0x29]]
        %v2880 = vstv %s2879
        %v2881 = vmul.f32 %v2880, %v2865
        %v2882 = vmul.f32 %v2880, %v2867
        %v2883 = vmul.f32 %v2880, %v2866
        %v2884 = vmul.f32 %v2880, %v2868
        %v2885 = vadd.f32 %v2843, %v2881
        %v2886 = vadd.f32 %v2844, %v2882
        %v2887 = vadd.f32 %v2845, %v2883
        %v2888 = vadd.f32 %v2846, %v2884
        %s2889 = sld [smem:[#allocation13 + $0x51]]
        %v2890 = vstv %s2889
        %v2891 = vmul.f32 %v2890, %v2865
        %v2892 = vmul.f32 %v2890, %v2867
        %v2893 = vmul.f32 %v2890, %v2866
        %v2894 = vmul.f32 %v2890, %v2868
        %v2895 = vadd.f32 %v2853, %v2891
        %v2896 = vadd.f32 %v2854, %v2892
        %v2897 = vadd.f32 %v2855, %v2893
        %v2898 = vadd.f32 %v2856, %v2894
        %2899 = vrot.lane.b32.xlu0 %v2823, 112
        %v2900 = vpop.permute.xlu0 %2899
        %2901 = vrot.lane.b32.xlu0 %v2825, 112
        %v2902 = vpop.permute.xlu0 %2901
        %2903 = vrot.lane.b32.xlu0 %v2824, 112
        %v2904 = vpop.permute.xlu0 %2903
        %2905 = vrot.lane.b32.xlu0 %v2826, 112
        %v2906 = vpop.permute.xlu0 %2905
        %v2907 = vsel %vm487, %v2900, %v2904
        %v2908 = vsel %vm487, %v2902, %v2906
        %v2909 = vsel %vm487, %v2904, %v2900
        %v2910 = vsel %vm487, %v2906, %v2902
        %s2911 = sld [smem:[#allocation13 + $0x2]]
        %v2912 = vstv %s2911
        %v2913 = vmul.f32 %v2912, %v2907
        %v2914 = vmul.f32 %v2912, %v2909
        %v2915 = vmul.f32 %v2912, %v2908
        %v2916 = vmul.f32 %v2912, %v2910
        %v2917 = vadd.f32 %v2875, %v2913
        %v2918 = vadd.f32 %v2876, %v2914
        %v2919 = vadd.f32 %v2877, %v2915
        %v2920 = vadd.f32 %v2878, %v2916
        %s2921 = sld [smem:[#allocation13 + $0x2a]]
        %v2922 = vstv %s2921
        %v2923 = vmul.f32 %v2922, %v2907
        %v2924 = vmul.f32 %v2922, %v2909
        %v2925 = vmul.f32 %v2922, %v2908
        %v2926 = vmul.f32 %v2922, %v2910
        %v2927 = vadd.f32 %v2885, %v2923
        %v2928 = vadd.f32 %v2886, %v2924
        %v2929 = vadd.f32 %v2887, %v2925
        %v2930 = vadd.f32 %v2888, %v2926
        %s2931 = sld [smem:[#allocation13 + $0x52]]
        %v2932 = vstv %s2931
        %v2933 = vmul.f32 %v2932, %v2907
        %v2934 = vmul.f32 %v2932, %v2909
        %v2935 = vmul.f32 %v2932, %v2908
        %v2936 = vmul.f32 %v2932, %v2910
        %v2937 = vadd.f32 %v2895, %v2933
        %v2938 = vadd.f32 %v2896, %v2934
        %v2939 = vadd.f32 %v2897, %v2935
        %v2940 = vadd.f32 %v2898, %v2936
        %2941 = vrot.lane.b32.xlu0 %v2823, 111
        %v2942 = vpop.permute.xlu0 %2941
        %2943 = vrot.lane.b32.xlu0 %v2825, 111
        %v2944 = vpop.permute.xlu0 %2943
        %2945 = vrot.lane.b32.xlu0 %v2824, 111
        %v2946 = vpop.permute.xlu0 %2945
        %2947 = vrot.lane.b32.xlu0 %v2826, 111
        %v2948 = vpop.permute.xlu0 %2947
        %v2949 = vsel %vm540, %v2942, %v2946
        %v2950 = vsel %vm540, %v2944, %v2948
        %v2951 = vsel %vm540, %v2946, %v2942
        %v2952 = vsel %vm540, %v2948, %v2944
        %s2953 = sld [smem:[#allocation13 + $0x3]]
        %v2954 = vstv %s2953
        %v2955 = vmul.f32 %v2954, %v2949
        %v2956 = vmul.f32 %v2954, %v2951
        %v2957 = vmul.f32 %v2954, %v2950
        %v2958 = vmul.f32 %v2954, %v2952
        %v2959 = vadd.f32 %v2917, %v2955
        %v2960 = vadd.f32 %v2918, %v2956
        %v2961 = vadd.f32 %v2919, %v2957
        %v2962 = vadd.f32 %v2920, %v2958
        %s2963 = sld [smem:[#allocation13 + $0x2b]]
        %v2964 = vstv %s2963
        %v2965 = vmul.f32 %v2964, %v2949
        %v2966 = vmul.f32 %v2964, %v2951
        %v2967 = vmul.f32 %v2964, %v2950
        %v2968 = vmul.f32 %v2964, %v2952
        %v2969 = vadd.f32 %v2927, %v2965
        %v2970 = vadd.f32 %v2928, %v2966
        %v2971 = vadd.f32 %v2929, %v2967
        %v2972 = vadd.f32 %v2930, %v2968
        %s2973 = sld [smem:[#allocation13 + $0x53]]
        %v2974 = vstv %s2973
        %v2975 = vmul.f32 %v2974, %v2949
        %v2976 = vmul.f32 %v2974, %v2951
        %v2977 = vmul.f32 %v2974, %v2950
        %v2978 = vmul.f32 %v2974, %v2952
        %v2979 = vadd.f32 %v2937, %v2975
        %v2980 = vadd.f32 %v2938, %v2976
        %v2981 = vadd.f32 %v2939, %v2977
        %v2982 = vadd.f32 %v2940, %v2978
        %v2983 = vrot.slane %v2823, 1
        %v2984 = vrot.slane %v2824, 1
        %v2985 = vrot.slane %v2825, 1
        %v2986 = vrot.slane %v2826, 1
        %v2987 = vsel %vm591, %v2983, %v2985
        %v2988 = vsel %vm591, %v2984, %v2986
        %v2989 = vsel %vm591, %v2985, %v2983
        %v2990 = vsel %vm591, %v2986, %v2984
        %s2991 = sld [smem:[#allocation13 + $0x4]]
        %v2992 = vstv %s2991
        %v2993 = vmul.f32 %v2992, %v2987
        %v2994 = vmul.f32 %v2992, %v2988
        %v2995 = vmul.f32 %v2992, %v2989
        %v2996 = vmul.f32 %v2992, %v2990
        %v2997 = vadd.f32 %v2959, %v2993
        %v2998 = vadd.f32 %v2960, %v2994
        %v2999 = vadd.f32 %v2961, %v2995
        %v3000 = vadd.f32 %v2962, %v2996
        %s3001 = sld [smem:[#allocation13 + $0x2c]]
        %v3002 = vstv %s3001
        %v3003 = vmul.f32 %v3002, %v2987
        %v3004 = vmul.f32 %v3002, %v2988
        %v3005 = vmul.f32 %v3002, %v2989
        %v3006 = vmul.f32 %v3002, %v2990
        %v3007 = vadd.f32 %v2969, %v3003
        %v3008 = vadd.f32 %v2970, %v3004
        %v3009 = vadd.f32 %v2971, %v3005
        %v3010 = vadd.f32 %v2972, %v3006
        %s3011 = sld [smem:[#allocation13 + $0x54]]
        %v3012 = vstv %s3011
        %v3013 = vmul.f32 %v3012, %v2987
        %v3014 = vmul.f32 %v3012, %v2988
        %v3015 = vmul.f32 %v3012, %v2989
        %v3016 = vmul.f32 %v3012, %v2990
        %v3017 = vadd.f32 %v2979, %v3013
        %v3018 = vadd.f32 %v2980, %v3014
        %v3019 = vadd.f32 %v2981, %v3015
        %v3020 = vadd.f32 %v2982, %v3016
        %3021 = vrot.lane.b32.xlu0 %v2987, 127
        %v3022 = vpop.permute.xlu0 %3021
        %3023 = vrot.lane.b32.xlu0 %v2989, 127
        %v3024 = vpop.permute.xlu0 %3023
        %3025 = vrot.lane.b32.xlu0 %v2988, 127
        %v3026 = vpop.permute.xlu0 %3025
        %3027 = vrot.lane.b32.xlu0 %v2990, 127
        %v3028 = vpop.permute.xlu0 %3027
        %v3029 = vsel %vm434, %v3022, %v3026
        %v3030 = vsel %vm434, %v3024, %v3028
        %v3031 = vsel %vm434, %v3026, %v3022
        %v3032 = vsel %vm434, %v3028, %v3024
        %s3033 = sld [smem:[#allocation13 + $0x5]]
        %v3034 = vstv %s3033
        %v3035 = vmul.f32 %v3034, %v3029
        %v3036 = vmul.f32 %v3034, %v3031
        %v3037 = vmul.f32 %v3034, %v3030
        %v3038 = vmul.f32 %v3034, %v3032
        %v3039 = vadd.f32 %v2997, %v3035
        %v3040 = vadd.f32 %v2998, %v3036
        %v3041 = vadd.f32 %v2999, %v3037
        %v3042 = vadd.f32 %v3000, %v3038
        %s3043 = sld [smem:[#allocation13 + $0x2d]]
        %v3044 = vstv %s3043
        %v3045 = vmul.f32 %v3044, %v3029
        %v3046 = vmul.f32 %v3044, %v3031
        %v3047 = vmul.f32 %v3044, %v3030
        %v3048 = vmul.f32 %v3044, %v3032
        %v3049 = vadd.f32 %v3007, %v3045
        %v3050 = vadd.f32 %v3008, %v3046
        %v3051 = vadd.f32 %v3009, %v3047
        %v3052 = vadd.f32 %v3010, %v3048
        %s3053 = sld [smem:[#allocation13 + $0x55]]
        %v3054 = vstv %s3053
        %v3055 = vmul.f32 %v3054, %v3029
        %v3056 = vmul.f32 %v3054, %v3031
        %v3057 = vmul.f32 %v3054, %v3030
        %v3058 = vmul.f32 %v3054, %v3032
        %v3059 = vadd.f32 %v3017, %v3055
        %v3060 = vadd.f32 %v3018, %v3056
        %v3061 = vadd.f32 %v3019, %v3057
        %v3062 = vadd.f32 %v3020, %v3058
        %3063 = vrot.lane.b32.xlu0 %v2987, 112
        %v3064 = vpop.permute.xlu0 %3063
        %3065 = vrot.lane.b32.xlu0 %v2989, 112
        %v3066 = vpop.permute.xlu0 %3065
        %3067 = vrot.lane.b32.xlu0 %v2988, 112
        %v3068 = vpop.permute.xlu0 %3067
        %3069 = vrot.lane.b32.xlu0 %v2990, 112
        %v3070 = vpop.permute.xlu0 %3069
        %v3071 = vsel %vm487, %v3064, %v3068
        %v3072 = vsel %vm487, %v3066, %v3070
        %v3073 = vsel %vm487, %v3068, %v3064
        %v3074 = vsel %vm487, %v3070, %v3066
        %s3075 = sld [smem:[#allocation13 + $0x6]]
        %v3076 = vstv %s3075
        %v3077 = vmul.f32 %v3076, %v3071
        %v3078 = vmul.f32 %v3076, %v3073
        %v3079 = vmul.f32 %v3076, %v3072
        %v3080 = vmul.f32 %v3076, %v3074
        %v3081 = vadd.f32 %v3039, %v3077
        %v3082 = vadd.f32 %v3040, %v3078
        %v3083 = vadd.f32 %v3041, %v3079
        %v3084 = vadd.f32 %v3042, %v3080
        %s3085 = sld [smem:[#allocation13 + $0x2e]]
        %v3086 = vstv %s3085
        %v3087 = vmul.f32 %v3086, %v3071
        %v3088 = vmul.f32 %v3086, %v3073
        %v3089 = vmul.f32 %v3086, %v3072
        %v3090 = vmul.f32 %v3086, %v3074
        %v3091 = vadd.f32 %v3049, %v3087
        %v3092 = vadd.f32 %v3050, %v3088
        %v3093 = vadd.f32 %v3051, %v3089
        %v3094 = vadd.f32 %v3052, %v3090
        %s3095 = sld [smem:[#allocation13 + $0x56]]
        %v3096 = vstv %s3095
        %v3097 = vmul.f32 %v3096, %v3071
        %v3098 = vmul.f32 %v3096, %v3073
        %v3099 = vmul.f32 %v3096, %v3072
        %v3100 = vmul.f32 %v3096, %v3074
        %v3101 = vadd.f32 %v3059, %v3097
        %v3102 = vadd.f32 %v3060, %v3098
        %v3103 = vadd.f32 %v3061, %v3099
        %v3104 = vadd.f32 %v3062, %v3100
        %3105 = vrot.lane.b32.xlu0 %v2987, 111
        %v3106 = vpop.permute.xlu0 %3105
        %3107 = vrot.lane.b32.xlu0 %v2989, 111
        %v3108 = vpop.permute.xlu0 %3107
        %3109 = vrot.lane.b32.xlu0 %v2988, 111
        %v3110 = vpop.permute.xlu0 %3109
        %3111 = vrot.lane.b32.xlu0 %v2990, 111
        %v3112 = vpop.permute.xlu0 %3111
        %v3113 = vsel %vm540, %v3106, %v3110
        %v3114 = vsel %vm540, %v3108, %v3112
        %v3115 = vsel %vm540, %v3110, %v3106
        %v3116 = vsel %vm540, %v3112, %v3108
        %s3117 = sld [smem:[#allocation13 + $0x7]]
        %v3118 = vstv %s3117
        %v3119 = vmul.f32 %v3118, %v3113
        %v3120 = vmul.f32 %v3118, %v3115
        %v3121 = vmul.f32 %v3118, %v3114
        %v3122 = vmul.f32 %v3118, %v3116
        %v3123 = vadd.f32 %v3081, %v3119
        %v3124 = vadd.f32 %v3082, %v3120
        %v3125 = vadd.f32 %v3083, %v3121
        %v3126 = vadd.f32 %v3084, %v3122
        %s3127 = sld [smem:[#allocation13 + $0x2f]]
        %v3128 = vstv %s3127
        %v3129 = vmul.f32 %v3128, %v3113
        %v3130 = vmul.f32 %v3128, %v3115
        %v3131 = vmul.f32 %v3128, %v3114
        %v3132 = vmul.f32 %v3128, %v3116
        %v3133 = vadd.f32 %v3091, %v3129
        %v3134 = vadd.f32 %v3092, %v3130
        %v3135 = vadd.f32 %v3093, %v3131
        %v3136 = vadd.f32 %v3094, %v3132
        %s3137 = sld [smem:[#allocation13 + $0x57]]
        %v3138 = vstv %s3137
        %v3139 = vmul.f32 %v3138, %v3113
        %v3140 = vmul.f32 %v3138, %v3115
        %v3141 = vmul.f32 %v3138, %v3114
        %v3142 = vmul.f32 %v3138, %v3116
        %v3143 = vadd.f32 %v3101, %v3139
        %v3144 = vadd.f32 %v3102, %v3140
        %v3145 = vadd.f32 %v3103, %v3141
        %v3146 = vadd.f32 %v3104, %v3142
        %v3147 = vld [vmem:[%s2785] sm:$0xff]
        %v3148 = vld [vmem:[%s2785 + $0x8] sm:$0xff]
        %v3149 = vld [vmem:[%s2785 + $0x10] sm:$0xff]
        %v3150 = vld [vmem:[%s2785 + $0x18] sm:$0xff]
        %s3151 = sld [smem:[#allocation13 + $0x8]]
        %v3152 = vstv %s3151
        %v3153 = vmul.f32 %v3152, %v3147
        %v3154 = vmul.f32 %v3152, %v3148
        %v3155 = vmul.f32 %v3152, %v3149
        %v3156 = vmul.f32 %v3152, %v3150
        %v3157 = vadd.f32 %v3123, %v3153
        %v3158 = vadd.f32 %v3124, %v3154
        %v3159 = vadd.f32 %v3125, %v3155
        %v3160 = vadd.f32 %v3126, %v3156
        %s3161 = sld [smem:[#allocation13 + $0x30]]
        %v3162 = vstv %s3161
        %v3163 = vmul.f32 %v3162, %v3147
        %v3164 = vmul.f32 %v3162, %v3148
        %v3165 = vmul.f32 %v3162, %v3149
        %v3166 = vmul.f32 %v3162, %v3150
        %v3167 = vadd.f32 %v3133, %v3163
        %v3168 = vadd.f32 %v3134, %v3164
        %v3169 = vadd.f32 %v3135, %v3165
        %v3170 = vadd.f32 %v3136, %v3166
        %s3171 = sld [smem:[#allocation13 + $0x58]]
        %v3172 = vstv %s3171
        %v3173 = vmul.f32 %v3172, %v3147
        %v3174 = vmul.f32 %v3172, %v3148
        %v3175 = vmul.f32 %v3172, %v3149
        %v3176 = vmul.f32 %v3172, %v3150
        %v3177 = vadd.f32 %v3143, %v3173
        %v3178 = vadd.f32 %v3144, %v3174
        %v3179 = vadd.f32 %v3145, %v3175
        %v3180 = vadd.f32 %v3146, %v3176
        %3181 = vrot.lane.b32.xlu0 %v3147, 127
        %v3182 = vpop.permute.xlu0 %3181
        %3183 = vrot.lane.b32.xlu0 %v3149, 127
        %v3184 = vpop.permute.xlu0 %3183
        %3185 = vrot.lane.b32.xlu0 %v3148, 127
        %v3186 = vpop.permute.xlu0 %3185
        %3187 = vrot.lane.b32.xlu0 %v3150, 127
        %v3188 = vpop.permute.xlu0 %3187
        %v3189 = vsel %vm434, %v3182, %v3186
        %v3190 = vsel %vm434, %v3184, %v3188
        %v3191 = vsel %vm434, %v3186, %v3182
        %v3192 = vsel %vm434, %v3188, %v3184
        %s3193 = sld [smem:[#allocation13 + $0x9]]
        %v3194 = vstv %s3193
        %v3195 = vmul.f32 %v3194, %v3189
        %v3196 = vmul.f32 %v3194, %v3191
        %v3197 = vmul.f32 %v3194, %v3190
        %v3198 = vmul.f32 %v3194, %v3192
        %v3199 = vadd.f32 %v3157, %v3195
        %v3200 = vadd.f32 %v3158, %v3196
        %v3201 = vadd.f32 %v3159, %v3197
        %v3202 = vadd.f32 %v3160, %v3198
        %s3203 = sld [smem:[#allocation13 + $0x31]]
        %v3204 = vstv %s3203
        %v3205 = vmul.f32 %v3204, %v3189
        %v3206 = vmul.f32 %v3204, %v3191
        %v3207 = vmul.f32 %v3204, %v3190
        %v3208 = vmul.f32 %v3204, %v3192
        %v3209 = vadd.f32 %v3167, %v3205
        %v3210 = vadd.f32 %v3168, %v3206
        %v3211 = vadd.f32 %v3169, %v3207
        %v3212 = vadd.f32 %v3170, %v3208
        %s3213 = sld [smem:[#allocation13 + $0x59]]
        %v3214 = vstv %s3213
        %v3215 = vmul.f32 %v3214, %v3189
        %v3216 = vmul.f32 %v3214, %v3191
        %v3217 = vmul.f32 %v3214, %v3190
        %v3218 = vmul.f32 %v3214, %v3192
        %v3219 = vadd.f32 %v3177, %v3215
        %v3220 = vadd.f32 %v3178, %v3216
        %v3221 = vadd.f32 %v3179, %v3217
        %v3222 = vadd.f32 %v3180, %v3218
        %3223 = vrot.lane.b32.xlu0 %v3147, 112
        %v3224 = vpop.permute.xlu0 %3223
        %3225 = vrot.lane.b32.xlu0 %v3149, 112
        %v3226 = vpop.permute.xlu0 %3225
        %3227 = vrot.lane.b32.xlu0 %v3148, 112
        %v3228 = vpop.permute.xlu0 %3227
        %3229 = vrot.lane.b32.xlu0 %v3150, 112
        %v3230 = vpop.permute.xlu0 %3229
        %v3231 = vsel %vm487, %v3224, %v3228
        %v3232 = vsel %vm487, %v3226, %v3230
        %v3233 = vsel %vm487, %v3228, %v3224
        %v3234 = vsel %vm487, %v3230, %v3226
        %s3235 = sld [smem:[#allocation13 + $0xa]]
        %v3236 = vstv %s3235
        %v3237 = vmul.f32 %v3236, %v3231
        %v3238 = vmul.f32 %v3236, %v3233
        %v3239 = vmul.f32 %v3236, %v3232
        %v3240 = vmul.f32 %v3236, %v3234
        %v3241 = vadd.f32 %v3199, %v3237
        %v3242 = vadd.f32 %v3200, %v3238
        %v3243 = vadd.f32 %v3201, %v3239
        %v3244 = vadd.f32 %v3202, %v3240
        %s3245 = sld [smem:[#allocation13 + $0x32]]
        %v3246 = vstv %s3245
        %v3247 = vmul.f32 %v3246, %v3231
        %v3248 = vmul.f32 %v3246, %v3233
        %v3249 = vmul.f32 %v3246, %v3232
        %v3250 = vmul.f32 %v3246, %v3234
        %v3251 = vadd.f32 %v3209, %v3247
        %v3252 = vadd.f32 %v3210, %v3248
        %v3253 = vadd.f32 %v3211, %v3249
        %v3254 = vadd.f32 %v3212, %v3250
        %s3255 = sld [smem:[#allocation13 + $0x5a]]
        %v3256 = vstv %s3255
        %v3257 = vmul.f32 %v3256, %v3231
        %v3258 = vmul.f32 %v3256, %v3233
        %v3259 = vmul.f32 %v3256, %v3232
        %v3260 = vmul.f32 %v3256, %v3234
        %v3261 = vadd.f32 %v3219, %v3257
        %v3262 = vadd.f32 %v3220, %v3258
        %v3263 = vadd.f32 %v3221, %v3259
        %v3264 = vadd.f32 %v3222, %v3260
        %3265 = vrot.lane.b32.xlu0 %v3147, 111
        %v3266 = vpop.permute.xlu0 %3265
        %3267 = vrot.lane.b32.xlu0 %v3149, 111
        %v3268 = vpop.permute.xlu0 %3267
        %3269 = vrot.lane.b32.xlu0 %v3148, 111
        %v3270 = vpop.permute.xlu0 %3269
        %3271 = vrot.lane.b32.xlu0 %v3150, 111
        %v3272 = vpop.permute.xlu0 %3271
        %v3273 = vsel %vm540, %v3266, %v3270
        %v3274 = vsel %vm540, %v3268, %v3272
        %v3275 = vsel %vm540, %v3270, %v3266
        %v3276 = vsel %vm540, %v3272, %v3268
        %s3277 = sld [smem:[#allocation13 + $0xb]]
        %v3278 = vstv %s3277
        %v3279 = vmul.f32 %v3278, %v3273
        %v3280 = vmul.f32 %v3278, %v3275
        %v3281 = vmul.f32 %v3278, %v3274
        %v3282 = vmul.f32 %v3278, %v3276
        %v3283 = vadd.f32 %v3241, %v3279
        %v3284 = vadd.f32 %v3242, %v3280
        %v3285 = vadd.f32 %v3243, %v3281
        %v3286 = vadd.f32 %v3244, %v3282
        %s3287 = sld [smem:[#allocation13 + $0x33]]
        %v3288 = vstv %s3287
        %v3289 = vmul.f32 %v3288, %v3273
        %v3290 = vmul.f32 %v3288, %v3275
        %v3291 = vmul.f32 %v3288, %v3274
        %v3292 = vmul.f32 %v3288, %v3276
        %v3293 = vadd.f32 %v3251, %v3289
        %v3294 = vadd.f32 %v3252, %v3290
        %v3295 = vadd.f32 %v3253, %v3291
        %v3296 = vadd.f32 %v3254, %v3292
        %s3297 = sld [smem:[#allocation13 + $0x5b]]
        %v3298 = vstv %s3297
        %v3299 = vmul.f32 %v3298, %v3273
        %v3300 = vmul.f32 %v3298, %v3275
        %v3301 = vmul.f32 %v3298, %v3274
        %v3302 = vmul.f32 %v3298, %v3276
        %v3303 = vadd.f32 %v3261, %v3299
        %v3304 = vadd.f32 %v3262, %v3300
        %v3305 = vadd.f32 %v3263, %v3301
        %v3306 = vadd.f32 %v3264, %v3302
        %v3307 = vrot.slane %v3147, 1
        %v3308 = vrot.slane %v3148, 1
        %v3309 = vrot.slane %v3149, 1
        %v3310 = vrot.slane %v3150, 1
        %v3311 = vsel %vm591, %v3307, %v3309
        %v3312 = vsel %vm591, %v3308, %v3310
        %v3313 = vsel %vm591, %v3309, %v3307
        %v3314 = vsel %vm591, %v3310, %v3308
        %s3315 = sld [smem:[#allocation13 + $0xc]]
        %v3316 = vstv %s3315
        %v3317 = vmul.f32 %v3316, %v3311
        %v3318 = vmul.f32 %v3316, %v3312
        %v3319 = vmul.f32 %v3316, %v3313
        %v3320 = vmul.f32 %v3316, %v3314
        %v3321 = vadd.f32 %v3283, %v3317
        %v3322 = vadd.f32 %v3284, %v3318
        %v3323 = vadd.f32 %v3285, %v3319
        %v3324 = vadd.f32 %v3286, %v3320
        %s3325 = sld [smem:[#allocation13 + $0x34]]
        %v3326 = vstv %s3325
        %v3327 = vmul.f32 %v3326, %v3311
        %v3328 = vmul.f32 %v3326, %v3312
        %v3329 = vmul.f32 %v3326, %v3313
        %v3330 = vmul.f32 %v3326, %v3314
        %v3331 = vadd.f32 %v3293, %v3327
        %v3332 = vadd.f32 %v3294, %v3328
        %v3333 = vadd.f32 %v3295, %v3329
        %v3334 = vadd.f32 %v3296, %v3330
        %s3335 = sld [smem:[#allocation13 + $0x5c]]
        %v3336 = vstv %s3335
        %v3337 = vmul.f32 %v3336, %v3311
        %v3338 = vmul.f32 %v3336, %v3312
        %v3339 = vmul.f32 %v3336, %v3313
        %v3340 = vmul.f32 %v3336, %v3314
        %v3341 = vadd.f32 %v3303, %v3337
        %v3342 = vadd.f32 %v3304, %v3338
        %v3343 = vadd.f32 %v3305, %v3339
        %v3344 = vadd.f32 %v3306, %v3340
        %3345 = vrot.lane.b32.xlu0 %v3311, 127
        %v3346 = vpop.permute.xlu0 %3345
        %3347 = vrot.lane.b32.xlu0 %v3313, 127
        %v3348 = vpop.permute.xlu0 %3347
        %3349 = vrot.lane.b32.xlu0 %v3312, 127
        %v3350 = vpop.permute.xlu0 %3349
        %3351 = vrot.lane.b32.xlu0 %v3314, 127
        %v3352 = vpop.permute.xlu0 %3351
        %v3353 = vsel %vm434, %v3346, %v3350
        %v3354 = vsel %vm434, %v3348, %v3352
        %v3355 = vsel %vm434, %v3350, %v3346
        %v3356 = vsel %vm434, %v3352, %v3348
        %s3357 = sld [smem:[#allocation13 + $0xd]]
        %v3358 = vstv %s3357
        %v3359 = vmul.f32 %v3358, %v3353
        %v3360 = vmul.f32 %v3358, %v3355
        %v3361 = vmul.f32 %v3358, %v3354
        %v3362 = vmul.f32 %v3358, %v3356
        %v3363 = vadd.f32 %v3321, %v3359
        %v3364 = vadd.f32 %v3322, %v3360
        %v3365 = vadd.f32 %v3323, %v3361
        %v3366 = vadd.f32 %v3324, %v3362
        %s3367 = sld [smem:[#allocation13 + $0x35]]
        %v3368 = vstv %s3367
        %v3369 = vmul.f32 %v3368, %v3353
        %v3370 = vmul.f32 %v3368, %v3355
        %v3371 = vmul.f32 %v3368, %v3354
        %v3372 = vmul.f32 %v3368, %v3356
        %v3373 = vadd.f32 %v3331, %v3369
        %v3374 = vadd.f32 %v3332, %v3370
        %v3375 = vadd.f32 %v3333, %v3371
        %v3376 = vadd.f32 %v3334, %v3372
        %s3377 = sld [smem:[#allocation13 + $0x5d]]
        %v3378 = vstv %s3377
        %v3379 = vmul.f32 %v3378, %v3353
        %v3380 = vmul.f32 %v3378, %v3355
        %v3381 = vmul.f32 %v3378, %v3354
        %v3382 = vmul.f32 %v3378, %v3356
        %v3383 = vadd.f32 %v3341, %v3379
        %v3384 = vadd.f32 %v3342, %v3380
        %v3385 = vadd.f32 %v3343, %v3381
        %v3386 = vadd.f32 %v3344, %v3382
        %3387 = vrot.lane.b32.xlu0 %v3311, 112
        %v3388 = vpop.permute.xlu0 %3387
        %3389 = vrot.lane.b32.xlu0 %v3313, 112
        %v3390 = vpop.permute.xlu0 %3389
        %3391 = vrot.lane.b32.xlu0 %v3312, 112
        %v3392 = vpop.permute.xlu0 %3391
        %3393 = vrot.lane.b32.xlu0 %v3314, 112
        %v3394 = vpop.permute.xlu0 %3393
        %v3395 = vsel %vm487, %v3388, %v3392
        %v3396 = vsel %vm487, %v3390, %v3394
        %v3397 = vsel %vm487, %v3392, %v3388
        %v3398 = vsel %vm487, %v3394, %v3390
        %s3399 = sld [smem:[#allocation13 + $0xe]]
        %v3400 = vstv %s3399
        %v3401 = vmul.f32 %v3400, %v3395
        %v3402 = vmul.f32 %v3400, %v3397
        %v3403 = vmul.f32 %v3400, %v3396
        %v3404 = vmul.f32 %v3400, %v3398
        %v3405 = vadd.f32 %v3363, %v3401
        %v3406 = vadd.f32 %v3364, %v3402
        %v3407 = vadd.f32 %v3365, %v3403
        %v3408 = vadd.f32 %v3366, %v3404
        %s3409 = sld [smem:[#allocation13 + $0x36]]
        %v3410 = vstv %s3409
        %v3411 = vmul.f32 %v3410, %v3395
        %v3412 = vmul.f32 %v3410, %v3397
        %v3413 = vmul.f32 %v3410, %v3396
        %v3414 = vmul.f32 %v3410, %v3398
        %v3415 = vadd.f32 %v3373, %v3411
        %v3416 = vadd.f32 %v3374, %v3412
        %v3417 = vadd.f32 %v3375, %v3413
        %v3418 = vadd.f32 %v3376, %v3414
        %s3419 = sld [smem:[#allocation13 + $0x5e]]
        %v3420 = vstv %s3419
        %v3421 = vmul.f32 %v3420, %v3395
        %v3422 = vmul.f32 %v3420, %v3397
        %v3423 = vmul.f32 %v3420, %v3396
        %v3424 = vmul.f32 %v3420, %v3398
        %v3425 = vadd.f32 %v3383, %v3421
        %v3426 = vadd.f32 %v3384, %v3422
        %v3427 = vadd.f32 %v3385, %v3423
        %v3428 = vadd.f32 %v3386, %v3424
        %3429 = vrot.lane.b32.xlu0 %v3311, 111
        %v3430 = vpop.permute.xlu0 %3429
        %3431 = vrot.lane.b32.xlu0 %v3313, 111
        %v3432 = vpop.permute.xlu0 %3431
        %3433 = vrot.lane.b32.xlu0 %v3312, 111
        %v3434 = vpop.permute.xlu0 %3433
        %3435 = vrot.lane.b32.xlu0 %v3314, 111
        %v3436 = vpop.permute.xlu0 %3435
        %v3437 = vsel %vm540, %v3430, %v3434
        %v3438 = vsel %vm540, %v3432, %v3436
        %v3439 = vsel %vm540, %v3434, %v3430
        %v3440 = vsel %vm540, %v3436, %v3432
        %s3441 = sld [smem:[#allocation13 + $0xf]]
        %v3442 = vstv %s3441
        %v3443 = vmul.f32 %v3442, %v3437
        %v3444 = vmul.f32 %v3442, %v3439
        %v3445 = vmul.f32 %v3442, %v3438
        %v3446 = vmul.f32 %v3442, %v3440
        %v3447 = vadd.f32 %v3405, %v3443
        %v3448 = vadd.f32 %v3406, %v3444
        %v3449 = vadd.f32 %v3407, %v3445
        %v3450 = vadd.f32 %v3408, %v3446
        %s3451 = sld [smem:[#allocation13 + $0x37]]
        %v3452 = vstv %s3451
        %v3453 = vmul.f32 %v3452, %v3437
        %v3454 = vmul.f32 %v3452, %v3439
        %v3455 = vmul.f32 %v3452, %v3438
        %v3456 = vmul.f32 %v3452, %v3440
        %v3457 = vadd.f32 %v3415, %v3453
        %v3458 = vadd.f32 %v3416, %v3454
        %v3459 = vadd.f32 %v3417, %v3455
        %v3460 = vadd.f32 %v3418, %v3456
        %s3461 = sld [smem:[#allocation13 + $0x5f]]
        %v3462 = vstv %s3461
        %v3463 = vmul.f32 %v3462, %v3437
        %v3464 = vmul.f32 %v3462, %v3439
        %v3465 = vmul.f32 %v3462, %v3438
        %v3466 = vmul.f32 %v3462, %v3440
        %v3467 = vadd.f32 %v3425, %v3463
        %v3468 = vadd.f32 %v3426, %v3464
        %v3469 = vadd.f32 %v3427, %v3465
        %v3470 = vadd.f32 %v3428, %v3466
        %v3471 = vld [vmem:[%s2794] sm:$0xff]
        %v3472 = vld [vmem:[%s2794 + $0x8] sm:$0xff]
        %v3473 = vld [vmem:[%s2794 + $0x10] sm:$0xff]
        %v3474 = vld [vmem:[%s2794 + $0x18] sm:$0xff]
        %s3475 = sld [smem:[#allocation13 + $0x10]]
        %v3476 = vstv %s3475
        %v3477 = vmul.f32 %v3476, %v3471
        %v3478 = vmul.f32 %v3476, %v3472
        %v3479 = vmul.f32 %v3476, %v3473
        %v3480 = vmul.f32 %v3476, %v3474
        %v3481 = vadd.f32 %v3447, %v3477
        %v3482 = vadd.f32 %v3448, %v3478
        %v3483 = vadd.f32 %v3449, %v3479
        %v3484 = vadd.f32 %v3450, %v3480
        %s3485 = sld [smem:[#allocation13 + $0x38]]
        %v3486 = vstv %s3485
        %v3487 = vmul.f32 %v3486, %v3471
        %v3488 = vmul.f32 %v3486, %v3472
        %v3489 = vmul.f32 %v3486, %v3473
        %v3490 = vmul.f32 %v3486, %v3474
        %v3491 = vadd.f32 %v3457, %v3487
        %v3492 = vadd.f32 %v3458, %v3488
        %v3493 = vadd.f32 %v3459, %v3489
        %v3494 = vadd.f32 %v3460, %v3490
        %s3495 = sld [smem:[#allocation13 + $0x60]]
        %v3496 = vstv %s3495
        %v3497 = vmul.f32 %v3496, %v3471
        %v3498 = vmul.f32 %v3496, %v3472
        %v3499 = vmul.f32 %v3496, %v3473
        %v3500 = vmul.f32 %v3496, %v3474
        %v3501 = vadd.f32 %v3467, %v3497
        %v3502 = vadd.f32 %v3468, %v3498
        %v3503 = vadd.f32 %v3469, %v3499
        %v3504 = vadd.f32 %v3470, %v3500
        %3505 = vrot.lane.b32.xlu0 %v3471, 127
        %v3506 = vpop.permute.xlu0 %3505
        %3507 = vrot.lane.b32.xlu0 %v3473, 127
        %v3508 = vpop.permute.xlu0 %3507
        %3509 = vrot.lane.b32.xlu0 %v3472, 127
        %v3510 = vpop.permute.xlu0 %3509
        %3511 = vrot.lane.b32.xlu0 %v3474, 127
        %v3512 = vpop.permute.xlu0 %3511
        %v3513 = vsel %vm434, %v3506, %v3510
        %v3514 = vsel %vm434, %v3508, %v3512
        %v3515 = vsel %vm434, %v3510, %v3506
        %v3516 = vsel %vm434, %v3512, %v3508
        %s3517 = sld [smem:[#allocation13 + $0x11]]
        %v3518 = vstv %s3517
        %v3519 = vmul.f32 %v3518, %v3513
        %v3520 = vmul.f32 %v3518, %v3515
        %v3521 = vmul.f32 %v3518, %v3514
        %v3522 = vmul.f32 %v3518, %v3516
        %v3523 = vadd.f32 %v3481, %v3519
        %v3524 = vadd.f32 %v3482, %v3520
        %v3525 = vadd.f32 %v3483, %v3521
        %v3526 = vadd.f32 %v3484, %v3522
        %s3527 = sld [smem:[#allocation13 + $0x39]]
        %v3528 = vstv %s3527
        %v3529 = vmul.f32 %v3528, %v3513
        %v3530 = vmul.f32 %v3528, %v3515
        %v3531 = vmul.f32 %v3528, %v3514
        %v3532 = vmul.f32 %v3528, %v3516
        %v3533 = vadd.f32 %v3491, %v3529
        %v3534 = vadd.f32 %v3492, %v3530
        %v3535 = vadd.f32 %v3493, %v3531
        %v3536 = vadd.f32 %v3494, %v3532
        %s3537 = sld [smem:[#allocation13 + $0x61]]
        %v3538 = vstv %s3537
        %v3539 = vmul.f32 %v3538, %v3513
        %v3540 = vmul.f32 %v3538, %v3515
        %v3541 = vmul.f32 %v3538, %v3514
        %v3542 = vmul.f32 %v3538, %v3516
        %v3543 = vadd.f32 %v3501, %v3539
        %v3544 = vadd.f32 %v3502, %v3540
        %v3545 = vadd.f32 %v3503, %v3541
        %v3546 = vadd.f32 %v3504, %v3542
        %3547 = vrot.lane.b32.xlu0 %v3471, 112
        %v3548 = vpop.permute.xlu0 %3547
        %3549 = vrot.lane.b32.xlu0 %v3473, 112
        %v3550 = vpop.permute.xlu0 %3549
        %3551 = vrot.lane.b32.xlu0 %v3472, 112
        %v3552 = vpop.permute.xlu0 %3551
        %3553 = vrot.lane.b32.xlu0 %v3474, 112
        %v3554 = vpop.permute.xlu0 %3553
        %v3555 = vsel %vm487, %v3548, %v3552
        %v3556 = vsel %vm487, %v3550, %v3554
        %v3557 = vsel %vm487, %v3552, %v3548
        %v3558 = vsel %vm487, %v3554, %v3550
        %s3559 = sld [smem:[#allocation13 + $0x12]]
        %v3560 = vstv %s3559
        %v3561 = vmul.f32 %v3560, %v3555
        %v3562 = vmul.f32 %v3560, %v3557
        %v3563 = vmul.f32 %v3560, %v3556
        %v3564 = vmul.f32 %v3560, %v3558
        %v3565 = vadd.f32 %v3523, %v3561
        %v3566 = vadd.f32 %v3524, %v3562
        %v3567 = vadd.f32 %v3525, %v3563
        %v3568 = vadd.f32 %v3526, %v3564
        %s3569 = sld [smem:[#allocation13 + $0x3a]]
        %v3570 = vstv %s3569
        %v3571 = vmul.f32 %v3570, %v3555
        %v3572 = vmul.f32 %v3570, %v3557
        %v3573 = vmul.f32 %v3570, %v3556
        %v3574 = vmul.f32 %v3570, %v3558
        %v3575 = vadd.f32 %v3533, %v3571
        %v3576 = vadd.f32 %v3534, %v3572
        %v3577 = vadd.f32 %v3535, %v3573
        %v3578 = vadd.f32 %v3536, %v3574
        %s3579 = sld [smem:[#allocation13 + $0x62]]
        %v3580 = vstv %s3579
        %v3581 = vmul.f32 %v3580, %v3555
        %v3582 = vmul.f32 %v3580, %v3557
        %v3583 = vmul.f32 %v3580, %v3556
        %v3584 = vmul.f32 %v3580, %v3558
        %v3585 = vadd.f32 %v3543, %v3581
        %v3586 = vadd.f32 %v3544, %v3582
        %v3587 = vadd.f32 %v3545, %v3583
        %v3588 = vadd.f32 %v3546, %v3584
        %3589 = vrot.lane.b32.xlu0 %v3471, 111
        %v3590 = vpop.permute.xlu0 %3589
        %3591 = vrot.lane.b32.xlu0 %v3473, 111
        %v3592 = vpop.permute.xlu0 %3591
        %3593 = vrot.lane.b32.xlu0 %v3472, 111
        %v3594 = vpop.permute.xlu0 %3593
        %3595 = vrot.lane.b32.xlu0 %v3474, 111
        %v3596 = vpop.permute.xlu0 %3595
        %v3597 = vsel %vm540, %v3590, %v3594
        %v3598 = vsel %vm540, %v3592, %v3596
        %v3599 = vsel %vm540, %v3594, %v3590
        %v3600 = vsel %vm540, %v3596, %v3592
        %s3601 = sld [smem:[#allocation13 + $0x13]]
        %v3602 = vstv %s3601
        %v3603 = vmul.f32 %v3602, %v3597
        %v3604 = vmul.f32 %v3602, %v3599
        %v3605 = vmul.f32 %v3602, %v3598
        %v3606 = vmul.f32 %v3602, %v3600
        %v3607 = vadd.f32 %v3565, %v3603
        %v3608 = vadd.f32 %v3566, %v3604
        %v3609 = vadd.f32 %v3567, %v3605
        %v3610 = vadd.f32 %v3568, %v3606
        %s3611 = sld [smem:[#allocation13 + $0x3b]]
        %v3612 = vstv %s3611
        %v3613 = vmul.f32 %v3612, %v3597
        %v3614 = vmul.f32 %v3612, %v3599
        %v3615 = vmul.f32 %v3612, %v3598
        %v3616 = vmul.f32 %v3612, %v3600
        %v3617 = vadd.f32 %v3575, %v3613
        %v3618 = vadd.f32 %v3576, %v3614
        %v3619 = vadd.f32 %v3577, %v3615
        %v3620 = vadd.f32 %v3578, %v3616
        %s3621 = sld [smem:[#allocation13 + $0x63]]
        %v3622 = vstv %s3621
        %v3623 = vmul.f32 %v3622, %v3597
        %v3624 = vmul.f32 %v3622, %v3599
        %v3625 = vmul.f32 %v3622, %v3598
        %v3626 = vmul.f32 %v3622, %v3600
        %v3627 = vadd.f32 %v3585, %v3623
        %v3628 = vadd.f32 %v3586, %v3624
        %v3629 = vadd.f32 %v3587, %v3625
        %v3630 = vadd.f32 %v3588, %v3626
        %v3631 = vrot.slane %v3471, 1
        %v3632 = vrot.slane %v3472, 1
        %v3633 = vrot.slane %v3473, 1
        %v3634 = vrot.slane %v3474, 1
        %v3635 = vsel %vm591, %v3631, %v3633
        %v3636 = vsel %vm591, %v3632, %v3634
        %v3637 = vsel %vm591, %v3633, %v3631
        %v3638 = vsel %vm591, %v3634, %v3632
        %s3639 = sld [smem:[#allocation13 + $0x14]]
        %v3640 = vstv %s3639
        %v3641 = vmul.f32 %v3640, %v3635
        %v3642 = vmul.f32 %v3640, %v3636
        %v3643 = vmul.f32 %v3640, %v3637
        %v3644 = vmul.f32 %v3640, %v3638
        %v3645 = vadd.f32 %v3607, %v3641
        %v3646 = vadd.f32 %v3608, %v3642
        %v3647 = vadd.f32 %v3609, %v3643
        %v3648 = vadd.f32 %v3610, %v3644
        %s3649 = sld [smem:[#allocation13 + $0x3c]]
        %v3650 = vstv %s3649
        %v3651 = vmul.f32 %v3650, %v3635
        %v3652 = vmul.f32 %v3650, %v3636
        %v3653 = vmul.f32 %v3650, %v3637
        %v3654 = vmul.f32 %v3650, %v3638
        %v3655 = vadd.f32 %v3617, %v3651
        %v3656 = vadd.f32 %v3618, %v3652
        %v3657 = vadd.f32 %v3619, %v3653
        %v3658 = vadd.f32 %v3620, %v3654
        %s3659 = sld [smem:[#allocation13 + $0x64]]
        %v3660 = vstv %s3659
        %v3661 = vmul.f32 %v3660, %v3635
        %v3662 = vmul.f32 %v3660, %v3636
        %v3663 = vmul.f32 %v3660, %v3637
        %v3664 = vmul.f32 %v3660, %v3638
        %v3665 = vadd.f32 %v3627, %v3661
        %v3666 = vadd.f32 %v3628, %v3662
        %v3667 = vadd.f32 %v3629, %v3663
        %v3668 = vadd.f32 %v3630, %v3664
        %3669 = vrot.lane.b32.xlu0 %v3635, 127
        %v3670 = vpop.permute.xlu0 %3669
        %3671 = vrot.lane.b32.xlu0 %v3637, 127
        %v3672 = vpop.permute.xlu0 %3671
        %3673 = vrot.lane.b32.xlu0 %v3636, 127
        %v3674 = vpop.permute.xlu0 %3673
        %3675 = vrot.lane.b32.xlu0 %v3638, 127
        %v3676 = vpop.permute.xlu0 %3675
        %v3677 = vsel %vm434, %v3670, %v3674
        %v3678 = vsel %vm434, %v3672, %v3676
        %v3679 = vsel %vm434, %v3674, %v3670
        %v3680 = vsel %vm434, %v3676, %v3672
        %s3681 = sld [smem:[#allocation13 + $0x15]]
        %v3682 = vstv %s3681
        %v3683 = vmul.f32 %v3682, %v3677
        %v3684 = vmul.f32 %v3682, %v3679
        %v3685 = vmul.f32 %v3682, %v3678
        %v3686 = vmul.f32 %v3682, %v3680
        %v3687 = vadd.f32 %v3645, %v3683
        %v3688 = vadd.f32 %v3646, %v3684
        %v3689 = vadd.f32 %v3647, %v3685
        %v3690 = vadd.f32 %v3648, %v3686
        %s3691 = sld [smem:[#allocation13 + $0x3d]]
        %v3692 = vstv %s3691
        %v3693 = vmul.f32 %v3692, %v3677
        %v3694 = vmul.f32 %v3692, %v3679
        %v3695 = vmul.f32 %v3692, %v3678
        %v3696 = vmul.f32 %v3692, %v3680
        %v3697 = vadd.f32 %v3655, %v3693
        %v3698 = vadd.f32 %v3656, %v3694
        %v3699 = vadd.f32 %v3657, %v3695
        %v3700 = vadd.f32 %v3658, %v3696
        %s3701 = sld [smem:[#allocation13 + $0x65]]
        %v3702 = vstv %s3701
        %v3703 = vmul.f32 %v3702, %v3677
        %v3704 = vmul.f32 %v3702, %v3679
        %v3705 = vmul.f32 %v3702, %v3678
        %v3706 = vmul.f32 %v3702, %v3680
        %v3707 = vadd.f32 %v3665, %v3703
        %v3708 = vadd.f32 %v3666, %v3704
        %v3709 = vadd.f32 %v3667, %v3705
        %v3710 = vadd.f32 %v3668, %v3706
        %3711 = vrot.lane.b32.xlu0 %v3635, 112
        %v3712 = vpop.permute.xlu0 %3711
        %3713 = vrot.lane.b32.xlu0 %v3637, 112
        %v3714 = vpop.permute.xlu0 %3713
        %3715 = vrot.lane.b32.xlu0 %v3636, 112
        %v3716 = vpop.permute.xlu0 %3715
        %3717 = vrot.lane.b32.xlu0 %v3638, 112
        %v3718 = vpop.permute.xlu0 %3717
        %v3719 = vsel %vm487, %v3712, %v3716
        %v3720 = vsel %vm487, %v3714, %v3718
        %v3721 = vsel %vm487, %v3716, %v3712
        %v3722 = vsel %vm487, %v3718, %v3714
        %s3723 = sld [smem:[#allocation13 + $0x16]]
        %v3724 = vstv %s3723
        %v3725 = vmul.f32 %v3724, %v3719
        %v3726 = vmul.f32 %v3724, %v3721
        %v3727 = vmul.f32 %v3724, %v3720
        %v3728 = vmul.f32 %v3724, %v3722
        %v3729 = vadd.f32 %v3687, %v3725
        %v3730 = vadd.f32 %v3688, %v3726
        %v3731 = vadd.f32 %v3689, %v3727
        %v3732 = vadd.f32 %v3690, %v3728
        %s3733 = sld [smem:[#allocation13 + $0x3e]]
        %v3734 = vstv %s3733
        %v3735 = vmul.f32 %v3734, %v3719
        %v3736 = vmul.f32 %v3734, %v3721
        %v3737 = vmul.f32 %v3734, %v3720
        %v3738 = vmul.f32 %v3734, %v3722
        %v3739 = vadd.f32 %v3697, %v3735
        %v3740 = vadd.f32 %v3698, %v3736
        %v3741 = vadd.f32 %v3699, %v3737
        %v3742 = vadd.f32 %v3700, %v3738
        %s3743 = sld [smem:[#allocation13 + $0x66]]
        %v3744 = vstv %s3743
        %v3745 = vmul.f32 %v3744, %v3719
        %v3746 = vmul.f32 %v3744, %v3721
        %v3747 = vmul.f32 %v3744, %v3720
        %v3748 = vmul.f32 %v3744, %v3722
        %v3749 = vadd.f32 %v3707, %v3745
        %v3750 = vadd.f32 %v3708, %v3746
        %v3751 = vadd.f32 %v3709, %v3747
        %v3752 = vadd.f32 %v3710, %v3748
        %3753 = vrot.lane.b32.xlu0 %v3635, 111
        %v3754 = vpop.permute.xlu0 %3753
        %3755 = vrot.lane.b32.xlu0 %v3637, 111
        %v3756 = vpop.permute.xlu0 %3755
        %3757 = vrot.lane.b32.xlu0 %v3636, 111
        %v3758 = vpop.permute.xlu0 %3757
        %3759 = vrot.lane.b32.xlu0 %v3638, 111
        %v3760 = vpop.permute.xlu0 %3759
        %v3761 = vsel %vm540, %v3754, %v3758
        %v3762 = vsel %vm540, %v3756, %v3760
        %v3763 = vsel %vm540, %v3758, %v3754
        %v3764 = vsel %vm540, %v3760, %v3756
        %s3765 = sld [smem:[#allocation13 + $0x17]]
        %v3766 = vstv %s3765
        %v3767 = vmul.f32 %v3766, %v3761
        %v3768 = vmul.f32 %v3766, %v3763
        %v3769 = vmul.f32 %v3766, %v3762
        %v3770 = vmul.f32 %v3766, %v3764
        %v3771 = vadd.f32 %v3729, %v3767
        %v3772 = vadd.f32 %v3730, %v3768
        %v3773 = vadd.f32 %v3731, %v3769
        %v3774 = vadd.f32 %v3732, %v3770
        %s3775 = sld [smem:[#allocation13 + $0x3f]]
        %v3776 = vstv %s3775
        %v3777 = vmul.f32 %v3776, %v3761
        %v3778 = vmul.f32 %v3776, %v3763
        %v3779 = vmul.f32 %v3776, %v3762
        %v3780 = vmul.f32 %v3776, %v3764
        %v3781 = vadd.f32 %v3739, %v3777
        %v3782 = vadd.f32 %v3740, %v3778
        %v3783 = vadd.f32 %v3741, %v3779
        %v3784 = vadd.f32 %v3742, %v3780
        %s3785 = sld [smem:[#allocation13 + $0x67]]
        %v3786 = vstv %s3785
        %v3787 = vmul.f32 %v3786, %v3761
        %v3788 = vmul.f32 %v3786, %v3763
        %v3789 = vmul.f32 %v3786, %v3762
        %v3790 = vmul.f32 %v3786, %v3764
        %v3791 = vadd.f32 %v3749, %v3787
        %v3792 = vadd.f32 %v3750, %v3788
        %v3793 = vadd.f32 %v3751, %v3789
        %v3794 = vadd.f32 %v3752, %v3790
        %v3795 = vld [vmem:[%s2803] sm:$0xff]
        %v3796 = vld [vmem:[%s2803 + $0x8] sm:$0xff]
        %v3797 = vld [vmem:[%s2803 + $0x10] sm:$0xff]
        %v3798 = vld [vmem:[%s2803 + $0x18] sm:$0xff]
        %s3799 = sld [smem:[#allocation13 + $0x18]]
        %v3800 = vstv %s3799
        %v3801 = vmul.f32 %v3800, %v3795
        %v3802 = vmul.f32 %v3800, %v3796
        %v3803 = vmul.f32 %v3800, %v3797
        %v3804 = vmul.f32 %v3800, %v3798
        %v3805 = vadd.f32 %v3771, %v3801
        %v3806 = vadd.f32 %v3772, %v3802
        %v3807 = vadd.f32 %v3773, %v3803
        %v3808 = vadd.f32 %v3774, %v3804
        %s3809 = sld [smem:[#allocation13 + $0x40]]
        %v3810 = vstv %s3809
        %v3811 = vmul.f32 %v3810, %v3795
        %v3812 = vmul.f32 %v3810, %v3796
        %v3813 = vmul.f32 %v3810, %v3797
        %v3814 = vmul.f32 %v3810, %v3798
        %v3815 = vadd.f32 %v3781, %v3811
        %v3816 = vadd.f32 %v3782, %v3812
        %v3817 = vadd.f32 %v3783, %v3813
        %v3818 = vadd.f32 %v3784, %v3814
        %s3819 = sld [smem:[#allocation13 + $0x68]]
        %v3820 = vstv %s3819
        %v3821 = vmul.f32 %v3820, %v3795
        %v3822 = vmul.f32 %v3820, %v3796
        %v3823 = vmul.f32 %v3820, %v3797
        %v3824 = vmul.f32 %v3820, %v3798
        %v3825 = vadd.f32 %v3791, %v3821
        %v3826 = vadd.f32 %v3792, %v3822
        %v3827 = vadd.f32 %v3793, %v3823
        %v3828 = vadd.f32 %v3794, %v3824
        %3829 = vrot.lane.b32.xlu0 %v3795, 127
        %v3830 = vpop.permute.xlu0 %3829
        %3831 = vrot.lane.b32.xlu0 %v3797, 127
        %v3832 = vpop.permute.xlu0 %3831
        %3833 = vrot.lane.b32.xlu0 %v3796, 127
        %v3834 = vpop.permute.xlu0 %3833
        %3835 = vrot.lane.b32.xlu0 %v3798, 127
        %v3836 = vpop.permute.xlu0 %3835
        %v3837 = vsel %vm434, %v3830, %v3834
        %v3838 = vsel %vm434, %v3832, %v3836
        %v3839 = vsel %vm434, %v3834, %v3830
        %v3840 = vsel %vm434, %v3836, %v3832
        %s3841 = sld [smem:[#allocation13 + $0x19]]
        %v3842 = vstv %s3841
        %v3843 = vmul.f32 %v3842, %v3837
        %v3844 = vmul.f32 %v3842, %v3839
        %v3845 = vmul.f32 %v3842, %v3838
        %v3846 = vmul.f32 %v3842, %v3840
        %v3847 = vadd.f32 %v3805, %v3843
        %v3848 = vadd.f32 %v3806, %v3844
        %v3849 = vadd.f32 %v3807, %v3845
        %v3850 = vadd.f32 %v3808, %v3846
        %s3851 = sld [smem:[#allocation13 + $0x41]]
        %v3852 = vstv %s3851
        %v3853 = vmul.f32 %v3852, %v3837
        %v3854 = vmul.f32 %v3852, %v3839
        %v3855 = vmul.f32 %v3852, %v3838
        %v3856 = vmul.f32 %v3852, %v3840
        %v3857 = vadd.f32 %v3815, %v3853
        %v3858 = vadd.f32 %v3816, %v3854
        %v3859 = vadd.f32 %v3817, %v3855
        %v3860 = vadd.f32 %v3818, %v3856
        %s3861 = sld [smem:[#allocation13 + $0x69]]
        %v3862 = vstv %s3861
        %v3863 = vmul.f32 %v3862, %v3837
        %v3864 = vmul.f32 %v3862, %v3839
        %v3865 = vmul.f32 %v3862, %v3838
        %v3866 = vmul.f32 %v3862, %v3840
        %v3867 = vadd.f32 %v3825, %v3863
        %v3868 = vadd.f32 %v3826, %v3864
        %v3869 = vadd.f32 %v3827, %v3865
        %v3870 = vadd.f32 %v3828, %v3866
        %3871 = vrot.lane.b32.xlu0 %v3795, 112
        %v3872 = vpop.permute.xlu0 %3871
        %3873 = vrot.lane.b32.xlu0 %v3797, 112
        %v3874 = vpop.permute.xlu0 %3873
        %3875 = vrot.lane.b32.xlu0 %v3796, 112
        %v3876 = vpop.permute.xlu0 %3875
        %3877 = vrot.lane.b32.xlu0 %v3798, 112
        %v3878 = vpop.permute.xlu0 %3877
        %v3879 = vsel %vm487, %v3872, %v3876
        %v3880 = vsel %vm487, %v3874, %v3878
        %v3881 = vsel %vm487, %v3876, %v3872
        %v3882 = vsel %vm487, %v3878, %v3874
        %s3883 = sld [smem:[#allocation13 + $0x1a]]
        %v3884 = vstv %s3883
        %v3885 = vmul.f32 %v3884, %v3879
        %v3886 = vmul.f32 %v3884, %v3881
        %v3887 = vmul.f32 %v3884, %v3880
        %v3888 = vmul.f32 %v3884, %v3882
        %v3889 = vadd.f32 %v3847, %v3885
        %v3890 = vadd.f32 %v3848, %v3886
        %v3891 = vadd.f32 %v3849, %v3887
        %v3892 = vadd.f32 %v3850, %v3888
        %s3893 = sld [smem:[#allocation13 + $0x42]]
        %v3894 = vstv %s3893
        %v3895 = vmul.f32 %v3894, %v3879
        %v3896 = vmul.f32 %v3894, %v3881
        %v3897 = vmul.f32 %v3894, %v3880
        %v3898 = vmul.f32 %v3894, %v3882
        %v3899 = vadd.f32 %v3857, %v3895
        %v3900 = vadd.f32 %v3858, %v3896
        %v3901 = vadd.f32 %v3859, %v3897
        %v3902 = vadd.f32 %v3860, %v3898
        %s3903 = sld [smem:[#allocation13 + $0x6a]]
        %v3904 = vstv %s3903
        %v3905 = vmul.f32 %v3904, %v3879
        %v3906 = vmul.f32 %v3904, %v3881
        %v3907 = vmul.f32 %v3904, %v3880
        %v3908 = vmul.f32 %v3904, %v3882
        %v3909 = vadd.f32 %v3867, %v3905
        %v3910 = vadd.f32 %v3868, %v3906
        %v3911 = vadd.f32 %v3869, %v3907
        %v3912 = vadd.f32 %v3870, %v3908
        %3913 = vrot.lane.b32.xlu0 %v3795, 111
        %v3914 = vpop.permute.xlu0 %3913
        %3915 = vrot.lane.b32.xlu0 %v3797, 111
        %v3916 = vpop.permute.xlu0 %3915
        %3917 = vrot.lane.b32.xlu0 %v3796, 111
        %v3918 = vpop.permute.xlu0 %3917
        %3919 = vrot.lane.b32.xlu0 %v3798, 111
        %v3920 = vpop.permute.xlu0 %3919
        %v3921 = vsel %vm540, %v3914, %v3918
        %v3922 = vsel %vm540, %v3916, %v3920
        %v3923 = vsel %vm540, %v3918, %v3914
        %v3924 = vsel %vm540, %v3920, %v3916
        %s3925 = sld [smem:[#allocation13 + $0x1b]]
        %v3926 = vstv %s3925
        %v3927 = vmul.f32 %v3926, %v3921
        %v3928 = vmul.f32 %v3926, %v3923
        %v3929 = vmul.f32 %v3926, %v3922
        %v3930 = vmul.f32 %v3926, %v3924
        %v3931 = vadd.f32 %v3889, %v3927
        %v3932 = vadd.f32 %v3890, %v3928
        %v3933 = vadd.f32 %v3891, %v3929
        %v3934 = vadd.f32 %v3892, %v3930
        %s3935 = sld [smem:[#allocation13 + $0x43]]
        %v3936 = vstv %s3935
        %v3937 = vmul.f32 %v3936, %v3921
        %v3938 = vmul.f32 %v3936, %v3923
        %v3939 = vmul.f32 %v3936, %v3922
        %v3940 = vmul.f32 %v3936, %v3924
        %v3941 = vadd.f32 %v3899, %v3937
        %v3942 = vadd.f32 %v3900, %v3938
        %v3943 = vadd.f32 %v3901, %v3939
        %v3944 = vadd.f32 %v3902, %v3940
        %s3945 = sld [smem:[#allocation13 + $0x6b]]
        %v3946 = vstv %s3945
        %v3947 = vmul.f32 %v3946, %v3921
        %v3948 = vmul.f32 %v3946, %v3923
        %v3949 = vmul.f32 %v3946, %v3922
        %v3950 = vmul.f32 %v3946, %v3924
        %v3951 = vadd.f32 %v3909, %v3947
        %v3952 = vadd.f32 %v3910, %v3948
        %v3953 = vadd.f32 %v3911, %v3949
        %v3954 = vadd.f32 %v3912, %v3950
        %v3955 = vrot.slane %v3795, 1
        %v3956 = vrot.slane %v3796, 1
        %v3957 = vrot.slane %v3797, 1
        %v3958 = vrot.slane %v3798, 1
        %v3959 = vsel %vm591, %v3955, %v3957
        %v3960 = vsel %vm591, %v3956, %v3958
        %v3961 = vsel %vm591, %v3957, %v3955
        %v3962 = vsel %vm591, %v3958, %v3956
        %s3963 = sld [smem:[#allocation13 + $0x1c]]
        %v3964 = vstv %s3963
        %v3965 = vmul.f32 %v3964, %v3959
        %v3966 = vmul.f32 %v3964, %v3960
        %v3967 = vmul.f32 %v3964, %v3961
        %v3968 = vmul.f32 %v3964, %v3962
        %v3969 = vadd.f32 %v3931, %v3965
        %v3970 = vadd.f32 %v3932, %v3966
        %v3971 = vadd.f32 %v3933, %v3967
        %v3972 = vadd.f32 %v3934, %v3968
        %s3973 = sld [smem:[#allocation13 + $0x44]]
        %v3974 = vstv %s3973
        %v3975 = vmul.f32 %v3974, %v3959
        %v3976 = vmul.f32 %v3974, %v3960
        %v3977 = vmul.f32 %v3974, %v3961
        %v3978 = vmul.f32 %v3974, %v3962
        %v3979 = vadd.f32 %v3941, %v3975
        %v3980 = vadd.f32 %v3942, %v3976
        %v3981 = vadd.f32 %v3943, %v3977
        %v3982 = vadd.f32 %v3944, %v3978
        %s3983 = sld [smem:[#allocation13 + $0x6c]]
        %v3984 = vstv %s3983
        %v3985 = vmul.f32 %v3984, %v3959
        %v3986 = vmul.f32 %v3984, %v3960
        %v3987 = vmul.f32 %v3984, %v3961
        %v3988 = vmul.f32 %v3984, %v3962
        %v3989 = vadd.f32 %v3951, %v3985
        %v3990 = vadd.f32 %v3952, %v3986
        %v3991 = vadd.f32 %v3953, %v3987
        %v3992 = vadd.f32 %v3954, %v3988
        %3993 = vrot.lane.b32.xlu0 %v3959, 127
        %v3994 = vpop.permute.xlu0 %3993
        %3995 = vrot.lane.b32.xlu0 %v3961, 127
        %v3996 = vpop.permute.xlu0 %3995
        %3997 = vrot.lane.b32.xlu0 %v3960, 127
        %v3998 = vpop.permute.xlu0 %3997
        %3999 = vrot.lane.b32.xlu0 %v3962, 127
        %v4000 = vpop.permute.xlu0 %3999
        %v4001 = vsel %vm434, %v3994, %v3998
        %v4002 = vsel %vm434, %v3996, %v4000
        %v4003 = vsel %vm434, %v3998, %v3994
        %v4004 = vsel %vm434, %v4000, %v3996
        %s4005 = sld [smem:[#allocation13 + $0x1d]]
        %v4006 = vstv %s4005
        %v4007 = vmul.f32 %v4006, %v4001
        %v4008 = vmul.f32 %v4006, %v4003
        %v4009 = vmul.f32 %v4006, %v4002
        %v4010 = vmul.f32 %v4006, %v4004
        %v4011 = vadd.f32 %v3969, %v4007
        %v4012 = vadd.f32 %v3970, %v4008
        %v4013 = vadd.f32 %v3971, %v4009
        %v4014 = vadd.f32 %v3972, %v4010
        %s4015 = sld [smem:[#allocation13 + $0x45]]
        %v4016 = vstv %s4015
        %v4017 = vmul.f32 %v4016, %v4001
        %v4018 = vmul.f32 %v4016, %v4003
        %v4019 = vmul.f32 %v4016, %v4002
        %v4020 = vmul.f32 %v4016, %v4004
        %v4021 = vadd.f32 %v3979, %v4017
        %v4022 = vadd.f32 %v3980, %v4018
        %v4023 = vadd.f32 %v3981, %v4019
        %v4024 = vadd.f32 %v3982, %v4020
        %s4025 = sld [smem:[#allocation13 + $0x6d]]
        %v4026 = vstv %s4025
        %v4027 = vmul.f32 %v4026, %v4001
        %v4028 = vmul.f32 %v4026, %v4003
        %v4029 = vmul.f32 %v4026, %v4002
        %v4030 = vmul.f32 %v4026, %v4004
        %v4031 = vadd.f32 %v3989, %v4027
        %v4032 = vadd.f32 %v3990, %v4028
        %v4033 = vadd.f32 %v3991, %v4029
        %v4034 = vadd.f32 %v3992, %v4030
        %4035 = vrot.lane.b32.xlu0 %v3959, 112
        %v4036 = vpop.permute.xlu0 %4035
        %4037 = vrot.lane.b32.xlu0 %v3961, 112
        %v4038 = vpop.permute.xlu0 %4037
        %4039 = vrot.lane.b32.xlu0 %v3960, 112
        %v4040 = vpop.permute.xlu0 %4039
        %4041 = vrot.lane.b32.xlu0 %v3962, 112
        %v4042 = vpop.permute.xlu0 %4041
        %v4043 = vsel %vm487, %v4036, %v4040
        %v4044 = vsel %vm487, %v4038, %v4042
        %v4045 = vsel %vm487, %v4040, %v4036
        %v4046 = vsel %vm487, %v4042, %v4038
        %s4047 = sld [smem:[#allocation13 + $0x1e]]
        %v4048 = vstv %s4047
        %v4049 = vmul.f32 %v4048, %v4043
        %v4050 = vmul.f32 %v4048, %v4045
        %v4051 = vmul.f32 %v4048, %v4044
        %v4052 = vmul.f32 %v4048, %v4046
        %v4053 = vadd.f32 %v4011, %v4049
        %v4054 = vadd.f32 %v4012, %v4050
        %v4055 = vadd.f32 %v4013, %v4051
        %v4056 = vadd.f32 %v4014, %v4052
        %s4057 = sld [smem:[#allocation13 + $0x46]]
        %v4058 = vstv %s4057
        %v4059 = vmul.f32 %v4058, %v4043
        %v4060 = vmul.f32 %v4058, %v4045
        %v4061 = vmul.f32 %v4058, %v4044
        %v4062 = vmul.f32 %v4058, %v4046
        %v4063 = vadd.f32 %v4021, %v4059
        %v4064 = vadd.f32 %v4022, %v4060
        %v4065 = vadd.f32 %v4023, %v4061
        %v4066 = vadd.f32 %v4024, %v4062
        %s4067 = sld [smem:[#allocation13 + $0x6e]]
        %v4068 = vstv %s4067
        %v4069 = vmul.f32 %v4068, %v4043
        %v4070 = vmul.f32 %v4068, %v4045
        %v4071 = vmul.f32 %v4068, %v4044
        %v4072 = vmul.f32 %v4068, %v4046
        %v4073 = vadd.f32 %v4031, %v4069
        %v4074 = vadd.f32 %v4032, %v4070
        %v4075 = vadd.f32 %v4033, %v4071
        %v4076 = vadd.f32 %v4034, %v4072
        %4077 = vrot.lane.b32.xlu0 %v3959, 111
        %v4078 = vpop.permute.xlu0 %4077
        %4079 = vrot.lane.b32.xlu0 %v3961, 111
        %v4080 = vpop.permute.xlu0 %4079
        %4081 = vrot.lane.b32.xlu0 %v3960, 111
        %v4082 = vpop.permute.xlu0 %4081
        %4083 = vrot.lane.b32.xlu0 %v3962, 111
        %v4084 = vpop.permute.xlu0 %4083
        %v4085 = vsel %vm540, %v4078, %v4082
        %v4086 = vsel %vm540, %v4080, %v4084
        %v4087 = vsel %vm540, %v4082, %v4078
        %v4088 = vsel %vm540, %v4084, %v4080
        %s4089 = sld [smem:[#allocation13 + $0x1f]]
        %v4090 = vstv %s4089
        %v4091 = vmul.f32 %v4090, %v4085
        %v4092 = vmul.f32 %v4090, %v4087
        %v4093 = vmul.f32 %v4090, %v4086
        %v4094 = vmul.f32 %v4090, %v4088
        %v4095 = vadd.f32 %v4053, %v4091
        %v4096 = vadd.f32 %v4054, %v4092
        %v4097 = vadd.f32 %v4055, %v4093
        %v4098 = vadd.f32 %v4056, %v4094
        %s4099 = sld [smem:[#allocation13 + $0x47]]
        %v4100 = vstv %s4099
        %v4101 = vmul.f32 %v4100, %v4085
        %v4102 = vmul.f32 %v4100, %v4087
        %v4103 = vmul.f32 %v4100, %v4086
        %v4104 = vmul.f32 %v4100, %v4088
        %v4105 = vadd.f32 %v4063, %v4101
        %v4106 = vadd.f32 %v4064, %v4102
        %v4107 = vadd.f32 %v4065, %v4103
        %v4108 = vadd.f32 %v4066, %v4104
        %s4109 = sld [smem:[#allocation13 + $0x6f]]
        %v4110 = vstv %s4109
        %v4111 = vmul.f32 %v4110, %v4085
        %v4112 = vmul.f32 %v4110, %v4087
        %v4113 = vmul.f32 %v4110, %v4086
        %v4114 = vmul.f32 %v4110, %v4088
        %v4115 = vadd.f32 %v4073, %v4111
        %v4116 = vadd.f32 %v4074, %v4112
        %v4117 = vadd.f32 %v4075, %v4113
        %v4118 = vadd.f32 %v4076, %v4114
        %v4119 = vld [vmem:[%s2812] sm:$0xff]
        %v4120 = vld [vmem:[%s2812 + $0x8] sm:$0xff]
        %v4121 = vld [vmem:[%s2812 + $0x10] sm:$0xff]
        %v4122 = vld [vmem:[%s2812 + $0x18] sm:$0xff]
        %s4123 = sld [smem:[#allocation13 + $0x20]]
        %v4124 = vstv %s4123
        %v4125 = vmul.f32 %v4124, %v4119
        %v4126 = vmul.f32 %v4124, %v4120
        %v4127 = vmul.f32 %v4124, %v4121
        %v4128 = vmul.f32 %v4124, %v4122
        %v4129 = vadd.f32 %v4095, %v4125
        %v4130 = vadd.f32 %v4096, %v4126
        %v4131 = vadd.f32 %v4097, %v4127
        %v4132 = vadd.f32 %v4098, %v4128
        %s4133 = sld [smem:[#allocation13 + $0x48]]
        %v4134 = vstv %s4133
        %v4135 = vmul.f32 %v4134, %v4119
        %v4136 = vmul.f32 %v4134, %v4120
        %v4137 = vmul.f32 %v4134, %v4121
        %v4138 = vmul.f32 %v4134, %v4122
        %v4139 = vadd.f32 %v4105, %v4135
        %v4140 = vadd.f32 %v4106, %v4136
        %v4141 = vadd.f32 %v4107, %v4137
        %v4142 = vadd.f32 %v4108, %v4138
        %s4143 = sld [smem:[#allocation13 + $0x70]]
        %v4144 = vstv %s4143
        %v4145 = vmul.f32 %v4144, %v4119
        %v4146 = vmul.f32 %v4144, %v4120
        %v4147 = vmul.f32 %v4144, %v4121
        %v4148 = vmul.f32 %v4144, %v4122
        %v4149 = vadd.f32 %v4115, %v4145
        %v4150 = vadd.f32 %v4116, %v4146
        %v4151 = vadd.f32 %v4117, %v4147
        %v4152 = vadd.f32 %v4118, %v4148
        %4153 = vrot.lane.b32.xlu0 %v4119, 127
        %v4154 = vpop.permute.xlu0 %4153
        %4155 = vrot.lane.b32.xlu0 %v4121, 127
        %v4156 = vpop.permute.xlu0 %4155
        %4157 = vrot.lane.b32.xlu0 %v4120, 127
        %v4158 = vpop.permute.xlu0 %4157
        %4159 = vrot.lane.b32.xlu0 %v4122, 127
        %v4160 = vpop.permute.xlu0 %4159
        %v4161 = vsel %vm434, %v4154, %v4158
        %v4162 = vsel %vm434, %v4156, %v4160
        %v4163 = vsel %vm434, %v4158, %v4154
        %v4164 = vsel %vm434, %v4160, %v4156
        %s4165 = sld [smem:[#allocation13 + $0x21]]
        %v4166 = vstv %s4165
        %v4167 = vmul.f32 %v4166, %v4161
        %v4168 = vmul.f32 %v4166, %v4163
        %v4169 = vmul.f32 %v4166, %v4162
        %v4170 = vmul.f32 %v4166, %v4164
        %v4171 = vadd.f32 %v4129, %v4167
        %v4172 = vadd.f32 %v4130, %v4168
        %v4173 = vadd.f32 %v4131, %v4169
        %v4174 = vadd.f32 %v4132, %v4170
        %s4175 = sld [smem:[#allocation13 + $0x49]]
        %v4176 = vstv %s4175
        %v4177 = vmul.f32 %v4176, %v4161
        %v4178 = vmul.f32 %v4176, %v4163
        %v4179 = vmul.f32 %v4176, %v4162
        %v4180 = vmul.f32 %v4176, %v4164
        %v4181 = vadd.f32 %v4139, %v4177
        %v4182 = vadd.f32 %v4140, %v4178
        %v4183 = vadd.f32 %v4141, %v4179
        %v4184 = vadd.f32 %v4142, %v4180
        %s4185 = sld [smem:[#allocation13 + $0x71]]
        %v4186 = vstv %s4185
        %v4187 = vmul.f32 %v4186, %v4161
        %v4188 = vmul.f32 %v4186, %v4163
        %v4189 = vmul.f32 %v4186, %v4162
        %v4190 = vmul.f32 %v4186, %v4164
        %v4191 = vadd.f32 %v4149, %v4187
        %v4192 = vadd.f32 %v4150, %v4188
        %v4193 = vadd.f32 %v4151, %v4189
        %v4194 = vadd.f32 %v4152, %v4190
        %4195 = vrot.lane.b32.xlu0 %v4119, 112
        %v4196 = vpop.permute.xlu0 %4195
        %4197 = vrot.lane.b32.xlu0 %v4121, 112
        %v4198 = vpop.permute.xlu0 %4197
        %4199 = vrot.lane.b32.xlu0 %v4120, 112
        %v4200 = vpop.permute.xlu0 %4199
        %4201 = vrot.lane.b32.xlu0 %v4122, 112
        %v4202 = vpop.permute.xlu0 %4201
        %v4203 = vsel %vm487, %v4196, %v4200
        %v4204 = vsel %vm487, %v4198, %v4202
        %v4205 = vsel %vm487, %v4200, %v4196
        %v4206 = vsel %vm487, %v4202, %v4198
        %s4207 = sld [smem:[#allocation13 + $0x22]]
        %v4208 = vstv %s4207
        %v4209 = vmul.f32 %v4208, %v4203
        %v4210 = vmul.f32 %v4208, %v4205
        %v4211 = vmul.f32 %v4208, %v4204
        %v4212 = vmul.f32 %v4208, %v4206
        %v4213 = vadd.f32 %v4171, %v4209
        %v4214 = vadd.f32 %v4172, %v4210
        %v4215 = vadd.f32 %v4173, %v4211
        %v4216 = vadd.f32 %v4174, %v4212
        %s4217 = sld [smem:[#allocation13 + $0x4a]]
        %v4218 = vstv %s4217
        %v4219 = vmul.f32 %v4218, %v4203
        %v4220 = vmul.f32 %v4218, %v4205
        %v4221 = vmul.f32 %v4218, %v4204
        %v4222 = vmul.f32 %v4218, %v4206
        %v4223 = vadd.f32 %v4181, %v4219
        %v4224 = vadd.f32 %v4182, %v4220
        %v4225 = vadd.f32 %v4183, %v4221
        %v4226 = vadd.f32 %v4184, %v4222
        %s4227 = sld [smem:[#allocation13 + $0x72]]
        %v4228 = vstv %s4227
        %v4229 = vmul.f32 %v4228, %v4203
        %v4230 = vmul.f32 %v4228, %v4205
        %v4231 = vmul.f32 %v4228, %v4204
        %v4232 = vmul.f32 %v4228, %v4206
        %v4233 = vadd.f32 %v4191, %v4229
        %v4234 = vadd.f32 %v4192, %v4230
        %v4235 = vadd.f32 %v4193, %v4231
        %v4236 = vadd.f32 %v4194, %v4232
        %4237 = vrot.lane.b32.xlu0 %v4119, 111
        %v4238 = vpop.permute.xlu0 %4237
        %4239 = vrot.lane.b32.xlu0 %v4121, 111
        %v4240 = vpop.permute.xlu0 %4239
        %4241 = vrot.lane.b32.xlu0 %v4120, 111
        %v4242 = vpop.permute.xlu0 %4241
        %4243 = vrot.lane.b32.xlu0 %v4122, 111
        %v4244 = vpop.permute.xlu0 %4243
        %v4245 = vsel %vm540, %v4238, %v4242
        %v4246 = vsel %vm540, %v4240, %v4244
        %v4247 = vsel %vm540, %v4242, %v4238
        %v4248 = vsel %vm540, %v4244, %v4240
        %s4249 = sld [smem:[#allocation13 + $0x23]]
        %v4250 = vstv %s4249
        %v4251 = vmul.f32 %v4250, %v4245
        %v4252 = vmul.f32 %v4250, %v4247
        %v4253 = vmul.f32 %v4250, %v4246
        %v4254 = vmul.f32 %v4250, %v4248
        %v4255 = vadd.f32 %v4213, %v4251
        %v4256 = vadd.f32 %v4214, %v4252
        %v4257 = vadd.f32 %v4215, %v4253
        %v4258 = vadd.f32 %v4216, %v4254
        %s4259 = sld [smem:[#allocation13 + $0x4b]]
        %v4260 = vstv %s4259
        %v4261 = vmul.f32 %v4260, %v4245
        %v4262 = vmul.f32 %v4260, %v4247
        %v4263 = vmul.f32 %v4260, %v4246
        %v4264 = vmul.f32 %v4260, %v4248
        %v4265 = vadd.f32 %v4223, %v4261
        %v4266 = vadd.f32 %v4224, %v4262
        %v4267 = vadd.f32 %v4225, %v4263
        %v4268 = vadd.f32 %v4226, %v4264
        %s4269 = sld [smem:[#allocation13 + $0x73]]
        %v4270 = vstv %s4269
        %v4271 = vmul.f32 %v4270, %v4245
        %v4272 = vmul.f32 %v4270, %v4247
        %v4273 = vmul.f32 %v4270, %v4246
        %v4274 = vmul.f32 %v4270, %v4248
        %v4275 = vadd.f32 %v4233, %v4271
        %v4276 = vadd.f32 %v4234, %v4272
        %v4277 = vadd.f32 %v4235, %v4273
        %v4278 = vadd.f32 %v4236, %v4274
        %v4279 = vrot.slane %v4119, 1
        %v4280 = vrot.slane %v4120, 1
        %v4281 = vrot.slane %v4121, 1
        %v4282 = vrot.slane %v4122, 1
        %v4283 = vsel %vm591, %v4279, %v4281
        %v4284 = vsel %vm591, %v4280, %v4282
        %v4285 = vsel %vm591, %v4281, %v4279
        %v4286 = vsel %vm591, %v4282, %v4280
        %s4287 = sld [smem:[#allocation13 + $0x24]]
        %v4288 = vstv %s4287
        %v4289 = vmul.f32 %v4288, %v4283
        %v4290 = vmul.f32 %v4288, %v4284
        %v4291 = vmul.f32 %v4288, %v4285
        %v4292 = vmul.f32 %v4288, %v4286
        %v4293 = vadd.f32 %v4255, %v4289
        %v4294 = vadd.f32 %v4256, %v4290
        %v4295 = vadd.f32 %v4257, %v4291
        %v4296 = vadd.f32 %v4258, %v4292
        %s4297 = sld [smem:[#allocation13 + $0x4c]]
        %v4298 = vstv %s4297
        %v4299 = vmul.f32 %v4298, %v4283
        %v4300 = vmul.f32 %v4298, %v4284
        %v4301 = vmul.f32 %v4298, %v4285
        %v4302 = vmul.f32 %v4298, %v4286
        %v4303 = vadd.f32 %v4265, %v4299
        %v4304 = vadd.f32 %v4266, %v4300
        %v4305 = vadd.f32 %v4267, %v4301
        %v4306 = vadd.f32 %v4268, %v4302
        %s4307 = sld [smem:[#allocation13 + $0x74]]
        %v4308 = vstv %s4307
        %v4309 = vmul.f32 %v4308, %v4283
        %v4310 = vmul.f32 %v4308, %v4284
        %v4311 = vmul.f32 %v4308, %v4285
        %v4312 = vmul.f32 %v4308, %v4286
        %v4313 = vadd.f32 %v4275, %v4309
        %v4314 = vadd.f32 %v4276, %v4310
        %v4315 = vadd.f32 %v4277, %v4311
        %v4316 = vadd.f32 %v4278, %v4312
        %4317 = vrot.lane.b32.xlu0 %v4283, 127
        %v4318 = vpop.permute.xlu0 %4317
        %4319 = vrot.lane.b32.xlu0 %v4285, 127
        %v4320 = vpop.permute.xlu0 %4319
        %4321 = vrot.lane.b32.xlu0 %v4284, 127
        %v4322 = vpop.permute.xlu0 %4321
        %4323 = vrot.lane.b32.xlu0 %v4286, 127
        %v4324 = vpop.permute.xlu0 %4323
        %v4325 = vsel %vm434, %v4318, %v4322
        %v4326 = vsel %vm434, %v4320, %v4324
        %v4327 = vsel %vm434, %v4322, %v4318
        %v4328 = vsel %vm434, %v4324, %v4320
        %s4329 = sld [smem:[#allocation13 + $0x25]]
        %v4330 = vstv %s4329
        %v4331 = vmul.f32 %v4330, %v4325
        %v4332 = vmul.f32 %v4330, %v4327
        %v4333 = vmul.f32 %v4330, %v4326
        %v4334 = vmul.f32 %v4330, %v4328
        %v4335 = vadd.f32 %v4293, %v4331
        %v4336 = vadd.f32 %v4294, %v4332
        %v4337 = vadd.f32 %v4295, %v4333
        %v4338 = vadd.f32 %v4296, %v4334
        %s4339 = sld [smem:[#allocation13 + $0x4d]]
        %v4340 = vstv %s4339
        %v4341 = vmul.f32 %v4340, %v4325
        %v4342 = vmul.f32 %v4340, %v4327
        %v4343 = vmul.f32 %v4340, %v4326
        %v4344 = vmul.f32 %v4340, %v4328
        %v4345 = vadd.f32 %v4303, %v4341
        %v4346 = vadd.f32 %v4304, %v4342
        %v4347 = vadd.f32 %v4305, %v4343
        %v4348 = vadd.f32 %v4306, %v4344
        %s4349 = sld [smem:[#allocation13 + $0x75]]
        %v4350 = vstv %s4349
        %v4351 = vmul.f32 %v4350, %v4325
        %v4352 = vmul.f32 %v4350, %v4327
        %v4353 = vmul.f32 %v4350, %v4326
        %v4354 = vmul.f32 %v4350, %v4328
        %v4355 = vadd.f32 %v4313, %v4351
        %v4356 = vadd.f32 %v4314, %v4352
        %v4357 = vadd.f32 %v4315, %v4353
        %v4358 = vadd.f32 %v4316, %v4354
        %4359 = vrot.lane.b32.xlu0 %v4283, 112
        %v4360 = vpop.permute.xlu0 %4359
        %4361 = vrot.lane.b32.xlu0 %v4285, 112
        %v4362 = vpop.permute.xlu0 %4361
        %4363 = vrot.lane.b32.xlu0 %v4284, 112
        %v4364 = vpop.permute.xlu0 %4363
        %4365 = vrot.lane.b32.xlu0 %v4286, 112
        %v4366 = vpop.permute.xlu0 %4365
        %v4367 = vsel %vm487, %v4360, %v4364
        %v4368 = vsel %vm487, %v4362, %v4366
        %v4369 = vsel %vm487, %v4364, %v4360
        %v4370 = vsel %vm487, %v4366, %v4362
        %s4371 = sld [smem:[#allocation13 + $0x26]]
        %v4372 = vstv %s4371
        %v4373 = vmul.f32 %v4372, %v4367
        %v4374 = vmul.f32 %v4372, %v4369
        %v4375 = vmul.f32 %v4372, %v4368
        %v4376 = vmul.f32 %v4372, %v4370
        %v4377 = vadd.f32 %v4335, %v4373
        %v4378 = vadd.f32 %v4336, %v4374
        %v4379 = vadd.f32 %v4337, %v4375
        %v4380 = vadd.f32 %v4338, %v4376
        %s4381 = sld [smem:[#allocation13 + $0x4e]]
        %v4382 = vstv %s4381
        %v4383 = vmul.f32 %v4382, %v4367
        %v4384 = vmul.f32 %v4382, %v4369
        %v4385 = vmul.f32 %v4382, %v4368
        %v4386 = vmul.f32 %v4382, %v4370
        %v4387 = vadd.f32 %v4345, %v4383
        %v4388 = vadd.f32 %v4346, %v4384
        %v4389 = vadd.f32 %v4347, %v4385
        %v4390 = vadd.f32 %v4348, %v4386
        %s4391 = sld [smem:[#allocation13 + $0x76]]
        %v4392 = vstv %s4391
        %v4393 = vmul.f32 %v4392, %v4367
        %v4394 = vmul.f32 %v4392, %v4369
        %v4395 = vmul.f32 %v4392, %v4368
        %v4396 = vmul.f32 %v4392, %v4370
        %v4397 = vadd.f32 %v4355, %v4393
        %v4398 = vadd.f32 %v4356, %v4394
        %v4399 = vadd.f32 %v4357, %v4395
        %v4400 = vadd.f32 %v4358, %v4396
        %4401 = vrot.lane.b32.xlu0 %v4283, 111
        %v4402 = vpop.permute.xlu0 %4401
        %4403 = vrot.lane.b32.xlu0 %v4285, 111
        %v4404 = vpop.permute.xlu0 %4403
        %4405 = vrot.lane.b32.xlu0 %v4284, 111
        %v4406 = vpop.permute.xlu0 %4405
        %4407 = vrot.lane.b32.xlu0 %v4286, 111
        %v4408 = vpop.permute.xlu0 %4407
        %v4409 = vsel %vm540, %v4402, %v4406
        %v4410 = vsel %vm540, %v4404, %v4408
        %v4411 = vsel %vm540, %v4406, %v4402
        %v4412 = vsel %vm540, %v4408, %v4404
        %s4413 = sld [smem:[#allocation13 + $0x27]]
        %v4414 = vstv %s4413
        %v4415 = vmul.f32 %v4414, %v4409
        %v4416 = vmul.f32 %v4414, %v4411
        %v4417 = vmul.f32 %v4414, %v4410
        %v4418 = vmul.f32 %v4414, %v4412
        %v4419 = vadd.f32 %v4377, %v4415
        %v4420 = vadd.f32 %v4378, %v4416
        %v4421 = vadd.f32 %v4379, %v4417
        %v4422 = vadd.f32 %v4380, %v4418
        %s4423 = sld [smem:[#allocation13 + $0x4f]]
        %v4424 = vstv %s4423
        %v4425 = vmul.f32 %v4424, %v4409
        %v4426 = vmul.f32 %v4424, %v4411
        %v4427 = vmul.f32 %v4424, %v4410
        %v4428 = vmul.f32 %v4424, %v4412
        %v4429 = vadd.f32 %v4387, %v4425
        %v4430 = vadd.f32 %v4388, %v4426
        %v4431 = vadd.f32 %v4389, %v4427
        %v4432 = vadd.f32 %v4390, %v4428
        %s4433 = sld [smem:[#allocation13 + $0x77]]
        %v4434 = vstv %s4433
        %v4435 = vmul.f32 %v4434, %v4409
        %v4436 = vmul.f32 %v4434, %v4411
        %v4437 = vmul.f32 %v4434, %v4410
        %v4438 = vmul.f32 %v4434, %v4412
        %v4439 = vadd.f32 %v4397, %v4435
        %v4440 = vadd.f32 %v4398, %v4436
        %v4441 = vadd.f32 %v4399, %v4437
        %v4442 = vadd.f32 %v4400, %v4438
        %v4443 = vmax.f32 %v4419, 0.0
        %v4444 = vmax.f32 %v4420, 0.0
        %v4445 = vmax.f32 %v4421, 0.0
        %v4446 = vmax.f32 %v4422, 0.0
        %4447 = vst [vmem:[%s371] sm:$0xff] %v4443
        %4448 = vst [vmem:[%s371 + $0x8] sm:$0xff] %v4444
        %4449 = vst [vmem:[%s371 + $0x10] sm:$0xff] %v4445
        %4450 = vst [vmem:[%s371 + $0x18] sm:$0xff] %v4446
        %v4451 = vmax.f32 %v4429, 0.0
        %v4452 = vmax.f32 %v4430, 0.0
        %v4453 = vmax.f32 %v4431, 0.0
        %v4454 = vmax.f32 %v4432, 0.0
        %s4455 = scalar_lea.vmem %s371, 32 [#allocation17]
        %4456 = vst [vmem:[%s4455] sm:$0xff] %v4451
        %4457 = vst [vmem:[%s4455 + $0x8] sm:$0xff] %v4452
        %4458 = vst [vmem:[%s4455 + $0x10] sm:$0xff] %v4453
        %4459 = vst [vmem:[%s4455 + $0x18] sm:$0xff] %v4454
        %v4460 = vmax.f32 %v4439, 0.0
        %v4461 = vmax.f32 %v4440, 0.0
        %v4462 = vmax.f32 %v4441, 0.0
        %v4463 = vmax.f32 %v4442, 0.0
        %s4464 = scalar_lea.vmem %s371, 64 [#allocation17]
        %4465 = vst [vmem:[%s4464] sm:$0xff] %v4460
        %4466 = vst [vmem:[%s4464 + $0x8] sm:$0xff] %v4461
        %4467 = vst [vmem:[%s4464 + $0x10] sm:$0xff] %v4462
        %4468 = vst [vmem:[%s4464 + $0x18] sm:$0xff] %v4463
        %s4469 = sand.u32 %s188, 1
        %s4470 = scalar_lea.sflag [#allocation6], %s4469
        %s4471 = sand.u32 %s188, 1
        %s4472 = smul.addr %s4471, 96
        %s4473 = scalar_lea.vmem [#allocation17], %s4472
        // Predicated region
        $region77: #{tpu_custom_call.1} parent=47 // pred_check
          %p4474 = pneg %p198
        $region78: #{tpu_custom_call.1} parent=47 // pred_check_branch
          %4476 = sbr.rel (%p4474) target = $region80
        $region79: #{tpu_custom_call.1} parent=47 // pred_region
          %s4478 = ssub.s32 1536, 1536
          %4479 = vsyncadd %s4470, %s4478
          %s4480 = smul.addr %s28, 12
          %s4481 = smul.addr %s4480, 128
          %s4482 = scalar_lea.hbm %s7, %s4481
          %s4483 = sshll.u32 %s4473, 4
          %s4484 = int_to_ptr.vmem [resolvable:$true] %s4483
          %4489 = dma.vmem_to_hbm [thread:$0]  %s4484, 1536, %s4482, %s4470, 256, 256, 16
        $region80: #{tpu_custom_call.1} parent=47 // pred_fallthru
          _
      $region48: #{tpu_custom_call.1} parent=5 // pred_fallthru
        _
      %p4490 = scmp.le.s32.totalorder 2, %s23
      // Predicated region
      $region81: #{tpu_custom_call.1} parent=5 // pred_check
        %p4491 = pneg %p4490
      $region82: #{tpu_custom_call.1} parent=5 // pred_check_branch
        %4493 = sbr.rel (%p4491) target = $region84
      $region83: #{tpu_custom_call.1} parent=5 // pred_region
        %s4494 = ssub.s32 %s23, 2
        // Predicated region
        $region85: #{tpu_custom_call.1} parent=83 // pred_check
          %p4495 = pneg %p204
        $region86: #{tpu_custom_call.1} parent=83 // pred_check_branch
          %4497 = sbr.rel (%p4495) target = $region88
        $region87: #{tpu_custom_call.1} parent=83 // pred_region
          %s4498 = sand.u32 %s189, 1
          %s4499 = scalar_lea.sflag [#allocation6], %s4498
          %s4500 = sand.u32 %s189, 1
          %s4501 = smul.addr %s4500, 96
          %s4502 = scalar_lea.vmem [#allocation17], %s4501
          %4503 = dma.done %s4499, 1536
        $region88: #{tpu_custom_call.1} parent=83 // pred_fallthru
          _
      $region84: #{tpu_custom_call.1} parent=5 // pred_fallthru
        _
    $region6: #{tpu_custom_call.1} parent=1 // loop_footer
      %s27 = sadd.s32 1, %s23
    $region7: #{tpu_custom_call.1} parent=1 // loop_footer_branch
      %22 = sbr.rel target = $region3
    $region8: #{tpu_custom_call.1} parent=1 // loop_exit
      _
    %4504 = vsyncpa [#allocation5], 1
    %s4505 = scalar_lea.sflag [#allocation5], 1
    %4506 = vsyncpa %s4505, 1
    %4507 = vsyncpa [#allocation6], 1
    %s4508 = scalar_lea.sflag [#allocation6], 1
    %4509 = vsyncpa %s4508, 1
    %4510 = vsyncpa [#allocation7], 1
    %s4511 = scalar_lea.sflag [#allocation7], 1
    %4512 = vsyncpa %s4511, 1
    %4513 = vsyncpa [#allocation8], 1
    %s4514 = scalar_lea.sflag [#allocation8], 1
    %4515 = vsyncpa %s4514, 1
    %4516 = vsyncpa [#allocation11], 1
    %4517 = vsyncpa [#allocation14], 1

</llo_original>
